<compile_context>
chip_gen: v5e
topology: v5e:2x2
jax: 0.10.0
libtpu: 0.0.40
codegen_flags: <defaults>
</compile_context>

<pallas_src>
import functools
import math

import jax
import jax.numpy as jnp
from jax import lax
from jax.experimental import pallas as pl
from jax.experimental.pallas import tpu as pltpu

LANE = 128


def _round_up(v, m):
    return (v + m - 1) // m * m


# ----------------------------------------------------------------------------
# Pallas kernel: bf16 MXU matmul + optional per-channel scale + add + ReLU
# ----------------------------------------------------------------------------
def _fused_matmul_kernel(x_ref, w_ref, *rest, relu, has_scale):
    # x_ref: (tm, K) bf16   w_ref: (K, tn) bf16
    # scale_ref (optional): (1, tn) f32
    # add_ref: (1, tn) or (tm, tn) f32     o_ref: (tm, tn)
    if has_scale:
        scale_ref, add_ref, o_ref = rest
    else:
        add_ref, o_ref = rest
    y = jnp.dot(x_ref[...], w_ref[...], preferred_element_type=jnp.float32)
    if has_scale:
        y = y * scale_ref[...]
    y = y + add_ref[...]
    if relu:
        y = jnp.maximum(y, 0.0)
    o_ref[...] = y.astype(o_ref.dtype)


def _tiles(M, N):
    """Pick (tm, padded_M, tn).  Big M tiles; keep >=2 parallel grid steps."""
    tm = min(512, _round_up(M, 16))
    Mp = _round_up(M, tm)
    tn = N
    if Mp // tm == 1:
        # Single M step: split N (preferred, stays lane-dense) or M so that
        # v7x's two TensorCores both get a "parallel" grid step.
        if N % 256 == 0:
            tn = N // 2
        elif N % 128 == 0 and N > 128:
            tn = 128
        elif tm % 32 == 0:
            tm //= 2
    return tm, Mp, tn


def fused_matmul(x, w, add, scale=None, *, relu, out_dtype):
    """out = maybe_relu(maybe_scale(x @ w) + add).

    x, w are cast to bfloat16 (MXU-native), accumulation is f32, epilogue f32.
    `add` may be per-channel (N,) or per-row (M, N).
    """
    M, K = x.shape
    N = w.shape[1]
    x = x.astype(jnp.bfloat16)
    w = w.astype(jnp.bfloat16)

    tm, Mp, tn = _tiles(M, N)
    if Mp != M:
        x = jnp.pad(x, ((0, Mp - M), (0, 0)))

    add = add.astype(jnp.float32)
    if add.ndim == 1:
        add = add.reshape(1, N)
    if add.shape[0] != 1 and Mp != M:
        add = jnp.pad(add, ((0, Mp - M), (0, 0)))

    in_specs = [
        pl.BlockSpec((tm, K), lambda i, j: (i, 0)),   # cols tile, resident over j
        pl.BlockSpec((K, tn), lambda i, j: (0, j)),   # full-K weight slab
    ]
    args = [x, w]
    if scale is not None:
        in_specs.append(pl.BlockSpec((1, tn), lambda i, j: (0, j)))
        args.append(scale.reshape(1, N).astype(jnp.float32))
    if add.shape[0] == 1:
        in_specs.append(pl.BlockSpec((1, tn), lambda i, j: (0, j)))
    else:
        in_specs.append(pl.BlockSpec((tm, tn), lambda i, j: (i, j)))
    args.append(add)

    out = pl.pallas_call(
        functools.partial(_fused_matmul_kernel, relu=relu,
                          has_scale=scale is not None),
        out_shape=jax.ShapeDtypeStruct((Mp, N), out_dtype),
        grid=(Mp // tm, N // tn),
        in_specs=in_specs,
        out_specs=pl.BlockSpec((tm, tn), lambda i, j: (i, j)),
        compiler_params=pltpu.CompilerParams(
            dimension_semantics=("parallel", "parallel"),
            vmem_limit_bytes=32 * 1024 * 1024,
        ),
    )(*args)
    return out[:M] if Mp != M else out


# ----------------------------------------------------------------------------
# JAX glue: im2col patch extraction (NHWC, bf16 — 2x less HBM than f32 cols)
# ----------------------------------------------------------------------------
def im2col(x_nhwc, k, stride, pad):
    x = jnp.pad(x_nhwc, ((0, 0), (pad, pad), (pad, pad), (0, 0)))
    B, H, W, C = x.shape
    Ho = (H - k) // stride + 1
    Wo = (W - k) // stride + 1
    patches = []
    for di in range(k):
        for dj in range(k):
            patches.append(
                x[:, di:di + Ho * stride:stride, dj:dj + Wo * stride:stride, :]
            )
    cols = jnp.concatenate(patches, axis=-1)          # (B, Ho, Wo, k*k*C)
    return cols.reshape(B * Ho * Wo, k * k * C), Ho, Wo


# ----------------------------------------------------------------------------
# Parameter construction (deterministic, synthetic)
# ----------------------------------------------------------------------------
def make_params(key, d_model=768, seq_length=5):
    ks = iter(jax.random.split(key, 64))
    specs = [(3, 48), (48, 96), (96, 192), (192, 384)]
    params = {}
    eps = 1e-5
    for i, (cin, cout) in enumerate(specs, start=1):
        std = math.sqrt(2.0 / (cin * 9))
        w = jax.random.normal(next(ks), (cout, cin, 3, 3), jnp.float32) * std
        b = 0.05 * jax.random.normal(next(ks), (cout,), jnp.float32)
        gamma = 1.0 + 0.1 * jax.random.normal(next(ks), (cout,), jnp.float32)
        beta = 0.1 * jax.random.normal(next(ks), (cout,), jnp.float32)
        r_mean = 0.1 * jax.random.normal(next(ks), (cout,), jnp.float32)
        r_var = jax.random.uniform(next(ks), (cout,), jnp.float32, 0.5, 1.5)
        # eval-mode BN folded with conv bias: y = scale * (Wx) + shift
        scale = gamma / jnp.sqrt(r_var + eps)
        shift = scale * (b - r_mean) + beta
        params[f"conv{i}"] = (w, scale, shift)
    std5 = math.sqrt(2.0 / 384)
    w5 = jax.random.normal(next(ks), (768, 384, 1, 1), jnp.float32) * std5
    b5 = 0.05 * jax.random.normal(next(ks), (768,), jnp.float32)
    params["conv5"] = (w5, b5)
    params["class_token"] = jax.random.normal(next(ks), (1, 1, d_model), jnp.float32)
    params["embeddings"] = jax.random.normal(next(ks), (seq_length, d_model), jnp.float32)
    return params


# ----------------------------------------------------------------------------
# Forward pass (Pallas)
# ----------------------------------------------------------------------------
def embedding_layer_forward(x_nchw, params):
    B = x_nchw.shape[0]
    x = jnp.transpose(x_nchw, (0, 2, 3, 1)).astype(jnp.bfloat16)  # NCHW -> NHWC bf16

    for i in range(1, 5):
        w, scale, shift = params[f"conv{i}"]
        cout, cin = w.shape[0], w.shape[1]
        cin_have = x.shape[-1]                      # may already be lane-padded
        cout_pad = _round_up(cout, LANE)            # lane-dense output channels
        # (Cout, Cin, kh, kw) -> (kh, kw, Cin_pad, Cout_pad) -> (9*Cin_pad, Cout_pad)
        wk = jnp.transpose(w, (2, 3, 1, 0))
        wk = jnp.pad(wk, ((0, 0), (0, 0),
                          (0, cin_have - cin), (0, cout_pad - cout)))
        w_mat = wk.reshape(9 * cin_have, cout_pad)
        scale_p = jnp.pad(scale, (0, cout_pad - cout), constant_values=1.0)
        shift_p = jnp.pad(shift, (0, cout_pad - cout))

        cols, Ho, Wo = im2col(x, k=3, stride=2, pad=1)
        y = fused_matmul(cols, w_mat, shift_p, scale=scale_p,
                         relu=True, out_dtype=jnp.bfloat16)
        x = y.reshape(B, Ho, Wo, cout_pad)

    # Conv5: 1x1 conv == matmul over channels; fuse conv bias + positional
    # embedding for the patch tokens into the kernel epilogue (no BN scale).
    w5, b5 = params["conv5"]
    d_model = w5.shape[0]
    Bn, H, W, C = x.shape
    cols = x.reshape(B * H * W, C)
    w5k = jnp.transpose(w5, (2, 3, 1, 0)).reshape(w5.shape[1], d_model)
    w5_mat = jnp.pad(w5k, ((0, C - w5.shape[1]), (0, 0)))

    emb = params["embeddings"].astype(jnp.float32)            # (S, d_model)
    row_add = jnp.tile(emb[1:], (B, 1)) + b5[None, :]          # (B*H*W, d_model)
    y = fused_matmul(cols, w5_mat, row_add, scale=None,
                     relu=False, out_dtype=jnp.float32)
    patches = y.reshape(B, H * W, d_model)                     # 'b c h w -> b (h w) c'

    token = params["class_token"].astype(jnp.float32) + emb[0][None, None, :]
    token = jnp.broadcast_to(token, (B, 1, d_model))
    return jnp.concatenate([token, patches], axis=1)


# ----------------------------------------------------------------------------
# Reference (lax.conv) with matched bf16-operand / f32-accumulate numerics
# ----------------------------------------------------------------------------
def reference_forward(x_nchw, params):
    y = x_nchw.astype(jnp.bfloat16)
    for i in range(1, 5):
        w, scale, shift = params[f"conv{i}"]
        y = lax.conv_general_dilated(
            y, w.astype(jnp.bfloat16), window_strides=(2, 2),
            padding=((1, 1), (1, 1)),
            dimension_numbers=("NCHW", "OIHW", "NCHW"),
            preferred_element_type=jnp.float32)
        y = y * scale[None, :, None, None] + shift[None, :, None, None]
        y = jnp.maximum(y, 0.0).astype(jnp.bfloat16)
    w5, b5 = params["conv5"]
    y = lax.conv_general_dilated(
        y, w5.astype(jnp.bfloat16), window_strides=(1, 1), padding=((0, 0), (0, 0)),
        dimension_numbers=("NCHW", "OIHW", "NCHW"),
        preferred_element_type=jnp.float32)
    y = y + b5[None, :, None, None]
    B, C, H, W = y.shape
    y = jnp.transpose(y, (0, 2, 3, 1)).reshape(B, H * W, C)
    token = jnp.broadcast_to(params["class_token"], (B, 1, C))
    return jnp.concatenate([token, y], axis=1) + params["embeddings"]


if __name__ == "__main__":
    # Small config: image_size=32, patch_size=16 (4 stride-2 convs), d_model=768,
    # seq_length = (32//16)**2 + 1 = 5, batch=2.
    key = jax.random.PRNGKey(0)
    k_params, k_x = jax.random.split(key)
    params = make_params(k_params, d_model=768, seq_length=5)
    x = jax.random.normal(k_x, (2, 3, 32, 32), jnp.float32)

    out = jax.jit(embedding_layer_forward)(x, params)
    out = jax.block_until_ready(out)
    assert out.shape == (2, 5, 768), out.shape

    ref = jax.block_until_ready(reference_forward(x, params))
    assert jnp.allclose(out, ref, rtol=2e-2, atol=2e-2), \
        float(jnp.max(jnp.abs(out - ref)))

    print("KERNEL_OK")
</pallas_src>

<mosaic_0001>
module attributes {stable_mosaic.version = 11 : i64} {
  func.func @_fused_matmul_kernel(%arg0: i32, %arg1: i32, %arg2: memref<256x27xbf16, #tpu.memory_space<vmem>>, %arg3: memref<27x128xbf16, #tpu.memory_space<vmem>>, %arg4: memref<1x128xf32, #tpu.memory_space<vmem>>, %arg5: memref<1x128xf32, #tpu.memory_space<vmem>>, %arg6: memref<256x128xbf16, #tpu.memory_space<vmem>>) attributes {dimension_semantics = [#tpu.dimension_semantics<parallel>, #tpu.dimension_semantics<parallel>], iteration_bounds = array<i64: 2, 1>, scalar_prefetch = 0 : i64, scratch_operands = 0 : i64, tpu.core_type = #tpu.core_type<tc>, window_params = [{transform_indices = @transform_0, window_bounds = array<i64: 256, 27>}, {transform_indices = @transform_1, window_bounds = array<i64: 27, 128>}, {transform_indices = @transform_2, window_bounds = array<i64: 1, 128>}, {transform_indices = @transform_3, window_bounds = array<i64: 1, 128>}, {transform_indices = @transform_4, window_bounds = array<i64: 256, 128>}]} {
    %c0 = arith.constant 0 : index
    %c0_0 = arith.constant 0 : index
    %0 = vector.load %arg2[%c0, %c0_0] : memref<256x27xbf16, #tpu.memory_space<vmem>>, vector<256x27xbf16>
    %c0_1 = arith.constant 0 : index
    %c0_2 = arith.constant 0 : index
    %1 = vector.load %arg3[%c0_1, %c0_2] : memref<27x128xbf16, #tpu.memory_space<vmem>>, vector<27x128xbf16>
    %cst = arith.constant dense<0.000000e+00> : vector<256x128xf32>
    %2 = tpu.matmul %0, %1, %cst {dimension_numbers = #tpu.dot_dimension_numbers<[1], [0], [0], [1], [0, 0, 1, 1], [], []>} : vector<256x27xbf16>, vector<27x128xbf16>, vector<256x128xf32> -> vector<256x128xf32>
    %c0_3 = arith.constant 0 : index
    %c0_4 = arith.constant 0 : index
    %3 = vector.load %arg4[%c0_3, %c0_4] : memref<1x128xf32, #tpu.memory_space<vmem>>, vector<1x128xf32>
    %4 = vector.broadcast %3 : vector<1x128xf32> to vector<256x128xf32>
    %5 = arith.mulf %2, %4 : vector<256x128xf32>
    %c0_5 = arith.constant 0 : index
    %c0_6 = arith.constant 0 : index
    %6 = vector.load %arg5[%c0_5, %c0_6] : memref<1x128xf32, #tpu.memory_space<vmem>>, vector<1x128xf32>
    %7 = vector.broadcast %6 : vector<1x128xf32> to vector<256x128xf32>
    %8 = arith.addf %5, %7 : vector<256x128xf32>
    %cst_7 = arith.constant 0.000000e+00 : f32
    %9 = vector.broadcast %cst_7 : f32 to vector<256x128xf32>
    %10 = arith.maximumf %8, %9 : vector<256x128xf32>
    %11 = arith.truncf %10 : vector<256x128xf32> to vector<256x128xbf16>
    %c0_8 = arith.constant 0 : index
    %c0_9 = arith.constant 0 : index
    %12 = vector.load %arg6[%c0_8, %c0_9] : memref<256x128xbf16, #tpu.memory_space<vmem>>, vector<256x128xbf16>
    tpu.vector_store %arg6[%c0_8, %c0_9], %11 {strides = array<i32>} : memref<256x128xbf16, #tpu.memory_space<vmem>>, vector<256x128xbf16>,
    return
  }
  func.func @transform_0(%arg0: i32, %arg1: i32) -> (i32, i32) {
    %c0_i32 = arith.constant 0 : i32
    %c0_i32_0 = arith.constant 0 : i32
    return %arg0, %c0_i32 : i32, i32
  }
  func.func @transform_1(%arg0: i32, %arg1: i32) -> (i32, i32) {
    %c0_i32 = arith.constant 0 : i32
    %c0_i32_0 = arith.constant 0 : i32
    return %c0_i32, %arg1 : i32, i32
  }
  func.func @transform_2(%arg0: i32, %arg1: i32) -> (i32, i32) {
    %c0_i32 = arith.constant 0 : i32
    %c0_i32_0 = arith.constant 0 : i32
    return %c0_i32, %arg1 : i32, i32
  }
  func.func @transform_3(%arg0: i32, %arg1: i32) -> (i32, i32) {
    %c0_i32 = arith.constant 0 : i32
    %c0_i32_0 = arith.constant 0 : i32
    return %c0_i32, %arg1 : i32, i32
  }
  func.func @transform_4(%arg0: i32, %arg1: i32) -> (i32, i32) {
    %c0_i32 = arith.constant 0 : i32
    return %arg0, %arg1 : i32, i32
  }
}

module attributes {stable_mosaic.version = 11 : i64} {
  func.func @_fused_matmul_kernel(%arg0: i32, %arg1: i32, %arg2: memref<64x1152xbf16, #tpu.memory_space<vmem>>, %arg3: memref<1152x128xbf16, #tpu.memory_space<vmem>>, %arg4: memref<1x128xf32, #tpu.memory_space<vmem>>, %arg5: memref<1x128xf32, #tpu.memory_space<vmem>>, %arg6: memref<64x128xbf16, #tpu.memory_space<vmem>>) attributes {dimension_semantics = [#tpu.dimension_semantics<parallel>, #tpu.dimension_semantics<parallel>], iteration_bounds = array<i64: 2, 1>, scalar_prefetch = 0 : i64, scratch_operands = 0 : i64, tpu.core_type = #tpu.core_type<tc>, window_params = [{transform_indices = @transform_0, window_bounds = array<i64: 64, 1152>}, {transform_indices = @transform_1, window_bounds = array<i64: 1152, 128>}, {transform_indices = @transform_2, window_bounds = array<i64: 1, 128>}, {transform_indices = @transform_3, window_bounds = array<i64: 1, 128>}, {transform_indices = @transform_4, window_bounds = array<i64: 64, 128>}]} {
    %c0 = arith.constant 0 : index
    %c0_0 = arith.constant 0 : index
    %0 = vector.load %arg2[%c0, %c0_0] : memref<64x1152xbf16, #tpu.memory_space<vmem>>, vector<64x1152xbf16>
    %c0_1 = arith.constant 0 : index
    %c0_2 = arith.constant 0 : index
    %1 = vector.load %arg3[%c0_1, %c0_2] : memref<1152x128xbf16, #tpu.memory_space<vmem>>, vector<1152x128xbf16>
    %cst = arith.constant dense<0.000000e+00> : vector<64x128xf32>
    %2 = tpu.matmul %0, %1, %cst {dimension_numbers = #tpu.dot_dimension_numbers<[1], [0], [0], [1], [0, 0, 1, 1], [], []>} : vector<64x1152xbf16>, vector<1152x128xbf16>, vector<64x128xf32> -> vector<64x128xf32>
    %c0_3 = arith.constant 0 : index
    %c0_4 = arith.constant 0 : index
    %3 = vector.load %arg4[%c0_3, %c0_4] : memref<1x128xf32, #tpu.memory_space<vmem>>, vector<1x128xf32>
    %4 = vector.broadcast %3 : vector<1x128xf32> to vector<64x128xf32>
    %5 = arith.mulf %2, %4 : vector<64x128xf32>
    %c0_5 = arith.constant 0 : index
    %c0_6 = arith.constant 0 : index
    %6 = vector.load %arg5[%c0_5, %c0_6] : memref<1x128xf32, #tpu.memory_space<vmem>>, vector<1x128xf32>
    %7 = vector.broadcast %6 : vector<1x128xf32> to vector<64x128xf32>
    %8 = arith.addf %5, %7 : vector<64x128xf32>
    %cst_7 = arith.constant 0.000000e+00 : f32
    %9 = vector.broadcast %cst_7 : f32 to vector<64x128xf32>
    %10 = arith.maximumf %8, %9 : vector<64x128xf32>
    %11 = arith.truncf %10 : vector<64x128xf32> to vector<64x128xbf16>
    %c0_8 = arith.constant 0 : index
    %c0_9 = arith.constant 0 : index
    %12 = vector.load %arg6[%c0_8, %c0_9] : memref<64x128xbf16, #tpu.memory_space<vmem>>, vector<64x128xbf16>
    tpu.vector_store %arg6[%c0_8, %c0_9], %11 {strides = array<i32>} : memref<64x128xbf16, #tpu.memory_space<vmem>>, vector<64x128xbf16>,
    return
  }
  func.func @transform_0(%arg0: i32, %arg1: i32) -> (i32, i32) {
    %c0_i32 = arith.constant 0 : i32
    %c0_i32_0 = arith.constant 0 : i32
    return %arg0, %c0_i32 : i32, i32
  }
  func.func @transform_1(%arg0: i32, %arg1: i32) -> (i32, i32) {
    %c0_i32 = arith.constant 0 : i32
    %c0_i32_0 = arith.constant 0 : i32
    return %c0_i32, %arg1 : i32, i32
  }
  func.func @transform_2(%arg0: i32, %arg1: i32) -> (i32, i32) {
    %c0_i32 = arith.constant 0 : i32
    %c0_i32_0 = arith.constant 0 : i32
    return %c0_i32, %arg1 : i32, i32
  }
  func.func @transform_3(%arg0: i32, %arg1: i32) -> (i32, i32) {
    %c0_i32 = arith.constant 0 : i32
    %c0_i32_0 = arith.constant 0 : i32
    return %c0_i32, %arg1 : i32, i32
  }
  func.func @transform_4(%arg0: i32, %arg1: i32) -> (i32, i32) {
    %c0_i32 = arith.constant 0 : i32
    return %arg0, %arg1 : i32, i32
  }
}

module attributes {stable_mosaic.version = 11 : i64} {
  func.func @_fused_matmul_kernel(%arg0: i32, %arg1: i32, %arg2: memref<32x1152xbf16, #tpu.memory_space<vmem>>, %arg3: memref<1152x128xbf16, #tpu.memory_space<vmem>>, %arg4: memref<1x128xf32, #tpu.memory_space<vmem>>, %arg5: memref<1x128xf32, #tpu.memory_space<vmem>>, %arg6: memref<32x128xbf16, #tpu.memory_space<vmem>>) attributes {dimension_semantics = [#tpu.dimension_semantics<parallel>, #tpu.dimension_semantics<parallel>], iteration_bounds = array<i64: 1, 2>, scalar_prefetch = 0 : i64, scratch_operands = 0 : i64, tpu.core_type = #tpu.core_type<tc>, window_params = [{transform_indices = @transform_0, window_bounds = array<i64: 32, 1152>}, {transform_indices = @transform_1, window_bounds = array<i64: 1152, 128>}, {transform_indices = @transform_2, window_bounds = array<i64: 1, 128>}, {transform_indices = @transform_3, window_bounds = array<i64: 1, 128>}, {transform_indices = @transform_4, window_bounds = array<i64: 32, 128>}]} {
    %c0 = arith.constant 0 : index
    %c0_0 = arith.constant 0 : index
    %0 = vector.load %arg2[%c0, %c0_0] : memref<32x1152xbf16, #tpu.memory_space<vmem>>, vector<32x1152xbf16>
    %c0_1 = arith.constant 0 : index
    %c0_2 = arith.constant 0 : index
    %1 = vector.load %arg3[%c0_1, %c0_2] : memref<1152x128xbf16, #tpu.memory_space<vmem>>, vector<1152x128xbf16>
    %cst = arith.constant dense<0.000000e+00> : vector<32x128xf32>
    %2 = tpu.matmul %0, %1, %cst {dimension_numbers = #tpu.dot_dimension_numbers<[1], [0], [0], [1], [0, 0, 1, 1], [], []>} : vector<32x1152xbf16>, vector<1152x128xbf16>, vector<32x128xf32> -> vector<32x128xf32>
    %c0_3 = arith.constant 0 : index
    %c0_4 = arith.constant 0 : index
    %3 = vector.load %arg4[%c0_3, %c0_4] : memref<1x128xf32, #tpu.memory_space<vmem>>, vector<1x128xf32>
    %4 = vector.broadcast %3 : vector<1x128xf32> to vector<32x128xf32>
    %5 = arith.mulf %2, %4 : vector<32x128xf32>
    %c0_5 = arith.constant 0 : index
    %c0_6 = arith.constant 0 : index
    %6 = vector.load %arg5[%c0_5, %c0_6] : memref<1x128xf32, #tpu.memory_space<vmem>>, vector<1x128xf32>
    %7 = vector.broadcast %6 : vector<1x128xf32> to vector<32x128xf32>
    %8 = arith.addf %5, %7 : vector<32x128xf32>
    %cst_7 = arith.constant 0.000000e+00 : f32
    %9 = vector.broadcast %cst_7 : f32 to vector<32x128xf32>
    %10 = arith.maximumf %8, %9 : vector<32x128xf32>
    %11 = arith.truncf %10 : vector<32x128xf32> to vector<32x128xbf16>
    %c0_8 = arith.constant 0 : index
    %c0_9 = arith.constant 0 : index
    %12 = vector.load %arg6[%c0_8, %c0_9] : memref<32x128xbf16, #tpu.memory_space<vmem>>, vector<32x128xbf16>
    tpu.vector_store %arg6[%c0_8, %c0_9], %11 {strides = array<i32>} : memref<32x128xbf16, #tpu.memory_space<vmem>>, vector<32x128xbf16>,
    return
  }
  func.func @transform_0(%arg0: i32, %arg1: i32) -> (i32, i32) {
    %c0_i32 = arith.constant 0 : i32
    %c0_i32_0 = arith.constant 0 : i32
    return %arg0, %c0_i32 : i32, i32
  }
  func.func @transform_1(%arg0: i32, %arg1: i32) -> (i32, i32) {
    %c0_i32 = arith.constant 0 : i32
    %c0_i32_0 = arith.constant 0 : i32
    return %c0_i32, %arg1 : i32, i32
  }
  func.func @transform_2(%arg0: i32, %arg1: i32) -> (i32, i32) {
    %c0_i32 = arith.constant 0 : i32
    %c0_i32_0 = arith.constant 0 : i32
    return %c0_i32, %arg1 : i32, i32
  }
  func.func @transform_3(%arg0: i32, %arg1: i32) -> (i32, i32) {
    %c0_i32 = arith.constant 0 : i32
    %c0_i32_0 = arith.constant 0 : i32
    return %c0_i32, %arg1 : i32, i32
  }
  func.func @transform_4(%arg0: i32, %arg1: i32) -> (i32, i32) {
    %c0_i32 = arith.constant 0 : i32
    return %arg0, %arg1 : i32, i32
  }
}

module attributes {stable_mosaic.version = 11 : i64} {
  func.func @_fused_matmul_kernel(%arg0: i32, %arg1: i32, %arg2: memref<16x2304xbf16, #tpu.memory_space<vmem>>, %arg3: memref<2304x128xbf16, #tpu.memory_space<vmem>>, %arg4: memref<1x128xf32, #tpu.memory_space<vmem>>, %arg5: memref<1x128xf32, #tpu.memory_space<vmem>>, %arg6: memref<16x128xbf16, #tpu.memory_space<vmem>>) attributes {dimension_semantics = [#tpu.dimension_semantics<parallel>, #tpu.dimension_semantics<parallel>], iteration_bounds = array<i64: 1, 3>, scalar_prefetch = 0 : i64, scratch_operands = 0 : i64, tpu.core_type = #tpu.core_type<tc>, window_params = [{transform_indices = @transform_0, window_bounds = array<i64: 16, 2304>}, {transform_indices = @transform_1, window_bounds = array<i64: 2304, 128>}, {transform_indices = @transform_2, window_bounds = array<i64: 1, 128>}, {transform_indices = @transform_3, window_bounds = array<i64: 1, 128>}, {transform_indices = @transform_4, window_bounds = array<i64: 16, 128>}]} {
    %c0 = arith.constant 0 : index
    %c0_0 = arith.constant 0 : index
    %0 = vector.load %arg2[%c0, %c0_0] : memref<16x2304xbf16, #tpu.memory_space<vmem>>, vector<16x2304xbf16>
    %c0_1 = arith.constant 0 : index
    %c0_2 = arith.constant 0 : index
    %1 = vector.load %arg3[%c0_1, %c0_2] : memref<2304x128xbf16, #tpu.memory_space<vmem>>, vector<2304x128xbf16>
    %cst = arith.constant dense<0.000000e+00> : vector<16x128xf32>
    %2 = tpu.matmul %0, %1, %cst {dimension_numbers = #tpu.dot_dimension_numbers<[1], [0], [0], [1], [0, 0, 1, 1], [], []>} : vector<16x2304xbf16>, vector<2304x128xbf16>, vector<16x128xf32> -> vector<16x128xf32>
    %c0_3 = arith.constant 0 : index
    %c0_4 = arith.constant 0 : index
    %3 = vector.load %arg4[%c0_3, %c0_4] : memref<1x128xf32, #tpu.memory_space<vmem>>, vector<1x128xf32>
    %4 = vector.broadcast %3 : vector<1x128xf32> to vector<16x128xf32>
    %5 = arith.mulf %2, %4 : vector<16x128xf32>
    %c0_5 = arith.constant 0 : index
    %c0_6 = arith.constant 0 : index
    %6 = vector.load %arg5[%c0_5, %c0_6] : memref<1x128xf32, #tpu.memory_space<vmem>>, vector<1x128xf32>
    %7 = vector.broadcast %6 : vector<1x128xf32> to vector<16x128xf32>
    %8 = arith.addf %5, %7 : vector<16x128xf32>
    %cst_7 = arith.constant 0.000000e+00 : f32
    %9 = vector.broadcast %cst_7 : f32 to vector<16x128xf32>
    %10 = arith.maximumf %8, %9 : vector<16x128xf32>
    %11 = arith.truncf %10 : vector<16x128xf32> to vector<16x128xbf16>
    %c0_8 = arith.constant 0 : index
    %c0_9 = arith.constant 0 : index
    %12 = vector.load %arg6[%c0_8, %c0_9] : memref<16x128xbf16, #tpu.memory_space<vmem>>, vector<16x128xbf16>
    tpu.vector_store %arg6[%c0_8, %c0_9], %11 {strides = array<i32>} : memref<16x128xbf16, #tpu.memory_space<vmem>>, vector<16x128xbf16>,
    return
  }
  func.func @transform_0(%arg0: i32, %arg1: i32) -> (i32, i32) {
    %c0_i32 = arith.constant 0 : i32
    %c0_i32_0 = arith.constant 0 : i32
    return %arg0, %c0_i32 : i32, i32
  }
  func.func @transform_1(%arg0: i32, %arg1: i32) -> (i32, i32) {
    %c0_i32 = arith.constant 0 : i32
    %c0_i32_0 = arith.constant 0 : i32
    return %c0_i32, %arg1 : i32, i32
  }
  func.func @transform_2(%arg0: i32, %arg1: i32) -> (i32, i32) {
    %c0_i32 = arith.constant 0 : i32
    %c0_i32_0 = arith.constant 0 : i32
    return %c0_i32, %arg1 : i32, i32
  }
  func.func @transform_3(%arg0: i32, %arg1: i32) -> (i32, i32) {
    %c0_i32 = arith.constant 0 : i32
    %c0_i32_0 = arith.constant 0 : i32
    return %c0_i32, %arg1 : i32, i32
  }
  func.func @transform_4(%arg0: i32, %arg1: i32) -> (i32, i32) {
    %c0_i32 = arith.constant 0 : i32
    return %arg0, %arg1 : i32, i32
  }
}

module attributes {stable_mosaic.version = 11 : i64} {
  func.func @_fused_matmul_kernel(%arg0: i32, %arg1: i32, %arg2: memref<16x384xbf16, #tpu.memory_space<vmem>>, %arg3: memref<384x384xbf16, #tpu.memory_space<vmem>>, %arg4: memref<16x384xf32, #tpu.memory_space<vmem>>, %arg5: memref<16x384xf32, #tpu.memory_space<vmem>>) attributes {dimension_semantics = [#tpu.dimension_semantics<parallel>, #tpu.dimension_semantics<parallel>], iteration_bounds = array<i64: 1, 2>, scalar_prefetch = 0 : i64, scratch_operands = 0 : i64, tpu.core_type = #tpu.core_type<tc>, window_params = [{transform_indices = @transform_0, window_bounds = array<i64: 16, 384>}, {transform_indices = @transform_1, window_bounds = array<i64: 384, 384>}, {transform_indices = @transform_2, window_bounds = array<i64: 16, 384>}, {transform_indices = @transform_3, window_bounds = array<i64: 16, 384>}]} {
    %c0 = arith.constant 0 : index
    %c0_0 = arith.constant 0 : index
    %0 = vector.load %arg2[%c0, %c0_0] : memref<16x384xbf16, #tpu.memory_space<vmem>>, vector<16x384xbf16>
    %c0_1 = arith.constant 0 : index
    %c0_2 = arith.constant 0 : index
    %1 = vector.load %arg3[%c0_1, %c0_2] : memref<384x384xbf16, #tpu.memory_space<vmem>>, vector<384x384xbf16>
    %cst = arith.constant dense<0.000000e+00> : vector<16x384xf32>
    %2 = tpu.matmul %0, %1, %cst {dimension_numbers = #tpu.dot_dimension_numbers<[1], [0], [0], [1], [0, 0, 1, 1], [], []>} : vector<16x384xbf16>, vector<384x384xbf16>, vector<16x384xf32> -> vector<16x384xf32>
    %c0_3 = arith.constant 0 : index
    %c0_4 = arith.constant 0 : index
    %3 = vector.load %arg4[%c0_3, %c0_4] : memref<16x384xf32, #tpu.memory_space<vmem>>, vector<16x384xf32>
    %4 = arith.addf %2, %3 : vector<16x384xf32>
    %c0_5 = arith.constant 0 : index
    %c0_6 = arith.constant 0 : index
    %5 = vector.load %arg5[%c0_5, %c0_6] : memref<16x384xf32, #tpu.memory_space<vmem>>, vector<16x384xf32>
    tpu.vector_store %arg5[%c0_5, %c0_6], %4 {strides = array<i32>} : memref<16x384xf32, #tpu.memory_space<vmem>>, vector<16x384xf32>,
    return
  }
  func.func @transform_0(%arg0: i32, %arg1: i32) -> (i32, i32) {
    %c0_i32 = arith.constant 0 : i32
    %c0_i32_0 = arith.constant 0 : i32
    return %arg0, %c0_i32 : i32, i32
  }
  func.func @transform_1(%arg0: i32, %arg1: i32) -> (i32, i32) {
    %c0_i32 = arith.constant 0 : i32
    %c0_i32_0 = arith.constant 0 : i32
    return %c0_i32, %arg1 : i32, i32
  }
  func.func @transform_2(%arg0: i32, %arg1: i32) -> (i32, i32) {
    %c0_i32 = arith.constant 0 : i32
    return %arg0, %arg1 : i32, i32
  }
  func.func @transform_3(%arg0: i32, %arg1: i32) -> (i32, i32) {
    %c0_i32 = arith.constant 0 : i32
    return %arg0, %arg1 : i32, i32
  }
}

</mosaic_0001>

<llo_original>
// kernel: embedding_layer_forward.5
$region0: #{embedding_layer_forward.5}
  #allocation0 [shape = 'u32[]', space=smem, size = 0x4, offset = 0x4, fixed_abs, tag = 'smem constant byte address 0x4 - core index']
  #allocation1 [shape = 'u32[72,128]{1,0:T(1,128)}', space=vmem, size = 0x9000, scoped, tag = 'internal scratch']
  %s0 = inlined_call_operand.vmem [shape: bf16[512,27], index: 0, kind: input, shape index: {}]
  %s1 = inlined_call_operand.vmem [shape: bf16[27,128], index: 1, kind: input, shape index: {}]
  %s2 = inlined_call_operand.vmem [shape: f32[1,128], index: 2, kind: input, shape index: {}]
  %s3 = inlined_call_operand.vmem [shape: f32[1,128], index: 3, kind: input, shape index: {}]
  %s4 = inlined_call_operand.vmem [shape: bf16[512,128], index: 4, kind: output, shape index: {}]
  %s5 = sld [smem:[#allocation0]]
  $region49: #{embedding_layer_forward.5} parent=0
    _
  %s7 = ssub.s32 1, %s5
  %s8 = scalar_select 0, %s7, %s5
  loop: start=0, step=1, limit=4
  $region2: #{embedding_layer_forward.5} parent=0 // loop_pre_header
    _
  $region3: #{embedding_layer_forward.5} parent=0 // loop_header
    %s10 = sphi 0, %s14
    %p11 = scmp.ge.s32.totalorder %s10, 4
    %s17 = sphi 0, %s29
    %s18 = sphi 0, %s25
    %s19 = sphi 0, %s17
    %s20 = sphi 0, %s18
    %s21 = sphi 0, %s19
    %s22 = sphi 0, %s20
    %s32 = sphi 0, %s34
    %s35 = sphi 0, %s32
    %s36 = sphi 0, %s35
    %s52 = sphi 0, %s36
    %s58 = sphi 0, %s60
    %s61 = sphi 0, %s58
    %s62 = sphi 0, %s61
    %s78 = sphi 0, %s62
    %s84 = sphi 0, %s86
    %s87 = sphi 0, %s84
    %s88 = sphi 0, %s87
    %s104 = sphi 0, %s88
    %s110 = sphi 0, %s112
    %s113 = sphi 0, %s110
    %s114 = sphi 0, %s113
    %s130 = sphi 0, %s114
    %s138 = sphi 0, %s140
    %s141 = sphi 0, %s138
    %s142 = sphi 0, %s141
    %s158 = sphi 0, %s142
  $region4: #{embedding_layer_forward.5} parent=0 // loop_header_branch
    %13 = sbr.rel (%p11) target = $region8
  $region5: #{embedding_layer_forward.5} parent=0 // loop_body
    %s15 = ssub.s32 %s10, 1
    %s16 = ssub.s32 %s10, 2
    %s23 = sadd.s32 1, %s18
    %p24 = scmp.ge.s32.totalorder %s23, 1
    %s25 = scalar_select %p24, 0, %s23
    %s26 = sadd.s32 1, %s17
    %s27 = scalar_select %p24, %s26, %s17
    %p28 = scmp.ge.s32.totalorder %s27, 2
    %s29 = scalar_select %p28, 0, %s27
    %s30 = ssub.s32 %s17, %s29
    %p31 = scmp.eq.s32.totalorder %s30, 0
    %s33 = sadd.s32 %s32, 1
    %s34 = scalar_select %p31, %s32, %s33
    %p37 = pneg %p31
    %p38 = scmp.eq.s32.totalorder %s10, 1
    %p39 = por %p37, %p38
    %p40 = scmp.ne.s32.totalorder %s32, %s35
    %p41 = scmp.eq.s32.totalorder %s10, 0
    %p42 = por %p40, %p41
    %p43 = scmp.ne.s32.totalorder %s32, %s35
    %p44 = scmp.eq.s32.totalorder %s15, 1
    %p45 = por %p43, %p44
    %p46 = scmp.ne.s32.totalorder %s35, %s36
    %p47 = scmp.eq.s32.totalorder %s15, 0
    %p48 = por %p46, %p47
    %p49 = scmp.ne.s32.totalorder %s35, %s36
    %p50 = scmp.eq.s32.totalorder %s16, 1
    %p51 = por %p49, %p50
    %p53 = scmp.ne.s32.totalorder %s36, %s52
    %p54 = scmp.eq.s32.totalorder %s16, 0
    %p55 = por %p53, %p54
    %s56 = ssub.s32 %s18, %s25
    %p57 = scmp.eq.s32.totalorder %s56, 0
    %s59 = sadd.s32 %s58, 1
    %s60 = scalar_select %p57, %s58, %s59
    %p63 = pneg %p57
    %p64 = scmp.eq.s32.totalorder %s10, 1
    %p65 = por %p63, %p64
    %p66 = scmp.ne.s32.totalorder %s58, %s61
    %p67 = scmp.eq.s32.totalorder %s10, 0
    %p68 = por %p66, %p67
    %p69 = scmp.ne.s32.totalorder %s58, %s61
    %p70 = scmp.eq.s32.totalorder %s15, 1
    %p71 = por %p69, %p70
    %p72 = scmp.ne.s32.totalorder %s61, %s62
    %p73 = scmp.eq.s32.totalorder %s15, 0
    %p74 = por %p72, %p73
    %p75 = scmp.ne.s32.totalorder %s61, %s62
    %p76 = scmp.eq.s32.totalorder %s16, 1
    %p77 = por %p75, %p76
    %p79 = scmp.ne.s32.totalorder %s62, %s78
    %p80 = scmp.eq.s32.totalorder %s16, 0
    %p81 = por %p79, %p80
    %s82 = ssub.s32 %s18, %s25
    %p83 = scmp.eq.s32.totalorder %s82, 0
    %s85 = sadd.s32 %s84, 1
    %s86 = scalar_select %p83, %s84, %s85
    %p89 = pneg %p83
    %p90 = scmp.eq.s32.totalorder %s10, 1
    %p91 = por %p89, %p90
    %p92 = scmp.ne.s32.totalorder %s84, %s87
    %p93 = scmp.eq.s32.totalorder %s10, 0
    %p94 = por %p92, %p93
    %p95 = scmp.ne.s32.totalorder %s84, %s87
    %p96 = scmp.eq.s32.totalorder %s15, 1
    %p97 = por %p95, %p96
    %p98 = scmp.ne.s32.totalorder %s87, %s88
    %p99 = scmp.eq.s32.totalorder %s15, 0
    %p100 = por %p98, %p99
    %p101 = scmp.ne.s32.totalorder %s87, %s88
    %p102 = scmp.eq.s32.totalorder %s16, 1
    %p103 = por %p101, %p102
    %p105 = scmp.ne.s32.totalorder %s88, %s104
    %p106 = scmp.eq.s32.totalorder %s16, 0
    %p107 = por %p105, %p106
    %s108 = ssub.s32 %s18, %s25
    %p109 = scmp.eq.s32.totalorder %s108, 0
    %s111 = sadd.s32 %s110, 1
    %s112 = scalar_select %p109, %s110, %s111
    %p115 = pneg %p109
    %p116 = scmp.eq.s32.totalorder %s10, 1
    %p117 = por %p115, %p116
    %p118 = scmp.ne.s32.totalorder %s110, %s113
    %p119 = scmp.eq.s32.totalorder %s10, 0
    %p120 = por %p118, %p119
    %p121 = scmp.ne.s32.totalorder %s110, %s113
    %p122 = scmp.eq.s32.totalorder %s15, 1
    %p123 = por %p121, %p122
    %p124 = scmp.ne.s32.totalorder %s113, %s114
    %p125 = scmp.eq.s32.totalorder %s15, 0
    %p126 = por %p124, %p125
    %p127 = scmp.ne.s32.totalorder %s113, %s114
    %p128 = scmp.eq.s32.totalorder %s16, 1
    %p129 = por %p127, %p128
    %p131 = scmp.ne.s32.totalorder %s114, %s130
    %p132 = scmp.eq.s32.totalorder %s16, 0
    %p133 = por %p131, %p132
    %s134 = ssub.s32 %s17, %s29
    %s135 = ssub.s32 %s18, %s25
    %s136 = sor.u32 %s134, %s135
    %p137 = scmp.eq.s32.totalorder %s136, 0
    %s139 = sadd.s32 %s138, 1
    %s140 = scalar_select %p137, %s138, %s139
    %p143 = pneg %p137
    %p144 = scmp.eq.s32.totalorder %s10, 1
    %p145 = por %p143, %p144
    %p146 = scmp.ne.s32.totalorder %s138, %s141
    %p147 = scmp.eq.s32.totalorder %s10, 0
    %p148 = por %p146, %p147
    %p149 = scmp.ne.s32.totalorder %s138, %s141
    %p150 = scmp.eq.s32.totalorder %s15, 1
    %p151 = por %p149, %p150
    %p152 = scmp.ne.s32.totalorder %s141, %s142
    %p153 = scmp.eq.s32.totalorder %s15, 0
    %p154 = por %p152, %p153
    %p155 = scmp.ne.s32.totalorder %s141, %s142
    %p156 = scmp.eq.s32.totalorder %s16, 1
    %p157 = por %p155, %p156
    %p159 = scmp.ne.s32.totalorder %s142, %s158
    %p160 = scmp.eq.s32.totalorder %s16, 0
    %p161 = por %p159, %p160
    %p162 = scmp.le.s32.totalorder 1, %s10
    %p163 = scmp.lt.s32.totalorder %s10, 3
    %p164 = pnand %p162, %p163
    %p165 = pneg %p164
    // Predicated region
    $region9: #{embedding_layer_forward.5} parent=5 // pred_check
      _
    $region10: #{embedding_layer_forward.5} parent=5 // pred_check_branch
      %167 = sbr.rel (%p164) target = $region12
    $region11: #{embedding_layer_forward.5} parent=5 // pred_region
      %s168 = ssub.s32 %s10, 1
      // Predicated region
      $region13: #{embedding_layer_forward.5} parent=11 // pred_check
        %p169 = pneg %p74
      $region14: #{embedding_layer_forward.5} parent=11 // pred_check_branch
        %171 = sbr.rel (%p169) target = $region16
      $region15: #{embedding_layer_forward.5} parent=11 // pred_region
        %p172 = scmp.lt.s32.totalorder %s20, 0
        %s173 = scalar_select %p172, %s20, 0
        %s174 = smul.addr %s173, 4
        %s175 = scalar_lea.vmem %s1, %s174
      $region16: #{embedding_layer_forward.5} parent=11 // pred_fallthru
        _
      // Predicated region
      $region17: #{embedding_layer_forward.5} parent=11 // pred_check
        %p176 = pneg %p100
      $region18: #{embedding_layer_forward.5} parent=11 // pred_check_branch
        %178 = sbr.rel (%p176) target = $region20
      $region19: #{embedding_layer_forward.5} parent=11 // pred_region
        %p179 = scmp.lt.s32.totalorder %s20, 0
        %s180 = scalar_select %p179, %s20, 0
        %s181 = scalar_lea.vmem %s2, %s180
      $region20: #{embedding_layer_forward.5} parent=11 // pred_fallthru
        _
      // Predicated region
      $region21: #{embedding_layer_forward.5} parent=11 // pred_check
        %p182 = pneg %p126
      $region22: #{embedding_layer_forward.5} parent=11 // pred_check_branch
        %184 = sbr.rel (%p182) target = $region24
      $region23: #{embedding_layer_forward.5} parent=11 // pred_region
        %p185 = scmp.lt.s32.totalorder %s20, 0
        %s186 = scalar_select %p185, %s20, 0
        %s187 = scalar_lea.vmem %s3, %s186
      $region24: #{embedding_layer_forward.5} parent=11 // pred_fallthru
        _
    $region12: #{embedding_layer_forward.5} parent=5 // pred_fallthru
      _
    %p188 = scmp.lt.s32.totalorder %s10, 2
    // Predicated region
    $region25: #{embedding_layer_forward.5} parent=5 // pred_check
      %p189 = pneg %p188
    $region26: #{embedding_layer_forward.5} parent=5 // pred_check_branch
      %191 = sbr.rel (%p189) target = $region28
    $region27: #{embedding_layer_forward.5} parent=5 // pred_region
      // Predicated region
      $region29: #{embedding_layer_forward.5} parent=27 // pred_check
        %p192 = pneg %p42
      $region30: #{embedding_layer_forward.5} parent=27 // pred_check_branch
        %194 = sbr.rel (%p192) target = $region32
      $region31: #{embedding_layer_forward.5} parent=27 // pred_region
        %s195 = smul.u32 32, %s17
        %p196 = scmp.lt.s32.totalorder %s195, 63
        %s197 = scalar_select %p196, %s195, 63
        %s198 = smul.addr %s197, 4
        %s199 = scalar_lea.vmem %s0, %s198
        %s200 = smul.u32 32, %s17
      $region32: #{embedding_layer_forward.5} parent=27 // pred_fallthru
        _
    $region28: #{embedding_layer_forward.5} parent=5 // pred_fallthru
      _
    %p201 = scmp.le.s32.totalorder 1, %s10
    %p202 = scmp.lt.s32.totalorder %s10, 3
    %p203 = pnand %p201, %p202
    %p204 = pneg %p203
    // Predicated region
    $region33: #{embedding_layer_forward.5} parent=5 // pred_check
      _
    $region34: #{embedding_layer_forward.5} parent=5 // pred_check_branch
      %206 = sbr.rel (%p203) target = $region36
    $region35: #{embedding_layer_forward.5} parent=5 // pred_region
      %s207 = ssub.s32 %s10, 1
      %s208 = smul.u32 32, %s19
      %p209 = scmp.lt.s32.totalorder %s208, 63
      %s210 = scalar_select %p209, %s208, 63
      %s211 = smul.addr %s210, 4
      %s212 = scalar_lea.vmem %s0, %s211
      %p213 = pneg %p48
      %p214 = pneg %p45
      %p215 = scmp.lt.s32.totalorder %s20, 0
      %s216 = scalar_select %p215, %s20, 0
      %s217 = smul.addr %s216, 4
      %s218 = scalar_lea.vmem %s1, %s217
      %p219 = pneg %p74
      %p220 = pneg %p71
      %p221 = scmp.lt.s32.totalorder %s20, 0
      %s222 = scalar_select %p221, %s20, 0
      %s223 = scalar_lea.vmem %s2, %s222
      %p224 = pneg %p100
      %p225 = pneg %p97
      %p226 = scmp.lt.s32.totalorder %s20, 0
      %s227 = scalar_select %p226, %s20, 0
      %s228 = scalar_lea.vmem %s3, %s227
      %p229 = pneg %p126
      %p230 = pneg %p123
      %p231 = pneg %p154
      %p232 = pneg %p151
      %s233 = smul.u32 32, %s19
      %p234 = scmp.lt.s32.totalorder %s233, 63
      %s235 = scalar_select %p234, %s233, 63
      %p236 = scmp.lt.s32.totalorder %s20, 0
      %s237 = scalar_select %p236, %s20, 0
      %s238 = sadd.s32 %s237, %s235
      %s239 = smul.addr %s238, 4
      %s240 = scalar_lea.vmem %s4, %s239
      %s241 = smul.u32 32, %s19
      %p242 = scmp.lt.s32.totalorder %s241, 63
      %s243 = scalar_select %p242, %s241, 63
      %s244 = smul.addr %s243, 4
      %s245 = scalar_lea.vmem %s0, %s244
      %s246 = smul.u32 32, %s19
      %p247 = scmp.lt.s32.totalorder %s20, 0
      %s248 = scalar_select %p247, %s20, 0
      %s249 = smul.addr %s248, 4
      %s250 = scalar_lea.vmem %s1, %s249
      %p251 = scmp.lt.s32.totalorder %s20, 0
      %s252 = scalar_select %p251, %s20, 0
      %s253 = scalar_lea.vmem %s2, %s252
      %p254 = scmp.lt.s32.totalorder %s20, 0
      %s255 = scalar_select %p254, %s20, 0
      %s256 = scalar_lea.vmem %s3, %s255
      %s257 = smul.u32 32, %s19
      %p258 = scmp.lt.s32.totalorder %s257, 63
      %s259 = scalar_select %p258, %s257, 63
      %p260 = scmp.lt.s32.totalorder %s20, 0
      %s261 = scalar_select %p260, %s20, 0
      %s262 = sadd.s32 %s261, %s259
      %s263 = smul.addr %s262, 4
      %s264 = scalar_lea.vmem %s4, %s263
      %s265 = smul.u32 32, %s19
      %v267 = vld [vmem:[%s245] sm:$0xf]
      %v268 = vld [vmem:[%s245 + $0x4] sm:$0xf]
      %v269 = vld [vmem:[%s245 + $0x8] sm:$0xf]
      %v270 = vld [vmem:[%s245 + $0xc] sm:$0xf]
      %v271 = vld [vmem:[%s245 + $0x10] sm:$0xf]
      %v272 = vld [vmem:[%s245 + $0x14] sm:$0xf]
      %v273 = vld [vmem:[%s245 + $0x18] sm:$0xf]
      %v274 = vld [vmem:[%s245 + $0x1c] sm:$0xf]
      %v275 = vld [vmem:[%s245 + $0x20] sm:$0xf]
      %v276 = vld [vmem:[%s245 + $0x24] sm:$0xf]
      %v277 = vld [vmem:[%s245 + $0x28] sm:$0xf]
      %v278 = vld [vmem:[%s245 + $0x2c] sm:$0xf]
      %v279 = vld [vmem:[%s245 + $0x30] sm:$0xf]
      %v280 = vld [vmem:[%s245 + $0x34] sm:$0xf]
      %v281 = vld [vmem:[%s245 + $0x38] sm:$0xf]
      %v282 = vld [vmem:[%s245 + $0x3c] sm:$0xf]
      %v283 = vld [vmem:[%s245 + $0x40] sm:$0xf]
      %v284 = vld [vmem:[%s245 + $0x44] sm:$0xf]
      %v285 = vld [vmem:[%s245 + $0x48] sm:$0xf]
      %v286 = vld [vmem:[%s245 + $0x4c] sm:$0xf]
      %v287 = vld [vmem:[%s245 + $0x50] sm:$0xf]
      %v288 = vld [vmem:[%s245 + $0x54] sm:$0xf]
      %v289 = vld [vmem:[%s245 + $0x58] sm:$0xf]
      %v290 = vld [vmem:[%s245 + $0x5c] sm:$0xf]
      %v291 = vld [vmem:[%s245 + $0x60] sm:$0xf]
      %v292 = vld [vmem:[%s245 + $0x64] sm:$0xf]
      %v293 = vld [vmem:[%s245 + $0x68] sm:$0xf]
      %v294 = vld [vmem:[%s245 + $0x6c] sm:$0xf]
      %v295 = vld [vmem:[%s245 + $0x70] sm:$0xf]
      %v296 = vld [vmem:[%s245 + $0x74] sm:$0xf]
      %v297 = vld [vmem:[%s245 + $0x78] sm:$0xf]
      %v298 = vld [vmem:[%s245 + $0x7c] sm:$0xf]
      %v299 = vld [vmem:[%s250] sm:$0xf]
      %v300 = vld [vmem:[%s250 + $0x4] sm:$0xf]
      %v301 = vld [vmem:[%s250 + $0x8] sm:$0xf]
      %v302 = vld [vmem:[%s250 + $0xc] sm:$0x3]
      %v335 = vunpack.c.l.b16 %v267
      %v336 = vunpack.c.l.b16 %v268
      %v337 = vunpack.c.l.b16 %v269
      %v338 = vunpack.c.l.b16 %v270
      %v339 = vunpack.c.l.b16 %v271
      %v340 = vunpack.c.l.b16 %v272
      %v341 = vunpack.c.l.b16 %v273
      %v342 = vunpack.c.l.b16 %v274
      %v343 = vunpack.c.l.b16 %v275
      %v344 = vunpack.c.l.b16 %v276
      %v345 = vunpack.c.l.b16 %v277
      %v346 = vunpack.c.l.b16 %v278
      %v347 = vunpack.c.l.b16 %v279
      %v348 = vunpack.c.l.b16 %v280
      %v349 = vunpack.c.l.b16 %v281
      %v350 = vunpack.c.l.b16 %v282
      %v351 = vunpack.c.l.b16 %v283
      %v352 = vunpack.c.l.b16 %v284
      %v353 = vunpack.c.l.b16 %v285
      %v354 = vunpack.c.l.b16 %v286
      %v355 = vunpack.c.l.b16 %v287
      %v356 = vunpack.c.l.b16 %v288
      %v357 = vunpack.c.l.b16 %v289
      %v358 = vunpack.c.l.b16 %v290
      %v359 = vunpack.c.l.b16 %v291
      %v360 = vunpack.c.l.b16 %v292
      %v361 = vunpack.c.l.b16 %v293
      %v362 = vunpack.c.l.b16 %v294
      %v363 = vunpack.c.l.b16 %v295
      %v364 = vunpack.c.l.b16 %v296
      %v365 = vunpack.c.l.b16 %v297
      %v366 = vunpack.c.l.b16 %v298
      %v367 = vpack.c.b16 %v336, %v335
      %v368 = vpack.c.b16 %v338, %v337
      %v369 = vpack.c.b16 %v340, %v339
      %v370 = vpack.c.b16 %v342, %v341
      %v371 = vpack.c.b16 %v344, %v343
      %v372 = vpack.c.b16 %v346, %v345
      %v373 = vpack.c.b16 %v348, %v347
      %v374 = vpack.c.b16 %v350, %v349
      %v375 = vpack.c.b16 %v352, %v351
      %v376 = vpack.c.b16 %v354, %v353
      %v377 = vpack.c.b16 %v356, %v355
      %v378 = vpack.c.b16 %v358, %v357
      %v379 = vpack.c.b16 %v360, %v359
      %v380 = vpack.c.b16 %v362, %v361
      %v381 = vpack.c.b16 %v364, %v363
      %v382 = vpack.c.b16 %v366, %v365
      %v387 = vunpack.c.l.b16 %v299
      %v388 = vunpack.c.l.b16 %v300
      %v389 = vunpack.c.l.b16 %v301
      %v390 = vunpack.c.l.b16 %v302
      %v391 = vpack.c.b16 %v388, %v387
      %v392 = vpack.c.b16 %v390, %v389
      %vm394 = vcmask 220160
      %v396 = vsel %vm394, %v367, 0
      %v399 = vsel %vm394, %v368, 0
      %v402 = vsel %vm394, %v369, 0
      %v405 = vsel %vm394, %v370, 0
      %v408 = vsel %vm394, %v371, 0
      %v411 = vsel %vm394, %v372, 0
      %v414 = vsel %vm394, %v373, 0
      %v417 = vsel %vm394, %v374, 0
      %v420 = vsel %vm394, %v375, 0
      %v423 = vsel %vm394, %v376, 0
      %v426 = vsel %vm394, %v377, 0
      %v429 = vsel %vm394, %v378, 0
      %v432 = vsel %vm394, %v379, 0
      %v435 = vsel %vm394, %v380, 0
      %v438 = vsel %vm394, %v381, 0
      %v441 = vsel %vm394, %v382, 0
      %vm443 = vcmask 1044480
      %vm444 = vcmask 1045504
      %v445 = vsel %vm443, 4294967295, 65535
      %v446 = vsel %vm444, %v445, 0
      %v448 = vand.u32 %v392, %v446
      %450 = vmatpush.bf16.msra.mxu0 0
      %451 = vmatpush.bf16.msra.mxu0 0
      %452 = vmatpush.bf16.msra.mxu0 0
      %453 = vmatpush.bf16.msra.mxu0 0
      %454 = vmatpush.bf16.msra.mxu0 0
      %455 = vmatpush.bf16.msra.mxu0 0
      %456 = vmatpush.bf16.msra.mxu0 %v448
      %457 = vmatpush.bf16.msra.mxu0 %v391
      %458 = vmatmul.bf16.gmra.mxu0 %v396
      %v459 = vpop.f32.mrf.mxu0
      %v460 = vadd.f32 0.0, %v459
      %v461 = vpop.f32.mrf.mxu0
      %v462 = vadd.f32 0.0, %v461
      %463 = vmatmul.bf16.gmra.mxu0 %v399
      %v464 = vpop.f32.mrf.mxu0
      %v465 = vadd.f32 0.0, %v464
      %v466 = vpop.f32.mrf.mxu0
      %v467 = vadd.f32 0.0, %v466
      %468 = vmatmul.bf16.gmra.mxu0 %v402
      %v469 = vpop.f32.mrf.mxu0
      %v470 = vadd.f32 0.0, %v469
      %v471 = vpop.f32.mrf.mxu0
      %v472 = vadd.f32 0.0, %v471
      %473 = vmatmul.bf16.gmra.mxu0 %v405
      %v474 = vpop.f32.mrf.mxu0
      %v475 = vadd.f32 0.0, %v474
      %v476 = vpop.f32.mrf.mxu0
      %v477 = vadd.f32 0.0, %v476
      %478 = vmatmul.bf16.gmra.mxu0 %v408
      %v479 = vpop.f32.mrf.mxu0
      %v480 = vadd.f32 0.0, %v479
      %v481 = vpop.f32.mrf.mxu0
      %v482 = vadd.f32 0.0, %v481
      %483 = vmatmul.bf16.gmra.mxu0 %v411
      %v484 = vpop.f32.mrf.mxu0
      %v485 = vadd.f32 0.0, %v484
      %v486 = vpop.f32.mrf.mxu0
      %v487 = vadd.f32 0.0, %v486
      %488 = vmatmul.bf16.gmra.mxu0 %v414
      %v489 = vpop.f32.mrf.mxu0
      %v490 = vadd.f32 0.0, %v489
      %v491 = vpop.f32.mrf.mxu0
      %v492 = vadd.f32 0.0, %v491
      %493 = vmatmul.bf16.gmra.mxu0 %v417
      %v494 = vpop.f32.mrf.mxu0
      %v495 = vadd.f32 0.0, %v494
      %v496 = vpop.f32.mrf.mxu0
      %v497 = vadd.f32 0.0, %v496
      %498 = vmatmul.bf16.gmra.mxu0 %v420
      %v499 = vpop.f32.mrf.mxu0
      %v500 = vadd.f32 0.0, %v499
      %v501 = vpop.f32.mrf.mxu0
      %v502 = vadd.f32 0.0, %v501
      %503 = vmatmul.bf16.gmra.mxu0 %v423
      %v504 = vpop.f32.mrf.mxu0
      %v505 = vadd.f32 0.0, %v504
      %v506 = vpop.f32.mrf.mxu0
      %v507 = vadd.f32 0.0, %v506
      %508 = vmatmul.bf16.gmra.mxu0 %v426
      %v509 = vpop.f32.mrf.mxu0
      %v510 = vadd.f32 0.0, %v509
      %v511 = vpop.f32.mrf.mxu0
      %v512 = vadd.f32 0.0, %v511
      %513 = vmatmul.bf16.gmra.mxu0 %v429
      %v514 = vpop.f32.mrf.mxu0
      %v515 = vadd.f32 0.0, %v514
      %v516 = vpop.f32.mrf.mxu0
      %v517 = vadd.f32 0.0, %v516
      %518 = vmatmul.bf16.gmra.mxu0 %v432
      %v519 = vpop.f32.mrf.mxu0
      %v520 = vadd.f32 0.0, %v519
      %v521 = vpop.f32.mrf.mxu0
      %v522 = vadd.f32 0.0, %v521
      %523 = vmatmul.bf16.gmra.mxu0 %v435
      %v524 = vpop.f32.mrf.mxu0
      %v525 = vadd.f32 0.0, %v524
      %v526 = vpop.f32.mrf.mxu0
      %v527 = vadd.f32 0.0, %v526
      %528 = vmatmul.bf16.gmra.mxu0 %v438
      %v529 = vpop.f32.mrf.mxu0
      %v530 = vadd.f32 0.0, %v529
      %v531 = vpop.f32.mrf.mxu0
      %v532 = vadd.f32 0.0, %v531
      %533 = vmatmul.bf16.gmra.mxu0 %v441
      %v534 = vpop.f32.mrf.mxu0
      %v535 = vadd.f32 0.0, %v534
      %v536 = vpop.f32.mrf.mxu0
      %v537 = vadd.f32 0.0, %v536
      %538 = vdwg.mxu0
      %v539 = vld [vmem:[%s253] sm:$0x1]
      %v541 = vperm.slane %v539, 0
      %v543 = vmul.f32 %v460, %v541
      %v544 = vmul.f32 %v462, %v541
      %v545 = vmul.f32 %v465, %v541
      %v546 = vmul.f32 %v467, %v541
      %v547 = vmul.f32 %v470, %v541
      %v548 = vmul.f32 %v472, %v541
      %v549 = vmul.f32 %v475, %v541
      %v550 = vmul.f32 %v477, %v541
      %v551 = vmul.f32 %v480, %v541
      %v552 = vmul.f32 %v482, %v541
      %v553 = vmul.f32 %v485, %v541
      %v554 = vmul.f32 %v487, %v541
      %v555 = vmul.f32 %v490, %v541
      %v556 = vmul.f32 %v492, %v541
      %v557 = vmul.f32 %v495, %v541
      %v558 = vmul.f32 %v497, %v541
      %v559 = vmul.f32 %v500, %v541
      %v560 = vmul.f32 %v502, %v541
      %v561 = vmul.f32 %v505, %v541
      %v562 = vmul.f32 %v507, %v541
      %v563 = vmul.f32 %v510, %v541
      %v564 = vmul.f32 %v512, %v541
      %v565 = vmul.f32 %v515, %v541
      %v566 = vmul.f32 %v517, %v541
      %v567 = vmul.f32 %v520, %v541
      %v568 = vmul.f32 %v522, %v541
      %v569 = vmul.f32 %v525, %v541
      %v570 = vmul.f32 %v527, %v541
      %v571 = vmul.f32 %v530, %v541
      %v572 = vmul.f32 %v532, %v541
      %v573 = vmul.f32 %v535, %v541
      %v574 = vmul.f32 %v537, %v541
      %v575 = vld [vmem:[%s256] sm:$0x1]
      %v577 = vperm.slane %v575, 0
      %v579 = vadd.f32 %v543, %v577
      %v580 = vadd.f32 %v544, %v577
      %v581 = vadd.f32 %v545, %v577
      %v582 = vadd.f32 %v546, %v577
      %v583 = vadd.f32 %v547, %v577
      %v584 = vadd.f32 %v548, %v577
      %v585 = vadd.f32 %v549, %v577
      %v586 = vadd.f32 %v550, %v577
      %v587 = vadd.f32 %v551, %v577
      %v588 = vadd.f32 %v552, %v577
      %v589 = vadd.f32 %v553, %v577
      %v590 = vadd.f32 %v554, %v577
      %v591 = vadd.f32 %v555, %v577
      %v592 = vadd.f32 %v556, %v577
      %v593 = vadd.f32 %v557, %v577
      %v594 = vadd.f32 %v558, %v577
      %v595 = vadd.f32 %v559, %v577
      %v596 = vadd.f32 %v560, %v577
      %v597 = vadd.f32 %v561, %v577
      %v598 = vadd.f32 %v562, %v577
      %v599 = vadd.f32 %v563, %v577
      %v600 = vadd.f32 %v564, %v577
      %v601 = vadd.f32 %v565, %v577
      %v602 = vadd.f32 %v566, %v577
      %v603 = vadd.f32 %v567, %v577
      %v604 = vadd.f32 %v568, %v577
      %v605 = vadd.f32 %v569, %v577
      %v606 = vadd.f32 %v570, %v577
      %v607 = vadd.f32 %v571, %v577
      %v608 = vadd.f32 %v572, %v577
      %v609 = vadd.f32 %v573, %v577
      %v610 = vadd.f32 %v574, %v577
      %v611 = vmax.f32 %v579, 0.0
      %v612 = vmax.f32 %v580, 0.0
      %v613 = vmax.f32 %v581, 0.0
      %v614 = vmax.f32 %v582, 0.0
      %v615 = vmax.f32 %v583, 0.0
      %v616 = vmax.f32 %v584, 0.0
      %v617 = vmax.f32 %v585, 0.0
      %v618 = vmax.f32 %v586, 0.0
      %v619 = vmax.f32 %v587, 0.0
      %v620 = vmax.f32 %v588, 0.0
      %v621 = vmax.f32 %v589, 0.0
      %v622 = vmax.f32 %v590, 0.0
      %v623 = vmax.f32 %v591, 0.0
      %v624 = vmax.f32 %v592, 0.0
      %v625 = vmax.f32 %v593, 0.0
      %v626 = vmax.f32 %v594, 0.0
      %v627 = vmax.f32 %v595, 0.0
      %v628 = vmax.f32 %v596, 0.0
      %v629 = vmax.f32 %v597, 0.0
      %v630 = vmax.f32 %v598, 0.0
      %v631 = vmax.f32 %v599, 0.0
      %v632 = vmax.f32 %v600, 0.0
      %v633 = vmax.f32 %v601, 0.0
      %v634 = vmax.f32 %v602, 0.0
      %v635 = vmax.f32 %v603, 0.0
      %v636 = vmax.f32 %v604, 0.0
      %v637 = vmax.f32 %v605, 0.0
      %v638 = vmax.f32 %v606, 0.0
      %v639 = vmax.f32 %v607, 0.0
      %v640 = vmax.f32 %v608, 0.0
      %v641 = vmax.f32 %v609, 0.0
      %v642 = vmax.f32 %v610, 0.0
      %v643 = vpack.c.bf16 %v611, %v611
      %v644 = vpack.c.bf16 %v612, %v612
      %v645 = vpack.c.bf16 %v613, %v613
      %v646 = vpack.c.bf16 %v614, %v614
      %v647 = vpack.c.bf16 %v615, %v615
      %v648 = vpack.c.bf16 %v616, %v616
      %v649 = vpack.c.bf16 %v617, %v617
      %v650 = vpack.c.bf16 %v618, %v618
      %v651 = vpack.c.bf16 %v619, %v619
      %v652 = vpack.c.bf16 %v620, %v620
      %v653 = vpack.c.bf16 %v621, %v621
      %v654 = vpack.c.bf16 %v622, %v622
      %v655 = vpack.c.bf16 %v623, %v623
      %v656 = vpack.c.bf16 %v624, %v624
      %v657 = vpack.c.bf16 %v625, %v625
      %v658 = vpack.c.bf16 %v626, %v626
      %v659 = vpack.c.bf16 %v627, %v627
      %v660 = vpack.c.bf16 %v628, %v628
      %v661 = vpack.c.bf16 %v629, %v629
      %v662 = vpack.c.bf16 %v630, %v630
      %v663 = vpack.c.bf16 %v631, %v631
      %v664 = vpack.c.bf16 %v632, %v632
      %v665 = vpack.c.bf16 %v633, %v633
      %v666 = vpack.c.bf16 %v634, %v634
      %v667 = vpack.c.bf16 %v635, %v635
      %v668 = vpack.c.bf16 %v636, %v636
      %v669 = vpack.c.bf16 %v637, %v637
      %v670 = vpack.c.bf16 %v638, %v638
      %v671 = vpack.c.bf16 %v639, %v639
      %v672 = vpack.c.bf16 %v640, %v640
      %v673 = vpack.c.bf16 %v641, %v641
      %v674 = vpack.c.bf16 %v642, %v642
      %675 = vst [vmem:[%s264] sm:$0xf] %v643
      %676 = vst [vmem:[%s264 + $0x4] sm:$0xf] %v644
      %677 = vst [vmem:[%s264 + $0x8] sm:$0xf] %v645
      %678 = vst [vmem:[%s264 + $0xc] sm:$0xf] %v646
      %679 = vst [vmem:[%s264 + $0x10] sm:$0xf] %v647
      %680 = vst [vmem:[%s264 + $0x14] sm:$0xf] %v648
      %681 = vst [vmem:[%s264 + $0x18] sm:$0xf] %v649
      %682 = vst [vmem:[%s264 + $0x1c] sm:$0xf] %v650
      %683 = vst [vmem:[%s264 + $0x20] sm:$0xf] %v651
      %684 = vst [vmem:[%s264 + $0x24] sm:$0xf] %v652
      %685 = vst [vmem:[%s264 + $0x28] sm:$0xf] %v653
      %686 = vst [vmem:[%s264 + $0x2c] sm:$0xf] %v654
      %687 = vst [vmem:[%s264 + $0x30] sm:$0xf] %v655
      %688 = vst [vmem:[%s264 + $0x34] sm:$0xf] %v656
      %689 = vst [vmem:[%s264 + $0x38] sm:$0xf] %v657
      %690 = vst [vmem:[%s264 + $0x3c] sm:$0xf] %v658
      %691 = vst [vmem:[%s264 + $0x40] sm:$0xf] %v659
      %692 = vst [vmem:[%s264 + $0x44] sm:$0xf] %v660
      %693 = vst [vmem:[%s264 + $0x48] sm:$0xf] %v661
      %694 = vst [vmem:[%s264 + $0x4c] sm:$0xf] %v662
      %695 = vst [vmem:[%s264 + $0x50] sm:$0xf] %v663
      %696 = vst [vmem:[%s264 + $0x54] sm:$0xf] %v664
      %697 = vst [vmem:[%s264 + $0x58] sm:$0xf] %v665
      %698 = vst [vmem:[%s264 + $0x5c] sm:$0xf] %v666
      %699 = vst [vmem:[%s264 + $0x60] sm:$0xf] %v667
      %700 = vst [vmem:[%s264 + $0x64] sm:$0xf] %v668
      %701 = vst [vmem:[%s264 + $0x68] sm:$0xf] %v669
      %702 = vst [vmem:[%s264 + $0x6c] sm:$0xf] %v670
      %703 = vst [vmem:[%s264 + $0x70] sm:$0xf] %v671
      %704 = vst [vmem:[%s264 + $0x74] sm:$0xf] %v672
      %705 = vst [vmem:[%s264 + $0x78] sm:$0xf] %v673
      %706 = vst [vmem:[%s264 + $0x7c] sm:$0xf] %v674
      %s707 = smul.u32 32, %s19
      %p708 = scmp.lt.s32.totalorder %s707, 63
      %s709 = scalar_select %p708, %s707, 63
      %p710 = scmp.lt.s32.totalorder %s20, 0
      %s711 = scalar_select %p710, %s20, 0
      %s712 = sadd.s32 %s711, %s709
      %s713 = smul.addr %s712, 4
      %s714 = scalar_lea.vmem %s4, %s713
      // Predicated region
      $region37: #{embedding_layer_forward.5} parent=35 // pred_check
        %p715 = pneg %p151
      $region38: #{embedding_layer_forward.5} parent=35 // pred_check_branch
        %717 = sbr.rel (%p715) target = $region40
      $region39: #{embedding_layer_forward.5} parent=35 // pred_region
        %s718 = smul.u32 32, %s19
      $region40: #{embedding_layer_forward.5} parent=35 // pred_fallthru
        _
    $region36: #{embedding_layer_forward.5} parent=5 // pred_fallthru
      _
    %p719 = scmp.le.s32.totalorder 2, %s10
    // Predicated region
    $region41: #{embedding_layer_forward.5} parent=5 // pred_check
      %p720 = pneg %p719
    $region42: #{embedding_layer_forward.5} parent=5 // pred_check_branch
      %722 = sbr.rel (%p720) target = $region44
    $region43: #{embedding_layer_forward.5} parent=5 // pred_region
      %s723 = ssub.s32 %s10, 2
      // Predicated region
      $region45: #{embedding_layer_forward.5} parent=43 // pred_check
        %p724 = pneg %p157
      $region46: #{embedding_layer_forward.5} parent=43 // pred_check_branch
        %726 = sbr.rel (%p724) target = $region48
      $region47: #{embedding_layer_forward.5} parent=43 // pred_region
        %s727 = smul.u32 32, %s21
        %p728 = scmp.lt.s32.totalorder %s727, 63
        %s729 = scalar_select %p728, %s727, 63
        %p730 = scmp.lt.s32.totalorder %s22, 0
        %s731 = scalar_select %p730, %s22, 0
        %s732 = sadd.s32 %s731, %s729
        %s733 = smul.addr %s732, 4
        %s734 = scalar_lea.vmem %s4, %s733
      $region48: #{embedding_layer_forward.5} parent=43 // pred_fallthru
        _
    $region44: #{embedding_layer_forward.5} parent=5 // pred_fallthru
      _
  $region6: #{embedding_layer_forward.5} parent=0 // loop_footer
    %s14 = sadd.s32 1, %s10
  $region7: #{embedding_layer_forward.5} parent=0 // loop_footer_branch
    %9 = sbr.rel target = $region3
  $region8: #{embedding_layer_forward.5} parent=0 // loop_exit
    _

// kernel: embedding_layer_forward.6
$region0: #{embedding_layer_forward.6}
  #allocation0 [shape = 'u32[]', space=smem, size = 0x4, offset = 0x4, fixed_abs, tag = 'smem constant byte address 0x4 - core index']
  #allocation1 [shape = 'u32[72,128]{1,0:T(1,128)}', space=vmem, size = 0x9000, scoped, tag = 'internal scratch']
  %s0 = inlined_call_operand.vmem [shape: bf16[128,1152], index: 0, kind: input, shape index: {}]
  %s1 = inlined_call_operand.vmem [shape: bf16[1152,128], index: 1, kind: input, shape index: {}]
  %s2 = inlined_call_operand.vmem [shape: f32[1,128], index: 2, kind: input, shape index: {}]
  %s3 = inlined_call_operand.vmem [shape: f32[1,128], index: 3, kind: input, shape index: {}]
  %s4 = inlined_call_operand.vmem [shape: bf16[128,128], index: 4, kind: output, shape index: {}]
  %s5 = sld [smem:[#allocation0]]
  $region49: #{embedding_layer_forward.6} parent=0
    _
  %s7 = ssub.s32 1, %s5
  %s8 = scalar_select 0, %s7, %s5
  loop: start=0, step=1, limit=4
  $region2: #{embedding_layer_forward.6} parent=0 // loop_pre_header
    _
  $region3: #{embedding_layer_forward.6} parent=0 // loop_header
    %s10 = sphi 0, %s14
    %p11 = scmp.ge.s32.totalorder %s10, 4
    %s17 = sphi 0, %s29
    %s18 = sphi 0, %s25
    %s19 = sphi 0, %s17
    %s20 = sphi 0, %s18
    %s21 = sphi 0, %s19
    %s22 = sphi 0, %s20
    %s32 = sphi 0, %s34
    %s35 = sphi 0, %s32
    %s36 = sphi 0, %s35
    %s52 = sphi 0, %s36
    %s58 = sphi 0, %s60
    %s61 = sphi 0, %s58
    %s62 = sphi 0, %s61
    %s78 = sphi 0, %s62
    %s84 = sphi 0, %s86
    %s87 = sphi 0, %s84
    %s88 = sphi 0, %s87
    %s104 = sphi 0, %s88
    %s110 = sphi 0, %s112
    %s113 = sphi 0, %s110
    %s114 = sphi 0, %s113
    %s130 = sphi 0, %s114
    %s138 = sphi 0, %s140
    %s141 = sphi 0, %s138
    %s142 = sphi 0, %s141
    %s158 = sphi 0, %s142
  $region4: #{embedding_layer_forward.6} parent=0 // loop_header_branch
    %13 = sbr.rel (%p11) target = $region8
  $region5: #{embedding_layer_forward.6} parent=0 // loop_body
    %s15 = ssub.s32 %s10, 1
    %s16 = ssub.s32 %s10, 2
    %s23 = sadd.s32 1, %s18
    %p24 = scmp.ge.s32.totalorder %s23, 1
    %s25 = scalar_select %p24, 0, %s23
    %s26 = sadd.s32 1, %s17
    %s27 = scalar_select %p24, %s26, %s17
    %p28 = scmp.ge.s32.totalorder %s27, 2
    %s29 = scalar_select %p28, 0, %s27
    %s30 = ssub.s32 %s17, %s29
    %p31 = scmp.eq.s32.totalorder %s30, 0
    %s33 = sadd.s32 %s32, 1
    %s34 = scalar_select %p31, %s32, %s33
    %p37 = pneg %p31
    %p38 = scmp.eq.s32.totalorder %s10, 1
    %p39 = por %p37, %p38
    %p40 = scmp.ne.s32.totalorder %s32, %s35
    %p41 = scmp.eq.s32.totalorder %s10, 0
    %p42 = por %p40, %p41
    %p43 = scmp.ne.s32.totalorder %s32, %s35
    %p44 = scmp.eq.s32.totalorder %s15, 1
    %p45 = por %p43, %p44
    %p46 = scmp.ne.s32.totalorder %s35, %s36
    %p47 = scmp.eq.s32.totalorder %s15, 0
    %p48 = por %p46, %p47
    %p49 = scmp.ne.s32.totalorder %s35, %s36
    %p50 = scmp.eq.s32.totalorder %s16, 1
    %p51 = por %p49, %p50
    %p53 = scmp.ne.s32.totalorder %s36, %s52
    %p54 = scmp.eq.s32.totalorder %s16, 0
    %p55 = por %p53, %p54
    %s56 = ssub.s32 %s18, %s25
    %p57 = scmp.eq.s32.totalorder %s56, 0
    %s59 = sadd.s32 %s58, 1
    %s60 = scalar_select %p57, %s58, %s59
    %p63 = pneg %p57
    %p64 = scmp.eq.s32.totalorder %s10, 1
    %p65 = por %p63, %p64
    %p66 = scmp.ne.s32.totalorder %s58, %s61
    %p67 = scmp.eq.s32.totalorder %s10, 0
    %p68 = por %p66, %p67
    %p69 = scmp.ne.s32.totalorder %s58, %s61
    %p70 = scmp.eq.s32.totalorder %s15, 1
    %p71 = por %p69, %p70
    %p72 = scmp.ne.s32.totalorder %s61, %s62
    %p73 = scmp.eq.s32.totalorder %s15, 0
    %p74 = por %p72, %p73
    %p75 = scmp.ne.s32.totalorder %s61, %s62
    %p76 = scmp.eq.s32.totalorder %s16, 1
    %p77 = por %p75, %p76
    %p79 = scmp.ne.s32.totalorder %s62, %s78
    %p80 = scmp.eq.s32.totalorder %s16, 0
    %p81 = por %p79, %p80
    %s82 = ssub.s32 %s18, %s25
    %p83 = scmp.eq.s32.totalorder %s82, 0
    %s85 = sadd.s32 %s84, 1
    %s86 = scalar_select %p83, %s84, %s85
    %p89 = pneg %p83
    %p90 = scmp.eq.s32.totalorder %s10, 1
    %p91 = por %p89, %p90
    %p92 = scmp.ne.s32.totalorder %s84, %s87
    %p93 = scmp.eq.s32.totalorder %s10, 0
    %p94 = por %p92, %p93
    %p95 = scmp.ne.s32.totalorder %s84, %s87
    %p96 = scmp.eq.s32.totalorder %s15, 1
    %p97 = por %p95, %p96
    %p98 = scmp.ne.s32.totalorder %s87, %s88
    %p99 = scmp.eq.s32.totalorder %s15, 0
    %p100 = por %p98, %p99
    %p101 = scmp.ne.s32.totalorder %s87, %s88
    %p102 = scmp.eq.s32.totalorder %s16, 1
    %p103 = por %p101, %p102
    %p105 = scmp.ne.s32.totalorder %s88, %s104
    %p106 = scmp.eq.s32.totalorder %s16, 0
    %p107 = por %p105, %p106
    %s108 = ssub.s32 %s18, %s25
    %p109 = scmp.eq.s32.totalorder %s108, 0
    %s111 = sadd.s32 %s110, 1
    %s112 = scalar_select %p109, %s110, %s111
    %p115 = pneg %p109
    %p116 = scmp.eq.s32.totalorder %s10, 1
    %p117 = por %p115, %p116
    %p118 = scmp.ne.s32.totalorder %s110, %s113
    %p119 = scmp.eq.s32.totalorder %s10, 0
    %p120 = por %p118, %p119
    %p121 = scmp.ne.s32.totalorder %s110, %s113
    %p122 = scmp.eq.s32.totalorder %s15, 1
    %p123 = por %p121, %p122
    %p124 = scmp.ne.s32.totalorder %s113, %s114
    %p125 = scmp.eq.s32.totalorder %s15, 0
    %p126 = por %p124, %p125
    %p127 = scmp.ne.s32.totalorder %s113, %s114
    %p128 = scmp.eq.s32.totalorder %s16, 1
    %p129 = por %p127, %p128
    %p131 = scmp.ne.s32.totalorder %s114, %s130
    %p132 = scmp.eq.s32.totalorder %s16, 0
    %p133 = por %p131, %p132
    %s134 = ssub.s32 %s17, %s29
    %s135 = ssub.s32 %s18, %s25
    %s136 = sor.u32 %s134, %s135
    %p137 = scmp.eq.s32.totalorder %s136, 0
    %s139 = sadd.s32 %s138, 1
    %s140 = scalar_select %p137, %s138, %s139
    %p143 = pneg %p137
    %p144 = scmp.eq.s32.totalorder %s10, 1
    %p145 = por %p143, %p144
    %p146 = scmp.ne.s32.totalorder %s138, %s141
    %p147 = scmp.eq.s32.totalorder %s10, 0
    %p148 = por %p146, %p147
    %p149 = scmp.ne.s32.totalorder %s138, %s141
    %p150 = scmp.eq.s32.totalorder %s15, 1
    %p151 = por %p149, %p150
    %p152 = scmp.ne.s32.totalorder %s141, %s142
    %p153 = scmp.eq.s32.totalorder %s15, 0
    %p154 = por %p152, %p153
    %p155 = scmp.ne.s32.totalorder %s141, %s142
    %p156 = scmp.eq.s32.totalorder %s16, 1
    %p157 = por %p155, %p156
    %p159 = scmp.ne.s32.totalorder %s142, %s158
    %p160 = scmp.eq.s32.totalorder %s16, 0
    %p161 = por %p159, %p160
    %p162 = scmp.le.s32.totalorder 1, %s10
    %p163 = scmp.lt.s32.totalorder %s10, 3
    %p164 = pnand %p162, %p163
    %p165 = pneg %p164
    // Predicated region
    $region9: #{embedding_layer_forward.6} parent=5 // pred_check
      _
    $region10: #{embedding_layer_forward.6} parent=5 // pred_check_branch
      %167 = sbr.rel (%p164) target = $region12
    $region11: #{embedding_layer_forward.6} parent=5 // pred_region
      %s168 = ssub.s32 %s10, 1
      // Predicated region
      $region13: #{embedding_layer_forward.6} parent=11 // pred_check
        %p169 = pneg %p74
      $region14: #{embedding_layer_forward.6} parent=11 // pred_check_branch
        %171 = sbr.rel (%p169) target = $region16
      $region15: #{embedding_layer_forward.6} parent=11 // pred_region
        %p172 = scmp.lt.s32.totalorder %s20, 0
        %s173 = scalar_select %p172, %s20, 0
        %s174 = smul.addr %s173, 4
        %s175 = scalar_lea.vmem %s1, %s174
      $region16: #{embedding_layer_forward.6} parent=11 // pred_fallthru
        _
      // Predicated region
      $region17: #{embedding_layer_forward.6} parent=11 // pred_check
        %p176 = pneg %p100
      $region18: #{embedding_layer_forward.6} parent=11 // pred_check_branch
        %178 = sbr.rel (%p176) target = $region20
      $region19: #{embedding_layer_forward.6} parent=11 // pred_region
        %p179 = scmp.lt.s32.totalorder %s20, 0
        %s180 = scalar_select %p179, %s20, 0
        %s181 = scalar_lea.vmem %s2, %s180
      $region20: #{embedding_layer_forward.6} parent=11 // pred_fallthru
        _
      // Predicated region
      $region21: #{embedding_layer_forward.6} parent=11 // pred_check
        %p182 = pneg %p126
      $region22: #{embedding_layer_forward.6} parent=11 // pred_check_branch
        %184 = sbr.rel (%p182) target = $region24
      $region23: #{embedding_layer_forward.6} parent=11 // pred_region
        %p185 = scmp.lt.s32.totalorder %s20, 0
        %s186 = scalar_select %p185, %s20, 0
        %s187 = scalar_lea.vmem %s3, %s186
      $region24: #{embedding_layer_forward.6} parent=11 // pred_fallthru
        _
    $region12: #{embedding_layer_forward.6} parent=5 // pred_fallthru
      _
    %p188 = scmp.lt.s32.totalorder %s10, 2
    // Predicated region
    $region25: #{embedding_layer_forward.6} parent=5 // pred_check
      %p189 = pneg %p188
    $region26: #{embedding_layer_forward.6} parent=5 // pred_check_branch
      %191 = sbr.rel (%p189) target = $region28
    $region27: #{embedding_layer_forward.6} parent=5 // pred_region
      // Predicated region
      $region29: #{embedding_layer_forward.6} parent=27 // pred_check
        %p192 = pneg %p42
      $region30: #{embedding_layer_forward.6} parent=27 // pred_check_branch
        %194 = sbr.rel (%p192) target = $region32
      $region31: #{embedding_layer_forward.6} parent=27 // pred_region
        %s195 = smul.u32 8, %s17
        %p196 = scmp.lt.s32.totalorder %s195, 15
        %s197 = scalar_select %p196, %s195, 15
        %s198 = smul.addr %s197, 9
        %s199 = smul.addr %s198, 4
        %s200 = scalar_lea.vmem %s0, %s199
        %s201 = smul.u32 8, %s17
      $region32: #{embedding_layer_forward.6} parent=27 // pred_fallthru
        _
    $region28: #{embedding_layer_forward.6} parent=5 // pred_fallthru
      _
    %p202 = scmp.le.s32.totalorder 1, %s10
    %p203 = scmp.lt.s32.totalorder %s10, 3
    %p204 = pnand %p202, %p203
    %p205 = pneg %p204
    // Predicated region
    $region33: #{embedding_layer_forward.6} parent=5 // pred_check
      _
    $region34: #{embedding_layer_forward.6} parent=5 // pred_check_branch
      %207 = sbr.rel (%p204) target = $region36
    $region35: #{embedding_layer_forward.6} parent=5 // pred_region
      %s208 = ssub.s32 %s10, 1
      %s209 = smul.u32 8, %s19
      %p210 = scmp.lt.s32.totalorder %s209, 15
      %s211 = scalar_select %p210, %s209, 15
      %s212 = smul.addr %s211, 9
      %s213 = smul.addr %s212, 4
      %s214 = scalar_lea.vmem %s0, %s213
      %p215 = pneg %p48
      %p216 = pneg %p45
      %p217 = scmp.lt.s32.totalorder %s20, 0
      %s218 = scalar_select %p217, %s20, 0
      %s219 = smul.addr %s218, 4
      %s220 = scalar_lea.vmem %s1, %s219
      %p221 = pneg %p74
      %p222 = pneg %p71
      %p223 = scmp.lt.s32.totalorder %s20, 0
      %s224 = scalar_select %p223, %s20, 0
      %s225 = scalar_lea.vmem %s2, %s224
      %p226 = pneg %p100
      %p227 = pneg %p97
      %p228 = scmp.lt.s32.totalorder %s20, 0
      %s229 = scalar_select %p228, %s20, 0
      %s230 = scalar_lea.vmem %s3, %s229
      %p231 = pneg %p126
      %p232 = pneg %p123
      %p233 = pneg %p154
      %p234 = pneg %p151
      %s235 = smul.u32 8, %s19
      %p236 = scmp.lt.s32.totalorder %s235, 15
      %s237 = scalar_select %p236, %s235, 15
      %p238 = scmp.lt.s32.totalorder %s20, 0
      %s239 = scalar_select %p238, %s20, 0
      %s240 = sadd.s32 %s239, %s237
      %s241 = smul.addr %s240, 4
      %s242 = scalar_lea.vmem %s4, %s241
      %s243 = smul.u32 8, %s19
      %p244 = scmp.lt.s32.totalorder %s243, 15
      %s245 = scalar_select %p244, %s243, 15
      %s246 = smul.addr %s245, 9
      %s247 = smul.addr %s246, 4
      %s248 = scalar_lea.vmem %s0, %s247
      %s249 = smul.u32 8, %s19
      %p250 = scmp.lt.s32.totalorder %s20, 0
      %s251 = scalar_select %p250, %s20, 0
      %s252 = smul.addr %s251, 4
      %s253 = scalar_lea.vmem %s1, %s252
      %p254 = scmp.lt.s32.totalorder %s20, 0
      %s255 = scalar_select %p254, %s20, 0
      %s256 = scalar_lea.vmem %s2, %s255
      %p257 = scmp.lt.s32.totalorder %s20, 0
      %s258 = scalar_select %p257, %s20, 0
      %s259 = scalar_lea.vmem %s3, %s258
      %s260 = smul.u32 8, %s19
      %p261 = scmp.lt.s32.totalorder %s260, 15
      %s262 = scalar_select %p261, %s260, 15
      %p263 = scmp.lt.s32.totalorder %s20, 0
      %s264 = scalar_select %p263, %s20, 0
      %s265 = sadd.s32 %s264, %s262
      %s266 = smul.addr %s265, 4
      %s267 = scalar_lea.vmem %s4, %s266
      %s268 = smul.u32 8, %s19
      %v269 = vld [vmem:[%s248] sm:$0xff]
      %v270 = vld [vmem:[%s248 + $0x8] sm:$0xff]
      %v271 = vld [vmem:[%s248 + $0x10] sm:$0xff]
      %v272 = vld [vmem:[%s248 + $0x18] sm:$0xff]
      %v273 = vld [vmem:[%s248 + $0x20] sm:$0xf]
      %v274 = vld [vmem:[%s248 + $0x24] sm:$0xff]
      %v275 = vld [vmem:[%s248 + $0x2c] sm:$0xff]
      %v276 = vld [vmem:[%s248 + $0x34] sm:$0xff]
      %v277 = vld [vmem:[%s248 + $0x3c] sm:$0xff]
      %v278 = vld [vmem:[%s248 + $0x44] sm:$0xf]
      %v279 = vld [vmem:[%s248 + $0x48] sm:$0xff]
      %v280 = vld [vmem:[%s248 + $0x50] sm:$0xff]
      %v281 = vld [vmem:[%s248 + $0x58] sm:$0xff]
      %v282 = vld [vmem:[%s248 + $0x60] sm:$0xff]
      %v283 = vld [vmem:[%s248 + $0x68] sm:$0xf]
      %v284 = vld [vmem:[%s248 + $0x6c] sm:$0xff]
      %v285 = vld [vmem:[%s248 + $0x74] sm:$0xff]
      %v286 = vld [vmem:[%s248 + $0x7c] sm:$0xff]
      %v287 = vld [vmem:[%s248 + $0x84] sm:$0xff]
      %v288 = vld [vmem:[%s248 + $0x8c] sm:$0xf]
      %v289 = vld [vmem:[%s248 + $0x90] sm:$0xff]
      %v290 = vld [vmem:[%s248 + $0x98] sm:$0xff]
      %v291 = vld [vmem:[%s248 + $0xa0] sm:$0xff]
      %v292 = vld [vmem:[%s248 + $0xa8] sm:$0xff]
      %v293 = vld [vmem:[%s248 + $0xb0] sm:$0xf]
      %v294 = vld [vmem:[%s248 + $0xb4] sm:$0xff]
      %v295 = vld [vmem:[%s248 + $0xbc] sm:$0xff]
      %v296 = vld [vmem:[%s248 + $0xc4] sm:$0xff]
      %v297 = vld [vmem:[%s248 + $0xcc] sm:$0xff]
      %v298 = vld [vmem:[%s248 + $0xd4] sm:$0xf]
      %v299 = vld [vmem:[%s248 + $0xd8] sm:$0xff]
      %v300 = vld [vmem:[%s248 + $0xe0] sm:$0xff]
      %v301 = vld [vmem:[%s248 + $0xe8] sm:$0xff]
      %v302 = vld [vmem:[%s248 + $0xf0] sm:$0xff]
      %v303 = vld [vmem:[%s248 + $0xf8] sm:$0xf]
      %v304 = vld [vmem:[%s248 + $0xfc] sm:$0xff]
      %v305 = vld [vmem:[%s248 + $0x104] sm:$0xff]
      %v306 = vld [vmem:[%s248 + $0x10c] sm:$0xff]
      %v307 = vld [vmem:[%s248 + $0x114] sm:$0xff]
      %v308 = vld [vmem:[%s248 + $0x11c] sm:$0xf]
      %v309 = vld [vmem:[%s253] sm:$0xf]
      %v310 = vld [vmem:[%s253 + $0x4] sm:$0xf]
      %v311 = vld [vmem:[%s253 + $0x8] sm:$0xf]
      %v312 = vld [vmem:[%s253 + $0xc] sm:$0xf]
      %v313 = vld [vmem:[%s253 + $0x10] sm:$0xf]
      %v314 = vld [vmem:[%s253 + $0x14] sm:$0xf]
      %v315 = vld [vmem:[%s253 + $0x18] sm:$0xf]
      %v316 = vld [vmem:[%s253 + $0x1c] sm:$0xf]
      %v317 = vld [vmem:[%s253 + $0x20] sm:$0xf]
      %v318 = vld [vmem:[%s253 + $0x24] sm:$0xf]
      %v319 = vld [vmem:[%s253 + $0x28] sm:$0xf]
      %v320 = vld [vmem:[%s253 + $0x2c] sm:$0xf]
      %v321 = vld [vmem:[%s253 + $0x30] sm:$0xf]
      %v322 = vld [vmem:[%s253 + $0x34] sm:$0xf]
      %v323 = vld [vmem:[%s253 + $0x38] sm:$0xf]
      %v324 = vld [vmem:[%s253 + $0x3c] sm:$0xf]
      %v325 = vld [vmem:[%s253 + $0x40] sm:$0xf]
      %v326 = vld [vmem:[%s253 + $0x44] sm:$0xf]
      %v327 = vld [vmem:[%s253 + $0x48] sm:$0xf]
      %v328 = vld [vmem:[%s253 + $0x4c] sm:$0xf]
      %v329 = vld [vmem:[%s253 + $0x50] sm:$0xf]
      %v330 = vld [vmem:[%s253 + $0x54] sm:$0xf]
      %v331 = vld [vmem:[%s253 + $0x58] sm:$0xf]
      %v332 = vld [vmem:[%s253 + $0x5c] sm:$0xf]
      %v333 = vld [vmem:[%s253 + $0x60] sm:$0xf]
      %v334 = vld [vmem:[%s253 + $0x64] sm:$0xf]
      %v335 = vld [vmem:[%s253 + $0x68] sm:$0xf]
      %v336 = vld [vmem:[%s253 + $0x6c] sm:$0xf]
      %v337 = vld [vmem:[%s253 + $0x70] sm:$0xf]
      %v338 = vld [vmem:[%s253 + $0x74] sm:$0xf]
      %v339 = vld [vmem:[%s253 + $0x78] sm:$0xf]
      %v340 = vld [vmem:[%s253 + $0x7c] sm:$0xf]
      %v341 = vld [vmem:[%s253 + $0x80] sm:$0xf]
      %v342 = vld [vmem:[%s253 + $0x84] sm:$0xf]
      %v343 = vld [vmem:[%s253 + $0x88] sm:$0xf]
      %v344 = vld [vmem:[%s253 + $0x8c] sm:$0xf]
      %v345 = vld [vmem:[%s253 + $0x90] sm:$0xf]
      %v346 = vld [vmem:[%s253 + $0x94] sm:$0xf]
      %v347 = vld [vmem:[%s253 + $0x98] sm:$0xf]
      %v348 = vld [vmem:[%s253 + $0x9c] sm:$0xf]
      %v349 = vld [vmem:[%s253 + $0xa0] sm:$0xf]
      %v350 = vld [vmem:[%s253 + $0xa4] sm:$0xf]
      %v351 = vld [vmem:[%s253 + $0xa8] sm:$0xf]
      %v352 = vld [vmem:[%s253 + $0xac] sm:$0xf]
      %v353 = vld [vmem:[%s253 + $0xb0] sm:$0xf]
      %v354 = vld [vmem:[%s253 + $0xb4] sm:$0xf]
      %v355 = vld [vmem:[%s253 + $0xb8] sm:$0xf]
      %v356 = vld [vmem:[%s253 + $0xbc] sm:$0xf]
      %v357 = vld [vmem:[%s253 + $0xc0] sm:$0xf]
      %v358 = vld [vmem:[%s253 + $0xc4] sm:$0xf]
      %v359 = vld [vmem:[%s253 + $0xc8] sm:$0xf]
      %v360 = vld [vmem:[%s253 + $0xcc] sm:$0xf]
      %v361 = vld [vmem:[%s253 + $0xd0] sm:$0xf]
      %v362 = vld [vmem:[%s253 + $0xd4] sm:$0xf]
      %v363 = vld [vmem:[%s253 + $0xd8] sm:$0xf]
      %v364 = vld [vmem:[%s253 + $0xdc] sm:$0xf]
      %v365 = vld [vmem:[%s253 + $0xe0] sm:$0xf]
      %v366 = vld [vmem:[%s253 + $0xe4] sm:$0xf]
      %v367 = vld [vmem:[%s253 + $0xe8] sm:$0xf]
      %v368 = vld [vmem:[%s253 + $0xec] sm:$0xf]
      %v369 = vld [vmem:[%s253 + $0xf0] sm:$0xf]
      %v370 = vld [vmem:[%s253 + $0xf4] sm:$0xf]
      %v371 = vld [vmem:[%s253 + $0xf8] sm:$0xf]
      %v372 = vld [vmem:[%s253 + $0xfc] sm:$0xf]
      %v373 = vld [vmem:[%s253 + $0x100] sm:$0xf]
      %v374 = vld [vmem:[%s253 + $0x104] sm:$0xf]
      %v375 = vld [vmem:[%s253 + $0x108] sm:$0xf]
      %v376 = vld [vmem:[%s253 + $0x10c] sm:$0xf]
      %v377 = vld [vmem:[%s253 + $0x110] sm:$0xf]
      %v378 = vld [vmem:[%s253 + $0x114] sm:$0xf]
      %v379 = vld [vmem:[%s253 + $0x118] sm:$0xf]
      %v380 = vld [vmem:[%s253 + $0x11c] sm:$0xf]
      %v381 = vld [vmem:[%s253 + $0x120] sm:$0xf]
      %v382 = vld [vmem:[%s253 + $0x124] sm:$0xf]
      %v383 = vld [vmem:[%s253 + $0x128] sm:$0xf]
      %v384 = vld [vmem:[%s253 + $0x12c] sm:$0xf]
      %v385 = vld [vmem:[%s253 + $0x130] sm:$0xf]
      %v386 = vld [vmem:[%s253 + $0x134] sm:$0xf]
      %v387 = vld [vmem:[%s253 + $0x138] sm:$0xf]
      %v388 = vld [vmem:[%s253 + $0x13c] sm:$0xf]
      %v389 = vld [vmem:[%s253 + $0x140] sm:$0xf]
      %v390 = vld [vmem:[%s253 + $0x144] sm:$0xf]
      %v391 = vld [vmem:[%s253 + $0x148] sm:$0xf]
      %v392 = vld [vmem:[%s253 + $0x14c] sm:$0xf]
      %v393 = vld [vmem:[%s253 + $0x150] sm:$0xf]
      %v394 = vld [vmem:[%s253 + $0x154] sm:$0xf]
      %v395 = vld [vmem:[%s253 + $0x158] sm:$0xf]
      %v396 = vld [vmem:[%s253 + $0x15c] sm:$0xf]
      %v397 = vld [vmem:[%s253 + $0x160] sm:$0xf]
      %v398 = vld [vmem:[%s253 + $0x164] sm:$0xf]
      %v399 = vld [vmem:[%s253 + $0x168] sm:$0xf]
      %v400 = vld [vmem:[%s253 + $0x16c] sm:$0xf]
      %v401 = vld [vmem:[%s253 + $0x170] sm:$0xf]
      %v402 = vld [vmem:[%s253 + $0x174] sm:$0xf]
      %v403 = vld [vmem:[%s253 + $0x178] sm:$0xf]
      %v404 = vld [vmem:[%s253 + $0x17c] sm:$0xf]
      %v405 = vld [vmem:[%s253 + $0x180] sm:$0xf]
      %v406 = vld [vmem:[%s253 + $0x184] sm:$0xf]
      %v407 = vld [vmem:[%s253 + $0x188] sm:$0xf]
      %v408 = vld [vmem:[%s253 + $0x18c] sm:$0xf]
      %v409 = vld [vmem:[%s253 + $0x190] sm:$0xf]
      %v410 = vld [vmem:[%s253 + $0x194] sm:$0xf]
      %v411 = vld [vmem:[%s253 + $0x198] sm:$0xf]
      %v412 = vld [vmem:[%s253 + $0x19c] sm:$0xf]
      %v413 = vld [vmem:[%s253 + $0x1a0] sm:$0xf]
      %v414 = vld [vmem:[%s253 + $0x1a4] sm:$0xf]
      %v415 = vld [vmem:[%s253 + $0x1a8] sm:$0xf]
      %v416 = vld [vmem:[%s253 + $0x1ac] sm:$0xf]
      %v417 = vld [vmem:[%s253 + $0x1b0] sm:$0xf]
      %v418 = vld [vmem:[%s253 + $0x1b4] sm:$0xf]
      %v419 = vld [vmem:[%s253 + $0x1b8] sm:$0xf]
      %v420 = vld [vmem:[%s253 + $0x1bc] sm:$0xf]
      %v421 = vld [vmem:[%s253 + $0x1c0] sm:$0xf]
      %v422 = vld [vmem:[%s253 + $0x1c4] sm:$0xf]
      %v423 = vld [vmem:[%s253 + $0x1c8] sm:$0xf]
      %v424 = vld [vmem:[%s253 + $0x1cc] sm:$0xf]
      %v425 = vld [vmem:[%s253 + $0x1d0] sm:$0xf]
      %v426 = vld [vmem:[%s253 + $0x1d4] sm:$0xf]
      %v427 = vld [vmem:[%s253 + $0x1d8] sm:$0xf]
      %v428 = vld [vmem:[%s253 + $0x1dc] sm:$0xf]
      %v429 = vld [vmem:[%s253 + $0x1e0] sm:$0xf]
      %v430 = vld [vmem:[%s253 + $0x1e4] sm:$0xf]
      %v431 = vld [vmem:[%s253 + $0x1e8] sm:$0xf]
      %v432 = vld [vmem:[%s253 + $0x1ec] sm:$0xf]
      %v433 = vld [vmem:[%s253 + $0x1f0] sm:$0xf]
      %v434 = vld [vmem:[%s253 + $0x1f4] sm:$0xf]
      %v435 = vld [vmem:[%s253 + $0x1f8] sm:$0xf]
      %v436 = vld [vmem:[%s253 + $0x1fc] sm:$0xf]
      %v437 = vld [vmem:[%s253 + $0x200] sm:$0xf]
      %v438 = vld [vmem:[%s253 + $0x204] sm:$0xf]
      %v439 = vld [vmem:[%s253 + $0x208] sm:$0xf]
      %v440 = vld [vmem:[%s253 + $0x20c] sm:$0xf]
      %v441 = vld [vmem:[%s253 + $0x210] sm:$0xf]
      %v442 = vld [vmem:[%s253 + $0x214] sm:$0xf]
      %v443 = vld [vmem:[%s253 + $0x218] sm:$0xf]
      %v444 = vld [vmem:[%s253 + $0x21c] sm:$0xf]
      %v445 = vld [vmem:[%s253 + $0x220] sm:$0xf]
      %v446 = vld [vmem:[%s253 + $0x224] sm:$0xf]
      %v447 = vld [vmem:[%s253 + $0x228] sm:$0xf]
      %v448 = vld [vmem:[%s253 + $0x22c] sm:$0xf]
      %v449 = vld [vmem:[%s253 + $0x230] sm:$0xf]
      %v450 = vld [vmem:[%s253 + $0x234] sm:$0xf]
      %v451 = vld [vmem:[%s253 + $0x238] sm:$0xf]
      %v452 = vld [vmem:[%s253 + $0x23c] sm:$0xf]
      %v493 = vunpack.c.l.b16 %v269
      %v494 = vunpack.c.h.b16 %v269
      %v495 = vunpack.c.l.b16 %v270
      %v496 = vunpack.c.h.b16 %v270
      %v497 = vunpack.c.l.b16 %v271
      %v498 = vunpack.c.h.b16 %v271
      %v499 = vunpack.c.l.b16 %v272
      %v500 = vunpack.c.h.b16 %v272
      %v501 = vunpack.c.l.b16 %v273
      %v502 = vunpack.c.l.b16 %v274
      %v503 = vunpack.c.h.b16 %v274
      %v504 = vunpack.c.l.b16 %v275
      %v505 = vunpack.c.h.b16 %v275
      %v506 = vunpack.c.l.b16 %v276
      %v507 = vunpack.c.h.b16 %v276
      %v508 = vunpack.c.l.b16 %v277
      %v509 = vunpack.c.h.b16 %v277
      %v510 = vunpack.c.l.b16 %v278
      %v511 = vunpack.c.l.b16 %v279
      %v512 = vunpack.c.h.b16 %v279
      %v513 = vunpack.c.l.b16 %v280
      %v514 = vunpack.c.h.b16 %v280
      %v515 = vunpack.c.l.b16 %v281
      %v516 = vunpack.c.h.b16 %v281
      %v517 = vunpack.c.l.b16 %v282
      %v518 = vunpack.c.h.b16 %v282
      %v519 = vunpack.c.l.b16 %v283
      %v520 = vunpack.c.l.b16 %v284
      %v521 = vunpack.c.h.b16 %v284
      %v522 = vunpack.c.l.b16 %v285
      %v523 = vunpack.c.h.b16 %v285
      %v524 = vunpack.c.l.b16 %v286
      %v525 = vunpack.c.h.b16 %v286
      %v526 = vunpack.c.l.b16 %v287
      %v527 = vunpack.c.h.b16 %v287
      %v528 = vunpack.c.l.b16 %v288
      %v529 = vunpack.c.l.b16 %v289
      %v530 = vunpack.c.h.b16 %v289
      %v531 = vunpack.c.l.b16 %v290
      %v532 = vunpack.c.h.b16 %v290
      %v533 = vunpack.c.l.b16 %v291
      %v534 = vunpack.c.h.b16 %v291
      %v535 = vunpack.c.l.b16 %v292
      %v536 = vunpack.c.h.b16 %v292
      %v537 = vunpack.c.l.b16 %v293
      %v538 = vunpack.c.l.b16 %v294
      %v539 = vunpack.c.h.b16 %v294
      %v540 = vunpack.c.l.b16 %v295
      %v541 = vunpack.c.h.b16 %v295
      %v542 = vunpack.c.l.b16 %v296
      %v543 = vunpack.c.h.b16 %v296
      %v544 = vunpack.c.l.b16 %v297
      %v545 = vunpack.c.h.b16 %v297
      %v546 = vunpack.c.l.b16 %v298
      %v547 = vunpack.c.l.b16 %v299
      %v548 = vunpack.c.h.b16 %v299
      %v549 = vunpack.c.l.b16 %v300
      %v550 = vunpack.c.h.b16 %v300
      %v551 = vunpack.c.l.b16 %v301
      %v552 = vunpack.c.h.b16 %v301
      %v553 = vunpack.c.l.b16 %v302
      %v554 = vunpack.c.h.b16 %v302
      %v555 = vunpack.c.l.b16 %v303
      %v556 = vunpack.c.l.b16 %v304
      %v557 = vunpack.c.h.b16 %v304
      %v558 = vunpack.c.l.b16 %v305
      %v559 = vunpack.c.h.b16 %v305
      %v560 = vunpack.c.l.b16 %v306
      %v561 = vunpack.c.h.b16 %v306
      %v562 = vunpack.c.l.b16 %v307
      %v563 = vunpack.c.h.b16 %v307
      %v564 = vunpack.c.l.b16 %v308
      %v565 = vpack.c.b16 %v502, %v493
      %v566 = vpack.c.b16 %v503, %v494
      %v567 = vpack.c.b16 %v504, %v495
      %v568 = vpack.c.b16 %v505, %v496
      %v569 = vpack.c.b16 %v506, %v497
      %v570 = vpack.c.b16 %v507, %v498
      %v571 = vpack.c.b16 %v508, %v499
      %v572 = vpack.c.b16 %v509, %v500
      %v573 = vpack.c.b16 %v510, %v501
      %v574 = vpack.c.b16 %v520, %v511
      %v575 = vpack.c.b16 %v521, %v512
      %v576 = vpack.c.b16 %v522, %v513
      %v577 = vpack.c.b16 %v523, %v514
      %v578 = vpack.c.b16 %v524, %v515
      %v579 = vpack.c.b16 %v525, %v516
      %v580 = vpack.c.b16 %v526, %v517
      %v581 = vpack.c.b16 %v527, %v518
      %v582 = vpack.c.b16 %v528, %v519
      %v583 = vpack.c.b16 %v538, %v529
      %v584 = vpack.c.b16 %v539, %v530
      %v585 = vpack.c.b16 %v540, %v531
      %v586 = vpack.c.b16 %v541, %v532
      %v587 = vpack.c.b16 %v542, %v533
      %v588 = vpack.c.b16 %v543, %v534
      %v589 = vpack.c.b16 %v544, %v535
      %v590 = vpack.c.b16 %v545, %v536
      %v591 = vpack.c.b16 %v546, %v537
      %v592 = vpack.c.b16 %v556, %v547
      %v593 = vpack.c.b16 %v557, %v548
      %v594 = vpack.c.b16 %v558, %v549
      %v595 = vpack.c.b16 %v559, %v550
      %v596 = vpack.c.b16 %v560, %v551
      %v597 = vpack.c.b16 %v561, %v552
      %v598 = vpack.c.b16 %v562, %v553
      %v599 = vpack.c.b16 %v563, %v554
      %v600 = vpack.c.b16 %v564, %v555
      %v781 = vunpack.c.l.b16 %v309
      %v782 = vunpack.c.l.b16 %v310
      %v783 = vunpack.c.l.b16 %v311
      %v784 = vunpack.c.l.b16 %v312
      %v785 = vunpack.c.l.b16 %v313
      %v786 = vunpack.c.l.b16 %v314
      %v787 = vunpack.c.l.b16 %v315
      %v788 = vunpack.c.l.b16 %v316
      %v789 = vunpack.c.l.b16 %v317
      %v790 = vunpack.c.l.b16 %v318
      %v791 = vunpack.c.l.b16 %v319
      %v792 = vunpack.c.l.b16 %v320
      %v793 = vunpack.c.l.b16 %v321
      %v794 = vunpack.c.l.b16 %v322
      %v795 = vunpack.c.l.b16 %v323
      %v796 = vunpack.c.l.b16 %v324
      %v797 = vunpack.c.l.b16 %v325
      %v798 = vunpack.c.l.b16 %v326
      %v799 = vunpack.c.l.b16 %v327
      %v800 = vunpack.c.l.b16 %v328
      %v801 = vunpack.c.l.b16 %v329
      %v802 = vunpack.c.l.b16 %v330
      %v803 = vunpack.c.l.b16 %v331
      %v804 = vunpack.c.l.b16 %v332
      %v805 = vunpack.c.l.b16 %v333
      %v806 = vunpack.c.l.b16 %v334
      %v807 = vunpack.c.l.b16 %v335
      %v808 = vunpack.c.l.b16 %v336
      %v809 = vunpack.c.l.b16 %v337
      %v810 = vunpack.c.l.b16 %v338
      %v811 = vunpack.c.l.b16 %v339
      %v812 = vunpack.c.l.b16 %v340
      %v813 = vunpack.c.l.b16 %v341
      %v814 = vunpack.c.l.b16 %v342
      %v815 = vunpack.c.l.b16 %v343
      %v816 = vunpack.c.l.b16 %v344
      %v817 = vunpack.c.l.b16 %v345
      %v818 = vunpack.c.l.b16 %v346
      %v819 = vunpack.c.l.b16 %v347
      %v820 = vunpack.c.l.b16 %v348
      %v821 = vunpack.c.l.b16 %v349
      %v822 = vunpack.c.l.b16 %v350
      %v823 = vunpack.c.l.b16 %v351
      %v824 = vunpack.c.l.b16 %v352
      %v825 = vunpack.c.l.b16 %v353
      %v826 = vunpack.c.l.b16 %v354
      %v827 = vunpack.c.l.b16 %v355
      %v828 = vunpack.c.l.b16 %v356
      %v829 = vunpack.c.l.b16 %v357
      %v830 = vunpack.c.l.b16 %v358
      %v831 = vunpack.c.l.b16 %v359
      %v832 = vunpack.c.l.b16 %v360
      %v833 = vunpack.c.l.b16 %v361
      %v834 = vunpack.c.l.b16 %v362
      %v835 = vunpack.c.l.b16 %v363
      %v836 = vunpack.c.l.b16 %v364
      %v837 = vunpack.c.l.b16 %v365
      %v838 = vunpack.c.l.b16 %v366
      %v839 = vunpack.c.l.b16 %v367
      %v840 = vunpack.c.l.b16 %v368
      %v841 = vunpack.c.l.b16 %v369
      %v842 = vunpack.c.l.b16 %v370
      %v843 = vunpack.c.l.b16 %v371
      %v844 = vunpack.c.l.b16 %v372
      %v845 = vunpack.c.l.b16 %v373
      %v846 = vunpack.c.l.b16 %v374
      %v847 = vunpack.c.l.b16 %v375
      %v848 = vunpack.c.l.b16 %v376
      %v849 = vunpack.c.l.b16 %v377
      %v850 = vunpack.c.l.b16 %v378
      %v851 = vunpack.c.l.b16 %v379
      %v852 = vunpack.c.l.b16 %v380
      %v853 = vunpack.c.l.b16 %v381
      %v854 = vunpack.c.l.b16 %v382
      %v855 = vunpack.c.l.b16 %v383
      %v856 = vunpack.c.l.b16 %v384
      %v857 = vunpack.c.l.b16 %v385
      %v858 = vunpack.c.l.b16 %v386
      %v859 = vunpack.c.l.b16 %v387
      %v860 = vunpack.c.l.b16 %v388
      %v861 = vunpack.c.l.b16 %v389
      %v862 = vunpack.c.l.b16 %v390
      %v863 = vunpack.c.l.b16 %v391
      %v864 = vunpack.c.l.b16 %v392
      %v865 = vunpack.c.l.b16 %v393
      %v866 = vunpack.c.l.b16 %v394
      %v867 = vunpack.c.l.b16 %v395
      %v868 = vunpack.c.l.b16 %v396
      %v869 = vunpack.c.l.b16 %v397
      %v870 = vunpack.c.l.b16 %v398
      %v871 = vunpack.c.l.b16 %v399
      %v872 = vunpack.c.l.b16 %v400
      %v873 = vunpack.c.l.b16 %v401
      %v874 = vunpack.c.l.b16 %v402
      %v875 = vunpack.c.l.b16 %v403
      %v876 = vunpack.c.l.b16 %v404
      %v877 = vunpack.c.l.b16 %v405
      %v878 = vunpack.c.l.b16 %v406
      %v879 = vunpack.c.l.b16 %v407
      %v880 = vunpack.c.l.b16 %v408
      %v881 = vunpack.c.l.b16 %v409
      %v882 = vunpack.c.l.b16 %v410
      %v883 = vunpack.c.l.b16 %v411
      %v884 = vunpack.c.l.b16 %v412
      %v885 = vunpack.c.l.b16 %v413
      %v886 = vunpack.c.l.b16 %v414
      %v887 = vunpack.c.l.b16 %v415
      %v888 = vunpack.c.l.b16 %v416
      %v889 = vunpack.c.l.b16 %v417
      %v890 = vunpack.c.l.b16 %v418
      %v891 = vunpack.c.l.b16 %v419
      %v892 = vunpack.c.l.b16 %v420
      %v893 = vunpack.c.l.b16 %v421
      %v894 = vunpack.c.l.b16 %v422
      %v895 = vunpack.c.l.b16 %v423
      %v896 = vunpack.c.l.b16 %v424
      %v897 = vunpack.c.l.b16 %v425
      %v898 = vunpack.c.l.b16 %v426
      %v899 = vunpack.c.l.b16 %v427
      %v900 = vunpack.c.l.b16 %v428
      %v901 = vunpack.c.l.b16 %v429
      %v902 = vunpack.c.l.b16 %v430
      %v903 = vunpack.c.l.b16 %v431
      %v904 = vunpack.c.l.b16 %v432
      %v905 = vunpack.c.l.b16 %v433
      %v906 = vunpack.c.l.b16 %v434
      %v907 = vunpack.c.l.b16 %v435
      %v908 = vunpack.c.l.b16 %v436
      %v909 = vunpack.c.l.b16 %v437
      %v910 = vunpack.c.l.b16 %v438
      %v911 = vunpack.c.l.b16 %v439
      %v912 = vunpack.c.l.b16 %v440
      %v913 = vunpack.c.l.b16 %v441
      %v914 = vunpack.c.l.b16 %v442
      %v915 = vunpack.c.l.b16 %v443
      %v916 = vunpack.c.l.b16 %v444
      %v917 = vunpack.c.l.b16 %v445
      %v918 = vunpack.c.l.b16 %v446
      %v919 = vunpack.c.l.b16 %v447
      %v920 = vunpack.c.l.b16 %v448
      %v921 = vunpack.c.l.b16 %v449
      %v922 = vunpack.c.l.b16 %v450
      %v923 = vunpack.c.l.b16 %v451
      %v924 = vunpack.c.l.b16 %v452
      %v925 = vpack.c.b16 %v782, %v781
      %v926 = vpack.c.b16 %v784, %v783
      %v927 = vpack.c.b16 %v786, %v785
      %v928 = vpack.c.b16 %v788, %v787
      %v929 = vpack.c.b16 %v790, %v789
      %v930 = vpack.c.b16 %v792, %v791
      %v931 = vpack.c.b16 %v794, %v793
      %v932 = vpack.c.b16 %v796, %v795
      %v933 = vpack.c.b16 %v798, %v797
      %v934 = vpack.c.b16 %v800, %v799
      %v935 = vpack.c.b16 %v802, %v801
      %v936 = vpack.c.b16 %v804, %v803
      %v937 = vpack.c.b16 %v806, %v805
      %v938 = vpack.c.b16 %v808, %v807
      %v939 = vpack.c.b16 %v810, %v809
      %v940 = vpack.c.b16 %v812, %v811
      %v941 = vpack.c.b16 %v814, %v813
      %v942 = vpack.c.b16 %v816, %v815
      %v943 = vpack.c.b16 %v818, %v817
      %v944 = vpack.c.b16 %v820, %v819
      %v945 = vpack.c.b16 %v822, %v821
      %v946 = vpack.c.b16 %v824, %v823
      %v947 = vpack.c.b16 %v826, %v825
      %v948 = vpack.c.b16 %v828, %v827
      %v949 = vpack.c.b16 %v830, %v829
      %v950 = vpack.c.b16 %v832, %v831
      %v951 = vpack.c.b16 %v834, %v833
      %v952 = vpack.c.b16 %v836, %v835
      %v953 = vpack.c.b16 %v838, %v837
      %v954 = vpack.c.b16 %v840, %v839
      %v955 = vpack.c.b16 %v842, %v841
      %v956 = vpack.c.b16 %v844, %v843
      %v957 = vpack.c.b16 %v846, %v845
      %v958 = vpack.c.b16 %v848, %v847
      %v959 = vpack.c.b16 %v850, %v849
      %v960 = vpack.c.b16 %v852, %v851
      %v961 = vpack.c.b16 %v854, %v853
      %v962 = vpack.c.b16 %v856, %v855
      %v963 = vpack.c.b16 %v858, %v857
      %v964 = vpack.c.b16 %v860, %v859
      %v965 = vpack.c.b16 %v862, %v861
      %v966 = vpack.c.b16 %v864, %v863
      %v967 = vpack.c.b16 %v866, %v865
      %v968 = vpack.c.b16 %v868, %v867
      %v969 = vpack.c.b16 %v870, %v869
      %v970 = vpack.c.b16 %v872, %v871
      %v971 = vpack.c.b16 %v874, %v873
      %v972 = vpack.c.b16 %v876, %v875
      %v973 = vpack.c.b16 %v878, %v877
      %v974 = vpack.c.b16 %v880, %v879
      %v975 = vpack.c.b16 %v882, %v881
      %v976 = vpack.c.b16 %v884, %v883
      %v977 = vpack.c.b16 %v886, %v885
      %v978 = vpack.c.b16 %v888, %v887
      %v979 = vpack.c.b16 %v890, %v889
      %v980 = vpack.c.b16 %v892, %v891
      %v981 = vpack.c.b16 %v894, %v893
      %v982 = vpack.c.b16 %v896, %v895
      %v983 = vpack.c.b16 %v898, %v897
      %v984 = vpack.c.b16 %v900, %v899
      %v985 = vpack.c.b16 %v902, %v901
      %v986 = vpack.c.b16 %v904, %v903
      %v987 = vpack.c.b16 %v906, %v905
      %v988 = vpack.c.b16 %v908, %v907
      %v989 = vpack.c.b16 %v910, %v909
      %v990 = vpack.c.b16 %v912, %v911
      %v991 = vpack.c.b16 %v914, %v913
      %v992 = vpack.c.b16 %v916, %v915
      %v993 = vpack.c.b16 %v918, %v917
      %v994 = vpack.c.b16 %v920, %v919
      %v995 = vpack.c.b16 %v922, %v921
      %v996 = vpack.c.b16 %v924, %v923
      %1069 = vmatpush.bf16.msra.mxu0 %v932
      %1070 = vmatpush.bf16.msra.mxu0 %v931
      %1071 = vmatpush.bf16.msra.mxu0 %v930
      %1072 = vmatpush.bf16.msra.mxu0 %v929
      %1073 = vmatpush.bf16.msra.mxu0 %v928
      %1074 = vmatpush.bf16.msra.mxu0 %v927
      %1075 = vmatpush.bf16.msra.mxu0 %v926
      %1076 = vmatpush.bf16.msra.mxu0 %v925
      %1077 = vmatmul.bf16.gmra.mxu0 %v565
      %v1078 = vpop.f32.mrf.mxu0
      %v1079 = vadd.f32 0.0, %v1078
      %v1080 = vpop.f32.mrf.mxu0
      %v1081 = vadd.f32 0.0, %v1080
      %1082 = vmatmul.bf16.gmra.mxu0 %v574
      %v1083 = vpop.f32.mrf.mxu0
      %v1084 = vadd.f32 0.0, %v1083
      %v1085 = vpop.f32.mrf.mxu0
      %v1086 = vadd.f32 0.0, %v1085
      %1087 = vmatmul.bf16.gmra.mxu0 %v583
      %v1088 = vpop.f32.mrf.mxu0
      %v1089 = vadd.f32 0.0, %v1088
      %v1090 = vpop.f32.mrf.mxu0
      %v1091 = vadd.f32 0.0, %v1090
      %1092 = vmatmul.bf16.gmra.mxu0 %v592
      %v1093 = vpop.f32.mrf.mxu0
      %v1094 = vadd.f32 0.0, %v1093
      %v1095 = vpop.f32.mrf.mxu0
      %v1096 = vadd.f32 0.0, %v1095
      %1097 = vdwg.mxu0
      %1098 = vmatpush.bf16.msra.mxu0 %v940
      %1099 = vmatpush.bf16.msra.mxu0 %v939
      %1100 = vmatpush.bf16.msra.mxu0 %v938
      %1101 = vmatpush.bf16.msra.mxu0 %v937
      %1102 = vmatpush.bf16.msra.mxu0 %v936
      %1103 = vmatpush.bf16.msra.mxu0 %v935
      %1104 = vmatpush.bf16.msra.mxu0 %v934
      %1105 = vmatpush.bf16.msra.mxu0 %v933
      %1106 = vmatmul.bf16.gmra.mxu0 %v566
      %v1107 = vpop.f32.mrf.mxu0
      %v1108 = vadd.f32 %v1079, %v1107
      %v1109 = vpop.f32.mrf.mxu0
      %v1110 = vadd.f32 %v1081, %v1109
      %1111 = vmatmul.bf16.gmra.mxu0 %v575
      %v1112 = vpop.f32.mrf.mxu0
      %v1113 = vadd.f32 %v1084, %v1112
      %v1114 = vpop.f32.mrf.mxu0
      %v1115 = vadd.f32 %v1086, %v1114
      %1116 = vmatmul.bf16.gmra.mxu0 %v584
      %v1117 = vpop.f32.mrf.mxu0
      %v1118 = vadd.f32 %v1089, %v1117
      %v1119 = vpop.f32.mrf.mxu0
      %v1120 = vadd.f32 %v1091, %v1119
      %1121 = vmatmul.bf16.gmra.mxu0 %v593
      %v1122 = vpop.f32.mrf.mxu0
      %v1123 = vadd.f32 %v1094, %v1122
      %v1124 = vpop.f32.mrf.mxu0
      %v1125 = vadd.f32 %v1096, %v1124
      %1126 = vdwg.mxu0
      %1127 = vmatpush.bf16.msra.mxu0 %v948
      %1128 = vmatpush.bf16.msra.mxu0 %v947
      %1129 = vmatpush.bf16.msra.mxu0 %v946
      %1130 = vmatpush.bf16.msra.mxu0 %v945
      %1131 = vmatpush.bf16.msra.mxu0 %v944
      %1132 = vmatpush.bf16.msra.mxu0 %v943
      %1133 = vmatpush.bf16.msra.mxu0 %v942
      %1134 = vmatpush.bf16.msra.mxu0 %v941
      %1135 = vmatmul.bf16.gmra.mxu0 %v567
      %v1136 = vpop.f32.mrf.mxu0
      %v1137 = vadd.f32 %v1108, %v1136
      %v1138 = vpop.f32.mrf.mxu0
      %v1139 = vadd.f32 %v1110, %v1138
      %1140 = vmatmul.bf16.gmra.mxu0 %v576
      %v1141 = vpop.f32.mrf.mxu0
      %v1142 = vadd.f32 %v1113, %v1141
      %v1143 = vpop.f32.mrf.mxu0
      %v1144 = vadd.f32 %v1115, %v1143
      %1145 = vmatmul.bf16.gmra.mxu0 %v585
      %v1146 = vpop.f32.mrf.mxu0
      %v1147 = vadd.f32 %v1118, %v1146
      %v1148 = vpop.f32.mrf.mxu0
      %v1149 = vadd.f32 %v1120, %v1148
      %1150 = vmatmul.bf16.gmra.mxu0 %v594
      %v1151 = vpop.f32.mrf.mxu0
      %v1152 = vadd.f32 %v1123, %v1151
      %v1153 = vpop.f32.mrf.mxu0
      %v1154 = vadd.f32 %v1125, %v1153
      %1155 = vdwg.mxu0
      %1156 = vmatpush.bf16.msra.mxu0 %v956
      %1157 = vmatpush.bf16.msra.mxu0 %v955
      %1158 = vmatpush.bf16.msra.mxu0 %v954
      %1159 = vmatpush.bf16.msra.mxu0 %v953
      %1160 = vmatpush.bf16.msra.mxu0 %v952
      %1161 = vmatpush.bf16.msra.mxu0 %v951
      %1162 = vmatpush.bf16.msra.mxu0 %v950
      %1163 = vmatpush.bf16.msra.mxu0 %v949
      %1164 = vmatmul.bf16.gmra.mxu0 %v568
      %v1165 = vpop.f32.mrf.mxu0
      %v1166 = vadd.f32 %v1137, %v1165
      %v1167 = vpop.f32.mrf.mxu0
      %v1168 = vadd.f32 %v1139, %v1167
      %1169 = vmatmul.bf16.gmra.mxu0 %v577
      %v1170 = vpop.f32.mrf.mxu0
      %v1171 = vadd.f32 %v1142, %v1170
      %v1172 = vpop.f32.mrf.mxu0
      %v1173 = vadd.f32 %v1144, %v1172
      %1174 = vmatmul.bf16.gmra.mxu0 %v586
      %v1175 = vpop.f32.mrf.mxu0
      %v1176 = vadd.f32 %v1147, %v1175
      %v1177 = vpop.f32.mrf.mxu0
      %v1178 = vadd.f32 %v1149, %v1177
      %1179 = vmatmul.bf16.gmra.mxu0 %v595
      %v1180 = vpop.f32.mrf.mxu0
      %v1181 = vadd.f32 %v1152, %v1180
      %v1182 = vpop.f32.mrf.mxu0
      %v1183 = vadd.f32 %v1154, %v1182
      %1184 = vdwg.mxu0
      %1185 = vmatpush.bf16.msra.mxu0 %v964
      %1186 = vmatpush.bf16.msra.mxu0 %v963
      %1187 = vmatpush.bf16.msra.mxu0 %v962
      %1188 = vmatpush.bf16.msra.mxu0 %v961
      %1189 = vmatpush.bf16.msra.mxu0 %v960
      %1190 = vmatpush.bf16.msra.mxu0 %v959
      %1191 = vmatpush.bf16.msra.mxu0 %v958
      %1192 = vmatpush.bf16.msra.mxu0 %v957
      %1193 = vmatmul.bf16.gmra.mxu0 %v569
      %v1194 = vpop.f32.mrf.mxu0
      %v1195 = vadd.f32 %v1166, %v1194
      %v1196 = vpop.f32.mrf.mxu0
      %v1197 = vadd.f32 %v1168, %v1196
      %1198 = vmatmul.bf16.gmra.mxu0 %v578
      %v1199 = vpop.f32.mrf.mxu0
      %v1200 = vadd.f32 %v1171, %v1199
      %v1201 = vpop.f32.mrf.mxu0
      %v1202 = vadd.f32 %v1173, %v1201
      %1203 = vmatmul.bf16.gmra.mxu0 %v587
      %v1204 = vpop.f32.mrf.mxu0
      %v1205 = vadd.f32 %v1176, %v1204
      %v1206 = vpop.f32.mrf.mxu0
      %v1207 = vadd.f32 %v1178, %v1206
      %1208 = vmatmul.bf16.gmra.mxu0 %v596
      %v1209 = vpop.f32.mrf.mxu0
      %v1210 = vadd.f32 %v1181, %v1209
      %v1211 = vpop.f32.mrf.mxu0
      %v1212 = vadd.f32 %v1183, %v1211
      %1213 = vdwg.mxu0
      %1214 = vmatpush.bf16.msra.mxu0 %v972
      %1215 = vmatpush.bf16.msra.mxu0 %v971
      %1216 = vmatpush.bf16.msra.mxu0 %v970
      %1217 = vmatpush.bf16.msra.mxu0 %v969
      %1218 = vmatpush.bf16.msra.mxu0 %v968
      %1219 = vmatpush.bf16.msra.mxu0 %v967
      %1220 = vmatpush.bf16.msra.mxu0 %v966
      %1221 = vmatpush.bf16.msra.mxu0 %v965
      %1222 = vmatmul.bf16.gmra.mxu0 %v570
      %v1223 = vpop.f32.mrf.mxu0
      %v1224 = vadd.f32 %v1195, %v1223
      %v1225 = vpop.f32.mrf.mxu0
      %v1226 = vadd.f32 %v1197, %v1225
      %1227 = vmatmul.bf16.gmra.mxu0 %v579
      %v1228 = vpop.f32.mrf.mxu0
      %v1229 = vadd.f32 %v1200, %v1228
      %v1230 = vpop.f32.mrf.mxu0
      %v1231 = vadd.f32 %v1202, %v1230
      %1232 = vmatmul.bf16.gmra.mxu0 %v588
      %v1233 = vpop.f32.mrf.mxu0
      %v1234 = vadd.f32 %v1205, %v1233
      %v1235 = vpop.f32.mrf.mxu0
      %v1236 = vadd.f32 %v1207, %v1235
      %1237 = vmatmul.bf16.gmra.mxu0 %v597
      %v1238 = vpop.f32.mrf.mxu0
      %v1239 = vadd.f32 %v1210, %v1238
      %v1240 = vpop.f32.mrf.mxu0
      %v1241 = vadd.f32 %v1212, %v1240
      %1242 = vdwg.mxu0
      %1243 = vmatpush.bf16.msra.mxu0 %v980
      %1244 = vmatpush.bf16.msra.mxu0 %v979
      %1245 = vmatpush.bf16.msra.mxu0 %v978
      %1246 = vmatpush.bf16.msra.mxu0 %v977
      %1247 = vmatpush.bf16.msra.mxu0 %v976
      %1248 = vmatpush.bf16.msra.mxu0 %v975
      %1249 = vmatpush.bf16.msra.mxu0 %v974
      %1250 = vmatpush.bf16.msra.mxu0 %v973
      %1251 = vmatmul.bf16.gmra.mxu0 %v571
      %v1252 = vpop.f32.mrf.mxu0
      %v1253 = vadd.f32 %v1224, %v1252
      %v1254 = vpop.f32.mrf.mxu0
      %v1255 = vadd.f32 %v1226, %v1254
      %1256 = vmatmul.bf16.gmra.mxu0 %v580
      %v1257 = vpop.f32.mrf.mxu0
      %v1258 = vadd.f32 %v1229, %v1257
      %v1259 = vpop.f32.mrf.mxu0
      %v1260 = vadd.f32 %v1231, %v1259
      %1261 = vmatmul.bf16.gmra.mxu0 %v589
      %v1262 = vpop.f32.mrf.mxu0
      %v1263 = vadd.f32 %v1234, %v1262
      %v1264 = vpop.f32.mrf.mxu0
      %v1265 = vadd.f32 %v1236, %v1264
      %1266 = vmatmul.bf16.gmra.mxu0 %v598
      %v1267 = vpop.f32.mrf.mxu0
      %v1268 = vadd.f32 %v1239, %v1267
      %v1269 = vpop.f32.mrf.mxu0
      %v1270 = vadd.f32 %v1241, %v1269
      %1271 = vdwg.mxu0
      %1272 = vmatpush.bf16.msra.mxu0 %v988
      %1273 = vmatpush.bf16.msra.mxu0 %v987
      %1274 = vmatpush.bf16.msra.mxu0 %v986
      %1275 = vmatpush.bf16.msra.mxu0 %v985
      %1276 = vmatpush.bf16.msra.mxu0 %v984
      %1277 = vmatpush.bf16.msra.mxu0 %v983
      %1278 = vmatpush.bf16.msra.mxu0 %v982
      %1279 = vmatpush.bf16.msra.mxu0 %v981
      %1280 = vmatmul.bf16.gmra.mxu0 %v572
      %v1281 = vpop.f32.mrf.mxu0
      %v1282 = vadd.f32 %v1253, %v1281
      %v1283 = vpop.f32.mrf.mxu0
      %v1284 = vadd.f32 %v1255, %v1283
      %1285 = vmatmul.bf16.gmra.mxu0 %v581
      %v1286 = vpop.f32.mrf.mxu0
      %v1287 = vadd.f32 %v1258, %v1286
      %v1288 = vpop.f32.mrf.mxu0
      %v1289 = vadd.f32 %v1260, %v1288
      %1290 = vmatmul.bf16.gmra.mxu0 %v590
      %v1291 = vpop.f32.mrf.mxu0
      %v1292 = vadd.f32 %v1263, %v1291
      %v1293 = vpop.f32.mrf.mxu0
      %v1294 = vadd.f32 %v1265, %v1293
      %1295 = vmatmul.bf16.gmra.mxu0 %v599
      %v1296 = vpop.f32.mrf.mxu0
      %v1297 = vadd.f32 %v1268, %v1296
      %v1298 = vpop.f32.mrf.mxu0
      %v1299 = vadd.f32 %v1270, %v1298
      %1300 = vdwg.mxu0
      %1301 = vmatpush.bf16.msra.mxu0 %v996
      %1302 = vmatpush.bf16.msra.mxu0 %v995
      %1303 = vmatpush.bf16.msra.mxu0 %v994
      %1304 = vmatpush.bf16.msra.mxu0 %v993
      %1305 = vmatpush.bf16.msra.mxu0 %v992
      %1306 = vmatpush.bf16.msra.mxu0 %v991
      %1307 = vmatpush.bf16.msra.mxu0 %v990
      %1308 = vmatpush.bf16.msra.mxu0 %v989
      %1309 = vmatmul.bf16.gmra.mxu0 %v573
      %v1310 = vpop.f32.mrf.mxu0
      %v1311 = vadd.f32 %v1282, %v1310
      %v1312 = vpop.f32.mrf.mxu0
      %v1313 = vadd.f32 %v1284, %v1312
      %1314 = vmatmul.bf16.gmra.mxu0 %v582
      %v1315 = vpop.f32.mrf.mxu0
      %v1316 = vadd.f32 %v1287, %v1315
      %v1317 = vpop.f32.mrf.mxu0
      %v1318 = vadd.f32 %v1289, %v1317
      %1319 = vmatmul.bf16.gmra.mxu0 %v591
      %v1320 = vpop.f32.mrf.mxu0
      %v1321 = vadd.f32 %v1292, %v1320
      %v1322 = vpop.f32.mrf.mxu0
      %v1323 = vadd.f32 %v1294, %v1322
      %1324 = vmatmul.bf16.gmra.mxu0 %v600
      %v1325 = vpop.f32.mrf.mxu0
      %v1326 = vadd.f32 %v1297, %v1325
      %v1327 = vpop.f32.mrf.mxu0
      %v1328 = vadd.f32 %v1299, %v1327
      %1329 = vdwg.mxu0
      %v1330 = vld [vmem:[%s256] sm:$0x1]
      %v1332 = vperm.slane %v1330, 0
      %v1334 = vmul.f32 %v1311, %v1332
      %v1335 = vmul.f32 %v1313, %v1332
      %v1336 = vmul.f32 %v1316, %v1332
      %v1337 = vmul.f32 %v1318, %v1332
      %v1338 = vmul.f32 %v1321, %v1332
      %v1339 = vmul.f32 %v1323, %v1332
      %v1340 = vmul.f32 %v1326, %v1332
      %v1341 = vmul.f32 %v1328, %v1332
      %v1342 = vld [vmem:[%s259] sm:$0x1]
      %v1344 = vperm.slane %v1342, 0
      %v1346 = vadd.f32 %v1334, %v1344
      %v1347 = vadd.f32 %v1335, %v1344
      %v1348 = vadd.f32 %v1336, %v1344
      %v1349 = vadd.f32 %v1337, %v1344
      %v1350 = vadd.f32 %v1338, %v1344
      %v1351 = vadd.f32 %v1339, %v1344
      %v1352 = vadd.f32 %v1340, %v1344
      %v1353 = vadd.f32 %v1341, %v1344
      %v1354 = vmax.f32 %v1346, 0.0
      %v1355 = vmax.f32 %v1347, 0.0
      %v1356 = vmax.f32 %v1348, 0.0
      %v1357 = vmax.f32 %v1349, 0.0
      %v1358 = vmax.f32 %v1350, 0.0
      %v1359 = vmax.f32 %v1351, 0.0
      %v1360 = vmax.f32 %v1352, 0.0
      %v1361 = vmax.f32 %v1353, 0.0
      %v1362 = vpack.c.bf16 %v1354, %v1354
      %v1363 = vpack.c.bf16 %v1355, %v1355
      %v1364 = vpack.c.bf16 %v1356, %v1356
      %v1365 = vpack.c.bf16 %v1357, %v1357
      %v1366 = vpack.c.bf16 %v1358, %v1358
      %v1367 = vpack.c.bf16 %v1359, %v1359
      %v1368 = vpack.c.bf16 %v1360, %v1360
      %v1369 = vpack.c.bf16 %v1361, %v1361
      %1370 = vst [vmem:[%s267] sm:$0xf] %v1362
      %1371 = vst [vmem:[%s267 + $0x4] sm:$0xf] %v1363
      %1372 = vst [vmem:[%s267 + $0x8] sm:$0xf] %v1364
      %1373 = vst [vmem:[%s267 + $0xc] sm:$0xf] %v1365
      %1374 = vst [vmem:[%s267 + $0x10] sm:$0xf] %v1366
      %1375 = vst [vmem:[%s267 + $0x14] sm:$0xf] %v1367
      %1376 = vst [vmem:[%s267 + $0x18] sm:$0xf] %v1368
      %1377 = vst [vmem:[%s267 + $0x1c] sm:$0xf] %v1369
      %s1378 = smul.u32 8, %s19
      %p1379 = scmp.lt.s32.totalorder %s1378, 15
      %s1380 = scalar_select %p1379, %s1378, 15
      %p1381 = scmp.lt.s32.totalorder %s20, 0
      %s1382 = scalar_select %p1381, %s20, 0
      %s1383 = sadd.s32 %s1382, %s1380
      %s1384 = smul.addr %s1383, 4
      %s1385 = scalar_lea.vmem %s4, %s1384
      // Predicated region
      $region37: #{embedding_layer_forward.6} parent=35 // pred_check
        %p1386 = pneg %p151
      $region38: #{embedding_layer_forward.6} parent=35 // pred_check_branch
        %1388 = sbr.rel (%p1386) target = $region40
      $region39: #{embedding_layer_forward.6} parent=35 // pred_region
        %s1389 = smul.u32 8, %s19
      $region40: #{embedding_layer_forward.6} parent=35 // pred_fallthru
        _
    $region36: #{embedding_layer_forward.6} parent=5 // pred_fallthru
      _
    %p1390 = scmp.le.s32.totalorder 2, %s10
    // Predicated region
    $region41: #{embedding_layer_forward.6} parent=5 // pred_check
      %p1391 = pneg %p1390
    $region42: #{embedding_layer_forward.6} parent=5 // pred_check_branch
      %1393 = sbr.rel (%p1391) target = $region44
    $region43: #{embedding_layer_forward.6} parent=5 // pred_region
      %s1394 = ssub.s32 %s10, 2
      // Predicated region
      $region45: #{embedding_layer_forward.6} parent=43 // pred_check
        %p1395 = pneg %p157
      $region46: #{embedding_layer_forward.6} parent=43 // pred_check_branch
        %1397 = sbr.rel (%p1395) target = $region48
      $region47: #{embedding_layer_forward.6} parent=43 // pred_region
        %s1398 = smul.u32 8, %s21
        %p1399 = scmp.lt.s32.totalorder %s1398, 15
        %s1400 = scalar_select %p1399, %s1398, 15
        %p1401 = scmp.lt.s32.totalorder %s22, 0
        %s1402 = scalar_select %p1401, %s22, 0
        %s1403 = sadd.s32 %s1402, %s1400
        %s1404 = smul.addr %s1403, 4
        %s1405 = scalar_lea.vmem %s4, %s1404
      $region48: #{embedding_layer_forward.6} parent=43 // pred_fallthru
        _
    $region44: #{embedding_layer_forward.6} parent=5 // pred_fallthru
      _
  $region6: #{embedding_layer_forward.6} parent=0 // loop_footer
    %s14 = sadd.s32 1, %s10
  $region7: #{embedding_layer_forward.6} parent=0 // loop_footer_branch
    %9 = sbr.rel target = $region3
  $region8: #{embedding_layer_forward.6} parent=0 // loop_exit
    _

// kernel: embedding_layer_forward.7
$region0: #{embedding_layer_forward.7}
  #allocation0 [shape = 'u32[]', space=smem, size = 0x4, offset = 0x4, fixed_abs, tag = 'smem constant byte address 0x4 - core index']
  #allocation1 [shape = 'u32[72,128]{1,0:T(1,128)}', space=vmem, size = 0x9000, scoped, tag = 'internal scratch']
  %s0 = inlined_call_operand.vmem [shape: bf16[32,1152], index: 0, kind: input, shape index: {}]
  %s1 = inlined_call_operand.vmem [shape: bf16[1152,256], index: 1, kind: input, shape index: {}]
  %s2 = inlined_call_operand.vmem [shape: f32[1,256], index: 2, kind: input, shape index: {}]
  %s3 = inlined_call_operand.vmem [shape: f32[1,256], index: 3, kind: input, shape index: {}]
  %s4 = inlined_call_operand.vmem [shape: bf16[32,256], index: 4, kind: output, shape index: {}]
  %s5 = sld [smem:[#allocation0]]
  $region127: #{embedding_layer_forward.7} parent=0
    _
  %s7 = ssub.s32 1, %s5
  %s8 = scalar_select 0, %s7, %s5
  $region1: #{embedding_layer_forward.7} parent=0
    #allocation2 [shape = 'u8[589824]{0}', space=vmem, size = 0x90000, scoped, tag = 'input window, operand 1']
    #allocation3 [shape = 'u8[16384]{0}', space=vmem, size = 0x4000, scoped, tag = 'output window, operand 0']
    loop: start=0, step=1, limit=4
    $region2: #{embedding_layer_forward.7} parent=1 // loop_pre_header
      _
    $region3: #{embedding_layer_forward.7} parent=1 // loop_header
      %s10 = sphi 0, %s14
      %p11 = scmp.ge.s32.totalorder %s10, 4
      %s17 = sphi 0, %s29
      %s18 = sphi 0, %s25
      %s19 = sphi 0, %s17
      %s20 = sphi 0, %s18
      %s21 = sphi 0, %s19
      %s22 = sphi 0, %s20
      %s32 = sphi 0, %s34
      %s35 = sphi 0, %s32
      %s36 = sphi 0, %s35
      %s52 = sphi 0, %s36
      %s58 = sphi 0, %s60
      %s61 = sphi 0, %s58
      %s62 = sphi 0, %s61
      %s78 = sphi 0, %s62
      %s84 = sphi 0, %s86
      %s87 = sphi 0, %s84
      %s88 = sphi 0, %s87
      %s104 = sphi 0, %s88
      %s110 = sphi 0, %s112
      %s113 = sphi 0, %s110
      %s114 = sphi 0, %s113
      %s130 = sphi 0, %s114
      %s138 = sphi 0, %s140
      %s141 = sphi 0, %s138
      %s142 = sphi 0, %s141
      %s158 = sphi 0, %s142
    $region4: #{embedding_layer_forward.7} parent=1 // loop_header_branch
      %13 = sbr.rel (%p11) target = $region8
    $region5: #{embedding_layer_forward.7} parent=1 // loop_body
      %s15 = ssub.s32 %s10, 1
      %s16 = ssub.s32 %s10, 2
      %s23 = sadd.s32 1, %s18
      %p24 = scmp.ge.s32.totalorder %s23, 2
      %s25 = scalar_select %p24, 0, %s23
      %s26 = sadd.s32 1, %s17
      %s27 = scalar_select %p24, %s26, %s17
      %p28 = scmp.ge.s32.totalorder %s27, 1
      %s29 = scalar_select %p28, 0, %s27
      %s30 = ssub.s32 %s17, %s29
      %p31 = scmp.eq.s32.totalorder %s30, 0
      %s33 = sadd.s32 %s32, 1
      %s34 = scalar_select %p31, %s32, %s33
      %p37 = pneg %p31
      %p38 = scmp.eq.s32.totalorder %s10, 1
      %p39 = por %p37, %p38
      %p40 = scmp.ne.s32.totalorder %s32, %s35
      %p41 = scmp.eq.s32.totalorder %s10, 0
      %p42 = por %p40, %p41
      %p43 = scmp.ne.s32.totalorder %s32, %s35
      %p44 = scmp.eq.s32.totalorder %s15, 1
      %p45 = por %p43, %p44
      %p46 = scmp.ne.s32.totalorder %s35, %s36
      %p47 = scmp.eq.s32.totalorder %s15, 0
      %p48 = por %p46, %p47
      %p49 = scmp.ne.s32.totalorder %s35, %s36
      %p50 = scmp.eq.s32.totalorder %s16, 1
      %p51 = por %p49, %p50
      %p53 = scmp.ne.s32.totalorder %s36, %s52
      %p54 = scmp.eq.s32.totalorder %s16, 0
      %p55 = por %p53, %p54
      %s56 = ssub.s32 %s18, %s25
      %p57 = scmp.eq.s32.totalorder %s56, 0
      %s59 = sadd.s32 %s58, 1
      %s60 = scalar_select %p57, %s58, %s59
      %p63 = pneg %p57
      %p64 = scmp.eq.s32.totalorder %s10, 1
      %p65 = por %p63, %p64
      %p66 = scmp.ne.s32.totalorder %s58, %s61
      %p67 = scmp.eq.s32.totalorder %s10, 0
      %p68 = por %p66, %p67
      %p69 = scmp.ne.s32.totalorder %s58, %s61
      %p70 = scmp.eq.s32.totalorder %s15, 1
      %p71 = por %p69, %p70
      %p72 = scmp.ne.s32.totalorder %s61, %s62
      %p73 = scmp.eq.s32.totalorder %s15, 0
      %p74 = por %p72, %p73
      %p75 = scmp.ne.s32.totalorder %s61, %s62
      %p76 = scmp.eq.s32.totalorder %s16, 1
      %p77 = por %p75, %p76
      %p79 = scmp.ne.s32.totalorder %s62, %s78
      %p80 = scmp.eq.s32.totalorder %s16, 0
      %p81 = por %p79, %p80
      %s82 = ssub.s32 %s18, %s25
      %p83 = scmp.eq.s32.totalorder %s82, 0
      %s85 = sadd.s32 %s84, 1
      %s86 = scalar_select %p83, %s84, %s85
      %p89 = pneg %p83
      %p90 = scmp.eq.s32.totalorder %s10, 1
      %p91 = por %p89, %p90
      %p92 = scmp.ne.s32.totalorder %s84, %s87
      %p93 = scmp.eq.s32.totalorder %s10, 0
      %p94 = por %p92, %p93
      %p95 = scmp.ne.s32.totalorder %s84, %s87
      %p96 = scmp.eq.s32.totalorder %s15, 1
      %p97 = por %p95, %p96
      %p98 = scmp.ne.s32.totalorder %s87, %s88
      %p99 = scmp.eq.s32.totalorder %s15, 0
      %p100 = por %p98, %p99
      %p101 = scmp.ne.s32.totalorder %s87, %s88
      %p102 = scmp.eq.s32.totalorder %s16, 1
      %p103 = por %p101, %p102
      %p105 = scmp.ne.s32.totalorder %s88, %s104
      %p106 = scmp.eq.s32.totalorder %s16, 0
      %p107 = por %p105, %p106
      %s108 = ssub.s32 %s18, %s25
      %p109 = scmp.eq.s32.totalorder %s108, 0
      %s111 = sadd.s32 %s110, 1
      %s112 = scalar_select %p109, %s110, %s111
      %p115 = pneg %p109
      %p116 = scmp.eq.s32.totalorder %s10, 1
      %p117 = por %p115, %p116
      %p118 = scmp.ne.s32.totalorder %s110, %s113
      %p119 = scmp.eq.s32.totalorder %s10, 0
      %p120 = por %p118, %p119
      %p121 = scmp.ne.s32.totalorder %s110, %s113
      %p122 = scmp.eq.s32.totalorder %s15, 1
      %p123 = por %p121, %p122
      %p124 = scmp.ne.s32.totalorder %s113, %s114
      %p125 = scmp.eq.s32.totalorder %s15, 0
      %p126 = por %p124, %p125
      %p127 = scmp.ne.s32.totalorder %s113, %s114
      %p128 = scmp.eq.s32.totalorder %s16, 1
      %p129 = por %p127, %p128
      %p131 = scmp.ne.s32.totalorder %s114, %s130
      %p132 = scmp.eq.s32.totalorder %s16, 0
      %p133 = por %p131, %p132
      %s134 = ssub.s32 %s17, %s29
      %s135 = ssub.s32 %s18, %s25
      %s136 = sor.u32 %s134, %s135
      %p137 = scmp.eq.s32.totalorder %s136, 0
      %s139 = sadd.s32 %s138, 1
      %s140 = scalar_select %p137, %s138, %s139
      %p143 = pneg %p137
      %p144 = scmp.eq.s32.totalorder %s10, 1
      %p145 = por %p143, %p144
      %p146 = scmp.ne.s32.totalorder %s138, %s141
      %p147 = scmp.eq.s32.totalorder %s10, 0
      %p148 = por %p146, %p147
      %p149 = scmp.ne.s32.totalorder %s138, %s141
      %p150 = scmp.eq.s32.totalorder %s15, 1
      %p151 = por %p149, %p150
      %p152 = scmp.ne.s32.totalorder %s141, %s142
      %p153 = scmp.eq.s32.totalorder %s15, 0
      %p154 = por %p152, %p153
      %p155 = scmp.ne.s32.totalorder %s141, %s142
      %p156 = scmp.eq.s32.totalorder %s16, 1
      %p157 = por %p155, %p156
      %p159 = scmp.ne.s32.totalorder %s142, %s158
      %p160 = scmp.eq.s32.totalorder %s16, 0
      %p161 = por %p159, %p160
      %p162 = scmp.le.s32.totalorder 1, %s10
      %p163 = scmp.lt.s32.totalorder %s10, 3
      %p164 = pnand %p162, %p163
      %p165 = pneg %p164
      // Predicated region
      $region9: #{embedding_layer_forward.7} parent=5 // pred_check
        _
      $region10: #{embedding_layer_forward.7} parent=5 // pred_check_branch
        %167 = sbr.rel (%p164) target = $region12
      $region11: #{embedding_layer_forward.7} parent=5 // pred_region
        %s168 = ssub.s32 %s10, 1
        // Predicated region
        $region13: #{embedding_layer_forward.7} parent=11 // pred_check
          %p169 = pneg %p48
        $region14: #{embedding_layer_forward.7} parent=11 // pred_check_branch
          %171 = sbr.rel (%p169) target = $region16
        $region15: #{embedding_layer_forward.7} parent=11 // pred_region
          %s172 = smul.u32 4, %s19
          %p173 = scmp.lt.s32.totalorder %s172, 3
          %s174 = scalar_select %p173, %s172, 3
          %s175 = smul.addr %s174, 9
          %s176 = smul.addr %s175, 4
          %s177 = scalar_lea.vmem %s0, %s176
          %s178 = smul.u32 4, %s19
        $region16: #{embedding_layer_forward.7} parent=11 // pred_fallthru
          _
      $region12: #{embedding_layer_forward.7} parent=5 // pred_fallthru
        _
      %p179 = scmp.lt.s32.totalorder %s10, 2
      // Predicated region
      $region17: #{embedding_layer_forward.7} parent=5 // pred_check
        %p180 = pneg %p179
      $region18: #{embedding_layer_forward.7} parent=5 // pred_check_branch
        %182 = sbr.rel (%p180) target = $region20
      $region19: #{embedding_layer_forward.7} parent=5 // pred_region
        // Predicated region
        $region21: #{embedding_layer_forward.7} parent=19 // pred_check
          %p183 = pneg %p68
        $region22: #{embedding_layer_forward.7} parent=19 // pred_check_branch
          %185 = sbr.rel (%p183) target = $region24
        $region23: #{embedding_layer_forward.7} parent=19 // pred_region
          %s186 = sand.u32 %s58, 1
          %s187 = sand.u32 %s58, 1
          %s188 = smul.addr %s187, 576
          %s189 = scalar_lea.vmem [#allocation2], %s188
          %s190 = smul.addr %s18, 4
          %s191 = scalar_lea.vmem %s1, %s190
          // Predicated region
          $region25: #{embedding_layer_forward.7} parent=23 // pred_check
            _
          $region26: #{embedding_layer_forward.7} parent=23 // pred_check_branch
            %193 = sbr.rel (0) target = $region28
          $region27: #{embedding_layer_forward.7} parent=23 // pred_region
            // Predicated region
            $region29: #{embedding_layer_forward.7} parent=27 // pred_check
              _
            $region30: #{embedding_layer_forward.7} parent=27 // pred_check_branch
              %195 = sbr.rel target = $region32
            $region31: #{embedding_layer_forward.7} parent=27 // pred_region
              // Predicated region
              $region44: #{embedding_layer_forward.7} parent=31 // pred_check
                _
              $region45: #{embedding_layer_forward.7} parent=31 // pred_check_branch
                %497 = sbr.rel (0) target = $region47
              $region46: #{embedding_layer_forward.7} parent=31 // pred_region
                loop: start=0, step=1, limit=1
                $region48: #{embedding_layer_forward.7} parent=46 // loop_pre_header
                  _
                $region49: #{embedding_layer_forward.7} parent=46 // loop_header
                  %s499 = sphi 0, %s503
                  %p500 = scmp.ge.s32.totalorder %s499, 1
                  %s504 = sphi %s191, %s191
                  %s505 = sphi %s189, %s189
                $region50: #{embedding_layer_forward.7} parent=46 // loop_header_branch
                  %502 = sbr.rel (%p500) target = $region54
                $region51: #{embedding_layer_forward.7} parent=46 // loop_body
                  _
                $region52: #{embedding_layer_forward.7} parent=46 // loop_footer
                  %s503 = sadd.s32 1, %s499
                $region53: #{embedding_layer_forward.7} parent=46 // loop_footer_branch
                  %498 = sbr.rel target = $region49
                $region54: #{embedding_layer_forward.7} parent=46 // loop_exit
                  _
                %s507 = ssub.s32 16, 1
                loop: start=0, step=1, limit=1
                $region55: #{embedding_layer_forward.7} parent=46 // loop_pre_header
                  _
                $region56: #{embedding_layer_forward.7} parent=46 // loop_header
                  %s509 = sphi 0, %s513
                  %p510 = scmp.ge.s32.totalorder %s509, 1
                  %s514 = sphi %s191, %s191
                  %s515 = sphi %s189, %s189
                $region57: #{embedding_layer_forward.7} parent=46 // loop_header_branch
                  %512 = sbr.rel (%p510) target = $region61
                $region58: #{embedding_layer_forward.7} parent=46 // loop_body
                  %v516 = vld [vmem:[%s514] sm:%s507]
                  %517 = vst [vmem:[%s515] sm:%s507] %v516
                  %v518 = vld [vmem:[%s514 + $0x8] sm:%s507]
                  %519 = vst [vmem:[%s515 + $0x4] sm:%s507] %v518
                  %v520 = vld [vmem:[%s514 + $0x10] sm:%s507]
                  %521 = vst [vmem:[%s515 + $0x8] sm:%s507] %v520
                  %v522 = vld [vmem:[%s514 + $0x18] sm:%s507]
                  %523 = vst [vmem:[%s515 + $0xc] sm:%s507] %v522
                  %v524 = vld [vmem:[%s514 + $0x20] sm:%s507]
                  %525 = vst [vmem:[%s515 + $0x10] sm:%s507] %v524
                  %v526 = vld [vmem:[%s514 + $0x28] sm:%s507]
                  %527 = vst [vmem:[%s515 + $0x14] sm:%s507] %v526
                  %v528 = vld [vmem:[%s514 + $0x30] sm:%s507]
                  %529 = vst [vmem:[%s515 + $0x18] sm:%s507] %v528
                  %v530 = vld [vmem:[%s514 + $0x38] sm:%s507]
                  %531 = vst [vmem:[%s515 + $0x1c] sm:%s507] %v530
                  %v532 = vld [vmem:[%s514 + $0x40] sm:%s507]
                  %533 = vst [vmem:[%s515 + $0x20] sm:%s507] %v532
                  %v534 = vld [vmem:[%s514 + $0x48] sm:%s507]
                  %535 = vst [vmem:[%s515 + $0x24] sm:%s507] %v534
                  %v536 = vld [vmem:[%s514 + $0x50] sm:%s507]
                  %537 = vst [vmem:[%s515 + $0x28] sm:%s507] %v536
                  %v538 = vld [vmem:[%s514 + $0x58] sm:%s507]
                  %539 = vst [vmem:[%s515 + $0x2c] sm:%s507] %v538
                  %v540 = vld [vmem:[%s514 + $0x60] sm:%s507]
                  %541 = vst [vmem:[%s515 + $0x30] sm:%s507] %v540
                  %v542 = vld [vmem:[%s514 + $0x68] sm:%s507]
                  %543 = vst [vmem:[%s515 + $0x34] sm:%s507] %v542
                  %v544 = vld [vmem:[%s514 + $0x70] sm:%s507]
                  %545 = vst [vmem:[%s515 + $0x38] sm:%s507] %v544
                  %v546 = vld [vmem:[%s514 + $0x78] sm:%s507]
                  %547 = vst [vmem:[%s515 + $0x3c] sm:%s507] %v546
                  %v548 = vld [vmem:[%s514 + $0x80] sm:%s507]
                  %549 = vst [vmem:[%s515 + $0x40] sm:%s507] %v548
                  %v550 = vld [vmem:[%s514 + $0x88] sm:%s507]
                  %551 = vst [vmem:[%s515 + $0x44] sm:%s507] %v550
                  %v552 = vld [vmem:[%s514 + $0x90] sm:%s507]
                  %553 = vst [vmem:[%s515 + $0x48] sm:%s507] %v552
                  %v554 = vld [vmem:[%s514 + $0x98] sm:%s507]
                  %555 = vst [vmem:[%s515 + $0x4c] sm:%s507] %v554
                  %v556 = vld [vmem:[%s514 + $0xa0] sm:%s507]
                  %557 = vst [vmem:[%s515 + $0x50] sm:%s507] %v556
                  %v558 = vld [vmem:[%s514 + $0xa8] sm:%s507]
                  %559 = vst [vmem:[%s515 + $0x54] sm:%s507] %v558
                  %v560 = vld [vmem:[%s514 + $0xb0] sm:%s507]
                  %561 = vst [vmem:[%s515 + $0x58] sm:%s507] %v560
                  %v562 = vld [vmem:[%s514 + $0xb8] sm:%s507]
                  %563 = vst [vmem:[%s515 + $0x5c] sm:%s507] %v562
                  %v564 = vld [vmem:[%s514 + $0xc0] sm:%s507]
                  %565 = vst [vmem:[%s515 + $0x60] sm:%s507] %v564
                  %v566 = vld [vmem:[%s514 + $0xc8] sm:%s507]
                  %567 = vst [vmem:[%s515 + $0x64] sm:%s507] %v566
                  %v568 = vld [vmem:[%s514 + $0xd0] sm:%s507]
                  %569 = vst [vmem:[%s515 + $0x68] sm:%s507] %v568
                  %v570 = vld [vmem:[%s514 + $0xd8] sm:%s507]
                  %571 = vst [vmem:[%s515 + $0x6c] sm:%s507] %v570
                  %v572 = vld [vmem:[%s514 + $0xe0] sm:%s507]
                  %573 = vst [vmem:[%s515 + $0x70] sm:%s507] %v572
                  %v574 = vld [vmem:[%s514 + $0xe8] sm:%s507]
                  %575 = vst [vmem:[%s515 + $0x74] sm:%s507] %v574
                  %v576 = vld [vmem:[%s514 + $0xf0] sm:%s507]
                  %577 = vst [vmem:[%s515 + $0x78] sm:%s507] %v576
                  %v578 = vld [vmem:[%s514 + $0xf8] sm:%s507]
                  %579 = vst [vmem:[%s515 + $0x7c] sm:%s507] %v578
                  %v580 = vld [vmem:[%s514 + $0x100] sm:%s507]
                  %581 = vst [vmem:[%s515 + $0x80] sm:%s507] %v580
                  %v582 = vld [vmem:[%s514 + $0x108] sm:%s507]
                  %583 = vst [vmem:[%s515 + $0x84] sm:%s507] %v582
                  %v584 = vld [vmem:[%s514 + $0x110] sm:%s507]
                  %585 = vst [vmem:[%s515 + $0x88] sm:%s507] %v584
                  %v586 = vld [vmem:[%s514 + $0x118] sm:%s507]
                  %587 = vst [vmem:[%s515 + $0x8c] sm:%s507] %v586
                  %v588 = vld [vmem:[%s514 + $0x120] sm:%s507]
                  %589 = vst [vmem:[%s515 + $0x90] sm:%s507] %v588
                  %v590 = vld [vmem:[%s514 + $0x128] sm:%s507]
                  %591 = vst [vmem:[%s515 + $0x94] sm:%s507] %v590
                  %v592 = vld [vmem:[%s514 + $0x130] sm:%s507]
                  %593 = vst [vmem:[%s515 + $0x98] sm:%s507] %v592
                  %v594 = vld [vmem:[%s514 + $0x138] sm:%s507]
                  %595 = vst [vmem:[%s515 + $0x9c] sm:%s507] %v594
                  %v596 = vld [vmem:[%s514 + $0x140] sm:%s507]
                  %597 = vst [vmem:[%s515 + $0xa0] sm:%s507] %v596
                  %v598 = vld [vmem:[%s514 + $0x148] sm:%s507]
                  %599 = vst [vmem:[%s515 + $0xa4] sm:%s507] %v598
                  %v600 = vld [vmem:[%s514 + $0x150] sm:%s507]
                  %601 = vst [vmem:[%s515 + $0xa8] sm:%s507] %v600
                  %v602 = vld [vmem:[%s514 + $0x158] sm:%s507]
                  %603 = vst [vmem:[%s515 + $0xac] sm:%s507] %v602
                  %v604 = vld [vmem:[%s514 + $0x160] sm:%s507]
                  %605 = vst [vmem:[%s515 + $0xb0] sm:%s507] %v604
                  %v606 = vld [vmem:[%s514 + $0x168] sm:%s507]
                  %607 = vst [vmem:[%s515 + $0xb4] sm:%s507] %v606
                  %v608 = vld [vmem:[%s514 + $0x170] sm:%s507]
                  %609 = vst [vmem:[%s515 + $0xb8] sm:%s507] %v608
                  %v610 = vld [vmem:[%s514 + $0x178] sm:%s507]
                  %611 = vst [vmem:[%s515 + $0xbc] sm:%s507] %v610
                  %v612 = vld [vmem:[%s514 + $0x180] sm:%s507]
                  %613 = vst [vmem:[%s515 + $0xc0] sm:%s507] %v612
                  %v614 = vld [vmem:[%s514 + $0x188] sm:%s507]
                  %615 = vst [vmem:[%s515 + $0xc4] sm:%s507] %v614
                  %v616 = vld [vmem:[%s514 + $0x190] sm:%s507]
                  %617 = vst [vmem:[%s515 + $0xc8] sm:%s507] %v616
                  %v618 = vld [vmem:[%s514 + $0x198] sm:%s507]
                  %619 = vst [vmem:[%s515 + $0xcc] sm:%s507] %v618
                  %v620 = vld [vmem:[%s514 + $0x1a0] sm:%s507]
                  %621 = vst [vmem:[%s515 + $0xd0] sm:%s507] %v620
                  %v622 = vld [vmem:[%s514 + $0x1a8] sm:%s507]
                  %623 = vst [vmem:[%s515 + $0xd4] sm:%s507] %v622
                  %v624 = vld [vmem:[%s514 + $0x1b0] sm:%s507]
                  %625 = vst [vmem:[%s515 + $0xd8] sm:%s507] %v624
                  %v626 = vld [vmem:[%s514 + $0x1b8] sm:%s507]
                  %627 = vst [vmem:[%s515 + $0xdc] sm:%s507] %v626
                  %v628 = vld [vmem:[%s514 + $0x1c0] sm:%s507]
                  %629 = vst [vmem:[%s515 + $0xe0] sm:%s507] %v628
                  %v630 = vld [vmem:[%s514 + $0x1c8] sm:%s507]
                  %631 = vst [vmem:[%s515 + $0xe4] sm:%s507] %v630
                  %v632 = vld [vmem:[%s514 + $0x1d0] sm:%s507]
                  %633 = vst [vmem:[%s515 + $0xe8] sm:%s507] %v632
                  %v634 = vld [vmem:[%s514 + $0x1d8] sm:%s507]
                  %635 = vst [vmem:[%s515 + $0xec] sm:%s507] %v634
                  %v636 = vld [vmem:[%s514 + $0x1e0] sm:%s507]
                  %637 = vst [vmem:[%s515 + $0xf0] sm:%s507] %v636
                  %v638 = vld [vmem:[%s514 + $0x1e8] sm:%s507]
                  %639 = vst [vmem:[%s515 + $0xf4] sm:%s507] %v638
                  %v640 = vld [vmem:[%s514 + $0x1f0] sm:%s507]
                  %641 = vst [vmem:[%s515 + $0xf8] sm:%s507] %v640
                  %v642 = vld [vmem:[%s514 + $0x1f8] sm:%s507]
                  %643 = vst [vmem:[%s515 + $0xfc] sm:%s507] %v642
                  %v644 = vld [vmem:[%s514 + $0x200] sm:%s507]
                  %645 = vst [vmem:[%s515 + $0x100] sm:%s507] %v644
                  %v646 = vld [vmem:[%s514 + $0x208] sm:%s507]
                  %647 = vst [vmem:[%s515 + $0x104] sm:%s507] %v646
                  %v648 = vld [vmem:[%s514 + $0x210] sm:%s507]
                  %649 = vst [vmem:[%s515 + $0x108] sm:%s507] %v648
                  %v650 = vld [vmem:[%s514 + $0x218] sm:%s507]
                  %651 = vst [vmem:[%s515 + $0x10c] sm:%s507] %v650
                  %v652 = vld [vmem:[%s514 + $0x220] sm:%s507]
                  %653 = vst [vmem:[%s515 + $0x110] sm:%s507] %v652
                  %v654 = vld [vmem:[%s514 + $0x228] sm:%s507]
                  %655 = vst [vmem:[%s515 + $0x114] sm:%s507] %v654
                  %v656 = vld [vmem:[%s514 + $0x230] sm:%s507]
                  %657 = vst [vmem:[%s515 + $0x118] sm:%s507] %v656
                  %v658 = vld [vmem:[%s514 + $0x238] sm:%s507]
                  %659 = vst [vmem:[%s515 + $0x11c] sm:%s507] %v658
                  %v660 = vld [vmem:[%s514 + $0x240] sm:%s507]
                  %661 = vst [vmem:[%s515 + $0x120] sm:%s507] %v660
                  %v662 = vld [vmem:[%s514 + $0x248] sm:%s507]
                  %663 = vst [vmem:[%s515 + $0x124] sm:%s507] %v662
                  %v664 = vld [vmem:[%s514 + $0x250] sm:%s507]
                  %665 = vst [vmem:[%s515 + $0x128] sm:%s507] %v664
                  %v666 = vld [vmem:[%s514 + $0x258] sm:%s507]
                  %667 = vst [vmem:[%s515 + $0x12c] sm:%s507] %v666
                  %v668 = vld [vmem:[%s514 + $0x260] sm:%s507]
                  %669 = vst [vmem:[%s515 + $0x130] sm:%s507] %v668
                  %v670 = vld [vmem:[%s514 + $0x268] sm:%s507]
                  %671 = vst [vmem:[%s515 + $0x134] sm:%s507] %v670
                  %v672 = vld [vmem:[%s514 + $0x270] sm:%s507]
                  %673 = vst [vmem:[%s515 + $0x138] sm:%s507] %v672
                  %v674 = vld [vmem:[%s514 + $0x278] sm:%s507]
                  %675 = vst [vmem:[%s515 + $0x13c] sm:%s507] %v674
                  %v676 = vld [vmem:[%s514 + $0x280] sm:%s507]
                  %677 = vst [vmem:[%s515 + $0x140] sm:%s507] %v676
                  %v678 = vld [vmem:[%s514 + $0x288] sm:%s507]
                  %679 = vst [vmem:[%s515 + $0x144] sm:%s507] %v678
                  %v680 = vld [vmem:[%s514 + $0x290] sm:%s507]
                  %681 = vst [vmem:[%s515 + $0x148] sm:%s507] %v680
                  %v682 = vld [vmem:[%s514 + $0x298] sm:%s507]
                  %683 = vst [vmem:[%s515 + $0x14c] sm:%s507] %v682
                  %v684 = vld [vmem:[%s514 + $0x2a0] sm:%s507]
                  %685 = vst [vmem:[%s515 + $0x150] sm:%s507] %v684
                  %v686 = vld [vmem:[%s514 + $0x2a8] sm:%s507]
                  %687 = vst [vmem:[%s515 + $0x154] sm:%s507] %v686
                  %v688 = vld [vmem:[%s514 + $0x2b0] sm:%s507]
                  %689 = vst [vmem:[%s515 + $0x158] sm:%s507] %v688
                  %v690 = vld [vmem:[%s514 + $0x2b8] sm:%s507]
                  %691 = vst [vmem:[%s515 + $0x15c] sm:%s507] %v690
                  %v692 = vld [vmem:[%s514 + $0x2c0] sm:%s507]
                  %693 = vst [vmem:[%s515 + $0x160] sm:%s507] %v692
                  %v694 = vld [vmem:[%s514 + $0x2c8] sm:%s507]
                  %695 = vst [vmem:[%s515 + $0x164] sm:%s507] %v694
                  %v696 = vld [vmem:[%s514 + $0x2d0] sm:%s507]
                  %697 = vst [vmem:[%s515 + $0x168] sm:%s507] %v696
                  %v698 = vld [vmem:[%s514 + $0x2d8] sm:%s507]
                  %699 = vst [vmem:[%s515 + $0x16c] sm:%s507] %v698
                  %v700 = vld [vmem:[%s514 + $0x2e0] sm:%s507]
                  %701 = vst [vmem:[%s515 + $0x170] sm:%s507] %v700
                  %v702 = vld [vmem:[%s514 + $0x2e8] sm:%s507]
                  %703 = vst [vmem:[%s515 + $0x174] sm:%s507] %v702
                  %v704 = vld [vmem:[%s514 + $0x2f0] sm:%s507]
                  %705 = vst [vmem:[%s515 + $0x178] sm:%s507] %v704
                  %v706 = vld [vmem:[%s514 + $0x2f8] sm:%s507]
                  %707 = vst [vmem:[%s515 + $0x17c] sm:%s507] %v706
                  %v708 = vld [vmem:[%s514 + $0x300] sm:%s507]
                  %709 = vst [vmem:[%s515 + $0x180] sm:%s507] %v708
                  %v710 = vld [vmem:[%s514 + $0x308] sm:%s507]
                  %711 = vst [vmem:[%s515 + $0x184] sm:%s507] %v710
                  %v712 = vld [vmem:[%s514 + $0x310] sm:%s507]
                  %713 = vst [vmem:[%s515 + $0x188] sm:%s507] %v712
                  %v714 = vld [vmem:[%s514 + $0x318] sm:%s507]
                  %715 = vst [vmem:[%s515 + $0x18c] sm:%s507] %v714
                  %v716 = vld [vmem:[%s514 + $0x320] sm:%s507]
                  %717 = vst [vmem:[%s515 + $0x190] sm:%s507] %v716
                  %v718 = vld [vmem:[%s514 + $0x328] sm:%s507]
                  %719 = vst [vmem:[%s515 + $0x194] sm:%s507] %v718
                  %v720 = vld [vmem:[%s514 + $0x330] sm:%s507]
                  %721 = vst [vmem:[%s515 + $0x198] sm:%s507] %v720
                  %v722 = vld [vmem:[%s514 + $0x338] sm:%s507]
                  %723 = vst [vmem:[%s515 + $0x19c] sm:%s507] %v722
                  %v724 = vld [vmem:[%s514 + $0x340] sm:%s507]
                  %725 = vst [vmem:[%s515 + $0x1a0] sm:%s507] %v724
                  %v726 = vld [vmem:[%s514 + $0x348] sm:%s507]
                  %727 = vst [vmem:[%s515 + $0x1a4] sm:%s507] %v726
                  %v728 = vld [vmem:[%s514 + $0x350] sm:%s507]
                  %729 = vst [vmem:[%s515 + $0x1a8] sm:%s507] %v728
                  %v730 = vld [vmem:[%s514 + $0x358] sm:%s507]
                  %731 = vst [vmem:[%s515 + $0x1ac] sm:%s507] %v730
                  %v732 = vld [vmem:[%s514 + $0x360] sm:%s507]
                  %733 = vst [vmem:[%s515 + $0x1b0] sm:%s507] %v732
                  %v734 = vld [vmem:[%s514 + $0x368] sm:%s507]
                  %735 = vst [vmem:[%s515 + $0x1b4] sm:%s507] %v734
                  %v736 = vld [vmem:[%s514 + $0x370] sm:%s507]
                  %737 = vst [vmem:[%s515 + $0x1b8] sm:%s507] %v736
                  %v738 = vld [vmem:[%s514 + $0x378] sm:%s507]
                  %739 = vst [vmem:[%s515 + $0x1bc] sm:%s507] %v738
                  %v740 = vld [vmem:[%s514 + $0x380] sm:%s507]
                  %741 = vst [vmem:[%s515 + $0x1c0] sm:%s507] %v740
                  %v742 = vld [vmem:[%s514 + $0x388] sm:%s507]
                  %743 = vst [vmem:[%s515 + $0x1c4] sm:%s507] %v742
                  %v744 = vld [vmem:[%s514 + $0x390] sm:%s507]
                  %745 = vst [vmem:[%s515 + $0x1c8] sm:%s507] %v744
                  %v746 = vld [vmem:[%s514 + $0x398] sm:%s507]
                  %747 = vst [vmem:[%s515 + $0x1cc] sm:%s507] %v746
                  %v748 = vld [vmem:[%s514 + $0x3a0] sm:%s507]
                  %749 = vst [vmem:[%s515 + $0x1d0] sm:%s507] %v748
                  %v750 = vld [vmem:[%s514 + $0x3a8] sm:%s507]
                  %751 = vst [vmem:[%s515 + $0x1d4] sm:%s507] %v750
                  %v752 = vld [vmem:[%s514 + $0x3b0] sm:%s507]
                  %753 = vst [vmem:[%s515 + $0x1d8] sm:%s507] %v752
                  %v754 = vld [vmem:[%s514 + $0x3b8] sm:%s507]
                  %755 = vst [vmem:[%s515 + $0x1dc] sm:%s507] %v754
                  %v756 = vld [vmem:[%s514 + $0x3c0] sm:%s507]
                  %757 = vst [vmem:[%s515 + $0x1e0] sm:%s507] %v756
                  %v758 = vld [vmem:[%s514 + $0x3c8] sm:%s507]
                  %759 = vst [vmem:[%s515 + $0x1e4] sm:%s507] %v758
                  %v760 = vld [vmem:[%s514 + $0x3d0] sm:%s507]
                  %761 = vst [vmem:[%s515 + $0x1e8] sm:%s507] %v760
                  %v762 = vld [vmem:[%s514 + $0x3d8] sm:%s507]
                  %763 = vst [vmem:[%s515 + $0x1ec] sm:%s507] %v762
                  %v764 = vld [vmem:[%s514 + $0x3e0] sm:%s507]
                  %765 = vst [vmem:[%s515 + $0x1f0] sm:%s507] %v764
                  %v766 = vld [vmem:[%s514 + $0x3e8] sm:%s507]
                  %767 = vst [vmem:[%s515 + $0x1f4] sm:%s507] %v766
                  %v768 = vld [vmem:[%s514 + $0x3f0] sm:%s507]
                  %769 = vst [vmem:[%s515 + $0x1f8] sm:%s507] %v768
                  %v770 = vld [vmem:[%s514 + $0x3f8] sm:%s507]
                  %771 = vst [vmem:[%s515 + $0x1fc] sm:%s507] %v770
                  %v772 = vld [vmem:[%s514 + $0x400] sm:%s507]
                  %773 = vst [vmem:[%s515 + $0x200] sm:%s507] %v772
                  %v774 = vld [vmem:[%s514 + $0x408] sm:%s507]
                  %775 = vst [vmem:[%s515 + $0x204] sm:%s507] %v774
                  %v776 = vld [vmem:[%s514 + $0x410] sm:%s507]
                  %777 = vst [vmem:[%s515 + $0x208] sm:%s507] %v776
                  %v778 = vld [vmem:[%s514 + $0x418] sm:%s507]
                  %779 = vst [vmem:[%s515 + $0x20c] sm:%s507] %v778
                  %v780 = vld [vmem:[%s514 + $0x420] sm:%s507]
                  %781 = vst [vmem:[%s515 + $0x210] sm:%s507] %v780
                  %v782 = vld [vmem:[%s514 + $0x428] sm:%s507]
                  %783 = vst [vmem:[%s515 + $0x214] sm:%s507] %v782
                  %v784 = vld [vmem:[%s514 + $0x430] sm:%s507]
                  %785 = vst [vmem:[%s515 + $0x218] sm:%s507] %v784
                  %v786 = vld [vmem:[%s514 + $0x438] sm:%s507]
                  %787 = vst [vmem:[%s515 + $0x21c] sm:%s507] %v786
                  %v788 = vld [vmem:[%s514 + $0x440] sm:%s507]
                  %789 = vst [vmem:[%s515 + $0x220] sm:%s507] %v788
                  %v790 = vld [vmem:[%s514 + $0x448] sm:%s507]
                  %791 = vst [vmem:[%s515 + $0x224] sm:%s507] %v790
                  %v792 = vld [vmem:[%s514 + $0x450] sm:%s507]
                  %793 = vst [vmem:[%s515 + $0x228] sm:%s507] %v792
                  %v794 = vld [vmem:[%s514 + $0x458] sm:%s507]
                  %795 = vst [vmem:[%s515 + $0x22c] sm:%s507] %v794
                  %v796 = vld [vmem:[%s514 + $0x460] sm:%s507]
                  %797 = vst [vmem:[%s515 + $0x230] sm:%s507] %v796
                  %v798 = vld [vmem:[%s514 + $0x468] sm:%s507]
                  %799 = vst [vmem:[%s515 + $0x234] sm:%s507] %v798
                  %v800 = vld [vmem:[%s514 + $0x470] sm:%s507]
                  %801 = vst [vmem:[%s515 + $0x238] sm:%s507] %v800
                  %v802 = vld [vmem:[%s514 + $0x478] sm:%s507]
                  %803 = vst [vmem:[%s515 + $0x23c] sm:%s507] %v802
                $region59: #{embedding_layer_forward.7} parent=46 // loop_footer
                  %s513 = sadd.s32 1, %s509
                $region60: #{embedding_layer_forward.7} parent=46 // loop_footer_branch
                  %508 = sbr.rel target = $region56
                $region61: #{embedding_layer_forward.7} parent=46 // loop_exit
                  _
              $region47: #{embedding_layer_forward.7} parent=31 // pred_fallthru
                _
            $region32: #{embedding_layer_forward.7} parent=27 // pred_fallthru
              _
            // Predicated region
            $region33: #{embedding_layer_forward.7} parent=27 // pred_check
              _
            $region34: #{embedding_layer_forward.7} parent=27 // pred_check_branch
              %197 = sbr.rel (0) target = $region36
            $region35: #{embedding_layer_forward.7} parent=27 // pred_region
              %s199 = ssub.s32 16, 1
              loop: start=0, step=1, limit=1
              $region37: #{embedding_layer_forward.7} parent=35 // loop_pre_header
                _
              $region38: #{embedding_layer_forward.7} parent=35 // loop_header
                %s201 = sphi 0, %s205
                %p202 = scmp.ge.s32.totalorder %s201, 1
                %s206 = sphi %s191, %s191
                %s207 = sphi %s189, %s189
              $region39: #{embedding_layer_forward.7} parent=35 // loop_header_branch
                %204 = sbr.rel (%p202) target = $region43
              $region40: #{embedding_layer_forward.7} parent=35 // loop_body
                %v208 = vld [vmem:[%s206] sm:%s199]
                %209 = vst [vmem:[%s207] sm:%s199] %v208
                %v210 = vld [vmem:[%s206 + $0x8] sm:%s199]
                %211 = vst [vmem:[%s207 + $0x4] sm:%s199] %v210
                %v212 = vld [vmem:[%s206 + $0x10] sm:%s199]
                %213 = vst [vmem:[%s207 + $0x8] sm:%s199] %v212
                %v214 = vld [vmem:[%s206 + $0x18] sm:%s199]
                %215 = vst [vmem:[%s207 + $0xc] sm:%s199] %v214
                %v216 = vld [vmem:[%s206 + $0x20] sm:%s199]
                %217 = vst [vmem:[%s207 + $0x10] sm:%s199] %v216
                %v218 = vld [vmem:[%s206 + $0x28] sm:%s199]
                %219 = vst [vmem:[%s207 + $0x14] sm:%s199] %v218
                %v220 = vld [vmem:[%s206 + $0x30] sm:%s199]
                %221 = vst [vmem:[%s207 + $0x18] sm:%s199] %v220
                %v222 = vld [vmem:[%s206 + $0x38] sm:%s199]
                %223 = vst [vmem:[%s207 + $0x1c] sm:%s199] %v222
                %v224 = vld [vmem:[%s206 + $0x40] sm:%s199]
                %225 = vst [vmem:[%s207 + $0x20] sm:%s199] %v224
                %v226 = vld [vmem:[%s206 + $0x48] sm:%s199]
                %227 = vst [vmem:[%s207 + $0x24] sm:%s199] %v226
                %v228 = vld [vmem:[%s206 + $0x50] sm:%s199]
                %229 = vst [vmem:[%s207 + $0x28] sm:%s199] %v228
                %v230 = vld [vmem:[%s206 + $0x58] sm:%s199]
                %231 = vst [vmem:[%s207 + $0x2c] sm:%s199] %v230
                %v232 = vld [vmem:[%s206 + $0x60] sm:%s199]
                %233 = vst [vmem:[%s207 + $0x30] sm:%s199] %v232
                %v234 = vld [vmem:[%s206 + $0x68] sm:%s199]
                %235 = vst [vmem:[%s207 + $0x34] sm:%s199] %v234
                %v236 = vld [vmem:[%s206 + $0x70] sm:%s199]
                %237 = vst [vmem:[%s207 + $0x38] sm:%s199] %v236
                %v238 = vld [vmem:[%s206 + $0x78] sm:%s199]
                %239 = vst [vmem:[%s207 + $0x3c] sm:%s199] %v238
                %v240 = vld [vmem:[%s206 + $0x80] sm:%s199]
                %241 = vst [vmem:[%s207 + $0x40] sm:%s199] %v240
                %v242 = vld [vmem:[%s206 + $0x88] sm:%s199]
                %243 = vst [vmem:[%s207 + $0x44] sm:%s199] %v242
                %v244 = vld [vmem:[%s206 + $0x90] sm:%s199]
                %245 = vst [vmem:[%s207 + $0x48] sm:%s199] %v244
                %v246 = vld [vmem:[%s206 + $0x98] sm:%s199]
                %247 = vst [vmem:[%s207 + $0x4c] sm:%s199] %v246
                %v248 = vld [vmem:[%s206 + $0xa0] sm:%s199]
                %249 = vst [vmem:[%s207 + $0x50] sm:%s199] %v248
                %v250 = vld [vmem:[%s206 + $0xa8] sm:%s199]
                %251 = vst [vmem:[%s207 + $0x54] sm:%s199] %v250
                %v252 = vld [vmem:[%s206 + $0xb0] sm:%s199]
                %253 = vst [vmem:[%s207 + $0x58] sm:%s199] %v252
                %v254 = vld [vmem:[%s206 + $0xb8] sm:%s199]
                %255 = vst [vmem:[%s207 + $0x5c] sm:%s199] %v254
                %v256 = vld [vmem:[%s206 + $0xc0] sm:%s199]
                %257 = vst [vmem:[%s207 + $0x60] sm:%s199] %v256
                %v258 = vld [vmem:[%s206 + $0xc8] sm:%s199]
                %259 = vst [vmem:[%s207 + $0x64] sm:%s199] %v258
                %v260 = vld [vmem:[%s206 + $0xd0] sm:%s199]
                %261 = vst [vmem:[%s207 + $0x68] sm:%s199] %v260
                %v262 = vld [vmem:[%s206 + $0xd8] sm:%s199]
                %263 = vst [vmem:[%s207 + $0x6c] sm:%s199] %v262
                %v264 = vld [vmem:[%s206 + $0xe0] sm:%s199]
                %265 = vst [vmem:[%s207 + $0x70] sm:%s199] %v264
                %v266 = vld [vmem:[%s206 + $0xe8] sm:%s199]
                %267 = vst [vmem:[%s207 + $0x74] sm:%s199] %v266
                %v268 = vld [vmem:[%s206 + $0xf0] sm:%s199]
                %269 = vst [vmem:[%s207 + $0x78] sm:%s199] %v268
                %v270 = vld [vmem:[%s206 + $0xf8] sm:%s199]
                %271 = vst [vmem:[%s207 + $0x7c] sm:%s199] %v270
                %v272 = vld [vmem:[%s206 + $0x100] sm:%s199]
                %273 = vst [vmem:[%s207 + $0x80] sm:%s199] %v272
                %v274 = vld [vmem:[%s206 + $0x108] sm:%s199]
                %275 = vst [vmem:[%s207 + $0x84] sm:%s199] %v274
                %v276 = vld [vmem:[%s206 + $0x110] sm:%s199]
                %277 = vst [vmem:[%s207 + $0x88] sm:%s199] %v276
                %v278 = vld [vmem:[%s206 + $0x118] sm:%s199]
                %279 = vst [vmem:[%s207 + $0x8c] sm:%s199] %v278
                %v280 = vld [vmem:[%s206 + $0x120] sm:%s199]
                %281 = vst [vmem:[%s207 + $0x90] sm:%s199] %v280
                %v282 = vld [vmem:[%s206 + $0x128] sm:%s199]
                %283 = vst [vmem:[%s207 + $0x94] sm:%s199] %v282
                %v284 = vld [vmem:[%s206 + $0x130] sm:%s199]
                %285 = vst [vmem:[%s207 + $0x98] sm:%s199] %v284
                %v286 = vld [vmem:[%s206 + $0x138] sm:%s199]
                %287 = vst [vmem:[%s207 + $0x9c] sm:%s199] %v286
                %v288 = vld [vmem:[%s206 + $0x140] sm:%s199]
                %289 = vst [vmem:[%s207 + $0xa0] sm:%s199] %v288
                %v290 = vld [vmem:[%s206 + $0x148] sm:%s199]
                %291 = vst [vmem:[%s207 + $0xa4] sm:%s199] %v290
                %v292 = vld [vmem:[%s206 + $0x150] sm:%s199]
                %293 = vst [vmem:[%s207 + $0xa8] sm:%s199] %v292
                %v294 = vld [vmem:[%s206 + $0x158] sm:%s199]
                %295 = vst [vmem:[%s207 + $0xac] sm:%s199] %v294
                %v296 = vld [vmem:[%s206 + $0x160] sm:%s199]
                %297 = vst [vmem:[%s207 + $0xb0] sm:%s199] %v296
                %v298 = vld [vmem:[%s206 + $0x168] sm:%s199]
                %299 = vst [vmem:[%s207 + $0xb4] sm:%s199] %v298
                %v300 = vld [vmem:[%s206 + $0x170] sm:%s199]
                %301 = vst [vmem:[%s207 + $0xb8] sm:%s199] %v300
                %v302 = vld [vmem:[%s206 + $0x178] sm:%s199]
                %303 = vst [vmem:[%s207 + $0xbc] sm:%s199] %v302
                %v304 = vld [vmem:[%s206 + $0x180] sm:%s199]
                %305 = vst [vmem:[%s207 + $0xc0] sm:%s199] %v304
                %v306 = vld [vmem:[%s206 + $0x188] sm:%s199]
                %307 = vst [vmem:[%s207 + $0xc4] sm:%s199] %v306
                %v308 = vld [vmem:[%s206 + $0x190] sm:%s199]
                %309 = vst [vmem:[%s207 + $0xc8] sm:%s199] %v308
                %v310 = vld [vmem:[%s206 + $0x198] sm:%s199]
                %311 = vst [vmem:[%s207 + $0xcc] sm:%s199] %v310
                %v312 = vld [vmem:[%s206 + $0x1a0] sm:%s199]
                %313 = vst [vmem:[%s207 + $0xd0] sm:%s199] %v312
                %v314 = vld [vmem:[%s206 + $0x1a8] sm:%s199]
                %315 = vst [vmem:[%s207 + $0xd4] sm:%s199] %v314
                %v316 = vld [vmem:[%s206 + $0x1b0] sm:%s199]
                %317 = vst [vmem:[%s207 + $0xd8] sm:%s199] %v316
                %v318 = vld [vmem:[%s206 + $0x1b8] sm:%s199]
                %319 = vst [vmem:[%s207 + $0xdc] sm:%s199] %v318
                %v320 = vld [vmem:[%s206 + $0x1c0] sm:%s199]
                %321 = vst [vmem:[%s207 + $0xe0] sm:%s199] %v320
                %v322 = vld [vmem:[%s206 + $0x1c8] sm:%s199]
                %323 = vst [vmem:[%s207 + $0xe4] sm:%s199] %v322
                %v324 = vld [vmem:[%s206 + $0x1d0] sm:%s199]
                %325 = vst [vmem:[%s207 + $0xe8] sm:%s199] %v324
                %v326 = vld [vmem:[%s206 + $0x1d8] sm:%s199]
                %327 = vst [vmem:[%s207 + $0xec] sm:%s199] %v326
                %v328 = vld [vmem:[%s206 + $0x1e0] sm:%s199]
                %329 = vst [vmem:[%s207 + $0xf0] sm:%s199] %v328
                %v330 = vld [vmem:[%s206 + $0x1e8] sm:%s199]
                %331 = vst [vmem:[%s207 + $0xf4] sm:%s199] %v330
                %v332 = vld [vmem:[%s206 + $0x1f0] sm:%s199]
                %333 = vst [vmem:[%s207 + $0xf8] sm:%s199] %v332
                %v334 = vld [vmem:[%s206 + $0x1f8] sm:%s199]
                %335 = vst [vmem:[%s207 + $0xfc] sm:%s199] %v334
                %v336 = vld [vmem:[%s206 + $0x200] sm:%s199]
                %337 = vst [vmem:[%s207 + $0x100] sm:%s199] %v336
                %v338 = vld [vmem:[%s206 + $0x208] sm:%s199]
                %339 = vst [vmem:[%s207 + $0x104] sm:%s199] %v338
                %v340 = vld [vmem:[%s206 + $0x210] sm:%s199]
                %341 = vst [vmem:[%s207 + $0x108] sm:%s199] %v340
                %v342 = vld [vmem:[%s206 + $0x218] sm:%s199]
                %343 = vst [vmem:[%s207 + $0x10c] sm:%s199] %v342
                %v344 = vld [vmem:[%s206 + $0x220] sm:%s199]
                %345 = vst [vmem:[%s207 + $0x110] sm:%s199] %v344
                %v346 = vld [vmem:[%s206 + $0x228] sm:%s199]
                %347 = vst [vmem:[%s207 + $0x114] sm:%s199] %v346
                %v348 = vld [vmem:[%s206 + $0x230] sm:%s199]
                %349 = vst [vmem:[%s207 + $0x118] sm:%s199] %v348
                %v350 = vld [vmem:[%s206 + $0x238] sm:%s199]
                %351 = vst [vmem:[%s207 + $0x11c] sm:%s199] %v350
                %v352 = vld [vmem:[%s206 + $0x240] sm:%s199]
                %353 = vst [vmem:[%s207 + $0x120] sm:%s199] %v352
                %v354 = vld [vmem:[%s206 + $0x248] sm:%s199]
                %355 = vst [vmem:[%s207 + $0x124] sm:%s199] %v354
                %v356 = vld [vmem:[%s206 + $0x250] sm:%s199]
                %357 = vst [vmem:[%s207 + $0x128] sm:%s199] %v356
                %v358 = vld [vmem:[%s206 + $0x258] sm:%s199]
                %359 = vst [vmem:[%s207 + $0x12c] sm:%s199] %v358
                %v360 = vld [vmem:[%s206 + $0x260] sm:%s199]
                %361 = vst [vmem:[%s207 + $0x130] sm:%s199] %v360
                %v362 = vld [vmem:[%s206 + $0x268] sm:%s199]
                %363 = vst [vmem:[%s207 + $0x134] sm:%s199] %v362
                %v364 = vld [vmem:[%s206 + $0x270] sm:%s199]
                %365 = vst [vmem:[%s207 + $0x138] sm:%s199] %v364
                %v366 = vld [vmem:[%s206 + $0x278] sm:%s199]
                %367 = vst [vmem:[%s207 + $0x13c] sm:%s199] %v366
                %v368 = vld [vmem:[%s206 + $0x280] sm:%s199]
                %369 = vst [vmem:[%s207 + $0x140] sm:%s199] %v368
                %v370 = vld [vmem:[%s206 + $0x288] sm:%s199]
                %371 = vst [vmem:[%s207 + $0x144] sm:%s199] %v370
                %v372 = vld [vmem:[%s206 + $0x290] sm:%s199]
                %373 = vst [vmem:[%s207 + $0x148] sm:%s199] %v372
                %v374 = vld [vmem:[%s206 + $0x298] sm:%s199]
                %375 = vst [vmem:[%s207 + $0x14c] sm:%s199] %v374
                %v376 = vld [vmem:[%s206 + $0x2a0] sm:%s199]
                %377 = vst [vmem:[%s207 + $0x150] sm:%s199] %v376
                %v378 = vld [vmem:[%s206 + $0x2a8] sm:%s199]
                %379 = vst [vmem:[%s207 + $0x154] sm:%s199] %v378
                %v380 = vld [vmem:[%s206 + $0x2b0] sm:%s199]
                %381 = vst [vmem:[%s207 + $0x158] sm:%s199] %v380
                %v382 = vld [vmem:[%s206 + $0x2b8] sm:%s199]
                %383 = vst [vmem:[%s207 + $0x15c] sm:%s199] %v382
                %v384 = vld [vmem:[%s206 + $0x2c0] sm:%s199]
                %385 = vst [vmem:[%s207 + $0x160] sm:%s199] %v384
                %v386 = vld [vmem:[%s206 + $0x2c8] sm:%s199]
                %387 = vst [vmem:[%s207 + $0x164] sm:%s199] %v386
                %v388 = vld [vmem:[%s206 + $0x2d0] sm:%s199]
                %389 = vst [vmem:[%s207 + $0x168] sm:%s199] %v388
                %v390 = vld [vmem:[%s206 + $0x2d8] sm:%s199]
                %391 = vst [vmem:[%s207 + $0x16c] sm:%s199] %v390
                %v392 = vld [vmem:[%s206 + $0x2e0] sm:%s199]
                %393 = vst [vmem:[%s207 + $0x170] sm:%s199] %v392
                %v394 = vld [vmem:[%s206 + $0x2e8] sm:%s199]
                %395 = vst [vmem:[%s207 + $0x174] sm:%s199] %v394
                %v396 = vld [vmem:[%s206 + $0x2f0] sm:%s199]
                %397 = vst [vmem:[%s207 + $0x178] sm:%s199] %v396
                %v398 = vld [vmem:[%s206 + $0x2f8] sm:%s199]
                %399 = vst [vmem:[%s207 + $0x17c] sm:%s199] %v398
                %v400 = vld [vmem:[%s206 + $0x300] sm:%s199]
                %401 = vst [vmem:[%s207 + $0x180] sm:%s199] %v400
                %v402 = vld [vmem:[%s206 + $0x308] sm:%s199]
                %403 = vst [vmem:[%s207 + $0x184] sm:%s199] %v402
                %v404 = vld [vmem:[%s206 + $0x310] sm:%s199]
                %405 = vst [vmem:[%s207 + $0x188] sm:%s199] %v404
                %v406 = vld [vmem:[%s206 + $0x318] sm:%s199]
                %407 = vst [vmem:[%s207 + $0x18c] sm:%s199] %v406
                %v408 = vld [vmem:[%s206 + $0x320] sm:%s199]
                %409 = vst [vmem:[%s207 + $0x190] sm:%s199] %v408
                %v410 = vld [vmem:[%s206 + $0x328] sm:%s199]
                %411 = vst [vmem:[%s207 + $0x194] sm:%s199] %v410
                %v412 = vld [vmem:[%s206 + $0x330] sm:%s199]
                %413 = vst [vmem:[%s207 + $0x198] sm:%s199] %v412
                %v414 = vld [vmem:[%s206 + $0x338] sm:%s199]
                %415 = vst [vmem:[%s207 + $0x19c] sm:%s199] %v414
                %v416 = vld [vmem:[%s206 + $0x340] sm:%s199]
                %417 = vst [vmem:[%s207 + $0x1a0] sm:%s199] %v416
                %v418 = vld [vmem:[%s206 + $0x348] sm:%s199]
                %419 = vst [vmem:[%s207 + $0x1a4] sm:%s199] %v418
                %v420 = vld [vmem:[%s206 + $0x350] sm:%s199]
                %421 = vst [vmem:[%s207 + $0x1a8] sm:%s199] %v420
                %v422 = vld [vmem:[%s206 + $0x358] sm:%s199]
                %423 = vst [vmem:[%s207 + $0x1ac] sm:%s199] %v422
                %v424 = vld [vmem:[%s206 + $0x360] sm:%s199]
                %425 = vst [vmem:[%s207 + $0x1b0] sm:%s199] %v424
                %v426 = vld [vmem:[%s206 + $0x368] sm:%s199]
                %427 = vst [vmem:[%s207 + $0x1b4] sm:%s199] %v426
                %v428 = vld [vmem:[%s206 + $0x370] sm:%s199]
                %429 = vst [vmem:[%s207 + $0x1b8] sm:%s199] %v428
                %v430 = vld [vmem:[%s206 + $0x378] sm:%s199]
                %431 = vst [vmem:[%s207 + $0x1bc] sm:%s199] %v430
                %v432 = vld [vmem:[%s206 + $0x380] sm:%s199]
                %433 = vst [vmem:[%s207 + $0x1c0] sm:%s199] %v432
                %v434 = vld [vmem:[%s206 + $0x388] sm:%s199]
                %435 = vst [vmem:[%s207 + $0x1c4] sm:%s199] %v434
                %v436 = vld [vmem:[%s206 + $0x390] sm:%s199]
                %437 = vst [vmem:[%s207 + $0x1c8] sm:%s199] %v436
                %v438 = vld [vmem:[%s206 + $0x398] sm:%s199]
                %439 = vst [vmem:[%s207 + $0x1cc] sm:%s199] %v438
                %v440 = vld [vmem:[%s206 + $0x3a0] sm:%s199]
                %441 = vst [vmem:[%s207 + $0x1d0] sm:%s199] %v440
                %v442 = vld [vmem:[%s206 + $0x3a8] sm:%s199]
                %443 = vst [vmem:[%s207 + $0x1d4] sm:%s199] %v442
                %v444 = vld [vmem:[%s206 + $0x3b0] sm:%s199]
                %445 = vst [vmem:[%s207 + $0x1d8] sm:%s199] %v444
                %v446 = vld [vmem:[%s206 + $0x3b8] sm:%s199]
                %447 = vst [vmem:[%s207 + $0x1dc] sm:%s199] %v446
                %v448 = vld [vmem:[%s206 + $0x3c0] sm:%s199]
                %449 = vst [vmem:[%s207 + $0x1e0] sm:%s199] %v448
                %v450 = vld [vmem:[%s206 + $0x3c8] sm:%s199]
                %451 = vst [vmem:[%s207 + $0x1e4] sm:%s199] %v450
                %v452 = vld [vmem:[%s206 + $0x3d0] sm:%s199]
                %453 = vst [vmem:[%s207 + $0x1e8] sm:%s199] %v452
                %v454 = vld [vmem:[%s206 + $0x3d8] sm:%s199]
                %455 = vst [vmem:[%s207 + $0x1ec] sm:%s199] %v454
                %v456 = vld [vmem:[%s206 + $0x3e0] sm:%s199]
                %457 = vst [vmem:[%s207 + $0x1f0] sm:%s199] %v456
                %v458 = vld [vmem:[%s206 + $0x3e8] sm:%s199]
                %459 = vst [vmem:[%s207 + $0x1f4] sm:%s199] %v458
                %v460 = vld [vmem:[%s206 + $0x3f0] sm:%s199]
                %461 = vst [vmem:[%s207 + $0x1f8] sm:%s199] %v460
                %v462 = vld [vmem:[%s206 + $0x3f8] sm:%s199]
                %463 = vst [vmem:[%s207 + $0x1fc] sm:%s199] %v462
                %v464 = vld [vmem:[%s206 + $0x400] sm:%s199]
                %465 = vst [vmem:[%s207 + $0x200] sm:%s199] %v464
                %v466 = vld [vmem:[%s206 + $0x408] sm:%s199]
                %467 = vst [vmem:[%s207 + $0x204] sm:%s199] %v466
                %v468 = vld [vmem:[%s206 + $0x410] sm:%s199]
                %469 = vst [vmem:[%s207 + $0x208] sm:%s199] %v468
                %v470 = vld [vmem:[%s206 + $0x418] sm:%s199]
                %471 = vst [vmem:[%s207 + $0x20c] sm:%s199] %v470
                %v472 = vld [vmem:[%s206 + $0x420] sm:%s199]
                %473 = vst [vmem:[%s207 + $0x210] sm:%s199] %v472
                %v474 = vld [vmem:[%s206 + $0x428] sm:%s199]
                %475 = vst [vmem:[%s207 + $0x214] sm:%s199] %v474
                %v476 = vld [vmem:[%s206 + $0x430] sm:%s199]
                %477 = vst [vmem:[%s207 + $0x218] sm:%s199] %v476
                %v478 = vld [vmem:[%s206 + $0x438] sm:%s199]
                %479 = vst [vmem:[%s207 + $0x21c] sm:%s199] %v478
                %v480 = vld [vmem:[%s206 + $0x440] sm:%s199]
                %481 = vst [vmem:[%s207 + $0x220] sm:%s199] %v480
                %v482 = vld [vmem:[%s206 + $0x448] sm:%s199]
                %483 = vst [vmem:[%s207 + $0x224] sm:%s199] %v482
                %v484 = vld [vmem:[%s206 + $0x450] sm:%s199]
                %485 = vst [vmem:[%s207 + $0x228] sm:%s199] %v484
                %v486 = vld [vmem:[%s206 + $0x458] sm:%s199]
                %487 = vst [vmem:[%s207 + $0x22c] sm:%s199] %v486
                %v488 = vld [vmem:[%s206 + $0x460] sm:%s199]
                %489 = vst [vmem:[%s207 + $0x230] sm:%s199] %v488
                %v490 = vld [vmem:[%s206 + $0x468] sm:%s199]
                %491 = vst [vmem:[%s207 + $0x234] sm:%s199] %v490
                %v492 = vld [vmem:[%s206 + $0x470] sm:%s199]
                %493 = vst [vmem:[%s207 + $0x238] sm:%s199] %v492
                %v494 = vld [vmem:[%s206 + $0x478] sm:%s199]
                %495 = vst [vmem:[%s207 + $0x23c] sm:%s199] %v494
              $region41: #{embedding_layer_forward.7} parent=35 // loop_footer
                %s205 = sadd.s32 1, %s201
              $region42: #{embedding_layer_forward.7} parent=35 // loop_footer_branch
                %200 = sbr.rel target = $region38
              $region43: #{embedding_layer_forward.7} parent=35 // loop_exit
                _
            $region36: #{embedding_layer_forward.7} parent=27 // pred_fallthru
              _
          $region28: #{embedding_layer_forward.7} parent=23 // pred_fallthru
            _
          %804 = vnop
        $region24: #{embedding_layer_forward.7} parent=19 // pred_fallthru
          _
        // Predicated region
        $region62: #{embedding_layer_forward.7} parent=19 // pred_check
          %p805 = pneg %p94
        $region63: #{embedding_layer_forward.7} parent=19 // pred_check_branch
          %807 = sbr.rel (%p805) target = $region65
        $region64: #{embedding_layer_forward.7} parent=19 // pred_region
          %p808 = scmp.lt.s32.totalorder %s18, 1
          %s809 = scalar_select %p808, %s18, 1
          %s810 = scalar_lea.vmem %s2, %s809
        $region65: #{embedding_layer_forward.7} parent=19 // pred_fallthru
          _
        // Predicated region
        $region66: #{embedding_layer_forward.7} parent=19 // pred_check
          %p811 = pneg %p120
        $region67: #{embedding_layer_forward.7} parent=19 // pred_check_branch
          %813 = sbr.rel (%p811) target = $region69
        $region68: #{embedding_layer_forward.7} parent=19 // pred_region
          %p814 = scmp.lt.s32.totalorder %s18, 1
          %s815 = scalar_select %p814, %s18, 1
          %s816 = scalar_lea.vmem %s3, %s815
        $region69: #{embedding_layer_forward.7} parent=19 // pred_fallthru
          _
      $region20: #{embedding_layer_forward.7} parent=5 // pred_fallthru
        _
      %p817 = scmp.le.s32.totalorder 1, %s10
      %p818 = scmp.lt.s32.totalorder %s10, 3
      %p819 = pnand %p817, %p818
      %p820 = pneg %p819
      // Predicated region
      $region70: #{embedding_layer_forward.7} parent=5 // pred_check
        _
      $region71: #{embedding_layer_forward.7} parent=5 // pred_check_branch
        %822 = sbr.rel (%p819) target = $region73
      $region72: #{embedding_layer_forward.7} parent=5 // pred_region
        %s823 = ssub.s32 %s10, 1
        %s824 = sand.u32 %s61, 1
        %s825 = sand.u32 %s61, 1
        %s826 = smul.addr %s825, 576
        %s827 = scalar_lea.vmem [#allocation2], %s826
        // Predicated region
        $region74: #{embedding_layer_forward.7} parent=72 // pred_check
          %p828 = pneg %p74
        $region75: #{embedding_layer_forward.7} parent=72 // pred_check_branch
          %830 = sbr.rel (%p828) target = $region77
        $region76: #{embedding_layer_forward.7} parent=72 // pred_region
          _
        $region77: #{embedding_layer_forward.7} parent=72 // pred_fallthru
          _
        %s831 = smul.u32 4, %s19
        %p832 = scmp.lt.s32.totalorder %s831, 3
        %s833 = scalar_select %p832, %s831, 3
        %s834 = smul.addr %s833, 9
        %s835 = smul.addr %s834, 4
        %s836 = scalar_lea.vmem %s0, %s835
        %p837 = pneg %p48
        %p838 = pneg %p45
        %s839 = sand.u32 %s61, 1
        %s840 = sand.u32 %s61, 1
        %s841 = smul.addr %s840, 576
        %s842 = scalar_lea.vmem [#allocation2], %s841
        %p843 = pneg %p74
        %p844 = pneg %p71
        %p845 = scmp.lt.s32.totalorder %s20, 1
        %s846 = scalar_select %p845, %s20, 1
        %s847 = scalar_lea.vmem %s2, %s846
        %p848 = pneg %p100
        %p849 = pneg %p97
        %p850 = scmp.lt.s32.totalorder %s20, 1
        %s851 = scalar_select %p850, %s20, 1
        %s852 = scalar_lea.vmem %s3, %s851
        %p853 = pneg %p126
        %p854 = pneg %p123
        %p855 = pneg %p154
        %p856 = pneg %p151
        %s857 = sand.u32 %s141, 1
        %s858 = sand.u32 %s141, 1
        %s859 = smul.addr %s858, 16
        %s860 = scalar_lea.vmem [#allocation3], %s859
        %s861 = smul.u32 4, %s19
        %p862 = scmp.lt.s32.totalorder %s861, 3
        %s863 = scalar_select %p862, %s861, 3
        %s864 = smul.addr %s863, 9
        %s865 = smul.addr %s864, 4
        %s866 = scalar_lea.vmem %s0, %s865
        %s867 = smul.u32 4, %s19
        %p868 = scmp.lt.s32.totalorder %s20, 1
        %s869 = scalar_select %p868, %s20, 1
        %s870 = scalar_lea.vmem %s2, %s869
        %p871 = scmp.lt.s32.totalorder %s20, 1
        %s872 = scalar_select %p871, %s20, 1
        %s873 = scalar_lea.vmem %s3, %s872
        %s874 = smul.u32 4, %s19
        %v875 = vld [vmem:[%s866] sm:$0xff]
        %v876 = vld [vmem:[%s866 + $0x8] sm:$0xff]
        %v877 = vld [vmem:[%s866 + $0x10] sm:$0xff]
        %v878 = vld [vmem:[%s866 + $0x18] sm:$0xff]
        %v879 = vld [vmem:[%s866 + $0x20] sm:$0xf]
        %v880 = vld [vmem:[%s866 + $0x24] sm:$0xff]
        %v881 = vld [vmem:[%s866 + $0x2c] sm:$0xff]
        %v882 = vld [vmem:[%s866 + $0x34] sm:$0xff]
        %v883 = vld [vmem:[%s866 + $0x3c] sm:$0xff]
        %v884 = vld [vmem:[%s866 + $0x44] sm:$0xf]
        %v885 = vld [vmem:[%s866 + $0x48] sm:$0xff]
        %v886 = vld [vmem:[%s866 + $0x50] sm:$0xff]
        %v887 = vld [vmem:[%s866 + $0x58] sm:$0xff]
        %v888 = vld [vmem:[%s866 + $0x60] sm:$0xff]
        %v889 = vld [vmem:[%s866 + $0x68] sm:$0xf]
        %v890 = vld [vmem:[%s866 + $0x6c] sm:$0xff]
        %v891 = vld [vmem:[%s866 + $0x74] sm:$0xff]
        %v892 = vld [vmem:[%s866 + $0x7c] sm:$0xff]
        %v893 = vld [vmem:[%s866 + $0x84] sm:$0xff]
        %v894 = vld [vmem:[%s866 + $0x8c] sm:$0xf]
        %v895 = vld [vmem:[%s827] sm:$0xf]
        %v896 = vld [vmem:[%s827 + $0x4] sm:$0xf]
        %v897 = vld [vmem:[%s827 + $0x8] sm:$0xf]
        %v898 = vld [vmem:[%s827 + $0xc] sm:$0xf]
        %v899 = vld [vmem:[%s827 + $0x10] sm:$0xf]
        %v900 = vld [vmem:[%s827 + $0x14] sm:$0xf]
        %v901 = vld [vmem:[%s827 + $0x18] sm:$0xf]
        %v902 = vld [vmem:[%s827 + $0x1c] sm:$0xf]
        %v903 = vld [vmem:[%s827 + $0x20] sm:$0xf]
        %v904 = vld [vmem:[%s827 + $0x24] sm:$0xf]
        %v905 = vld [vmem:[%s827 + $0x28] sm:$0xf]
        %v906 = vld [vmem:[%s827 + $0x2c] sm:$0xf]
        %v907 = vld [vmem:[%s827 + $0x30] sm:$0xf]
        %v908 = vld [vmem:[%s827 + $0x34] sm:$0xf]
        %v909 = vld [vmem:[%s827 + $0x38] sm:$0xf]
        %v910 = vld [vmem:[%s827 + $0x3c] sm:$0xf]
        %v911 = vld [vmem:[%s827 + $0x40] sm:$0xf]
        %v912 = vld [vmem:[%s827 + $0x44] sm:$0xf]
        %v913 = vld [vmem:[%s827 + $0x48] sm:$0xf]
        %v914 = vld [vmem:[%s827 + $0x4c] sm:$0xf]
        %v915 = vld [vmem:[%s827 + $0x50] sm:$0xf]
        %v916 = vld [vmem:[%s827 + $0x54] sm:$0xf]
        %v917 = vld [vmem:[%s827 + $0x58] sm:$0xf]
        %v918 = vld [vmem:[%s827 + $0x5c] sm:$0xf]
        %v919 = vld [vmem:[%s827 + $0x60] sm:$0xf]
        %v920 = vld [vmem:[%s827 + $0x64] sm:$0xf]
        %v921 = vld [vmem:[%s827 + $0x68] sm:$0xf]
        %v922 = vld [vmem:[%s827 + $0x6c] sm:$0xf]
        %v923 = vld [vmem:[%s827 + $0x70] sm:$0xf]
        %v924 = vld [vmem:[%s827 + $0x74] sm:$0xf]
        %v925 = vld [vmem:[%s827 + $0x78] sm:$0xf]
        %v926 = vld [vmem:[%s827 + $0x7c] sm:$0xf]
        %v927 = vld [vmem:[%s827 + $0x80] sm:$0xf]
        %v928 = vld [vmem:[%s827 + $0x84] sm:$0xf]
        %v929 = vld [vmem:[%s827 + $0x88] sm:$0xf]
        %v930 = vld [vmem:[%s827 + $0x8c] sm:$0xf]
        %v931 = vld [vmem:[%s827 + $0x90] sm:$0xf]
        %v932 = vld [vmem:[%s827 + $0x94] sm:$0xf]
        %v933 = vld [vmem:[%s827 + $0x98] sm:$0xf]
        %v934 = vld [vmem:[%s827 + $0x9c] sm:$0xf]
        %v935 = vld [vmem:[%s827 + $0xa0] sm:$0xf]
        %v936 = vld [vmem:[%s827 + $0xa4] sm:$0xf]
        %v937 = vld [vmem:[%s827 + $0xa8] sm:$0xf]
        %v938 = vld [vmem:[%s827 + $0xac] sm:$0xf]
        %v939 = vld [vmem:[%s827 + $0xb0] sm:$0xf]
        %v940 = vld [vmem:[%s827 + $0xb4] sm:$0xf]
        %v941 = vld [vmem:[%s827 + $0xb8] sm:$0xf]
        %v942 = vld [vmem:[%s827 + $0xbc] sm:$0xf]
        %v943 = vld [vmem:[%s827 + $0xc0] sm:$0xf]
        %v944 = vld [vmem:[%s827 + $0xc4] sm:$0xf]
        %v945 = vld [vmem:[%s827 + $0xc8] sm:$0xf]
        %v946 = vld [vmem:[%s827 + $0xcc] sm:$0xf]
        %v947 = vld [vmem:[%s827 + $0xd0] sm:$0xf]
        %v948 = vld [vmem:[%s827 + $0xd4] sm:$0xf]
        %v949 = vld [vmem:[%s827 + $0xd8] sm:$0xf]
        %v950 = vld [vmem:[%s827 + $0xdc] sm:$0xf]
        %v951 = vld [vmem:[%s827 + $0xe0] sm:$0xf]
        %v952 = vld [vmem:[%s827 + $0xe4] sm:$0xf]
        %v953 = vld [vmem:[%s827 + $0xe8] sm:$0xf]
        %v954 = vld [vmem:[%s827 + $0xec] sm:$0xf]
        %v955 = vld [vmem:[%s827 + $0xf0] sm:$0xf]
        %v956 = vld [vmem:[%s827 + $0xf4] sm:$0xf]
        %v957 = vld [vmem:[%s827 + $0xf8] sm:$0xf]
        %v958 = vld [vmem:[%s827 + $0xfc] sm:$0xf]
        %v959 = vld [vmem:[%s827 + $0x100] sm:$0xf]
        %v960 = vld [vmem:[%s827 + $0x104] sm:$0xf]
        %v961 = vld [vmem:[%s827 + $0x108] sm:$0xf]
        %v962 = vld [vmem:[%s827 + $0x10c] sm:$0xf]
        %v963 = vld [vmem:[%s827 + $0x110] sm:$0xf]
        %v964 = vld [vmem:[%s827 + $0x114] sm:$0xf]
        %v965 = vld [vmem:[%s827 + $0x118] sm:$0xf]
        %v966 = vld [vmem:[%s827 + $0x11c] sm:$0xf]
        %v967 = vld [vmem:[%s827 + $0x120] sm:$0xf]
        %v968 = vld [vmem:[%s827 + $0x124] sm:$0xf]
        %v969 = vld [vmem:[%s827 + $0x128] sm:$0xf]
        %v970 = vld [vmem:[%s827 + $0x12c] sm:$0xf]
        %v971 = vld [vmem:[%s827 + $0x130] sm:$0xf]
        %v972 = vld [vmem:[%s827 + $0x134] sm:$0xf]
        %v973 = vld [vmem:[%s827 + $0x138] sm:$0xf]
        %v974 = vld [vmem:[%s827 + $0x13c] sm:$0xf]
        %v975 = vld [vmem:[%s827 + $0x140] sm:$0xf]
        %v976 = vld [vmem:[%s827 + $0x144] sm:$0xf]
        %v977 = vld [vmem:[%s827 + $0x148] sm:$0xf]
        %v978 = vld [vmem:[%s827 + $0x14c] sm:$0xf]
        %v979 = vld [vmem:[%s827 + $0x150] sm:$0xf]
        %v980 = vld [vmem:[%s827 + $0x154] sm:$0xf]
        %v981 = vld [vmem:[%s827 + $0x158] sm:$0xf]
        %v982 = vld [vmem:[%s827 + $0x15c] sm:$0xf]
        %v983 = vld [vmem:[%s827 + $0x160] sm:$0xf]
        %v984 = vld [vmem:[%s827 + $0x164] sm:$0xf]
        %v985 = vld [vmem:[%s827 + $0x168] sm:$0xf]
        %v986 = vld [vmem:[%s827 + $0x16c] sm:$0xf]
        %v987 = vld [vmem:[%s827 + $0x170] sm:$0xf]
        %v988 = vld [vmem:[%s827 + $0x174] sm:$0xf]
        %v989 = vld [vmem:[%s827 + $0x178] sm:$0xf]
        %v990 = vld [vmem:[%s827 + $0x17c] sm:$0xf]
        %v991 = vld [vmem:[%s827 + $0x180] sm:$0xf]
        %v992 = vld [vmem:[%s827 + $0x184] sm:$0xf]
        %v993 = vld [vmem:[%s827 + $0x188] sm:$0xf]
        %v994 = vld [vmem:[%s827 + $0x18c] sm:$0xf]
        %v995 = vld [vmem:[%s827 + $0x190] sm:$0xf]
        %v996 = vld [vmem:[%s827 + $0x194] sm:$0xf]
        %v997 = vld [vmem:[%s827 + $0x198] sm:$0xf]
        %v998 = vld [vmem:[%s827 + $0x19c] sm:$0xf]
        %v999 = vld [vmem:[%s827 + $0x1a0] sm:$0xf]
        %v1000 = vld [vmem:[%s827 + $0x1a4] sm:$0xf]
        %v1001 = vld [vmem:[%s827 + $0x1a8] sm:$0xf]
        %v1002 = vld [vmem:[%s827 + $0x1ac] sm:$0xf]
        %v1003 = vld [vmem:[%s827 + $0x1b0] sm:$0xf]
        %v1004 = vld [vmem:[%s827 + $0x1b4] sm:$0xf]
        %v1005 = vld [vmem:[%s827 + $0x1b8] sm:$0xf]
        %v1006 = vld [vmem:[%s827 + $0x1bc] sm:$0xf]
        %v1007 = vld [vmem:[%s827 + $0x1c0] sm:$0xf]
        %v1008 = vld [vmem:[%s827 + $0x1c4] sm:$0xf]
        %v1009 = vld [vmem:[%s827 + $0x1c8] sm:$0xf]
        %v1010 = vld [vmem:[%s827 + $0x1cc] sm:$0xf]
        %v1011 = vld [vmem:[%s827 + $0x1d0] sm:$0xf]
        %v1012 = vld [vmem:[%s827 + $0x1d4] sm:$0xf]
        %v1013 = vld [vmem:[%s827 + $0x1d8] sm:$0xf]
        %v1014 = vld [vmem:[%s827 + $0x1dc] sm:$0xf]
        %v1015 = vld [vmem:[%s827 + $0x1e0] sm:$0xf]
        %v1016 = vld [vmem:[%s827 + $0x1e4] sm:$0xf]
        %v1017 = vld [vmem:[%s827 + $0x1e8] sm:$0xf]
        %v1018 = vld [vmem:[%s827 + $0x1ec] sm:$0xf]
        %v1019 = vld [vmem:[%s827 + $0x1f0] sm:$0xf]
        %v1020 = vld [vmem:[%s827 + $0x1f4] sm:$0xf]
        %v1021 = vld [vmem:[%s827 + $0x1f8] sm:$0xf]
        %v1022 = vld [vmem:[%s827 + $0x1fc] sm:$0xf]
        %v1023 = vld [vmem:[%s827 + $0x200] sm:$0xf]
        %v1024 = vld [vmem:[%s827 + $0x204] sm:$0xf]
        %v1025 = vld [vmem:[%s827 + $0x208] sm:$0xf]
        %v1026 = vld [vmem:[%s827 + $0x20c] sm:$0xf]
        %v1027 = vld [vmem:[%s827 + $0x210] sm:$0xf]
        %v1028 = vld [vmem:[%s827 + $0x214] sm:$0xf]
        %v1029 = vld [vmem:[%s827 + $0x218] sm:$0xf]
        %v1030 = vld [vmem:[%s827 + $0x21c] sm:$0xf]
        %v1031 = vld [vmem:[%s827 + $0x220] sm:$0xf]
        %v1032 = vld [vmem:[%s827 + $0x224] sm:$0xf]
        %v1033 = vld [vmem:[%s827 + $0x228] sm:$0xf]
        %v1034 = vld [vmem:[%s827 + $0x22c] sm:$0xf]
        %v1035 = vld [vmem:[%s827 + $0x230] sm:$0xf]
        %v1036 = vld [vmem:[%s827 + $0x234] sm:$0xf]
        %v1037 = vld [vmem:[%s827 + $0x238] sm:$0xf]
        %v1038 = vld [vmem:[%s827 + $0x23c] sm:$0xf]
        %v1059 = vunpack.c.l.b16 %v875
        %v1060 = vunpack.c.h.b16 %v875
        %v1061 = vunpack.c.l.b16 %v876
        %v1062 = vunpack.c.h.b16 %v876
        %v1063 = vunpack.c.l.b16 %v877
        %v1064 = vunpack.c.h.b16 %v877
        %v1065 = vunpack.c.l.b16 %v878
        %v1066 = vunpack.c.h.b16 %v878
        %v1067 = vunpack.c.l.b16 %v879
        %v1068 = vunpack.c.l.b16 %v880
        %v1069 = vunpack.c.h.b16 %v880
        %v1070 = vunpack.c.l.b16 %v881
        %v1071 = vunpack.c.h.b16 %v881
        %v1072 = vunpack.c.l.b16 %v882
        %v1073 = vunpack.c.h.b16 %v882
        %v1074 = vunpack.c.l.b16 %v883
        %v1075 = vunpack.c.h.b16 %v883
        %v1076 = vunpack.c.l.b16 %v884
        %v1077 = vunpack.c.l.b16 %v885
        %v1078 = vunpack.c.h.b16 %v885
        %v1079 = vunpack.c.l.b16 %v886
        %v1080 = vunpack.c.h.b16 %v886
        %v1081 = vunpack.c.l.b16 %v887
        %v1082 = vunpack.c.h.b16 %v887
        %v1083 = vunpack.c.l.b16 %v888
        %v1084 = vunpack.c.h.b16 %v888
        %v1085 = vunpack.c.l.b16 %v889
        %v1086 = vunpack.c.l.b16 %v890
        %v1087 = vunpack.c.h.b16 %v890
        %v1088 = vunpack.c.l.b16 %v891
        %v1089 = vunpack.c.h.b16 %v891
        %v1090 = vunpack.c.l.b16 %v892
        %v1091 = vunpack.c.h.b16 %v892
        %v1092 = vunpack.c.l.b16 %v893
        %v1093 = vunpack.c.h.b16 %v893
        %v1094 = vunpack.c.l.b16 %v894
        %v1095 = vpack.c.b16 %v1068, %v1059
        %v1096 = vpack.c.b16 %v1069, %v1060
        %v1097 = vpack.c.b16 %v1070, %v1061
        %v1098 = vpack.c.b16 %v1071, %v1062
        %v1099 = vpack.c.b16 %v1072, %v1063
        %v1100 = vpack.c.b16 %v1073, %v1064
        %v1101 = vpack.c.b16 %v1074, %v1065
        %v1102 = vpack.c.b16 %v1075, %v1066
        %v1103 = vpack.c.b16 %v1076, %v1067
        %v1104 = vpack.c.b16 %v1086, %v1077
        %v1105 = vpack.c.b16 %v1087, %v1078
        %v1106 = vpack.c.b16 %v1088, %v1079
        %v1107 = vpack.c.b16 %v1089, %v1080
        %v1108 = vpack.c.b16 %v1090, %v1081
        %v1109 = vpack.c.b16 %v1091, %v1082
        %v1110 = vpack.c.b16 %v1092, %v1083
        %v1111 = vpack.c.b16 %v1093, %v1084
        %v1112 = vpack.c.b16 %v1094, %v1085
        %v1275 = vunpack.c.l.b16 %v895
        %v1276 = vunpack.c.l.b16 %v896
        %v1277 = vunpack.c.l.b16 %v897
        %v1278 = vunpack.c.l.b16 %v898
        %v1279 = vunpack.c.l.b16 %v899
        %v1280 = vunpack.c.l.b16 %v900
        %v1281 = vunpack.c.l.b16 %v901
        %v1282 = vunpack.c.l.b16 %v902
        %v1283 = vunpack.c.l.b16 %v903
        %v1284 = vunpack.c.l.b16 %v904
        %v1285 = vunpack.c.l.b16 %v905
        %v1286 = vunpack.c.l.b16 %v906
        %v1287 = vunpack.c.l.b16 %v907
        %v1288 = vunpack.c.l.b16 %v908
        %v1289 = vunpack.c.l.b16 %v909
        %v1290 = vunpack.c.l.b16 %v910
        %v1291 = vunpack.c.l.b16 %v911
        %v1292 = vunpack.c.l.b16 %v912
        %v1293 = vunpack.c.l.b16 %v913
        %v1294 = vunpack.c.l.b16 %v914
        %v1295 = vunpack.c.l.b16 %v915
        %v1296 = vunpack.c.l.b16 %v916
        %v1297 = vunpack.c.l.b16 %v917
        %v1298 = vunpack.c.l.b16 %v918
        %v1299 = vunpack.c.l.b16 %v919
        %v1300 = vunpack.c.l.b16 %v920
        %v1301 = vunpack.c.l.b16 %v921
        %v1302 = vunpack.c.l.b16 %v922
        %v1303 = vunpack.c.l.b16 %v923
        %v1304 = vunpack.c.l.b16 %v924
        %v1305 = vunpack.c.l.b16 %v925
        %v1306 = vunpack.c.l.b16 %v926
        %v1307 = vunpack.c.l.b16 %v927
        %v1308 = vunpack.c.l.b16 %v928
        %v1309 = vunpack.c.l.b16 %v929
        %v1310 = vunpack.c.l.b16 %v930
        %v1311 = vunpack.c.l.b16 %v931
        %v1312 = vunpack.c.l.b16 %v932
        %v1313 = vunpack.c.l.b16 %v933
        %v1314 = vunpack.c.l.b16 %v934
        %v1315 = vunpack.c.l.b16 %v935
        %v1316 = vunpack.c.l.b16 %v936
        %v1317 = vunpack.c.l.b16 %v937
        %v1318 = vunpack.c.l.b16 %v938
        %v1319 = vunpack.c.l.b16 %v939
        %v1320 = vunpack.c.l.b16 %v940
        %v1321 = vunpack.c.l.b16 %v941
        %v1322 = vunpack.c.l.b16 %v942
        %v1323 = vunpack.c.l.b16 %v943
        %v1324 = vunpack.c.l.b16 %v944
        %v1325 = vunpack.c.l.b16 %v945
        %v1326 = vunpack.c.l.b16 %v946
        %v1327 = vunpack.c.l.b16 %v947
        %v1328 = vunpack.c.l.b16 %v948
        %v1329 = vunpack.c.l.b16 %v949
        %v1330 = vunpack.c.l.b16 %v950
        %v1331 = vunpack.c.l.b16 %v951
        %v1332 = vunpack.c.l.b16 %v952
        %v1333 = vunpack.c.l.b16 %v953
        %v1334 = vunpack.c.l.b16 %v954
        %v1335 = vunpack.c.l.b16 %v955
        %v1336 = vunpack.c.l.b16 %v956
        %v1337 = vunpack.c.l.b16 %v957
        %v1338 = vunpack.c.l.b16 %v958
        %v1339 = vunpack.c.l.b16 %v959
        %v1340 = vunpack.c.l.b16 %v960
        %v1341 = vunpack.c.l.b16 %v961
        %v1342 = vunpack.c.l.b16 %v962
        %v1343 = vunpack.c.l.b16 %v963
        %v1344 = vunpack.c.l.b16 %v964
        %v1345 = vunpack.c.l.b16 %v965
        %v1346 = vunpack.c.l.b16 %v966
        %v1347 = vunpack.c.l.b16 %v967
        %v1348 = vunpack.c.l.b16 %v968
        %v1349 = vunpack.c.l.b16 %v969
        %v1350 = vunpack.c.l.b16 %v970
        %v1351 = vunpack.c.l.b16 %v971
        %v1352 = vunpack.c.l.b16 %v972
        %v1353 = vunpack.c.l.b16 %v973
        %v1354 = vunpack.c.l.b16 %v974
        %v1355 = vunpack.c.l.b16 %v975
        %v1356 = vunpack.c.l.b16 %v976
        %v1357 = vunpack.c.l.b16 %v977
        %v1358 = vunpack.c.l.b16 %v978
        %v1359 = vunpack.c.l.b16 %v979
        %v1360 = vunpack.c.l.b16 %v980
        %v1361 = vunpack.c.l.b16 %v981
        %v1362 = vunpack.c.l.b16 %v982
        %v1363 = vunpack.c.l.b16 %v983
        %v1364 = vunpack.c.l.b16 %v984
        %v1365 = vunpack.c.l.b16 %v985
        %v1366 = vunpack.c.l.b16 %v986
        %v1367 = vunpack.c.l.b16 %v987
        %v1368 = vunpack.c.l.b16 %v988
        %v1369 = vunpack.c.l.b16 %v989
        %v1370 = vunpack.c.l.b16 %v990
        %v1371 = vunpack.c.l.b16 %v991
        %v1372 = vunpack.c.l.b16 %v992
        %v1373 = vunpack.c.l.b16 %v993
        %v1374 = vunpack.c.l.b16 %v994
        %v1375 = vunpack.c.l.b16 %v995
        %v1376 = vunpack.c.l.b16 %v996
        %v1377 = vunpack.c.l.b16 %v997
        %v1378 = vunpack.c.l.b16 %v998
        %v1379 = vunpack.c.l.b16 %v999
        %v1380 = vunpack.c.l.b16 %v1000
        %v1381 = vunpack.c.l.b16 %v1001
        %v1382 = vunpack.c.l.b16 %v1002
        %v1383 = vunpack.c.l.b16 %v1003
        %v1384 = vunpack.c.l.b16 %v1004
        %v1385 = vunpack.c.l.b16 %v1005
        %v1386 = vunpack.c.l.b16 %v1006
        %v1387 = vunpack.c.l.b16 %v1007
        %v1388 = vunpack.c.l.b16 %v1008
        %v1389 = vunpack.c.l.b16 %v1009
        %v1390 = vunpack.c.l.b16 %v1010
        %v1391 = vunpack.c.l.b16 %v1011
        %v1392 = vunpack.c.l.b16 %v1012
        %v1393 = vunpack.c.l.b16 %v1013
        %v1394 = vunpack.c.l.b16 %v1014
        %v1395 = vunpack.c.l.b16 %v1015
        %v1396 = vunpack.c.l.b16 %v1016
        %v1397 = vunpack.c.l.b16 %v1017
        %v1398 = vunpack.c.l.b16 %v1018
        %v1399 = vunpack.c.l.b16 %v1019
        %v1400 = vunpack.c.l.b16 %v1020
        %v1401 = vunpack.c.l.b16 %v1021
        %v1402 = vunpack.c.l.b16 %v1022
        %v1403 = vunpack.c.l.b16 %v1023
        %v1404 = vunpack.c.l.b16 %v1024
        %v1405 = vunpack.c.l.b16 %v1025
        %v1406 = vunpack.c.l.b16 %v1026
        %v1407 = vunpack.c.l.b16 %v1027
        %v1408 = vunpack.c.l.b16 %v1028
        %v1409 = vunpack.c.l.b16 %v1029
        %v1410 = vunpack.c.l.b16 %v1030
        %v1411 = vunpack.c.l.b16 %v1031
        %v1412 = vunpack.c.l.b16 %v1032
        %v1413 = vunpack.c.l.b16 %v1033
        %v1414 = vunpack.c.l.b16 %v1034
        %v1415 = vunpack.c.l.b16 %v1035
        %v1416 = vunpack.c.l.b16 %v1036
        %v1417 = vunpack.c.l.b16 %v1037
        %v1418 = vunpack.c.l.b16 %v1038
        %v1419 = vpack.c.b16 %v1276, %v1275
        %v1420 = vpack.c.b16 %v1278, %v1277
        %v1421 = vpack.c.b16 %v1280, %v1279
        %v1422 = vpack.c.b16 %v1282, %v1281
        %v1423 = vpack.c.b16 %v1284, %v1283
        %v1424 = vpack.c.b16 %v1286, %v1285
        %v1425 = vpack.c.b16 %v1288, %v1287
        %v1426 = vpack.c.b16 %v1290, %v1289
        %v1427 = vpack.c.b16 %v1292, %v1291
        %v1428 = vpack.c.b16 %v1294, %v1293
        %v1429 = vpack.c.b16 %v1296, %v1295
        %v1430 = vpack.c.b16 %v1298, %v1297
        %v1431 = vpack.c.b16 %v1300, %v1299
        %v1432 = vpack.c.b16 %v1302, %v1301
        %v1433 = vpack.c.b16 %v1304, %v1303
        %v1434 = vpack.c.b16 %v1306, %v1305
        %v1435 = vpack.c.b16 %v1308, %v1307
        %v1436 = vpack.c.b16 %v1310, %v1309
        %v1437 = vpack.c.b16 %v1312, %v1311
        %v1438 = vpack.c.b16 %v1314, %v1313
        %v1439 = vpack.c.b16 %v1316, %v1315
        %v1440 = vpack.c.b16 %v1318, %v1317
        %v1441 = vpack.c.b16 %v1320, %v1319
        %v1442 = vpack.c.b16 %v1322, %v1321
        %v1443 = vpack.c.b16 %v1324, %v1323
        %v1444 = vpack.c.b16 %v1326, %v1325
        %v1445 = vpack.c.b16 %v1328, %v1327
        %v1446 = vpack.c.b16 %v1330, %v1329
        %v1447 = vpack.c.b16 %v1332, %v1331
        %v1448 = vpack.c.b16 %v1334, %v1333
        %v1449 = vpack.c.b16 %v1336, %v1335
        %v1450 = vpack.c.b16 %v1338, %v1337
        %v1451 = vpack.c.b16 %v1340, %v1339
        %v1452 = vpack.c.b16 %v1342, %v1341
        %v1453 = vpack.c.b16 %v1344, %v1343
        %v1454 = vpack.c.b16 %v1346, %v1345
        %v1455 = vpack.c.b16 %v1348, %v1347
        %v1456 = vpack.c.b16 %v1350, %v1349
        %v1457 = vpack.c.b16 %v1352, %v1351
        %v1458 = vpack.c.b16 %v1354, %v1353
        %v1459 = vpack.c.b16 %v1356, %v1355
        %v1460 = vpack.c.b16 %v1358, %v1357
        %v1461 = vpack.c.b16 %v1360, %v1359
        %v1462 = vpack.c.b16 %v1362, %v1361
        %v1463 = vpack.c.b16 %v1364, %v1363
        %v1464 = vpack.c.b16 %v1366, %v1365
        %v1465 = vpack.c.b16 %v1368, %v1367
        %v1466 = vpack.c.b16 %v1370, %v1369
        %v1467 = vpack.c.b16 %v1372, %v1371
        %v1468 = vpack.c.b16 %v1374, %v1373
        %v1469 = vpack.c.b16 %v1376, %v1375
        %v1470 = vpack.c.b16 %v1378, %v1377
        %v1471 = vpack.c.b16 %v1380, %v1379
        %v1472 = vpack.c.b16 %v1382, %v1381
        %v1473 = vpack.c.b16 %v1384, %v1383
        %v1474 = vpack.c.b16 %v1386, %v1385
        %v1475 = vpack.c.b16 %v1388, %v1387
        %v1476 = vpack.c.b16 %v1390, %v1389
        %v1477 = vpack.c.b16 %v1392, %v1391
        %v1478 = vpack.c.b16 %v1394, %v1393
        %v1479 = vpack.c.b16 %v1396, %v1395
        %v1480 = vpack.c.b16 %v1398, %v1397
        %v1481 = vpack.c.b16 %v1400, %v1399
        %v1482 = vpack.c.b16 %v1402, %v1401
        %v1483 = vpack.c.b16 %v1404, %v1403
        %v1484 = vpack.c.b16 %v1406, %v1405
        %v1485 = vpack.c.b16 %v1408, %v1407
        %v1486 = vpack.c.b16 %v1410, %v1409
        %v1487 = vpack.c.b16 %v1412, %v1411
        %v1488 = vpack.c.b16 %v1414, %v1413
        %v1489 = vpack.c.b16 %v1416, %v1415
        %v1490 = vpack.c.b16 %v1418, %v1417
        %1563 = vmatpush.bf16.msra.mxu0 %v1426
        %1564 = vmatpush.bf16.msra.mxu0 %v1425
        %1565 = vmatpush.bf16.msra.mxu0 %v1424
        %1566 = vmatpush.bf16.msra.mxu0 %v1423
        %1567 = vmatpush.bf16.msra.mxu0 %v1422
        %1568 = vmatpush.bf16.msra.mxu0 %v1421
        %1569 = vmatpush.bf16.msra.mxu0 %v1420
        %1570 = vmatpush.bf16.msra.mxu0 %v1419
        %1571 = vmatmul.bf16.gmra.mxu0 %v1095
        %v1572 = vpop.f32.mrf.mxu0
        %v1573 = vadd.f32 0.0, %v1572
        %v1574 = vpop.f32.mrf.mxu0
        %v1575 = vadd.f32 0.0, %v1574
        %1576 = vmatmul.bf16.gmra.mxu0 %v1104
        %v1577 = vpop.f32.mrf.mxu0
        %v1578 = vadd.f32 0.0, %v1577
        %v1579 = vpop.f32.mrf.mxu0
        %v1580 = vadd.f32 0.0, %v1579
        %1581 = vdwg.mxu0
        %1582 = vmatpush.bf16.msra.mxu0 %v1434
        %1583 = vmatpush.bf16.msra.mxu0 %v1433
        %1584 = vmatpush.bf16.msra.mxu0 %v1432
        %1585 = vmatpush.bf16.msra.mxu0 %v1431
        %1586 = vmatpush.bf16.msra.mxu0 %v1430
        %1587 = vmatpush.bf16.msra.mxu0 %v1429
        %1588 = vmatpush.bf16.msra.mxu0 %v1428
        %1589 = vmatpush.bf16.msra.mxu0 %v1427
        %1590 = vmatmul.bf16.gmra.mxu0 %v1096
        %v1591 = vpop.f32.mrf.mxu0
        %v1592 = vadd.f32 %v1573, %v1591
        %v1593 = vpop.f32.mrf.mxu0
        %v1594 = vadd.f32 %v1575, %v1593
        %1595 = vmatmul.bf16.gmra.mxu0 %v1105
        %v1596 = vpop.f32.mrf.mxu0
        %v1597 = vadd.f32 %v1578, %v1596
        %v1598 = vpop.f32.mrf.mxu0
        %v1599 = vadd.f32 %v1580, %v1598
        %1600 = vdwg.mxu0
        %1601 = vmatpush.bf16.msra.mxu0 %v1442
        %1602 = vmatpush.bf16.msra.mxu0 %v1441
        %1603 = vmatpush.bf16.msra.mxu0 %v1440
        %1604 = vmatpush.bf16.msra.mxu0 %v1439
        %1605 = vmatpush.bf16.msra.mxu0 %v1438
        %1606 = vmatpush.bf16.msra.mxu0 %v1437
        %1607 = vmatpush.bf16.msra.mxu0 %v1436
        %1608 = vmatpush.bf16.msra.mxu0 %v1435
        %1609 = vmatmul.bf16.gmra.mxu0 %v1097
        %v1610 = vpop.f32.mrf.mxu0
        %v1611 = vadd.f32 %v1592, %v1610
        %v1612 = vpop.f32.mrf.mxu0
        %v1613 = vadd.f32 %v1594, %v1612
        %1614 = vmatmul.bf16.gmra.mxu0 %v1106
        %v1615 = vpop.f32.mrf.mxu0
        %v1616 = vadd.f32 %v1597, %v1615
        %v1617 = vpop.f32.mrf.mxu0
        %v1618 = vadd.f32 %v1599, %v1617
        %1619 = vdwg.mxu0
        %1620 = vmatpush.bf16.msra.mxu0 %v1450
        %1621 = vmatpush.bf16.msra.mxu0 %v1449
        %1622 = vmatpush.bf16.msra.mxu0 %v1448
        %1623 = vmatpush.bf16.msra.mxu0 %v1447
        %1624 = vmatpush.bf16.msra.mxu0 %v1446
        %1625 = vmatpush.bf16.msra.mxu0 %v1445
        %1626 = vmatpush.bf16.msra.mxu0 %v1444
        %1627 = vmatpush.bf16.msra.mxu0 %v1443
        %1628 = vmatmul.bf16.gmra.mxu0 %v1098
        %v1629 = vpop.f32.mrf.mxu0
        %v1630 = vadd.f32 %v1611, %v1629
        %v1631 = vpop.f32.mrf.mxu0
        %v1632 = vadd.f32 %v1613, %v1631
        %1633 = vmatmul.bf16.gmra.mxu0 %v1107
        %v1634 = vpop.f32.mrf.mxu0
        %v1635 = vadd.f32 %v1616, %v1634
        %v1636 = vpop.f32.mrf.mxu0
        %v1637 = vadd.f32 %v1618, %v1636
        %1638 = vdwg.mxu0
        %1639 = vmatpush.bf16.msra.mxu0 %v1458
        %1640 = vmatpush.bf16.msra.mxu0 %v1457
        %1641 = vmatpush.bf16.msra.mxu0 %v1456
        %1642 = vmatpush.bf16.msra.mxu0 %v1455
        %1643 = vmatpush.bf16.msra.mxu0 %v1454
        %1644 = vmatpush.bf16.msra.mxu0 %v1453
        %1645 = vmatpush.bf16.msra.mxu0 %v1452
        %1646 = vmatpush.bf16.msra.mxu0 %v1451
        %1647 = vmatmul.bf16.gmra.mxu0 %v1099
        %v1648 = vpop.f32.mrf.mxu0
        %v1649 = vadd.f32 %v1630, %v1648
        %v1650 = vpop.f32.mrf.mxu0
        %v1651 = vadd.f32 %v1632, %v1650
        %1652 = vmatmul.bf16.gmra.mxu0 %v1108
        %v1653 = vpop.f32.mrf.mxu0
        %v1654 = vadd.f32 %v1635, %v1653
        %v1655 = vpop.f32.mrf.mxu0
        %v1656 = vadd.f32 %v1637, %v1655
        %1657 = vdwg.mxu0
        %1658 = vmatpush.bf16.msra.mxu0 %v1466
        %1659 = vmatpush.bf16.msra.mxu0 %v1465
        %1660 = vmatpush.bf16.msra.mxu0 %v1464
        %1661 = vmatpush.bf16.msra.mxu0 %v1463
        %1662 = vmatpush.bf16.msra.mxu0 %v1462
        %1663 = vmatpush.bf16.msra.mxu0 %v1461
        %1664 = vmatpush.bf16.msra.mxu0 %v1460
        %1665 = vmatpush.bf16.msra.mxu0 %v1459
        %1666 = vmatmul.bf16.gmra.mxu0 %v1100
        %v1667 = vpop.f32.mrf.mxu0
        %v1668 = vadd.f32 %v1649, %v1667
        %v1669 = vpop.f32.mrf.mxu0
        %v1670 = vadd.f32 %v1651, %v1669
        %1671 = vmatmul.bf16.gmra.mxu0 %v1109
        %v1672 = vpop.f32.mrf.mxu0
        %v1673 = vadd.f32 %v1654, %v1672
        %v1674 = vpop.f32.mrf.mxu0
        %v1675 = vadd.f32 %v1656, %v1674
        %1676 = vdwg.mxu0
        %1677 = vmatpush.bf16.msra.mxu0 %v1474
        %1678 = vmatpush.bf16.msra.mxu0 %v1473
        %1679 = vmatpush.bf16.msra.mxu0 %v1472
        %1680 = vmatpush.bf16.msra.mxu0 %v1471
        %1681 = vmatpush.bf16.msra.mxu0 %v1470
        %1682 = vmatpush.bf16.msra.mxu0 %v1469
        %1683 = vmatpush.bf16.msra.mxu0 %v1468
        %1684 = vmatpush.bf16.msra.mxu0 %v1467
        %1685 = vmatmul.bf16.gmra.mxu0 %v1101
        %v1686 = vpop.f32.mrf.mxu0
        %v1687 = vadd.f32 %v1668, %v1686
        %v1688 = vpop.f32.mrf.mxu0
        %v1689 = vadd.f32 %v1670, %v1688
        %1690 = vmatmul.bf16.gmra.mxu0 %v1110
        %v1691 = vpop.f32.mrf.mxu0
        %v1692 = vadd.f32 %v1673, %v1691
        %v1693 = vpop.f32.mrf.mxu0
        %v1694 = vadd.f32 %v1675, %v1693
        %1695 = vdwg.mxu0
        %1696 = vmatpush.bf16.msra.mxu0 %v1482
        %1697 = vmatpush.bf16.msra.mxu0 %v1481
        %1698 = vmatpush.bf16.msra.mxu0 %v1480
        %1699 = vmatpush.bf16.msra.mxu0 %v1479
        %1700 = vmatpush.bf16.msra.mxu0 %v1478
        %1701 = vmatpush.bf16.msra.mxu0 %v1477
        %1702 = vmatpush.bf16.msra.mxu0 %v1476
        %1703 = vmatpush.bf16.msra.mxu0 %v1475
        %1704 = vmatmul.bf16.gmra.mxu0 %v1102
        %v1705 = vpop.f32.mrf.mxu0
        %v1706 = vadd.f32 %v1687, %v1705
        %v1707 = vpop.f32.mrf.mxu0
        %v1708 = vadd.f32 %v1689, %v1707
        %1709 = vmatmul.bf16.gmra.mxu0 %v1111
        %v1710 = vpop.f32.mrf.mxu0
        %v1711 = vadd.f32 %v1692, %v1710
        %v1712 = vpop.f32.mrf.mxu0
        %v1713 = vadd.f32 %v1694, %v1712
        %1714 = vdwg.mxu0
        %1715 = vmatpush.bf16.msra.mxu0 %v1490
        %1716 = vmatpush.bf16.msra.mxu0 %v1489
        %1717 = vmatpush.bf16.msra.mxu0 %v1488
        %1718 = vmatpush.bf16.msra.mxu0 %v1487
        %1719 = vmatpush.bf16.msra.mxu0 %v1486
        %1720 = vmatpush.bf16.msra.mxu0 %v1485
        %1721 = vmatpush.bf16.msra.mxu0 %v1484
        %1722 = vmatpush.bf16.msra.mxu0 %v1483
        %1723 = vmatmul.bf16.gmra.mxu0 %v1103
        %v1724 = vpop.f32.mrf.mxu0
        %v1725 = vadd.f32 %v1706, %v1724
        %v1726 = vpop.f32.mrf.mxu0
        %v1727 = vadd.f32 %v1708, %v1726
        %1728 = vmatmul.bf16.gmra.mxu0 %v1112
        %v1729 = vpop.f32.mrf.mxu0
        %v1730 = vadd.f32 %v1711, %v1729
        %v1731 = vpop.f32.mrf.mxu0
        %v1732 = vadd.f32 %v1713, %v1731
        %1733 = vdwg.mxu0
        %v1734 = vld [vmem:[%s870] sm:$0x1]
        %v1736 = vperm.slane %v1734, 0
        %v1738 = vmul.f32 %v1725, %v1736
        %v1739 = vmul.f32 %v1727, %v1736
        %v1740 = vmul.f32 %v1730, %v1736
        %v1741 = vmul.f32 %v1732, %v1736
        %v1742 = vld [vmem:[%s873] sm:$0x1]
        %v1744 = vperm.slane %v1742, 0
        %v1746 = vadd.f32 %v1738, %v1744
        %v1747 = vadd.f32 %v1739, %v1744
        %v1748 = vadd.f32 %v1740, %v1744
        %v1749 = vadd.f32 %v1741, %v1744
        %v1750 = vmax.f32 %v1746, 0.0
        %v1751 = vmax.f32 %v1747, 0.0
        %v1752 = vmax.f32 %v1748, 0.0
        %v1753 = vmax.f32 %v1749, 0.0
        %v1754 = vpack.c.bf16 %v1750, %v1750
        %v1755 = vpack.c.bf16 %v1751, %v1751
        %v1756 = vpack.c.bf16 %v1752, %v1752
        %v1757 = vpack.c.bf16 %v1753, %v1753
        %1758 = vst [vmem:[%s860] sm:$0xf] %v1754
        %1759 = vst [vmem:[%s860 + $0x4] sm:$0xf] %v1755
        %1760 = vst [vmem:[%s860 + $0x8] sm:$0xf] %v1756
        %1761 = vst [vmem:[%s860 + $0xc] sm:$0xf] %v1757
        %s1762 = sand.u32 %s141, 1
        %s1763 = sand.u32 %s141, 1
        %s1764 = smul.addr %s1763, 16
        %s1765 = scalar_lea.vmem [#allocation3], %s1764
        // Predicated region
        $region78: #{embedding_layer_forward.7} parent=72 // pred_check
          %p1766 = pneg %p151
        $region79: #{embedding_layer_forward.7} parent=72 // pred_check_branch
          %1768 = sbr.rel (%p1766) target = $region81
        $region80: #{embedding_layer_forward.7} parent=72 // pred_region
          %s1769 = smul.u32 4, %s19
          %s1770 = smul.addr %s1769, 2
          %s1771 = sadd.s32 %s20, %s1770
          %s1772 = smul.addr %s1771, 4
          %s1773 = scalar_lea.vmem %s4, %s1772
          // Predicated region
          $region82: #{embedding_layer_forward.7} parent=80 // pred_check
            _
          $region83: #{embedding_layer_forward.7} parent=80 // pred_check_branch
            %1775 = sbr.rel (0) target = $region85
          $region84: #{embedding_layer_forward.7} parent=80 // pred_region
            // Predicated region
            $region86: #{embedding_layer_forward.7} parent=84 // pred_check
              _
            $region87: #{embedding_layer_forward.7} parent=84 // pred_check_branch
              %1777 = sbr.rel target = $region89
            $region88: #{embedding_layer_forward.7} parent=84 // pred_region
              // Predicated region
              $region101: #{embedding_layer_forward.7} parent=88 // pred_check
                _
              $region102: #{embedding_layer_forward.7} parent=88 // pred_check_branch
                %1799 = sbr.rel (0) target = $region104
              $region103: #{embedding_layer_forward.7} parent=88 // pred_region
                loop: start=0, step=1, limit=1
                $region105: #{embedding_layer_forward.7} parent=103 // loop_pre_header
                  _
                $region106: #{embedding_layer_forward.7} parent=103 // loop_header
                  %s1801 = sphi 0, %s1805
                  %p1802 = scmp.ge.s32.totalorder %s1801, 1
                  %s1806 = sphi %s1765, %s1765
                  %s1807 = sphi %s1773, %s1773
                $region107: #{embedding_layer_forward.7} parent=103 // loop_header_branch
                  %1804 = sbr.rel (%p1802) target = $region111
                $region108: #{embedding_layer_forward.7} parent=103 // loop_body
                  _
                $region109: #{embedding_layer_forward.7} parent=103 // loop_footer
                  %s1805 = sadd.s32 1, %s1801
                $region110: #{embedding_layer_forward.7} parent=103 // loop_footer_branch
                  %1800 = sbr.rel target = $region106
                $region111: #{embedding_layer_forward.7} parent=103 // loop_exit
                  _
                %s1809 = ssub.s32 16, 1
                loop: start=0, step=1, limit=1
                $region112: #{embedding_layer_forward.7} parent=103 // loop_pre_header
                  _
                $region113: #{embedding_layer_forward.7} parent=103 // loop_header
                  %s1811 = sphi 0, %s1815
                  %p1812 = scmp.ge.s32.totalorder %s1811, 1
                  %s1816 = sphi %s1765, %s1765
                  %s1817 = sphi %s1773, %s1773
                $region114: #{embedding_layer_forward.7} parent=103 // loop_header_branch
                  %1814 = sbr.rel (%p1812) target = $region118
                $region115: #{embedding_layer_forward.7} parent=103 // loop_body
                  %v1818 = vld [vmem:[%s1816] sm:%s1809]
                  %1819 = vst [vmem:[%s1817] sm:%s1809] %v1818
                  %v1820 = vld [vmem:[%s1816 + $0x4] sm:%s1809]
                  %1821 = vst [vmem:[%s1817 + $0x8] sm:%s1809] %v1820
                  %v1822 = vld [vmem:[%s1816 + $0x8] sm:%s1809]
                  %1823 = vst [vmem:[%s1817 + $0x10] sm:%s1809] %v1822
                  %v1824 = vld [vmem:[%s1816 + $0xc] sm:%s1809]
                  %1825 = vst [vmem:[%s1817 + $0x18] sm:%s1809] %v1824
                $region116: #{embedding_layer_forward.7} parent=103 // loop_footer
                  %s1815 = sadd.s32 1, %s1811
                $region117: #{embedding_layer_forward.7} parent=103 // loop_footer_branch
                  %1810 = sbr.rel target = $region113
                $region118: #{embedding_layer_forward.7} parent=103 // loop_exit
                  _
              $region104: #{embedding_layer_forward.7} parent=88 // pred_fallthru
                _
            $region89: #{embedding_layer_forward.7} parent=84 // pred_fallthru
              _
            // Predicated region
            $region90: #{embedding_layer_forward.7} parent=84 // pred_check
              _
            $region91: #{embedding_layer_forward.7} parent=84 // pred_check_branch
              %1779 = sbr.rel (0) target = $region93
            $region92: #{embedding_layer_forward.7} parent=84 // pred_region
              %s1781 = ssub.s32 16, 1
              loop: start=0, step=1, limit=1
              $region94: #{embedding_layer_forward.7} parent=92 // loop_pre_header
                _
              $region95: #{embedding_layer_forward.7} parent=92 // loop_header
                %s1783 = sphi 0, %s1787
                %p1784 = scmp.ge.s32.totalorder %s1783, 1
                %s1788 = sphi %s1765, %s1765
                %s1789 = sphi %s1773, %s1773
              $region96: #{embedding_layer_forward.7} parent=92 // loop_header_branch
                %1786 = sbr.rel (%p1784) target = $region100
              $region97: #{embedding_layer_forward.7} parent=92 // loop_body
                %v1790 = vld [vmem:[%s1788] sm:%s1781]
                %1791 = vst [vmem:[%s1789] sm:%s1781] %v1790
                %v1792 = vld [vmem:[%s1788 + $0x4] sm:%s1781]
                %1793 = vst [vmem:[%s1789 + $0x8] sm:%s1781] %v1792
                %v1794 = vld [vmem:[%s1788 + $0x8] sm:%s1781]
                %1795 = vst [vmem:[%s1789 + $0x10] sm:%s1781] %v1794
                %v1796 = vld [vmem:[%s1788 + $0xc] sm:%s1781]
                %1797 = vst [vmem:[%s1789 + $0x18] sm:%s1781] %v1796
              $region98: #{embedding_layer_forward.7} parent=92 // loop_footer
                %s1787 = sadd.s32 1, %s1783
              $region99: #{embedding_layer_forward.7} parent=92 // loop_footer_branch
                %1782 = sbr.rel target = $region95
              $region100: #{embedding_layer_forward.7} parent=92 // loop_exit
                _
            $region93: #{embedding_layer_forward.7} parent=84 // pred_fallthru
              _
          $region85: #{embedding_layer_forward.7} parent=80 // pred_fallthru
            _
          %1826 = vnop
        $region81: #{embedding_layer_forward.7} parent=72 // pred_fallthru
          _
      $region73: #{embedding_layer_forward.7} parent=5 // pred_fallthru
        _
      %p1827 = scmp.le.s32.totalorder 2, %s10
      // Predicated region
      $region119: #{embedding_layer_forward.7} parent=5 // pred_check
        %p1828 = pneg %p1827
      $region120: #{embedding_layer_forward.7} parent=5 // pred_check_branch
        %1830 = sbr.rel (%p1828) target = $region122
      $region121: #{embedding_layer_forward.7} parent=5 // pred_region
        %s1831 = ssub.s32 %s10, 2
        // Predicated region
        $region123: #{embedding_layer_forward.7} parent=121 // pred_check
          %p1832 = pneg %p157
        $region124: #{embedding_layer_forward.7} parent=121 // pred_check_branch
          %1834 = sbr.rel (%p1832) target = $region126
        $region125: #{embedding_layer_forward.7} parent=121 // pred_region
          %s1835 = sand.u32 %s142, 1
          %s1836 = sand.u32 %s142, 1
          %s1837 = smul.addr %s1836, 16
          %s1838 = scalar_lea.vmem [#allocation3], %s1837
        $region126: #{embedding_layer_forward.7} parent=121 // pred_fallthru
          _
      $region122: #{embedding_layer_forward.7} parent=5 // pred_fallthru
        _
    $region6: #{embedding_layer_forward.7} parent=1 // loop_footer
      %s14 = sadd.s32 1, %s10
    $region7: #{embedding_layer_forward.7} parent=1 // loop_footer_branch
      %9 = sbr.rel target = $region3
    $region8: #{embedding_layer_forward.7} parent=1 // loop_exit
      _

// kernel: tile.9
$region0: #{tile.9}
  %s0 = inlined_call_operand.vmem [shape: f32[2,4,768], index: 0, kind: input, shape index: {}]
  %s1 = inlined_call_operand.vmem [shape: f32[8,768], index: 1, kind: output, shape index: {}]
  $region1: #{tile.9} parent=0
    #allocation0 [shape = 'u8[49152]{0}', space=vmem, size = 0xc000, scoped, tag = 'scoped mem for input reshape']
    %s3 = ssub.s32 16, 1
    %s4 = scalar_lea.vmem %s0, 44
    %v5 = vld [vmem:[%s4] sm:%s3]
    %s6 = scalar_lea.vmem [#allocation0], 88
    %7 = vst [vmem:[%s6] sm:%s3] %v5
    %s8 = scalar_lea.vmem %s0, 40
    %v9 = vld [vmem:[%s8] sm:%s3]
    %s10 = scalar_lea.vmem [#allocation0], 80
    %11 = vst [vmem:[%s10] sm:%s3] %v9
    %s12 = scalar_lea.vmem %s0, 36
    %v13 = vld [vmem:[%s12] sm:%s3]
    %s14 = scalar_lea.vmem [#allocation0], 72
    %15 = vst [vmem:[%s14] sm:%s3] %v13
    %s16 = scalar_lea.vmem %s0, 32
    %v17 = vld [vmem:[%s16] sm:%s3]
    %s18 = scalar_lea.vmem [#allocation0], 64
    %19 = vst [vmem:[%s18] sm:%s3] %v17
    %s20 = scalar_lea.vmem %s0, 28
    %v21 = vld [vmem:[%s20] sm:%s3]
    %s22 = scalar_lea.vmem [#allocation0], 56
    %23 = vst [vmem:[%s22] sm:%s3] %v21
    %s24 = scalar_lea.vmem %s0, 24
    %v25 = vld [vmem:[%s24] sm:%s3]
    %s26 = scalar_lea.vmem [#allocation0], 48
    %27 = vst [vmem:[%s26] sm:%s3] %v25
    %s28 = scalar_lea.vmem %s0, 20
    %v29 = vld [vmem:[%s28] sm:%s3]
    %s30 = scalar_lea.vmem [#allocation0], 40
    %31 = vst [vmem:[%s30] sm:%s3] %v29
    %s32 = scalar_lea.vmem %s0, 16
    %v33 = vld [vmem:[%s32] sm:%s3]
    %s34 = scalar_lea.vmem [#allocation0], 32
    %35 = vst [vmem:[%s34] sm:%s3] %v33
    %s36 = scalar_lea.vmem %s0, 12
    %v37 = vld [vmem:[%s36] sm:%s3]
    %s38 = scalar_lea.vmem [#allocation0], 24
    %39 = vst [vmem:[%s38] sm:%s3] %v37
    %s40 = scalar_lea.vmem %s0, 8
    %v41 = vld [vmem:[%s40] sm:%s3]
    %s42 = scalar_lea.vmem [#allocation0], 16
    %43 = vst [vmem:[%s42] sm:%s3] %v41
    %s44 = scalar_lea.vmem %s0, 4
    %v45 = vld [vmem:[%s44] sm:%s3]
    %s46 = scalar_lea.vmem [#allocation0], 8
    %47 = vst [vmem:[%s46] sm:%s3] %v45
    %v48 = vld [vmem:[%s0] sm:%s3]
    %49 = vst [vmem:[#allocation0] sm:%s3] %v48
    %v50 = vld [vmem:[#allocation0] sm:$0xf]
    %51 = vst [vmem:[%s1] sm:$0xf] %v50
    %s52 = scalar_lea.vmem [#allocation0], 8
    %v53 = vld [vmem:[%s52] sm:$0xf]
    %s54 = scalar_lea.vmem %s1, 8
    %55 = vst [vmem:[%s54] sm:$0xf] %v53
    %s56 = scalar_lea.vmem [#allocation0], 16
    %v57 = vld [vmem:[%s56] sm:$0xf]
    %s58 = scalar_lea.vmem %s1, 16
    %59 = vst [vmem:[%s58] sm:$0xf] %v57
    %s60 = scalar_lea.vmem [#allocation0], 24
    %v61 = vld [vmem:[%s60] sm:$0xf]
    %s62 = scalar_lea.vmem %s1, 24
    %63 = vst [vmem:[%s62] sm:$0xf] %v61
    %s64 = scalar_lea.vmem [#allocation0], 32
    %v65 = vld [vmem:[%s64] sm:$0xf]
    %s66 = scalar_lea.vmem %s1, 32
    %67 = vst [vmem:[%s66] sm:$0xf] %v65
    %s68 = scalar_lea.vmem [#allocation0], 40
    %v69 = vld [vmem:[%s68] sm:$0xf]
    %s70 = scalar_lea.vmem %s1, 40
    %71 = vst [vmem:[%s70] sm:$0xf] %v69
    %s72 = scalar_lea.vmem [#allocation0], 48
    %v73 = vld [vmem:[%s72] sm:$0xf]
    %s74 = scalar_lea.vmem %s1, 4
    %75 = vst [vmem:[%s74] sm:$0xf] %v73
    %s76 = scalar_lea.vmem [#allocation0], 56
    %v77 = vld [vmem:[%s76] sm:$0xf]
    %s78 = scalar_lea.vmem %s1, 12
    %79 = vst [vmem:[%s78] sm:$0xf] %v77
    %s80 = scalar_lea.vmem [#allocation0], 64
    %v81 = vld [vmem:[%s80] sm:$0xf]
    %s82 = scalar_lea.vmem %s1, 20
    %83 = vst [vmem:[%s82] sm:$0xf] %v81
    %s84 = scalar_lea.vmem [#allocation0], 72
    %v85 = vld [vmem:[%s84] sm:$0xf]
    %s86 = scalar_lea.vmem %s1, 28
    %87 = vst [vmem:[%s86] sm:$0xf] %v85
    %s88 = scalar_lea.vmem [#allocation0], 80
    %v89 = vld [vmem:[%s88] sm:$0xf]
    %s90 = scalar_lea.vmem %s1, 36
    %91 = vst [vmem:[%s90] sm:$0xf] %v89
    %s92 = scalar_lea.vmem [#allocation0], 88
    %v93 = vld [vmem:[%s92] sm:$0xf]
    %s94 = scalar_lea.vmem %s1, 44
    %95 = vst [vmem:[%s94] sm:$0xf] %v93

// kernel: embedding_layer_forward.8
$region0: #{embedding_layer_forward.8}
  #allocation0 [shape = 'u32[]', space=smem, size = 0x4, offset = 0x4, fixed_abs, tag = 'smem constant byte address 0x4 - core index']
  #allocation1 [shape = 'u32[72,128]{1,0:T(1,128)}', space=vmem, size = 0x9000, scoped, tag = 'internal scratch']
  %s0 = inlined_call_operand.vmem [shape: bf16[16,2304], index: 0, kind: input, shape index: {}]
  %s1 = inlined_call_operand.vmem [shape: bf16[2304,384], index: 1, kind: input, shape index: {}]
  %s2 = inlined_call_operand.vmem [shape: f32[1,384], index: 2, kind: input, shape index: {}]
  %s3 = inlined_call_operand.vmem [shape: f32[1,384], index: 3, kind: input, shape index: {}]
  %s4 = inlined_call_operand.vmem [shape: bf16[16,384], index: 4, kind: output, shape index: {}]
  %s5 = sld [smem:[#allocation0]]
  $region138: #{embedding_layer_forward.8} parent=0
    _
  %s7 = ssub.s32 1, %s5
  %s8 = scalar_select 0, %s7, %s5
  $region1: #{embedding_layer_forward.8} parent=0
    #allocation2 [shape = 'u8[1179648]{0}', space=vmem, size = 0x120000, scoped, tag = 'input window, operand 1']
    #allocation3 [shape = 'u8[8192]{0}', space=vmem, size = 0x2000, scoped, tag = 'output window, operand 0']
    loop: start=0, step=1, limit=5
    $region2: #{embedding_layer_forward.8} parent=1 // loop_pre_header
      _
    $region3: #{embedding_layer_forward.8} parent=1 // loop_header
      %s10 = sphi 0, %s14
      %p11 = scmp.ge.s32.totalorder %s10, 5
      %s17 = sphi 0, %s29
      %s18 = sphi 0, %s25
      %s19 = sphi 0, %s17
      %s20 = sphi 0, %s18
      %s21 = sphi 0, %s19
      %s22 = sphi 0, %s20
      %s32 = sphi 0, %s34
      %s35 = sphi 0, %s32
      %s36 = sphi 0, %s35
      %s52 = sphi 0, %s36
      %s58 = sphi 0, %s60
      %s61 = sphi 0, %s58
      %s62 = sphi 0, %s61
      %s78 = sphi 0, %s62
      %s84 = sphi 0, %s86
      %s87 = sphi 0, %s84
      %s88 = sphi 0, %s87
      %s104 = sphi 0, %s88
      %s110 = sphi 0, %s112
      %s113 = sphi 0, %s110
      %s114 = sphi 0, %s113
      %s130 = sphi 0, %s114
      %s138 = sphi 0, %s140
      %s141 = sphi 0, %s138
      %s142 = sphi 0, %s141
      %s158 = sphi 0, %s142
    $region4: #{embedding_layer_forward.8} parent=1 // loop_header_branch
      %13 = sbr.rel (%p11) target = $region8
    $region5: #{embedding_layer_forward.8} parent=1 // loop_body
      %s15 = ssub.s32 %s10, 1
      %s16 = ssub.s32 %s10, 2
      %s23 = sadd.s32 1, %s18
      %p24 = scmp.ge.s32.totalorder %s23, 3
      %s25 = scalar_select %p24, 0, %s23
      %s26 = sadd.s32 1, %s17
      %s27 = scalar_select %p24, %s26, %s17
      %p28 = scmp.ge.s32.totalorder %s27, 1
      %s29 = scalar_select %p28, 0, %s27
      %s30 = ssub.s32 %s17, %s29
      %p31 = scmp.eq.s32.totalorder %s30, 0
      %s33 = sadd.s32 %s32, 1
      %s34 = scalar_select %p31, %s32, %s33
      %p37 = pneg %p31
      %p38 = scmp.eq.s32.totalorder %s10, 2
      %p39 = por %p37, %p38
      %p40 = scmp.ne.s32.totalorder %s32, %s35
      %p41 = scmp.eq.s32.totalorder %s10, 0
      %p42 = por %p40, %p41
      %p43 = scmp.ne.s32.totalorder %s32, %s35
      %p44 = scmp.eq.s32.totalorder %s15, 2
      %p45 = por %p43, %p44
      %p46 = scmp.ne.s32.totalorder %s35, %s36
      %p47 = scmp.eq.s32.totalorder %s15, 0
      %p48 = por %p46, %p47
      %p49 = scmp.ne.s32.totalorder %s35, %s36
      %p50 = scmp.eq.s32.totalorder %s16, 2
      %p51 = por %p49, %p50
      %p53 = scmp.ne.s32.totalorder %s36, %s52
      %p54 = scmp.eq.s32.totalorder %s16, 0
      %p55 = por %p53, %p54
      %s56 = ssub.s32 %s18, %s25
      %p57 = scmp.eq.s32.totalorder %s56, 0
      %s59 = sadd.s32 %s58, 1
      %s60 = scalar_select %p57, %s58, %s59
      %p63 = pneg %p57
      %p64 = scmp.eq.s32.totalorder %s10, 2
      %p65 = por %p63, %p64
      %p66 = scmp.ne.s32.totalorder %s58, %s61
      %p67 = scmp.eq.s32.totalorder %s10, 0
      %p68 = por %p66, %p67
      %p69 = scmp.ne.s32.totalorder %s58, %s61
      %p70 = scmp.eq.s32.totalorder %s15, 2
      %p71 = por %p69, %p70
      %p72 = scmp.ne.s32.totalorder %s61, %s62
      %p73 = scmp.eq.s32.totalorder %s15, 0
      %p74 = por %p72, %p73
      %p75 = scmp.ne.s32.totalorder %s61, %s62
      %p76 = scmp.eq.s32.totalorder %s16, 2
      %p77 = por %p75, %p76
      %p79 = scmp.ne.s32.totalorder %s62, %s78
      %p80 = scmp.eq.s32.totalorder %s16, 0
      %p81 = por %p79, %p80
      %s82 = ssub.s32 %s18, %s25
      %p83 = scmp.eq.s32.totalorder %s82, 0
      %s85 = sadd.s32 %s84, 1
      %s86 = scalar_select %p83, %s84, %s85
      %p89 = pneg %p83
      %p90 = scmp.eq.s32.totalorder %s10, 2
      %p91 = por %p89, %p90
      %p92 = scmp.ne.s32.totalorder %s84, %s87
      %p93 = scmp.eq.s32.totalorder %s10, 0
      %p94 = por %p92, %p93
      %p95 = scmp.ne.s32.totalorder %s84, %s87
      %p96 = scmp.eq.s32.totalorder %s15, 2
      %p97 = por %p95, %p96
      %p98 = scmp.ne.s32.totalorder %s87, %s88
      %p99 = scmp.eq.s32.totalorder %s15, 0
      %p100 = por %p98, %p99
      %p101 = scmp.ne.s32.totalorder %s87, %s88
      %p102 = scmp.eq.s32.totalorder %s16, 2
      %p103 = por %p101, %p102
      %p105 = scmp.ne.s32.totalorder %s88, %s104
      %p106 = scmp.eq.s32.totalorder %s16, 0
      %p107 = por %p105, %p106
      %s108 = ssub.s32 %s18, %s25
      %p109 = scmp.eq.s32.totalorder %s108, 0
      %s111 = sadd.s32 %s110, 1
      %s112 = scalar_select %p109, %s110, %s111
      %p115 = pneg %p109
      %p116 = scmp.eq.s32.totalorder %s10, 2
      %p117 = por %p115, %p116
      %p118 = scmp.ne.s32.totalorder %s110, %s113
      %p119 = scmp.eq.s32.totalorder %s10, 0
      %p120 = por %p118, %p119
      %p121 = scmp.ne.s32.totalorder %s110, %s113
      %p122 = scmp.eq.s32.totalorder %s15, 2
      %p123 = por %p121, %p122
      %p124 = scmp.ne.s32.totalorder %s113, %s114
      %p125 = scmp.eq.s32.totalorder %s15, 0
      %p126 = por %p124, %p125
      %p127 = scmp.ne.s32.totalorder %s113, %s114
      %p128 = scmp.eq.s32.totalorder %s16, 2
      %p129 = por %p127, %p128
      %p131 = scmp.ne.s32.totalorder %s114, %s130
      %p132 = scmp.eq.s32.totalorder %s16, 0
      %p133 = por %p131, %p132
      %s134 = ssub.s32 %s17, %s29
      %s135 = ssub.s32 %s18, %s25
      %s136 = sor.u32 %s134, %s135
      %p137 = scmp.eq.s32.totalorder %s136, 0
      %s139 = sadd.s32 %s138, 1
      %s140 = scalar_select %p137, %s138, %s139
      %p143 = pneg %p137
      %p144 = scmp.eq.s32.totalorder %s10, 2
      %p145 = por %p143, %p144
      %p146 = scmp.ne.s32.totalorder %s138, %s141
      %p147 = scmp.eq.s32.totalorder %s10, 0
      %p148 = por %p146, %p147
      %p149 = scmp.ne.s32.totalorder %s138, %s141
      %p150 = scmp.eq.s32.totalorder %s15, 2
      %p151 = por %p149, %p150
      %p152 = scmp.ne.s32.totalorder %s141, %s142
      %p153 = scmp.eq.s32.totalorder %s15, 0
      %p154 = por %p152, %p153
      %p155 = scmp.ne.s32.totalorder %s141, %s142
      %p156 = scmp.eq.s32.totalorder %s16, 2
      %p157 = por %p155, %p156
      %p159 = scmp.ne.s32.totalorder %s142, %s158
      %p160 = scmp.eq.s32.totalorder %s16, 0
      %p161 = por %p159, %p160
      %p162 = scmp.le.s32.totalorder 1, %s10
      %p163 = scmp.lt.s32.totalorder %s10, 4
      %p164 = pnand %p162, %p163
      %p165 = pneg %p164
      // Predicated region
      $region9: #{embedding_layer_forward.8} parent=5 // pred_check
        _
      $region10: #{embedding_layer_forward.8} parent=5 // pred_check_branch
        %167 = sbr.rel (%p164) target = $region12
      $region11: #{embedding_layer_forward.8} parent=5 // pred_region
        %s168 = ssub.s32 %s10, 1
        // Predicated region
        $region13: #{embedding_layer_forward.8} parent=11 // pred_check
          %p169 = pneg %p48
        $region14: #{embedding_layer_forward.8} parent=11 // pred_check_branch
          %171 = sbr.rel (%p169) target = $region16
        $region15: #{embedding_layer_forward.8} parent=11 // pred_region
          %s172 = smul.u32 2, %s19
          %p173 = scmp.lt.s32.totalorder %s172, 1
          %s174 = scalar_select %p173, %s172, 1
          %s175 = smul.addr %s174, 18
          %s176 = smul.addr %s175, 4
          %s177 = scalar_lea.vmem %s0, %s176
          %s178 = smul.u32 2, %s19
        $region16: #{embedding_layer_forward.8} parent=11 // pred_fallthru
          _
      $region12: #{embedding_layer_forward.8} parent=5 // pred_fallthru
        _
      %p179 = scmp.lt.s32.totalorder %s10, 3
      // Predicated region
      $region17: #{embedding_layer_forward.8} parent=5 // pred_check
        %p180 = pneg %p179
      $region18: #{embedding_layer_forward.8} parent=5 // pred_check_branch
        %182 = sbr.rel (%p180) target = $region20
      $region19: #{embedding_layer_forward.8} parent=5 // pred_region
        // Predicated region
        $region21: #{embedding_layer_forward.8} parent=19 // pred_check
          %p183 = pneg %p68
        $region22: #{embedding_layer_forward.8} parent=19 // pred_check_branch
          %185 = sbr.rel (%p183) target = $region24
        $region23: #{embedding_layer_forward.8} parent=19 // pred_region
          %s186 = sand.u32 %s58, 1
          %s187 = sand.u32 %s58, 1
          %s188 = smul.addr %s187, 1152
          %s189 = scalar_lea.vmem [#allocation2], %s188
          %s190 = smul.addr %s18, 4
          %s191 = scalar_lea.vmem %s1, %s190
          // Predicated region
          $region25: #{embedding_layer_forward.8} parent=23 // pred_check
            _
          $region26: #{embedding_layer_forward.8} parent=23 // pred_check_branch
            %193 = sbr.rel (0) target = $region28
          $region27: #{embedding_layer_forward.8} parent=23 // pred_region
            // Predicated region
            $region29: #{embedding_layer_forward.8} parent=27 // pred_check
              _
            $region30: #{embedding_layer_forward.8} parent=27 // pred_check_branch
              %195 = sbr.rel target = $region32
            $region31: #{embedding_layer_forward.8} parent=27 // pred_region
              // Predicated region
              $region44: #{embedding_layer_forward.8} parent=31 // pred_check
                _
              $region45: #{embedding_layer_forward.8} parent=31 // pred_check_branch
                %785 = sbr.rel target = $region47
              $region46: #{embedding_layer_forward.8} parent=31 // pred_region
                loop: start=0, step=1, limit=0
                $region48: #{embedding_layer_forward.8} parent=46 // loop_pre_header
                  _
                $region49: #{embedding_layer_forward.8} parent=46 // loop_header
                  %s787 = sphi 0, %s791
                  %p788 = scmp.ge.s32.totalorder %s787, 0
                  %s792 = sphi 0, %s1373
                  %s793 = sphi %s191, %s1376
                  %s794 = sphi %s189, %s1377
                $region50: #{embedding_layer_forward.8} parent=46 // loop_header_branch
                  %790 = sbr.rel (%p788) target = $region54
                $region51: #{embedding_layer_forward.8} parent=46 // loop_body
                  %v795 = vld [vmem:[%s793] sm:$0xff]
                  %796 = vst [vmem:[%s794] sm:$0xff] %v795
                  %v797 = vld [vmem:[%s793 + $0xc] sm:$0xff]
                  %798 = vst [vmem:[%s794 + $0x4] sm:$0xff] %v797
                  %v799 = vld [vmem:[%s793 + $0x18] sm:$0xff]
                  %800 = vst [vmem:[%s794 + $0x8] sm:$0xff] %v799
                  %v801 = vld [vmem:[%s793 + $0x24] sm:$0xff]
                  %802 = vst [vmem:[%s794 + $0xc] sm:$0xff] %v801
                  %v803 = vld [vmem:[%s793 + $0x30] sm:$0xff]
                  %804 = vst [vmem:[%s794 + $0x10] sm:$0xff] %v803
                  %v805 = vld [vmem:[%s793 + $0x3c] sm:$0xff]
                  %806 = vst [vmem:[%s794 + $0x14] sm:$0xff] %v805
                  %v807 = vld [vmem:[%s793 + $0x48] sm:$0xff]
                  %808 = vst [vmem:[%s794 + $0x18] sm:$0xff] %v807
                  %v809 = vld [vmem:[%s793 + $0x54] sm:$0xff]
                  %810 = vst [vmem:[%s794 + $0x1c] sm:$0xff] %v809
                  %v811 = vld [vmem:[%s793 + $0x60] sm:$0xff]
                  %812 = vst [vmem:[%s794 + $0x20] sm:$0xff] %v811
                  %v813 = vld [vmem:[%s793 + $0x6c] sm:$0xff]
                  %814 = vst [vmem:[%s794 + $0x24] sm:$0xff] %v813
                  %v815 = vld [vmem:[%s793 + $0x78] sm:$0xff]
                  %816 = vst [vmem:[%s794 + $0x28] sm:$0xff] %v815
                  %v817 = vld [vmem:[%s793 + $0x84] sm:$0xff]
                  %818 = vst [vmem:[%s794 + $0x2c] sm:$0xff] %v817
                  %v819 = vld [vmem:[%s793 + $0x90] sm:$0xff]
                  %820 = vst [vmem:[%s794 + $0x30] sm:$0xff] %v819
                  %v821 = vld [vmem:[%s793 + $0x9c] sm:$0xff]
                  %822 = vst [vmem:[%s794 + $0x34] sm:$0xff] %v821
                  %v823 = vld [vmem:[%s793 + $0xa8] sm:$0xff]
                  %824 = vst [vmem:[%s794 + $0x38] sm:$0xff] %v823
                  %v825 = vld [vmem:[%s793 + $0xb4] sm:$0xff]
                  %826 = vst [vmem:[%s794 + $0x3c] sm:$0xff] %v825
                  %v827 = vld [vmem:[%s793 + $0xc0] sm:$0xff]
                  %828 = vst [vmem:[%s794 + $0x40] sm:$0xff] %v827
                  %v829 = vld [vmem:[%s793 + $0xcc] sm:$0xff]
                  %830 = vst [vmem:[%s794 + $0x44] sm:$0xff] %v829
                  %v831 = vld [vmem:[%s793 + $0xd8] sm:$0xff]
                  %832 = vst [vmem:[%s794 + $0x48] sm:$0xff] %v831
                  %v833 = vld [vmem:[%s793 + $0xe4] sm:$0xff]
                  %834 = vst [vmem:[%s794 + $0x4c] sm:$0xff] %v833
                  %v835 = vld [vmem:[%s793 + $0xf0] sm:$0xff]
                  %836 = vst [vmem:[%s794 + $0x50] sm:$0xff] %v835
                  %v837 = vld [vmem:[%s793 + $0xfc] sm:$0xff]
                  %838 = vst [vmem:[%s794 + $0x54] sm:$0xff] %v837
                  %v839 = vld [vmem:[%s793 + $0x108] sm:$0xff]
                  %840 = vst [vmem:[%s794 + $0x58] sm:$0xff] %v839
                  %v841 = vld [vmem:[%s793 + $0x114] sm:$0xff]
                  %842 = vst [vmem:[%s794 + $0x5c] sm:$0xff] %v841
                  %v843 = vld [vmem:[%s793 + $0x120] sm:$0xff]
                  %844 = vst [vmem:[%s794 + $0x60] sm:$0xff] %v843
                  %v845 = vld [vmem:[%s793 + $0x12c] sm:$0xff]
                  %846 = vst [vmem:[%s794 + $0x64] sm:$0xff] %v845
                  %v847 = vld [vmem:[%s793 + $0x138] sm:$0xff]
                  %848 = vst [vmem:[%s794 + $0x68] sm:$0xff] %v847
                  %v849 = vld [vmem:[%s793 + $0x144] sm:$0xff]
                  %850 = vst [vmem:[%s794 + $0x6c] sm:$0xff] %v849
                  %v851 = vld [vmem:[%s793 + $0x150] sm:$0xff]
                  %852 = vst [vmem:[%s794 + $0x70] sm:$0xff] %v851
                  %v853 = vld [vmem:[%s793 + $0x15c] sm:$0xff]
                  %854 = vst [vmem:[%s794 + $0x74] sm:$0xff] %v853
                  %v855 = vld [vmem:[%s793 + $0x168] sm:$0xff]
                  %856 = vst [vmem:[%s794 + $0x78] sm:$0xff] %v855
                  %v857 = vld [vmem:[%s793 + $0x174] sm:$0xff]
                  %858 = vst [vmem:[%s794 + $0x7c] sm:$0xff] %v857
                  %v859 = vld [vmem:[%s793 + $0x180] sm:$0xff]
                  %860 = vst [vmem:[%s794 + $0x80] sm:$0xff] %v859
                  %v861 = vld [vmem:[%s793 + $0x18c] sm:$0xff]
                  %862 = vst [vmem:[%s794 + $0x84] sm:$0xff] %v861
                  %v863 = vld [vmem:[%s793 + $0x198] sm:$0xff]
                  %864 = vst [vmem:[%s794 + $0x88] sm:$0xff] %v863
                  %v865 = vld [vmem:[%s793 + $0x1a4] sm:$0xff]
                  %866 = vst [vmem:[%s794 + $0x8c] sm:$0xff] %v865
                  %v867 = vld [vmem:[%s793 + $0x1b0] sm:$0xff]
                  %868 = vst [vmem:[%s794 + $0x90] sm:$0xff] %v867
                  %v869 = vld [vmem:[%s793 + $0x1bc] sm:$0xff]
                  %870 = vst [vmem:[%s794 + $0x94] sm:$0xff] %v869
                  %v871 = vld [vmem:[%s793 + $0x1c8] sm:$0xff]
                  %872 = vst [vmem:[%s794 + $0x98] sm:$0xff] %v871
                  %v873 = vld [vmem:[%s793 + $0x1d4] sm:$0xff]
                  %874 = vst [vmem:[%s794 + $0x9c] sm:$0xff] %v873
                  %v875 = vld [vmem:[%s793 + $0x1e0] sm:$0xff]
                  %876 = vst [vmem:[%s794 + $0xa0] sm:$0xff] %v875
                  %v877 = vld [vmem:[%s793 + $0x1ec] sm:$0xff]
                  %878 = vst [vmem:[%s794 + $0xa4] sm:$0xff] %v877
                  %v879 = vld [vmem:[%s793 + $0x1f8] sm:$0xff]
                  %880 = vst [vmem:[%s794 + $0xa8] sm:$0xff] %v879
                  %v881 = vld [vmem:[%s793 + $0x204] sm:$0xff]
                  %882 = vst [vmem:[%s794 + $0xac] sm:$0xff] %v881
                  %v883 = vld [vmem:[%s793 + $0x210] sm:$0xff]
                  %884 = vst [vmem:[%s794 + $0xb0] sm:$0xff] %v883
                  %v885 = vld [vmem:[%s793 + $0x21c] sm:$0xff]
                  %886 = vst [vmem:[%s794 + $0xb4] sm:$0xff] %v885
                  %v887 = vld [vmem:[%s793 + $0x228] sm:$0xff]
                  %888 = vst [vmem:[%s794 + $0xb8] sm:$0xff] %v887
                  %v889 = vld [vmem:[%s793 + $0x234] sm:$0xff]
                  %890 = vst [vmem:[%s794 + $0xbc] sm:$0xff] %v889
                  %v891 = vld [vmem:[%s793 + $0x240] sm:$0xff]
                  %892 = vst [vmem:[%s794 + $0xc0] sm:$0xff] %v891
                  %v893 = vld [vmem:[%s793 + $0x24c] sm:$0xff]
                  %894 = vst [vmem:[%s794 + $0xc4] sm:$0xff] %v893
                  %v895 = vld [vmem:[%s793 + $0x258] sm:$0xff]
                  %896 = vst [vmem:[%s794 + $0xc8] sm:$0xff] %v895
                  %v897 = vld [vmem:[%s793 + $0x264] sm:$0xff]
                  %898 = vst [vmem:[%s794 + $0xcc] sm:$0xff] %v897
                  %v899 = vld [vmem:[%s793 + $0x270] sm:$0xff]
                  %900 = vst [vmem:[%s794 + $0xd0] sm:$0xff] %v899
                  %v901 = vld [vmem:[%s793 + $0x27c] sm:$0xff]
                  %902 = vst [vmem:[%s794 + $0xd4] sm:$0xff] %v901
                  %v903 = vld [vmem:[%s793 + $0x288] sm:$0xff]
                  %904 = vst [vmem:[%s794 + $0xd8] sm:$0xff] %v903
                  %v905 = vld [vmem:[%s793 + $0x294] sm:$0xff]
                  %906 = vst [vmem:[%s794 + $0xdc] sm:$0xff] %v905
                  %v907 = vld [vmem:[%s793 + $0x2a0] sm:$0xff]
                  %908 = vst [vmem:[%s794 + $0xe0] sm:$0xff] %v907
                  %v909 = vld [vmem:[%s793 + $0x2ac] sm:$0xff]
                  %910 = vst [vmem:[%s794 + $0xe4] sm:$0xff] %v909
                  %v911 = vld [vmem:[%s793 + $0x2b8] sm:$0xff]
                  %912 = vst [vmem:[%s794 + $0xe8] sm:$0xff] %v911
                  %v913 = vld [vmem:[%s793 + $0x2c4] sm:$0xff]
                  %914 = vst [vmem:[%s794 + $0xec] sm:$0xff] %v913
                  %v915 = vld [vmem:[%s793 + $0x2d0] sm:$0xff]
                  %916 = vst [vmem:[%s794 + $0xf0] sm:$0xff] %v915
                  %v917 = vld [vmem:[%s793 + $0x2dc] sm:$0xff]
                  %918 = vst [vmem:[%s794 + $0xf4] sm:$0xff] %v917
                  %v919 = vld [vmem:[%s793 + $0x2e8] sm:$0xff]
                  %920 = vst [vmem:[%s794 + $0xf8] sm:$0xff] %v919
                  %v921 = vld [vmem:[%s793 + $0x2f4] sm:$0xff]
                  %922 = vst [vmem:[%s794 + $0xfc] sm:$0xff] %v921
                  %v923 = vld [vmem:[%s793 + $0x300] sm:$0xff]
                  %924 = vst [vmem:[%s794 + $0x100] sm:$0xff] %v923
                  %v925 = vld [vmem:[%s793 + $0x30c] sm:$0xff]
                  %926 = vst [vmem:[%s794 + $0x104] sm:$0xff] %v925
                  %v927 = vld [vmem:[%s793 + $0x318] sm:$0xff]
                  %928 = vst [vmem:[%s794 + $0x108] sm:$0xff] %v927
                  %v929 = vld [vmem:[%s793 + $0x324] sm:$0xff]
                  %930 = vst [vmem:[%s794 + $0x10c] sm:$0xff] %v929
                  %v931 = vld [vmem:[%s793 + $0x330] sm:$0xff]
                  %932 = vst [vmem:[%s794 + $0x110] sm:$0xff] %v931
                  %v933 = vld [vmem:[%s793 + $0x33c] sm:$0xff]
                  %934 = vst [vmem:[%s794 + $0x114] sm:$0xff] %v933
                  %v935 = vld [vmem:[%s793 + $0x348] sm:$0xff]
                  %936 = vst [vmem:[%s794 + $0x118] sm:$0xff] %v935
                  %v937 = vld [vmem:[%s793 + $0x354] sm:$0xff]
                  %938 = vst [vmem:[%s794 + $0x11c] sm:$0xff] %v937
                  %v939 = vld [vmem:[%s793 + $0x360] sm:$0xff]
                  %940 = vst [vmem:[%s794 + $0x120] sm:$0xff] %v939
                  %v941 = vld [vmem:[%s793 + $0x36c] sm:$0xff]
                  %942 = vst [vmem:[%s794 + $0x124] sm:$0xff] %v941
                  %v943 = vld [vmem:[%s793 + $0x378] sm:$0xff]
                  %944 = vst [vmem:[%s794 + $0x128] sm:$0xff] %v943
                  %v945 = vld [vmem:[%s793 + $0x384] sm:$0xff]
                  %946 = vst [vmem:[%s794 + $0x12c] sm:$0xff] %v945
                  %v947 = vld [vmem:[%s793 + $0x390] sm:$0xff]
                  %948 = vst [vmem:[%s794 + $0x130] sm:$0xff] %v947
                  %v949 = vld [vmem:[%s793 + $0x39c] sm:$0xff]
                  %950 = vst [vmem:[%s794 + $0x134] sm:$0xff] %v949
                  %v951 = vld [vmem:[%s793 + $0x3a8] sm:$0xff]
                  %952 = vst [vmem:[%s794 + $0x138] sm:$0xff] %v951
                  %v953 = vld [vmem:[%s793 + $0x3b4] sm:$0xff]
                  %954 = vst [vmem:[%s794 + $0x13c] sm:$0xff] %v953
                  %v955 = vld [vmem:[%s793 + $0x3c0] sm:$0xff]
                  %956 = vst [vmem:[%s794 + $0x140] sm:$0xff] %v955
                  %v957 = vld [vmem:[%s793 + $0x3cc] sm:$0xff]
                  %958 = vst [vmem:[%s794 + $0x144] sm:$0xff] %v957
                  %v959 = vld [vmem:[%s793 + $0x3d8] sm:$0xff]
                  %960 = vst [vmem:[%s794 + $0x148] sm:$0xff] %v959
                  %v961 = vld [vmem:[%s793 + $0x3e4] sm:$0xff]
                  %962 = vst [vmem:[%s794 + $0x14c] sm:$0xff] %v961
                  %v963 = vld [vmem:[%s793 + $0x3f0] sm:$0xff]
                  %964 = vst [vmem:[%s794 + $0x150] sm:$0xff] %v963
                  %v965 = vld [vmem:[%s793 + $0x3fc] sm:$0xff]
                  %966 = vst [vmem:[%s794 + $0x154] sm:$0xff] %v965
                  %v967 = vld [vmem:[%s793 + $0x408] sm:$0xff]
                  %968 = vst [vmem:[%s794 + $0x158] sm:$0xff] %v967
                  %v969 = vld [vmem:[%s793 + $0x414] sm:$0xff]
                  %970 = vst [vmem:[%s794 + $0x15c] sm:$0xff] %v969
                  %v971 = vld [vmem:[%s793 + $0x420] sm:$0xff]
                  %972 = vst [vmem:[%s794 + $0x160] sm:$0xff] %v971
                  %v973 = vld [vmem:[%s793 + $0x42c] sm:$0xff]
                  %974 = vst [vmem:[%s794 + $0x164] sm:$0xff] %v973
                  %v975 = vld [vmem:[%s793 + $0x438] sm:$0xff]
                  %976 = vst [vmem:[%s794 + $0x168] sm:$0xff] %v975
                  %v977 = vld [vmem:[%s793 + $0x444] sm:$0xff]
                  %978 = vst [vmem:[%s794 + $0x16c] sm:$0xff] %v977
                  %v979 = vld [vmem:[%s793 + $0x450] sm:$0xff]
                  %980 = vst [vmem:[%s794 + $0x170] sm:$0xff] %v979
                  %v981 = vld [vmem:[%s793 + $0x45c] sm:$0xff]
                  %982 = vst [vmem:[%s794 + $0x174] sm:$0xff] %v981
                  %v983 = vld [vmem:[%s793 + $0x468] sm:$0xff]
                  %984 = vst [vmem:[%s794 + $0x178] sm:$0xff] %v983
                  %v985 = vld [vmem:[%s793 + $0x474] sm:$0xff]
                  %986 = vst [vmem:[%s794 + $0x17c] sm:$0xff] %v985
                  %v987 = vld [vmem:[%s793 + $0x480] sm:$0xff]
                  %988 = vst [vmem:[%s794 + $0x180] sm:$0xff] %v987
                  %v989 = vld [vmem:[%s793 + $0x48c] sm:$0xff]
                  %990 = vst [vmem:[%s794 + $0x184] sm:$0xff] %v989
                  %v991 = vld [vmem:[%s793 + $0x498] sm:$0xff]
                  %992 = vst [vmem:[%s794 + $0x188] sm:$0xff] %v991
                  %v993 = vld [vmem:[%s793 + $0x4a4] sm:$0xff]
                  %994 = vst [vmem:[%s794 + $0x18c] sm:$0xff] %v993
                  %v995 = vld [vmem:[%s793 + $0x4b0] sm:$0xff]
                  %996 = vst [vmem:[%s794 + $0x190] sm:$0xff] %v995
                  %v997 = vld [vmem:[%s793 + $0x4bc] sm:$0xff]
                  %998 = vst [vmem:[%s794 + $0x194] sm:$0xff] %v997
                  %v999 = vld [vmem:[%s793 + $0x4c8] sm:$0xff]
                  %1000 = vst [vmem:[%s794 + $0x198] sm:$0xff] %v999
                  %v1001 = vld [vmem:[%s793 + $0x4d4] sm:$0xff]
                  %1002 = vst [vmem:[%s794 + $0x19c] sm:$0xff] %v1001
                  %v1003 = vld [vmem:[%s793 + $0x4e0] sm:$0xff]
                  %1004 = vst [vmem:[%s794 + $0x1a0] sm:$0xff] %v1003
                  %v1005 = vld [vmem:[%s793 + $0x4ec] sm:$0xff]
                  %1006 = vst [vmem:[%s794 + $0x1a4] sm:$0xff] %v1005
                  %v1007 = vld [vmem:[%s793 + $0x4f8] sm:$0xff]
                  %1008 = vst [vmem:[%s794 + $0x1a8] sm:$0xff] %v1007
                  %v1009 = vld [vmem:[%s793 + $0x504] sm:$0xff]
                  %1010 = vst [vmem:[%s794 + $0x1ac] sm:$0xff] %v1009
                  %v1011 = vld [vmem:[%s793 + $0x510] sm:$0xff]
                  %1012 = vst [vmem:[%s794 + $0x1b0] sm:$0xff] %v1011
                  %v1013 = vld [vmem:[%s793 + $0x51c] sm:$0xff]
                  %1014 = vst [vmem:[%s794 + $0x1b4] sm:$0xff] %v1013
                  %v1015 = vld [vmem:[%s793 + $0x528] sm:$0xff]
                  %1016 = vst [vmem:[%s794 + $0x1b8] sm:$0xff] %v1015
                  %v1017 = vld [vmem:[%s793 + $0x534] sm:$0xff]
                  %1018 = vst [vmem:[%s794 + $0x1bc] sm:$0xff] %v1017
                  %v1019 = vld [vmem:[%s793 + $0x540] sm:$0xff]
                  %1020 = vst [vmem:[%s794 + $0x1c0] sm:$0xff] %v1019
                  %v1021 = vld [vmem:[%s793 + $0x54c] sm:$0xff]
                  %1022 = vst [vmem:[%s794 + $0x1c4] sm:$0xff] %v1021
                  %v1023 = vld [vmem:[%s793 + $0x558] sm:$0xff]
                  %1024 = vst [vmem:[%s794 + $0x1c8] sm:$0xff] %v1023
                  %v1025 = vld [vmem:[%s793 + $0x564] sm:$0xff]
                  %1026 = vst [vmem:[%s794 + $0x1cc] sm:$0xff] %v1025
                  %v1027 = vld [vmem:[%s793 + $0x570] sm:$0xff]
                  %1028 = vst [vmem:[%s794 + $0x1d0] sm:$0xff] %v1027
                  %v1029 = vld [vmem:[%s793 + $0x57c] sm:$0xff]
                  %1030 = vst [vmem:[%s794 + $0x1d4] sm:$0xff] %v1029
                  %v1031 = vld [vmem:[%s793 + $0x588] sm:$0xff]
                  %1032 = vst [vmem:[%s794 + $0x1d8] sm:$0xff] %v1031
                  %v1033 = vld [vmem:[%s793 + $0x594] sm:$0xff]
                  %1034 = vst [vmem:[%s794 + $0x1dc] sm:$0xff] %v1033
                  %v1035 = vld [vmem:[%s793 + $0x5a0] sm:$0xff]
                  %1036 = vst [vmem:[%s794 + $0x1e0] sm:$0xff] %v1035
                  %v1037 = vld [vmem:[%s793 + $0x5ac] sm:$0xff]
                  %1038 = vst [vmem:[%s794 + $0x1e4] sm:$0xff] %v1037
                  %v1039 = vld [vmem:[%s793 + $0x5b8] sm:$0xff]
                  %1040 = vst [vmem:[%s794 + $0x1e8] sm:$0xff] %v1039
                  %v1041 = vld [vmem:[%s793 + $0x5c4] sm:$0xff]
                  %1042 = vst [vmem:[%s794 + $0x1ec] sm:$0xff] %v1041
                  %v1043 = vld [vmem:[%s793 + $0x5d0] sm:$0xff]
                  %1044 = vst [vmem:[%s794 + $0x1f0] sm:$0xff] %v1043
                  %v1045 = vld [vmem:[%s793 + $0x5dc] sm:$0xff]
                  %1046 = vst [vmem:[%s794 + $0x1f4] sm:$0xff] %v1045
                  %v1047 = vld [vmem:[%s793 + $0x5e8] sm:$0xff]
                  %1048 = vst [vmem:[%s794 + $0x1f8] sm:$0xff] %v1047
                  %v1049 = vld [vmem:[%s793 + $0x5f4] sm:$0xff]
                  %1050 = vst [vmem:[%s794 + $0x1fc] sm:$0xff] %v1049
                  %v1051 = vld [vmem:[%s793 + $0x600] sm:$0xff]
                  %1052 = vst [vmem:[%s794 + $0x200] sm:$0xff] %v1051
                  %v1053 = vld [vmem:[%s793 + $0x60c] sm:$0xff]
                  %1054 = vst [vmem:[%s794 + $0x204] sm:$0xff] %v1053
                  %v1055 = vld [vmem:[%s793 + $0x618] sm:$0xff]
                  %1056 = vst [vmem:[%s794 + $0x208] sm:$0xff] %v1055
                  %v1057 = vld [vmem:[%s793 + $0x624] sm:$0xff]
                  %1058 = vst [vmem:[%s794 + $0x20c] sm:$0xff] %v1057
                  %v1059 = vld [vmem:[%s793 + $0x630] sm:$0xff]
                  %1060 = vst [vmem:[%s794 + $0x210] sm:$0xff] %v1059
                  %v1061 = vld [vmem:[%s793 + $0x63c] sm:$0xff]
                  %1062 = vst [vmem:[%s794 + $0x214] sm:$0xff] %v1061
                  %v1063 = vld [vmem:[%s793 + $0x648] sm:$0xff]
                  %1064 = vst [vmem:[%s794 + $0x218] sm:$0xff] %v1063
                  %v1065 = vld [vmem:[%s793 + $0x654] sm:$0xff]
                  %1066 = vst [vmem:[%s794 + $0x21c] sm:$0xff] %v1065
                  %v1067 = vld [vmem:[%s793 + $0x660] sm:$0xff]
                  %1068 = vst [vmem:[%s794 + $0x220] sm:$0xff] %v1067
                  %v1069 = vld [vmem:[%s793 + $0x66c] sm:$0xff]
                  %1070 = vst [vmem:[%s794 + $0x224] sm:$0xff] %v1069
                  %v1071 = vld [vmem:[%s793 + $0x678] sm:$0xff]
                  %1072 = vst [vmem:[%s794 + $0x228] sm:$0xff] %v1071
                  %v1073 = vld [vmem:[%s793 + $0x684] sm:$0xff]
                  %1074 = vst [vmem:[%s794 + $0x22c] sm:$0xff] %v1073
                  %v1075 = vld [vmem:[%s793 + $0x690] sm:$0xff]
                  %1076 = vst [vmem:[%s794 + $0x230] sm:$0xff] %v1075
                  %v1077 = vld [vmem:[%s793 + $0x69c] sm:$0xff]
                  %1078 = vst [vmem:[%s794 + $0x234] sm:$0xff] %v1077
                  %v1079 = vld [vmem:[%s793 + $0x6a8] sm:$0xff]
                  %1080 = vst [vmem:[%s794 + $0x238] sm:$0xff] %v1079
                  %v1081 = vld [vmem:[%s793 + $0x6b4] sm:$0xff]
                  %1082 = vst [vmem:[%s794 + $0x23c] sm:$0xff] %v1081
                  %v1083 = vld [vmem:[%s793 + $0x6c0] sm:$0xff]
                  %1084 = vst [vmem:[%s794 + $0x240] sm:$0xff] %v1083
                  %v1085 = vld [vmem:[%s793 + $0x6cc] sm:$0xff]
                  %1086 = vst [vmem:[%s794 + $0x244] sm:$0xff] %v1085
                  %v1087 = vld [vmem:[%s793 + $0x6d8] sm:$0xff]
                  %1088 = vst [vmem:[%s794 + $0x248] sm:$0xff] %v1087
                  %v1089 = vld [vmem:[%s793 + $0x6e4] sm:$0xff]
                  %1090 = vst [vmem:[%s794 + $0x24c] sm:$0xff] %v1089
                  %v1091 = vld [vmem:[%s793 + $0x6f0] sm:$0xff]
                  %1092 = vst [vmem:[%s794 + $0x250] sm:$0xff] %v1091
                  %v1093 = vld [vmem:[%s793 + $0x6fc] sm:$0xff]
                  %1094 = vst [vmem:[%s794 + $0x254] sm:$0xff] %v1093
                  %v1095 = vld [vmem:[%s793 + $0x708] sm:$0xff]
                  %1096 = vst [vmem:[%s794 + $0x258] sm:$0xff] %v1095
                  %v1097 = vld [vmem:[%s793 + $0x714] sm:$0xff]
                  %1098 = vst [vmem:[%s794 + $0x25c] sm:$0xff] %v1097
                  %v1099 = vld [vmem:[%s793 + $0x720] sm:$0xff]
                  %1100 = vst [vmem:[%s794 + $0x260] sm:$0xff] %v1099
                  %v1101 = vld [vmem:[%s793 + $0x72c] sm:$0xff]
                  %1102 = vst [vmem:[%s794 + $0x264] sm:$0xff] %v1101
                  %v1103 = vld [vmem:[%s793 + $0x738] sm:$0xff]
                  %1104 = vst [vmem:[%s794 + $0x268] sm:$0xff] %v1103
                  %v1105 = vld [vmem:[%s793 + $0x744] sm:$0xff]
                  %1106 = vst [vmem:[%s794 + $0x26c] sm:$0xff] %v1105
                  %v1107 = vld [vmem:[%s793 + $0x750] sm:$0xff]
                  %1108 = vst [vmem:[%s794 + $0x270] sm:$0xff] %v1107
                  %v1109 = vld [vmem:[%s793 + $0x75c] sm:$0xff]
                  %1110 = vst [vmem:[%s794 + $0x274] sm:$0xff] %v1109
                  %v1111 = vld [vmem:[%s793 + $0x768] sm:$0xff]
                  %1112 = vst [vmem:[%s794 + $0x278] sm:$0xff] %v1111
                  %v1113 = vld [vmem:[%s793 + $0x774] sm:$0xff]
                  %1114 = vst [vmem:[%s794 + $0x27c] sm:$0xff] %v1113
                  %v1115 = vld [vmem:[%s793 + $0x780] sm:$0xff]
                  %1116 = vst [vmem:[%s794 + $0x280] sm:$0xff] %v1115
                  %v1117 = vld [vmem:[%s793 + $0x78c] sm:$0xff]
                  %1118 = vst [vmem:[%s794 + $0x284] sm:$0xff] %v1117
                  %v1119 = vld [vmem:[%s793 + $0x798] sm:$0xff]
                  %1120 = vst [vmem:[%s794 + $0x288] sm:$0xff] %v1119
                  %v1121 = vld [vmem:[%s793 + $0x7a4] sm:$0xff]
                  %1122 = vst [vmem:[%s794 + $0x28c] sm:$0xff] %v1121
                  %v1123 = vld [vmem:[%s793 + $0x7b0] sm:$0xff]
                  %1124 = vst [vmem:[%s794 + $0x290] sm:$0xff] %v1123
                  %v1125 = vld [vmem:[%s793 + $0x7bc] sm:$0xff]
                  %1126 = vst [vmem:[%s794 + $0x294] sm:$0xff] %v1125
                  %v1127 = vld [vmem:[%s793 + $0x7c8] sm:$0xff]
                  %1128 = vst [vmem:[%s794 + $0x298] sm:$0xff] %v1127
                  %v1129 = vld [vmem:[%s793 + $0x7d4] sm:$0xff]
                  %1130 = vst [vmem:[%s794 + $0x29c] sm:$0xff] %v1129
                  %v1131 = vld [vmem:[%s793 + $0x7e0] sm:$0xff]
                  %1132 = vst [vmem:[%s794 + $0x2a0] sm:$0xff] %v1131
                  %v1133 = vld [vmem:[%s793 + $0x7ec] sm:$0xff]
                  %1134 = vst [vmem:[%s794 + $0x2a4] sm:$0xff] %v1133
                  %v1135 = vld [vmem:[%s793 + $0x7f8] sm:$0xff]
                  %1136 = vst [vmem:[%s794 + $0x2a8] sm:$0xff] %v1135
                  %v1137 = vld [vmem:[%s793 + $0x804] sm:$0xff]
                  %1138 = vst [vmem:[%s794 + $0x2ac] sm:$0xff] %v1137
                  %v1139 = vld [vmem:[%s793 + $0x810] sm:$0xff]
                  %1140 = vst [vmem:[%s794 + $0x2b0] sm:$0xff] %v1139
                  %v1141 = vld [vmem:[%s793 + $0x81c] sm:$0xff]
                  %1142 = vst [vmem:[%s794 + $0x2b4] sm:$0xff] %v1141
                  %v1143 = vld [vmem:[%s793 + $0x828] sm:$0xff]
                  %1144 = vst [vmem:[%s794 + $0x2b8] sm:$0xff] %v1143
                  %v1145 = vld [vmem:[%s793 + $0x834] sm:$0xff]
                  %1146 = vst [vmem:[%s794 + $0x2bc] sm:$0xff] %v1145
                  %v1147 = vld [vmem:[%s793 + $0x840] sm:$0xff]
                  %1148 = vst [vmem:[%s794 + $0x2c0] sm:$0xff] %v1147
                  %v1149 = vld [vmem:[%s793 + $0x84c] sm:$0xff]
                  %1150 = vst [vmem:[%s794 + $0x2c4] sm:$0xff] %v1149
                  %v1151 = vld [vmem:[%s793 + $0x858] sm:$0xff]
                  %1152 = vst [vmem:[%s794 + $0x2c8] sm:$0xff] %v1151
                  %v1153 = vld [vmem:[%s793 + $0x864] sm:$0xff]
                  %1154 = vst [vmem:[%s794 + $0x2cc] sm:$0xff] %v1153
                  %v1155 = vld [vmem:[%s793 + $0x870] sm:$0xff]
                  %1156 = vst [vmem:[%s794 + $0x2d0] sm:$0xff] %v1155
                  %v1157 = vld [vmem:[%s793 + $0x87c] sm:$0xff]
                  %1158 = vst [vmem:[%s794 + $0x2d4] sm:$0xff] %v1157
                  %v1159 = vld [vmem:[%s793 + $0x888] sm:$0xff]
                  %1160 = vst [vmem:[%s794 + $0x2d8] sm:$0xff] %v1159
                  %v1161 = vld [vmem:[%s793 + $0x894] sm:$0xff]
                  %1162 = vst [vmem:[%s794 + $0x2dc] sm:$0xff] %v1161
                  %v1163 = vld [vmem:[%s793 + $0x8a0] sm:$0xff]
                  %1164 = vst [vmem:[%s794 + $0x2e0] sm:$0xff] %v1163
                  %v1165 = vld [vmem:[%s793 + $0x8ac] sm:$0xff]
                  %1166 = vst [vmem:[%s794 + $0x2e4] sm:$0xff] %v1165
                  %v1167 = vld [vmem:[%s793 + $0x8b8] sm:$0xff]
                  %1168 = vst [vmem:[%s794 + $0x2e8] sm:$0xff] %v1167
                  %v1169 = vld [vmem:[%s793 + $0x8c4] sm:$0xff]
                  %1170 = vst [vmem:[%s794 + $0x2ec] sm:$0xff] %v1169
                  %v1171 = vld [vmem:[%s793 + $0x8d0] sm:$0xff]
                  %1172 = vst [vmem:[%s794 + $0x2f0] sm:$0xff] %v1171
                  %v1173 = vld [vmem:[%s793 + $0x8dc] sm:$0xff]
                  %1174 = vst [vmem:[%s794 + $0x2f4] sm:$0xff] %v1173
                  %v1175 = vld [vmem:[%s793 + $0x8e8] sm:$0xff]
                  %1176 = vst [vmem:[%s794 + $0x2f8] sm:$0xff] %v1175
                  %v1177 = vld [vmem:[%s793 + $0x8f4] sm:$0xff]
                  %1178 = vst [vmem:[%s794 + $0x2fc] sm:$0xff] %v1177
                  %v1179 = vld [vmem:[%s793 + $0x900] sm:$0xff]
                  %1180 = vst [vmem:[%s794 + $0x300] sm:$0xff] %v1179
                  %v1181 = vld [vmem:[%s793 + $0x90c] sm:$0xff]
                  %1182 = vst [vmem:[%s794 + $0x304] sm:$0xff] %v1181
                  %v1183 = vld [vmem:[%s793 + $0x918] sm:$0xff]
                  %1184 = vst [vmem:[%s794 + $0x308] sm:$0xff] %v1183
                  %v1185 = vld [vmem:[%s793 + $0x924] sm:$0xff]
                  %1186 = vst [vmem:[%s794 + $0x30c] sm:$0xff] %v1185
                  %v1187 = vld [vmem:[%s793 + $0x930] sm:$0xff]
                  %1188 = vst [vmem:[%s794 + $0x310] sm:$0xff] %v1187
                  %v1189 = vld [vmem:[%s793 + $0x93c] sm:$0xff]
                  %1190 = vst [vmem:[%s794 + $0x314] sm:$0xff] %v1189
                  %v1191 = vld [vmem:[%s793 + $0x948] sm:$0xff]
                  %1192 = vst [vmem:[%s794 + $0x318] sm:$0xff] %v1191
                  %v1193 = vld [vmem:[%s793 + $0x954] sm:$0xff]
                  %1194 = vst [vmem:[%s794 + $0x31c] sm:$0xff] %v1193
                  %v1195 = vld [vmem:[%s793 + $0x960] sm:$0xff]
                  %1196 = vst [vmem:[%s794 + $0x320] sm:$0xff] %v1195
                  %v1197 = vld [vmem:[%s793 + $0x96c] sm:$0xff]
                  %1198 = vst [vmem:[%s794 + $0x324] sm:$0xff] %v1197
                  %v1199 = vld [vmem:[%s793 + $0x978] sm:$0xff]
                  %1200 = vst [vmem:[%s794 + $0x328] sm:$0xff] %v1199
                  %v1201 = vld [vmem:[%s793 + $0x984] sm:$0xff]
                  %1202 = vst [vmem:[%s794 + $0x32c] sm:$0xff] %v1201
                  %v1203 = vld [vmem:[%s793 + $0x990] sm:$0xff]
                  %1204 = vst [vmem:[%s794 + $0x330] sm:$0xff] %v1203
                  %v1205 = vld [vmem:[%s793 + $0x99c] sm:$0xff]
                  %1206 = vst [vmem:[%s794 + $0x334] sm:$0xff] %v1205
                  %v1207 = vld [vmem:[%s793 + $0x9a8] sm:$0xff]
                  %1208 = vst [vmem:[%s794 + $0x338] sm:$0xff] %v1207
                  %v1209 = vld [vmem:[%s793 + $0x9b4] sm:$0xff]
                  %1210 = vst [vmem:[%s794 + $0x33c] sm:$0xff] %v1209
                  %v1211 = vld [vmem:[%s793 + $0x9c0] sm:$0xff]
                  %1212 = vst [vmem:[%s794 + $0x340] sm:$0xff] %v1211
                  %v1213 = vld [vmem:[%s793 + $0x9cc] sm:$0xff]
                  %1214 = vst [vmem:[%s794 + $0x344] sm:$0xff] %v1213
                  %v1215 = vld [vmem:[%s793 + $0x9d8] sm:$0xff]
                  %1216 = vst [vmem:[%s794 + $0x348] sm:$0xff] %v1215
                  %v1217 = vld [vmem:[%s793 + $0x9e4] sm:$0xff]
                  %1218 = vst [vmem:[%s794 + $0x34c] sm:$0xff] %v1217
                  %v1219 = vld [vmem:[%s793 + $0x9f0] sm:$0xff]
                  %1220 = vst [vmem:[%s794 + $0x350] sm:$0xff] %v1219
                  %v1221 = vld [vmem:[%s793 + $0x9fc] sm:$0xff]
                  %1222 = vst [vmem:[%s794 + $0x354] sm:$0xff] %v1221
                  %v1223 = vld [vmem:[%s793 + $0xa08] sm:$0xff]
                  %1224 = vst [vmem:[%s794 + $0x358] sm:$0xff] %v1223
                  %v1225 = vld [vmem:[%s793 + $0xa14] sm:$0xff]
                  %1226 = vst [vmem:[%s794 + $0x35c] sm:$0xff] %v1225
                  %v1227 = vld [vmem:[%s793 + $0xa20] sm:$0xff]
                  %1228 = vst [vmem:[%s794 + $0x360] sm:$0xff] %v1227
                  %v1229 = vld [vmem:[%s793 + $0xa2c] sm:$0xff]
                  %1230 = vst [vmem:[%s794 + $0x364] sm:$0xff] %v1229
                  %v1231 = vld [vmem:[%s793 + $0xa38] sm:$0xff]
                  %1232 = vst [vmem:[%s794 + $0x368] sm:$0xff] %v1231
                  %v1233 = vld [vmem:[%s793 + $0xa44] sm:$0xff]
                  %1234 = vst [vmem:[%s794 + $0x36c] sm:$0xff] %v1233
                  %v1235 = vld [vmem:[%s793 + $0xa50] sm:$0xff]
                  %1236 = vst [vmem:[%s794 + $0x370] sm:$0xff] %v1235
                  %v1237 = vld [vmem:[%s793 + $0xa5c] sm:$0xff]
                  %1238 = vst [vmem:[%s794 + $0x374] sm:$0xff] %v1237
                  %v1239 = vld [vmem:[%s793 + $0xa68] sm:$0xff]
                  %1240 = vst [vmem:[%s794 + $0x378] sm:$0xff] %v1239
                  %v1241 = vld [vmem:[%s793 + $0xa74] sm:$0xff]
                  %1242 = vst [vmem:[%s794 + $0x37c] sm:$0xff] %v1241
                  %v1243 = vld [vmem:[%s793 + $0xa80] sm:$0xff]
                  %1244 = vst [vmem:[%s794 + $0x380] sm:$0xff] %v1243
                  %v1245 = vld [vmem:[%s793 + $0xa8c] sm:$0xff]
                  %1246 = vst [vmem:[%s794 + $0x384] sm:$0xff] %v1245
                  %v1247 = vld [vmem:[%s793 + $0xa98] sm:$0xff]
                  %1248 = vst [vmem:[%s794 + $0x388] sm:$0xff] %v1247
                  %v1249 = vld [vmem:[%s793 + $0xaa4] sm:$0xff]
                  %1250 = vst [vmem:[%s794 + $0x38c] sm:$0xff] %v1249
                  %v1251 = vld [vmem:[%s793 + $0xab0] sm:$0xff]
                  %1252 = vst [vmem:[%s794 + $0x390] sm:$0xff] %v1251
                  %v1253 = vld [vmem:[%s793 + $0xabc] sm:$0xff]
                  %1254 = vst [vmem:[%s794 + $0x394] sm:$0xff] %v1253
                  %v1255 = vld [vmem:[%s793 + $0xac8] sm:$0xff]
                  %1256 = vst [vmem:[%s794 + $0x398] sm:$0xff] %v1255
                  %v1257 = vld [vmem:[%s793 + $0xad4] sm:$0xff]
                  %1258 = vst [vmem:[%s794 + $0x39c] sm:$0xff] %v1257
                  %v1259 = vld [vmem:[%s793 + $0xae0] sm:$0xff]
                  %1260 = vst [vmem:[%s794 + $0x3a0] sm:$0xff] %v1259
                  %v1261 = vld [vmem:[%s793 + $0xaec] sm:$0xff]
                  %1262 = vst [vmem:[%s794 + $0x3a4] sm:$0xff] %v1261
                  %v1263 = vld [vmem:[%s793 + $0xaf8] sm:$0xff]
                  %1264 = vst [vmem:[%s794 + $0x3a8] sm:$0xff] %v1263
                  %v1265 = vld [vmem:[%s793 + $0xb04] sm:$0xff]
                  %1266 = vst [vmem:[%s794 + $0x3ac] sm:$0xff] %v1265
                  %v1267 = vld [vmem:[%s793 + $0xb10] sm:$0xff]
                  %1268 = vst [vmem:[%s794 + $0x3b0] sm:$0xff] %v1267
                  %v1269 = vld [vmem:[%s793 + $0xb1c] sm:$0xff]
                  %1270 = vst [vmem:[%s794 + $0x3b4] sm:$0xff] %v1269
                  %v1271 = vld [vmem:[%s793 + $0xb28] sm:$0xff]
                  %1272 = vst [vmem:[%s794 + $0x3b8] sm:$0xff] %v1271
                  %v1273 = vld [vmem:[%s793 + $0xb34] sm:$0xff]
                  %1274 = vst [vmem:[%s794 + $0x3bc] sm:$0xff] %v1273
                  %v1275 = vld [vmem:[%s793 + $0xb40] sm:$0xff]
                  %1276 = vst [vmem:[%s794 + $0x3c0] sm:$0xff] %v1275
                  %v1277 = vld [vmem:[%s793 + $0xb4c] sm:$0xff]
                  %1278 = vst [vmem:[%s794 + $0x3c4] sm:$0xff] %v1277
                  %v1279 = vld [vmem:[%s793 + $0xb58] sm:$0xff]
                  %1280 = vst [vmem:[%s794 + $0x3c8] sm:$0xff] %v1279
                  %v1281 = vld [vmem:[%s793 + $0xb64] sm:$0xff]
                  %1282 = vst [vmem:[%s794 + $0x3cc] sm:$0xff] %v1281
                  %v1283 = vld [vmem:[%s793 + $0xb70] sm:$0xff]
                  %1284 = vst [vmem:[%s794 + $0x3d0] sm:$0xff] %v1283
                  %v1285 = vld [vmem:[%s793 + $0xb7c] sm:$0xff]
                  %1286 = vst [vmem:[%s794 + $0x3d4] sm:$0xff] %v1285
                  %v1287 = vld [vmem:[%s793 + $0xb88] sm:$0xff]
                  %1288 = vst [vmem:[%s794 + $0x3d8] sm:$0xff] %v1287
                  %v1289 = vld [vmem:[%s793 + $0xb94] sm:$0xff]
                  %1290 = vst [vmem:[%s794 + $0x3dc] sm:$0xff] %v1289
                  %v1291 = vld [vmem:[%s793 + $0xba0] sm:$0xff]
                  %1292 = vst [vmem:[%s794 + $0x3e0] sm:$0xff] %v1291
                  %v1293 = vld [vmem:[%s793 + $0xbac] sm:$0xff]
                  %1294 = vst [vmem:[%s794 + $0x3e4] sm:$0xff] %v1293
                  %v1295 = vld [vmem:[%s793 + $0xbb8] sm:$0xff]
                  %1296 = vst [vmem:[%s794 + $0x3e8] sm:$0xff] %v1295
                  %v1297 = vld [vmem:[%s793 + $0xbc4] sm:$0xff]
                  %1298 = vst [vmem:[%s794 + $0x3ec] sm:$0xff] %v1297
                  %v1299 = vld [vmem:[%s793 + $0xbd0] sm:$0xff]
                  %1300 = vst [vmem:[%s794 + $0x3f0] sm:$0xff] %v1299
                  %v1301 = vld [vmem:[%s793 + $0xbdc] sm:$0xff]
                  %1302 = vst [vmem:[%s794 + $0x3f4] sm:$0xff] %v1301
                  %v1303 = vld [vmem:[%s793 + $0xbe8] sm:$0xff]
                  %1304 = vst [vmem:[%s794 + $0x3f8] sm:$0xff] %v1303
                  %v1305 = vld [vmem:[%s793 + $0xbf4] sm:$0xff]
                  %1306 = vst [vmem:[%s794 + $0x3fc] sm:$0xff] %v1305
                  %v1307 = vld [vmem:[%s793 + $0xc00] sm:$0xff]
                  %1308 = vst [vmem:[%s794 + $0x400] sm:$0xff] %v1307
                  %v1309 = vld [vmem:[%s793 + $0xc0c] sm:$0xff]
                  %1310 = vst [vmem:[%s794 + $0x404] sm:$0xff] %v1309
                  %v1311 = vld [vmem:[%s793 + $0xc18] sm:$0xff]
                  %1312 = vst [vmem:[%s794 + $0x408] sm:$0xff] %v1311
                  %v1313 = vld [vmem:[%s793 + $0xc24] sm:$0xff]
                  %1314 = vst [vmem:[%s794 + $0x40c] sm:$0xff] %v1313
                  %v1315 = vld [vmem:[%s793 + $0xc30] sm:$0xff]
                  %1316 = vst [vmem:[%s794 + $0x410] sm:$0xff] %v1315
                  %v1317 = vld [vmem:[%s793 + $0xc3c] sm:$0xff]
                  %1318 = vst [vmem:[%s794 + $0x414] sm:$0xff] %v1317
                  %v1319 = vld [vmem:[%s793 + $0xc48] sm:$0xff]
                  %1320 = vst [vmem:[%s794 + $0x418] sm:$0xff] %v1319
                  %v1321 = vld [vmem:[%s793 + $0xc54] sm:$0xff]
                  %1322 = vst [vmem:[%s794 + $0x41c] sm:$0xff] %v1321
                  %v1323 = vld [vmem:[%s793 + $0xc60] sm:$0xff]
                  %1324 = vst [vmem:[%s794 + $0x420] sm:$0xff] %v1323
                  %v1325 = vld [vmem:[%s793 + $0xc6c] sm:$0xff]
                  %1326 = vst [vmem:[%s794 + $0x424] sm:$0xff] %v1325
                  %v1327 = vld [vmem:[%s793 + $0xc78] sm:$0xff]
                  %1328 = vst [vmem:[%s794 + $0x428] sm:$0xff] %v1327
                  %v1329 = vld [vmem:[%s793 + $0xc84] sm:$0xff]
                  %1330 = vst [vmem:[%s794 + $0x42c] sm:$0xff] %v1329
                  %v1331 = vld [vmem:[%s793 + $0xc90] sm:$0xff]
                  %1332 = vst [vmem:[%s794 + $0x430] sm:$0xff] %v1331
                  %v1333 = vld [vmem:[%s793 + $0xc9c] sm:$0xff]
                  %1334 = vst [vmem:[%s794 + $0x434] sm:$0xff] %v1333
                  %v1335 = vld [vmem:[%s793 + $0xca8] sm:$0xff]
                  %1336 = vst [vmem:[%s794 + $0x438] sm:$0xff] %v1335
                  %v1337 = vld [vmem:[%s793 + $0xcb4] sm:$0xff]
                  %1338 = vst [vmem:[%s794 + $0x43c] sm:$0xff] %v1337
                  %v1339 = vld [vmem:[%s793 + $0xcc0] sm:$0xff]
                  %1340 = vst [vmem:[%s794 + $0x440] sm:$0xff] %v1339
                  %v1341 = vld [vmem:[%s793 + $0xccc] sm:$0xff]
                  %1342 = vst [vmem:[%s794 + $0x444] sm:$0xff] %v1341
                  %v1343 = vld [vmem:[%s793 + $0xcd8] sm:$0xff]
                  %1344 = vst [vmem:[%s794 + $0x448] sm:$0xff] %v1343
                  %v1345 = vld [vmem:[%s793 + $0xce4] sm:$0xff]
                  %1346 = vst [vmem:[%s794 + $0x44c] sm:$0xff] %v1345
                  %v1347 = vld [vmem:[%s793 + $0xcf0] sm:$0xff]
                  %1348 = vst [vmem:[%s794 + $0x450] sm:$0xff] %v1347
                  %v1349 = vld [vmem:[%s793 + $0xcfc] sm:$0xff]
                  %1350 = vst [vmem:[%s794 + $0x454] sm:$0xff] %v1349
                  %v1351 = vld [vmem:[%s793 + $0xd08] sm:$0xff]
                  %1352 = vst [vmem:[%s794 + $0x458] sm:$0xff] %v1351
                  %v1353 = vld [vmem:[%s793 + $0xd14] sm:$0xff]
                  %1354 = vst [vmem:[%s794 + $0x45c] sm:$0xff] %v1353
                  %v1355 = vld [vmem:[%s793 + $0xd20] sm:$0xff]
                  %1356 = vst [vmem:[%s794 + $0x460] sm:$0xff] %v1355
                  %v1357 = vld [vmem:[%s793 + $0xd2c] sm:$0xff]
                  %1358 = vst [vmem:[%s794 + $0x464] sm:$0xff] %v1357
                  %v1359 = vld [vmem:[%s793 + $0xd38] sm:$0xff]
                  %1360 = vst [vmem:[%s794 + $0x468] sm:$0xff] %v1359
                  %v1361 = vld [vmem:[%s793 + $0xd44] sm:$0xff]
                  %1362 = vst [vmem:[%s794 + $0x46c] sm:$0xff] %v1361
                  %v1363 = vld [vmem:[%s793 + $0xd50] sm:$0xff]
                  %1364 = vst [vmem:[%s794 + $0x470] sm:$0xff] %v1363
                  %v1365 = vld [vmem:[%s793 + $0xd5c] sm:$0xff]
                  %1366 = vst [vmem:[%s794 + $0x474] sm:$0xff] %v1365
                  %v1367 = vld [vmem:[%s793 + $0xd68] sm:$0xff]
                  %1368 = vst [vmem:[%s794 + $0x478] sm:$0xff] %v1367
                  %v1369 = vld [vmem:[%s793 + $0xd74] sm:$0xff]
                  %1370 = vst [vmem:[%s794 + $0x47c] sm:$0xff] %v1369
                  %s1371 = sadd.s32 1, %s792
                  %p1372 = scmp.ge.s32.totalorder %s1371, 0
                  %s1373 = scalar_select %p1372, 0, %s1371
                  %s1374 = smul.u32 %s1373, 8
                  %s1375 = smul.u32 %s1373, 8
                  %s1376 = scalar_lea.vmem %s191, %s1374
                  %s1377 = scalar_lea.vmem %s189, %s1375 [#allocation2]
                $region52: #{embedding_layer_forward.8} parent=46 // loop_footer
                  %s791 = sadd.s32 1, %s787
                $region53: #{embedding_layer_forward.8} parent=46 // loop_footer_branch
                  %786 = sbr.rel target = $region49
                $region54: #{embedding_layer_forward.8} parent=46 // loop_exit
                  _
              $region47: #{embedding_layer_forward.8} parent=31 // pred_fallthru
                _
              // Predicated region
              $region55: #{embedding_layer_forward.8} parent=31 // pred_check
                _
              $region56: #{embedding_layer_forward.8} parent=31 // pred_check_branch
                %1379 = sbr.rel (0) target = $region58
              $region57: #{embedding_layer_forward.8} parent=31 // pred_region
                loop: start=0, step=1, limit=0
                $region59: #{embedding_layer_forward.8} parent=57 // loop_pre_header
                  _
                $region60: #{embedding_layer_forward.8} parent=57 // loop_header
                  %s1381 = sphi 0, %s1385
                  %p1382 = scmp.ge.s32.totalorder %s1381, 0
                  %s1386 = sphi 0, %s1967
                  %s1387 = sphi %s191, %s1970
                  %s1388 = sphi %s189, %s1971
                $region61: #{embedding_layer_forward.8} parent=57 // loop_header_branch
                  %1384 = sbr.rel (%p1382) target = $region65
                $region62: #{embedding_layer_forward.8} parent=57 // loop_body
                  %v1389 = vld [vmem:[%s1387] sm:$0xff]
                  %1390 = vst [vmem:[%s1388] sm:$0xff] %v1389
                  %v1391 = vld [vmem:[%s1387 + $0xc] sm:$0xff]
                  %1392 = vst [vmem:[%s1388 + $0x4] sm:$0xff] %v1391
                  %v1393 = vld [vmem:[%s1387 + $0x18] sm:$0xff]
                  %1394 = vst [vmem:[%s1388 + $0x8] sm:$0xff] %v1393
                  %v1395 = vld [vmem:[%s1387 + $0x24] sm:$0xff]
                  %1396 = vst [vmem:[%s1388 + $0xc] sm:$0xff] %v1395
                  %v1397 = vld [vmem:[%s1387 + $0x30] sm:$0xff]
                  %1398 = vst [vmem:[%s1388 + $0x10] sm:$0xff] %v1397
                  %v1399 = vld [vmem:[%s1387 + $0x3c] sm:$0xff]
                  %1400 = vst [vmem:[%s1388 + $0x14] sm:$0xff] %v1399
                  %v1401 = vld [vmem:[%s1387 + $0x48] sm:$0xff]
                  %1402 = vst [vmem:[%s1388 + $0x18] sm:$0xff] %v1401
                  %v1403 = vld [vmem:[%s1387 + $0x54] sm:$0xff]
                  %1404 = vst [vmem:[%s1388 + $0x1c] sm:$0xff] %v1403
                  %v1405 = vld [vmem:[%s1387 + $0x60] sm:$0xff]
                  %1406 = vst [vmem:[%s1388 + $0x20] sm:$0xff] %v1405
                  %v1407 = vld [vmem:[%s1387 + $0x6c] sm:$0xff]
                  %1408 = vst [vmem:[%s1388 + $0x24] sm:$0xff] %v1407
                  %v1409 = vld [vmem:[%s1387 + $0x78] sm:$0xff]
                  %1410 = vst [vmem:[%s1388 + $0x28] sm:$0xff] %v1409
                  %v1411 = vld [vmem:[%s1387 + $0x84] sm:$0xff]
                  %1412 = vst [vmem:[%s1388 + $0x2c] sm:$0xff] %v1411
                  %v1413 = vld [vmem:[%s1387 + $0x90] sm:$0xff]
                  %1414 = vst [vmem:[%s1388 + $0x30] sm:$0xff] %v1413
                  %v1415 = vld [vmem:[%s1387 + $0x9c] sm:$0xff]
                  %1416 = vst [vmem:[%s1388 + $0x34] sm:$0xff] %v1415
                  %v1417 = vld [vmem:[%s1387 + $0xa8] sm:$0xff]
                  %1418 = vst [vmem:[%s1388 + $0x38] sm:$0xff] %v1417
                  %v1419 = vld [vmem:[%s1387 + $0xb4] sm:$0xff]
                  %1420 = vst [vmem:[%s1388 + $0x3c] sm:$0xff] %v1419
                  %v1421 = vld [vmem:[%s1387 + $0xc0] sm:$0xff]
                  %1422 = vst [vmem:[%s1388 + $0x40] sm:$0xff] %v1421
                  %v1423 = vld [vmem:[%s1387 + $0xcc] sm:$0xff]
                  %1424 = vst [vmem:[%s1388 + $0x44] sm:$0xff] %v1423
                  %v1425 = vld [vmem:[%s1387 + $0xd8] sm:$0xff]
                  %1426 = vst [vmem:[%s1388 + $0x48] sm:$0xff] %v1425
                  %v1427 = vld [vmem:[%s1387 + $0xe4] sm:$0xff]
                  %1428 = vst [vmem:[%s1388 + $0x4c] sm:$0xff] %v1427
                  %v1429 = vld [vmem:[%s1387 + $0xf0] sm:$0xff]
                  %1430 = vst [vmem:[%s1388 + $0x50] sm:$0xff] %v1429
                  %v1431 = vld [vmem:[%s1387 + $0xfc] sm:$0xff]
                  %1432 = vst [vmem:[%s1388 + $0x54] sm:$0xff] %v1431
                  %v1433 = vld [vmem:[%s1387 + $0x108] sm:$0xff]
                  %1434 = vst [vmem:[%s1388 + $0x58] sm:$0xff] %v1433
                  %v1435 = vld [vmem:[%s1387 + $0x114] sm:$0xff]
                  %1436 = vst [vmem:[%s1388 + $0x5c] sm:$0xff] %v1435
                  %v1437 = vld [vmem:[%s1387 + $0x120] sm:$0xff]
                  %1438 = vst [vmem:[%s1388 + $0x60] sm:$0xff] %v1437
                  %v1439 = vld [vmem:[%s1387 + $0x12c] sm:$0xff]
                  %1440 = vst [vmem:[%s1388 + $0x64] sm:$0xff] %v1439
                  %v1441 = vld [vmem:[%s1387 + $0x138] sm:$0xff]
                  %1442 = vst [vmem:[%s1388 + $0x68] sm:$0xff] %v1441
                  %v1443 = vld [vmem:[%s1387 + $0x144] sm:$0xff]
                  %1444 = vst [vmem:[%s1388 + $0x6c] sm:$0xff] %v1443
                  %v1445 = vld [vmem:[%s1387 + $0x150] sm:$0xff]
                  %1446 = vst [vmem:[%s1388 + $0x70] sm:$0xff] %v1445
                  %v1447 = vld [vmem:[%s1387 + $0x15c] sm:$0xff]
                  %1448 = vst [vmem:[%s1388 + $0x74] sm:$0xff] %v1447
                  %v1449 = vld [vmem:[%s1387 + $0x168] sm:$0xff]
                  %1450 = vst [vmem:[%s1388 + $0x78] sm:$0xff] %v1449
                  %v1451 = vld [vmem:[%s1387 + $0x174] sm:$0xff]
                  %1452 = vst [vmem:[%s1388 + $0x7c] sm:$0xff] %v1451
                  %v1453 = vld [vmem:[%s1387 + $0x180] sm:$0xff]
                  %1454 = vst [vmem:[%s1388 + $0x80] sm:$0xff] %v1453
                  %v1455 = vld [vmem:[%s1387 + $0x18c] sm:$0xff]
                  %1456 = vst [vmem:[%s1388 + $0x84] sm:$0xff] %v1455
                  %v1457 = vld [vmem:[%s1387 + $0x198] sm:$0xff]
                  %1458 = vst [vmem:[%s1388 + $0x88] sm:$0xff] %v1457
                  %v1459 = vld [vmem:[%s1387 + $0x1a4] sm:$0xff]
                  %1460 = vst [vmem:[%s1388 + $0x8c] sm:$0xff] %v1459
                  %v1461 = vld [vmem:[%s1387 + $0x1b0] sm:$0xff]
                  %1462 = vst [vmem:[%s1388 + $0x90] sm:$0xff] %v1461
                  %v1463 = vld [vmem:[%s1387 + $0x1bc] sm:$0xff]
                  %1464 = vst [vmem:[%s1388 + $0x94] sm:$0xff] %v1463
                  %v1465 = vld [vmem:[%s1387 + $0x1c8] sm:$0xff]
                  %1466 = vst [vmem:[%s1388 + $0x98] sm:$0xff] %v1465
                  %v1467 = vld [vmem:[%s1387 + $0x1d4] sm:$0xff]
                  %1468 = vst [vmem:[%s1388 + $0x9c] sm:$0xff] %v1467
                  %v1469 = vld [vmem:[%s1387 + $0x1e0] sm:$0xff]
                  %1470 = vst [vmem:[%s1388 + $0xa0] sm:$0xff] %v1469
                  %v1471 = vld [vmem:[%s1387 + $0x1ec] sm:$0xff]
                  %1472 = vst [vmem:[%s1388 + $0xa4] sm:$0xff] %v1471
                  %v1473 = vld [vmem:[%s1387 + $0x1f8] sm:$0xff]
                  %1474 = vst [vmem:[%s1388 + $0xa8] sm:$0xff] %v1473
                  %v1475 = vld [vmem:[%s1387 + $0x204] sm:$0xff]
                  %1476 = vst [vmem:[%s1388 + $0xac] sm:$0xff] %v1475
                  %v1477 = vld [vmem:[%s1387 + $0x210] sm:$0xff]
                  %1478 = vst [vmem:[%s1388 + $0xb0] sm:$0xff] %v1477
                  %v1479 = vld [vmem:[%s1387 + $0x21c] sm:$0xff]
                  %1480 = vst [vmem:[%s1388 + $0xb4] sm:$0xff] %v1479
                  %v1481 = vld [vmem:[%s1387 + $0x228] sm:$0xff]
                  %1482 = vst [vmem:[%s1388 + $0xb8] sm:$0xff] %v1481
                  %v1483 = vld [vmem:[%s1387 + $0x234] sm:$0xff]
                  %1484 = vst [vmem:[%s1388 + $0xbc] sm:$0xff] %v1483
                  %v1485 = vld [vmem:[%s1387 + $0x240] sm:$0xff]
                  %1486 = vst [vmem:[%s1388 + $0xc0] sm:$0xff] %v1485
                  %v1487 = vld [vmem:[%s1387 + $0x24c] sm:$0xff]
                  %1488 = vst [vmem:[%s1388 + $0xc4] sm:$0xff] %v1487
                  %v1489 = vld [vmem:[%s1387 + $0x258] sm:$0xff]
                  %1490 = vst [vmem:[%s1388 + $0xc8] sm:$0xff] %v1489
                  %v1491 = vld [vmem:[%s1387 + $0x264] sm:$0xff]
                  %1492 = vst [vmem:[%s1388 + $0xcc] sm:$0xff] %v1491
                  %v1493 = vld [vmem:[%s1387 + $0x270] sm:$0xff]
                  %1494 = vst [vmem:[%s1388 + $0xd0] sm:$0xff] %v1493
                  %v1495 = vld [vmem:[%s1387 + $0x27c] sm:$0xff]
                  %1496 = vst [vmem:[%s1388 + $0xd4] sm:$0xff] %v1495
                  %v1497 = vld [vmem:[%s1387 + $0x288] sm:$0xff]
                  %1498 = vst [vmem:[%s1388 + $0xd8] sm:$0xff] %v1497
                  %v1499 = vld [vmem:[%s1387 + $0x294] sm:$0xff]
                  %1500 = vst [vmem:[%s1388 + $0xdc] sm:$0xff] %v1499
                  %v1501 = vld [vmem:[%s1387 + $0x2a0] sm:$0xff]
                  %1502 = vst [vmem:[%s1388 + $0xe0] sm:$0xff] %v1501
                  %v1503 = vld [vmem:[%s1387 + $0x2ac] sm:$0xff]
                  %1504 = vst [vmem:[%s1388 + $0xe4] sm:$0xff] %v1503
                  %v1505 = vld [vmem:[%s1387 + $0x2b8] sm:$0xff]
                  %1506 = vst [vmem:[%s1388 + $0xe8] sm:$0xff] %v1505
                  %v1507 = vld [vmem:[%s1387 + $0x2c4] sm:$0xff]
                  %1508 = vst [vmem:[%s1388 + $0xec] sm:$0xff] %v1507
                  %v1509 = vld [vmem:[%s1387 + $0x2d0] sm:$0xff]
                  %1510 = vst [vmem:[%s1388 + $0xf0] sm:$0xff] %v1509
                  %v1511 = vld [vmem:[%s1387 + $0x2dc] sm:$0xff]
                  %1512 = vst [vmem:[%s1388 + $0xf4] sm:$0xff] %v1511
                  %v1513 = vld [vmem:[%s1387 + $0x2e8] sm:$0xff]
                  %1514 = vst [vmem:[%s1388 + $0xf8] sm:$0xff] %v1513
                  %v1515 = vld [vmem:[%s1387 + $0x2f4] sm:$0xff]
                  %1516 = vst [vmem:[%s1388 + $0xfc] sm:$0xff] %v1515
                  %v1517 = vld [vmem:[%s1387 + $0x300] sm:$0xff]
                  %1518 = vst [vmem:[%s1388 + $0x100] sm:$0xff] %v1517
                  %v1519 = vld [vmem:[%s1387 + $0x30c] sm:$0xff]
                  %1520 = vst [vmem:[%s1388 + $0x104] sm:$0xff] %v1519
                  %v1521 = vld [vmem:[%s1387 + $0x318] sm:$0xff]
                  %1522 = vst [vmem:[%s1388 + $0x108] sm:$0xff] %v1521
                  %v1523 = vld [vmem:[%s1387 + $0x324] sm:$0xff]
                  %1524 = vst [vmem:[%s1388 + $0x10c] sm:$0xff] %v1523
                  %v1525 = vld [vmem:[%s1387 + $0x330] sm:$0xff]
                  %1526 = vst [vmem:[%s1388 + $0x110] sm:$0xff] %v1525
                  %v1527 = vld [vmem:[%s1387 + $0x33c] sm:$0xff]
                  %1528 = vst [vmem:[%s1388 + $0x114] sm:$0xff] %v1527
                  %v1529 = vld [vmem:[%s1387 + $0x348] sm:$0xff]
                  %1530 = vst [vmem:[%s1388 + $0x118] sm:$0xff] %v1529
                  %v1531 = vld [vmem:[%s1387 + $0x354] sm:$0xff]
                  %1532 = vst [vmem:[%s1388 + $0x11c] sm:$0xff] %v1531
                  %v1533 = vld [vmem:[%s1387 + $0x360] sm:$0xff]
                  %1534 = vst [vmem:[%s1388 + $0x120] sm:$0xff] %v1533
                  %v1535 = vld [vmem:[%s1387 + $0x36c] sm:$0xff]
                  %1536 = vst [vmem:[%s1388 + $0x124] sm:$0xff] %v1535
                  %v1537 = vld [vmem:[%s1387 + $0x378] sm:$0xff]
                  %1538 = vst [vmem:[%s1388 + $0x128] sm:$0xff] %v1537
                  %v1539 = vld [vmem:[%s1387 + $0x384] sm:$0xff]
                  %1540 = vst [vmem:[%s1388 + $0x12c] sm:$0xff] %v1539
                  %v1541 = vld [vmem:[%s1387 + $0x390] sm:$0xff]
                  %1542 = vst [vmem:[%s1388 + $0x130] sm:$0xff] %v1541
                  %v1543 = vld [vmem:[%s1387 + $0x39c] sm:$0xff]
                  %1544 = vst [vmem:[%s1388 + $0x134] sm:$0xff] %v1543
                  %v1545 = vld [vmem:[%s1387 + $0x3a8] sm:$0xff]
                  %1546 = vst [vmem:[%s1388 + $0x138] sm:$0xff] %v1545
                  %v1547 = vld [vmem:[%s1387 + $0x3b4] sm:$0xff]
                  %1548 = vst [vmem:[%s1388 + $0x13c] sm:$0xff] %v1547
                  %v1549 = vld [vmem:[%s1387 + $0x3c0] sm:$0xff]
                  %1550 = vst [vmem:[%s1388 + $0x140] sm:$0xff] %v1549
                  %v1551 = vld [vmem:[%s1387 + $0x3cc] sm:$0xff]
                  %1552 = vst [vmem:[%s1388 + $0x144] sm:$0xff] %v1551
                  %v1553 = vld [vmem:[%s1387 + $0x3d8] sm:$0xff]
                  %1554 = vst [vmem:[%s1388 + $0x148] sm:$0xff] %v1553
                  %v1555 = vld [vmem:[%s1387 + $0x3e4] sm:$0xff]
                  %1556 = vst [vmem:[%s1388 + $0x14c] sm:$0xff] %v1555
                  %v1557 = vld [vmem:[%s1387 + $0x3f0] sm:$0xff]
                  %1558 = vst [vmem:[%s1388 + $0x150] sm:$0xff] %v1557
                  %v1559 = vld [vmem:[%s1387 + $0x3fc] sm:$0xff]
                  %1560 = vst [vmem:[%s1388 + $0x154] sm:$0xff] %v1559
                  %v1561 = vld [vmem:[%s1387 + $0x408] sm:$0xff]
                  %1562 = vst [vmem:[%s1388 + $0x158] sm:$0xff] %v1561
                  %v1563 = vld [vmem:[%s1387 + $0x414] sm:$0xff]
                  %1564 = vst [vmem:[%s1388 + $0x15c] sm:$0xff] %v1563
                  %v1565 = vld [vmem:[%s1387 + $0x420] sm:$0xff]
                  %1566 = vst [vmem:[%s1388 + $0x160] sm:$0xff] %v1565
                  %v1567 = vld [vmem:[%s1387 + $0x42c] sm:$0xff]
                  %1568 = vst [vmem:[%s1388 + $0x164] sm:$0xff] %v1567
                  %v1569 = vld [vmem:[%s1387 + $0x438] sm:$0xff]
                  %1570 = vst [vmem:[%s1388 + $0x168] sm:$0xff] %v1569
                  %v1571 = vld [vmem:[%s1387 + $0x444] sm:$0xff]
                  %1572 = vst [vmem:[%s1388 + $0x16c] sm:$0xff] %v1571
                  %v1573 = vld [vmem:[%s1387 + $0x450] sm:$0xff]
                  %1574 = vst [vmem:[%s1388 + $0x170] sm:$0xff] %v1573
                  %v1575 = vld [vmem:[%s1387 + $0x45c] sm:$0xff]
                  %1576 = vst [vmem:[%s1388 + $0x174] sm:$0xff] %v1575
                  %v1577 = vld [vmem:[%s1387 + $0x468] sm:$0xff]
                  %1578 = vst [vmem:[%s1388 + $0x178] sm:$0xff] %v1577
                  %v1579 = vld [vmem:[%s1387 + $0x474] sm:$0xff]
                  %1580 = vst [vmem:[%s1388 + $0x17c] sm:$0xff] %v1579
                  %v1581 = vld [vmem:[%s1387 + $0x480] sm:$0xff]
                  %1582 = vst [vmem:[%s1388 + $0x180] sm:$0xff] %v1581
                  %v1583 = vld [vmem:[%s1387 + $0x48c] sm:$0xff]
                  %1584 = vst [vmem:[%s1388 + $0x184] sm:$0xff] %v1583
                  %v1585 = vld [vmem:[%s1387 + $0x498] sm:$0xff]
                  %1586 = vst [vmem:[%s1388 + $0x188] sm:$0xff] %v1585
                  %v1587 = vld [vmem:[%s1387 + $0x4a4] sm:$0xff]
                  %1588 = vst [vmem:[%s1388 + $0x18c] sm:$0xff] %v1587
                  %v1589 = vld [vmem:[%s1387 + $0x4b0] sm:$0xff]
                  %1590 = vst [vmem:[%s1388 + $0x190] sm:$0xff] %v1589
                  %v1591 = vld [vmem:[%s1387 + $0x4bc] sm:$0xff]
                  %1592 = vst [vmem:[%s1388 + $0x194] sm:$0xff] %v1591
                  %v1593 = vld [vmem:[%s1387 + $0x4c8] sm:$0xff]
                  %1594 = vst [vmem:[%s1388 + $0x198] sm:$0xff] %v1593
                  %v1595 = vld [vmem:[%s1387 + $0x4d4] sm:$0xff]
                  %1596 = vst [vmem:[%s1388 + $0x19c] sm:$0xff] %v1595
                  %v1597 = vld [vmem:[%s1387 + $0x4e0] sm:$0xff]
                  %1598 = vst [vmem:[%s1388 + $0x1a0] sm:$0xff] %v1597
                  %v1599 = vld [vmem:[%s1387 + $0x4ec] sm:$0xff]
                  %1600 = vst [vmem:[%s1388 + $0x1a4] sm:$0xff] %v1599
                  %v1601 = vld [vmem:[%s1387 + $0x4f8] sm:$0xff]
                  %1602 = vst [vmem:[%s1388 + $0x1a8] sm:$0xff] %v1601
                  %v1603 = vld [vmem:[%s1387 + $0x504] sm:$0xff]
                  %1604 = vst [vmem:[%s1388 + $0x1ac] sm:$0xff] %v1603
                  %v1605 = vld [vmem:[%s1387 + $0x510] sm:$0xff]
                  %1606 = vst [vmem:[%s1388 + $0x1b0] sm:$0xff] %v1605
                  %v1607 = vld [vmem:[%s1387 + $0x51c] sm:$0xff]
                  %1608 = vst [vmem:[%s1388 + $0x1b4] sm:$0xff] %v1607
                  %v1609 = vld [vmem:[%s1387 + $0x528] sm:$0xff]
                  %1610 = vst [vmem:[%s1388 + $0x1b8] sm:$0xff] %v1609
                  %v1611 = vld [vmem:[%s1387 + $0x534] sm:$0xff]
                  %1612 = vst [vmem:[%s1388 + $0x1bc] sm:$0xff] %v1611
                  %v1613 = vld [vmem:[%s1387 + $0x540] sm:$0xff]
                  %1614 = vst [vmem:[%s1388 + $0x1c0] sm:$0xff] %v1613
                  %v1615 = vld [vmem:[%s1387 + $0x54c] sm:$0xff]
                  %1616 = vst [vmem:[%s1388 + $0x1c4] sm:$0xff] %v1615
                  %v1617 = vld [vmem:[%s1387 + $0x558] sm:$0xff]
                  %1618 = vst [vmem:[%s1388 + $0x1c8] sm:$0xff] %v1617
                  %v1619 = vld [vmem:[%s1387 + $0x564] sm:$0xff]
                  %1620 = vst [vmem:[%s1388 + $0x1cc] sm:$0xff] %v1619
                  %v1621 = vld [vmem:[%s1387 + $0x570] sm:$0xff]
                  %1622 = vst [vmem:[%s1388 + $0x1d0] sm:$0xff] %v1621
                  %v1623 = vld [vmem:[%s1387 + $0x57c] sm:$0xff]
                  %1624 = vst [vmem:[%s1388 + $0x1d4] sm:$0xff] %v1623
                  %v1625 = vld [vmem:[%s1387 + $0x588] sm:$0xff]
                  %1626 = vst [vmem:[%s1388 + $0x1d8] sm:$0xff] %v1625
                  %v1627 = vld [vmem:[%s1387 + $0x594] sm:$0xff]
                  %1628 = vst [vmem:[%s1388 + $0x1dc] sm:$0xff] %v1627
                  %v1629 = vld [vmem:[%s1387 + $0x5a0] sm:$0xff]
                  %1630 = vst [vmem:[%s1388 + $0x1e0] sm:$0xff] %v1629
                  %v1631 = vld [vmem:[%s1387 + $0x5ac] sm:$0xff]
                  %1632 = vst [vmem:[%s1388 + $0x1e4] sm:$0xff] %v1631
                  %v1633 = vld [vmem:[%s1387 + $0x5b8] sm:$0xff]
                  %1634 = vst [vmem:[%s1388 + $0x1e8] sm:$0xff] %v1633
                  %v1635 = vld [vmem:[%s1387 + $0x5c4] sm:$0xff]
                  %1636 = vst [vmem:[%s1388 + $0x1ec] sm:$0xff] %v1635
                  %v1637 = vld [vmem:[%s1387 + $0x5d0] sm:$0xff]
                  %1638 = vst [vmem:[%s1388 + $0x1f0] sm:$0xff] %v1637
                  %v1639 = vld [vmem:[%s1387 + $0x5dc] sm:$0xff]
                  %1640 = vst [vmem:[%s1388 + $0x1f4] sm:$0xff] %v1639
                  %v1641 = vld [vmem:[%s1387 + $0x5e8] sm:$0xff]
                  %1642 = vst [vmem:[%s1388 + $0x1f8] sm:$0xff] %v1641
                  %v1643 = vld [vmem:[%s1387 + $0x5f4] sm:$0xff]
                  %1644 = vst [vmem:[%s1388 + $0x1fc] sm:$0xff] %v1643
                  %v1645 = vld [vmem:[%s1387 + $0x600] sm:$0xff]
                  %1646 = vst [vmem:[%s1388 + $0x200] sm:$0xff] %v1645
                  %v1647 = vld [vmem:[%s1387 + $0x60c] sm:$0xff]
                  %1648 = vst [vmem:[%s1388 + $0x204] sm:$0xff] %v1647
                  %v1649 = vld [vmem:[%s1387 + $0x618] sm:$0xff]
                  %1650 = vst [vmem:[%s1388 + $0x208] sm:$0xff] %v1649
                  %v1651 = vld [vmem:[%s1387 + $0x624] sm:$0xff]
                  %1652 = vst [vmem:[%s1388 + $0x20c] sm:$0xff] %v1651
                  %v1653 = vld [vmem:[%s1387 + $0x630] sm:$0xff]
                  %1654 = vst [vmem:[%s1388 + $0x210] sm:$0xff] %v1653
                  %v1655 = vld [vmem:[%s1387 + $0x63c] sm:$0xff]
                  %1656 = vst [vmem:[%s1388 + $0x214] sm:$0xff] %v1655
                  %v1657 = vld [vmem:[%s1387 + $0x648] sm:$0xff]
                  %1658 = vst [vmem:[%s1388 + $0x218] sm:$0xff] %v1657
                  %v1659 = vld [vmem:[%s1387 + $0x654] sm:$0xff]
                  %1660 = vst [vmem:[%s1388 + $0x21c] sm:$0xff] %v1659
                  %v1661 = vld [vmem:[%s1387 + $0x660] sm:$0xff]
                  %1662 = vst [vmem:[%s1388 + $0x220] sm:$0xff] %v1661
                  %v1663 = vld [vmem:[%s1387 + $0x66c] sm:$0xff]
                  %1664 = vst [vmem:[%s1388 + $0x224] sm:$0xff] %v1663
                  %v1665 = vld [vmem:[%s1387 + $0x678] sm:$0xff]
                  %1666 = vst [vmem:[%s1388 + $0x228] sm:$0xff] %v1665
                  %v1667 = vld [vmem:[%s1387 + $0x684] sm:$0xff]
                  %1668 = vst [vmem:[%s1388 + $0x22c] sm:$0xff] %v1667
                  %v1669 = vld [vmem:[%s1387 + $0x690] sm:$0xff]
                  %1670 = vst [vmem:[%s1388 + $0x230] sm:$0xff] %v1669
                  %v1671 = vld [vmem:[%s1387 + $0x69c] sm:$0xff]
                  %1672 = vst [vmem:[%s1388 + $0x234] sm:$0xff] %v1671
                  %v1673 = vld [vmem:[%s1387 + $0x6a8] sm:$0xff]
                  %1674 = vst [vmem:[%s1388 + $0x238] sm:$0xff] %v1673
                  %v1675 = vld [vmem:[%s1387 + $0x6b4] sm:$0xff]
                  %1676 = vst [vmem:[%s1388 + $0x23c] sm:$0xff] %v1675
                  %v1677 = vld [vmem:[%s1387 + $0x6c0] sm:$0xff]
                  %1678 = vst [vmem:[%s1388 + $0x240] sm:$0xff] %v1677
                  %v1679 = vld [vmem:[%s1387 + $0x6cc] sm:$0xff]
                  %1680 = vst [vmem:[%s1388 + $0x244] sm:$0xff] %v1679
                  %v1681 = vld [vmem:[%s1387 + $0x6d8] sm:$0xff]
                  %1682 = vst [vmem:[%s1388 + $0x248] sm:$0xff] %v1681
                  %v1683 = vld [vmem:[%s1387 + $0x6e4] sm:$0xff]
                  %1684 = vst [vmem:[%s1388 + $0x24c] sm:$0xff] %v1683
                  %v1685 = vld [vmem:[%s1387 + $0x6f0] sm:$0xff]
                  %1686 = vst [vmem:[%s1388 + $0x250] sm:$0xff] %v1685
                  %v1687 = vld [vmem:[%s1387 + $0x6fc] sm:$0xff]
                  %1688 = vst [vmem:[%s1388 + $0x254] sm:$0xff] %v1687
                  %v1689 = vld [vmem:[%s1387 + $0x708] sm:$0xff]
                  %1690 = vst [vmem:[%s1388 + $0x258] sm:$0xff] %v1689
                  %v1691 = vld [vmem:[%s1387 + $0x714] sm:$0xff]
                  %1692 = vst [vmem:[%s1388 + $0x25c] sm:$0xff] %v1691
                  %v1693 = vld [vmem:[%s1387 + $0x720] sm:$0xff]
                  %1694 = vst [vmem:[%s1388 + $0x260] sm:$0xff] %v1693
                  %v1695 = vld [vmem:[%s1387 + $0x72c] sm:$0xff]
                  %1696 = vst [vmem:[%s1388 + $0x264] sm:$0xff] %v1695
                  %v1697 = vld [vmem:[%s1387 + $0x738] sm:$0xff]
                  %1698 = vst [vmem:[%s1388 + $0x268] sm:$0xff] %v1697
                  %v1699 = vld [vmem:[%s1387 + $0x744] sm:$0xff]
                  %1700 = vst [vmem:[%s1388 + $0x26c] sm:$0xff] %v1699
                  %v1701 = vld [vmem:[%s1387 + $0x750] sm:$0xff]
                  %1702 = vst [vmem:[%s1388 + $0x270] sm:$0xff] %v1701
                  %v1703 = vld [vmem:[%s1387 + $0x75c] sm:$0xff]
                  %1704 = vst [vmem:[%s1388 + $0x274] sm:$0xff] %v1703
                  %v1705 = vld [vmem:[%s1387 + $0x768] sm:$0xff]
                  %1706 = vst [vmem:[%s1388 + $0x278] sm:$0xff] %v1705
                  %v1707 = vld [vmem:[%s1387 + $0x774] sm:$0xff]
                  %1708 = vst [vmem:[%s1388 + $0x27c] sm:$0xff] %v1707
                  %v1709 = vld [vmem:[%s1387 + $0x780] sm:$0xff]
                  %1710 = vst [vmem:[%s1388 + $0x280] sm:$0xff] %v1709
                  %v1711 = vld [vmem:[%s1387 + $0x78c] sm:$0xff]
                  %1712 = vst [vmem:[%s1388 + $0x284] sm:$0xff] %v1711
                  %v1713 = vld [vmem:[%s1387 + $0x798] sm:$0xff]
                  %1714 = vst [vmem:[%s1388 + $0x288] sm:$0xff] %v1713
                  %v1715 = vld [vmem:[%s1387 + $0x7a4] sm:$0xff]
                  %1716 = vst [vmem:[%s1388 + $0x28c] sm:$0xff] %v1715
                  %v1717 = vld [vmem:[%s1387 + $0x7b0] sm:$0xff]
                  %1718 = vst [vmem:[%s1388 + $0x290] sm:$0xff] %v1717
                  %v1719 = vld [vmem:[%s1387 + $0x7bc] sm:$0xff]
                  %1720 = vst [vmem:[%s1388 + $0x294] sm:$0xff] %v1719
                  %v1721 = vld [vmem:[%s1387 + $0x7c8] sm:$0xff]
                  %1722 = vst [vmem:[%s1388 + $0x298] sm:$0xff] %v1721
                  %v1723 = vld [vmem:[%s1387 + $0x7d4] sm:$0xff]
                  %1724 = vst [vmem:[%s1388 + $0x29c] sm:$0xff] %v1723
                  %v1725 = vld [vmem:[%s1387 + $0x7e0] sm:$0xff]
                  %1726 = vst [vmem:[%s1388 + $0x2a0] sm:$0xff] %v1725
                  %v1727 = vld [vmem:[%s1387 + $0x7ec] sm:$0xff]
                  %1728 = vst [vmem:[%s1388 + $0x2a4] sm:$0xff] %v1727
                  %v1729 = vld [vmem:[%s1387 + $0x7f8] sm:$0xff]
                  %1730 = vst [vmem:[%s1388 + $0x2a8] sm:$0xff] %v1729
                  %v1731 = vld [vmem:[%s1387 + $0x804] sm:$0xff]
                  %1732 = vst [vmem:[%s1388 + $0x2ac] sm:$0xff] %v1731
                  %v1733 = vld [vmem:[%s1387 + $0x810] sm:$0xff]
                  %1734 = vst [vmem:[%s1388 + $0x2b0] sm:$0xff] %v1733
                  %v1735 = vld [vmem:[%s1387 + $0x81c] sm:$0xff]
                  %1736 = vst [vmem:[%s1388 + $0x2b4] sm:$0xff] %v1735
                  %v1737 = vld [vmem:[%s1387 + $0x828] sm:$0xff]
                  %1738 = vst [vmem:[%s1388 + $0x2b8] sm:$0xff] %v1737
                  %v1739 = vld [vmem:[%s1387 + $0x834] sm:$0xff]
                  %1740 = vst [vmem:[%s1388 + $0x2bc] sm:$0xff] %v1739
                  %v1741 = vld [vmem:[%s1387 + $0x840] sm:$0xff]
                  %1742 = vst [vmem:[%s1388 + $0x2c0] sm:$0xff] %v1741
                  %v1743 = vld [vmem:[%s1387 + $0x84c] sm:$0xff]
                  %1744 = vst [vmem:[%s1388 + $0x2c4] sm:$0xff] %v1743
                  %v1745 = vld [vmem:[%s1387 + $0x858] sm:$0xff]
                  %1746 = vst [vmem:[%s1388 + $0x2c8] sm:$0xff] %v1745
                  %v1747 = vld [vmem:[%s1387 + $0x864] sm:$0xff]
                  %1748 = vst [vmem:[%s1388 + $0x2cc] sm:$0xff] %v1747
                  %v1749 = vld [vmem:[%s1387 + $0x870] sm:$0xff]
                  %1750 = vst [vmem:[%s1388 + $0x2d0] sm:$0xff] %v1749
                  %v1751 = vld [vmem:[%s1387 + $0x87c] sm:$0xff]
                  %1752 = vst [vmem:[%s1388 + $0x2d4] sm:$0xff] %v1751
                  %v1753 = vld [vmem:[%s1387 + $0x888] sm:$0xff]
                  %1754 = vst [vmem:[%s1388 + $0x2d8] sm:$0xff] %v1753
                  %v1755 = vld [vmem:[%s1387 + $0x894] sm:$0xff]
                  %1756 = vst [vmem:[%s1388 + $0x2dc] sm:$0xff] %v1755
                  %v1757 = vld [vmem:[%s1387 + $0x8a0] sm:$0xff]
                  %1758 = vst [vmem:[%s1388 + $0x2e0] sm:$0xff] %v1757
                  %v1759 = vld [vmem:[%s1387 + $0x8ac] sm:$0xff]
                  %1760 = vst [vmem:[%s1388 + $0x2e4] sm:$0xff] %v1759
                  %v1761 = vld [vmem:[%s1387 + $0x8b8] sm:$0xff]
                  %1762 = vst [vmem:[%s1388 + $0x2e8] sm:$0xff] %v1761
                  %v1763 = vld [vmem:[%s1387 + $0x8c4] sm:$0xff]
                  %1764 = vst [vmem:[%s1388 + $0x2ec] sm:$0xff] %v1763
                  %v1765 = vld [vmem:[%s1387 + $0x8d0] sm:$0xff]
                  %1766 = vst [vmem:[%s1388 + $0x2f0] sm:$0xff] %v1765
                  %v1767 = vld [vmem:[%s1387 + $0x8dc] sm:$0xff]
                  %1768 = vst [vmem:[%s1388 + $0x2f4] sm:$0xff] %v1767
                  %v1769 = vld [vmem:[%s1387 + $0x8e8] sm:$0xff]
                  %1770 = vst [vmem:[%s1388 + $0x2f8] sm:$0xff] %v1769
                  %v1771 = vld [vmem:[%s1387 + $0x8f4] sm:$0xff]
                  %1772 = vst [vmem:[%s1388 + $0x2fc] sm:$0xff] %v1771
                  %v1773 = vld [vmem:[%s1387 + $0x900] sm:$0xff]
                  %1774 = vst [vmem:[%s1388 + $0x300] sm:$0xff] %v1773
                  %v1775 = vld [vmem:[%s1387 + $0x90c] sm:$0xff]
                  %1776 = vst [vmem:[%s1388 + $0x304] sm:$0xff] %v1775
                  %v1777 = vld [vmem:[%s1387 + $0x918] sm:$0xff]
                  %1778 = vst [vmem:[%s1388 + $0x308] sm:$0xff] %v1777
                  %v1779 = vld [vmem:[%s1387 + $0x924] sm:$0xff]
                  %1780 = vst [vmem:[%s1388 + $0x30c] sm:$0xff] %v1779
                  %v1781 = vld [vmem:[%s1387 + $0x930] sm:$0xff]
                  %1782 = vst [vmem:[%s1388 + $0x310] sm:$0xff] %v1781
                  %v1783 = vld [vmem:[%s1387 + $0x93c] sm:$0xff]
                  %1784 = vst [vmem:[%s1388 + $0x314] sm:$0xff] %v1783
                  %v1785 = vld [vmem:[%s1387 + $0x948] sm:$0xff]
                  %1786 = vst [vmem:[%s1388 + $0x318] sm:$0xff] %v1785
                  %v1787 = vld [vmem:[%s1387 + $0x954] sm:$0xff]
                  %1788 = vst [vmem:[%s1388 + $0x31c] sm:$0xff] %v1787
                  %v1789 = vld [vmem:[%s1387 + $0x960] sm:$0xff]
                  %1790 = vst [vmem:[%s1388 + $0x320] sm:$0xff] %v1789
                  %v1791 = vld [vmem:[%s1387 + $0x96c] sm:$0xff]
                  %1792 = vst [vmem:[%s1388 + $0x324] sm:$0xff] %v1791
                  %v1793 = vld [vmem:[%s1387 + $0x978] sm:$0xff]
                  %1794 = vst [vmem:[%s1388 + $0x328] sm:$0xff] %v1793
                  %v1795 = vld [vmem:[%s1387 + $0x984] sm:$0xff]
                  %1796 = vst [vmem:[%s1388 + $0x32c] sm:$0xff] %v1795
                  %v1797 = vld [vmem:[%s1387 + $0x990] sm:$0xff]
                  %1798 = vst [vmem:[%s1388 + $0x330] sm:$0xff] %v1797
                  %v1799 = vld [vmem:[%s1387 + $0x99c] sm:$0xff]
                  %1800 = vst [vmem:[%s1388 + $0x334] sm:$0xff] %v1799
                  %v1801 = vld [vmem:[%s1387 + $0x9a8] sm:$0xff]
                  %1802 = vst [vmem:[%s1388 + $0x338] sm:$0xff] %v1801
                  %v1803 = vld [vmem:[%s1387 + $0x9b4] sm:$0xff]
                  %1804 = vst [vmem:[%s1388 + $0x33c] sm:$0xff] %v1803
                  %v1805 = vld [vmem:[%s1387 + $0x9c0] sm:$0xff]
                  %1806 = vst [vmem:[%s1388 + $0x340] sm:$0xff] %v1805
                  %v1807 = vld [vmem:[%s1387 + $0x9cc] sm:$0xff]
                  %1808 = vst [vmem:[%s1388 + $0x344] sm:$0xff] %v1807
                  %v1809 = vld [vmem:[%s1387 + $0x9d8] sm:$0xff]
                  %1810 = vst [vmem:[%s1388 + $0x348] sm:$0xff] %v1809
                  %v1811 = vld [vmem:[%s1387 + $0x9e4] sm:$0xff]
                  %1812 = vst [vmem:[%s1388 + $0x34c] sm:$0xff] %v1811
                  %v1813 = vld [vmem:[%s1387 + $0x9f0] sm:$0xff]
                  %1814 = vst [vmem:[%s1388 + $0x350] sm:$0xff] %v1813
                  %v1815 = vld [vmem:[%s1387 + $0x9fc] sm:$0xff]
                  %1816 = vst [vmem:[%s1388 + $0x354] sm:$0xff] %v1815
                  %v1817 = vld [vmem:[%s1387 + $0xa08] sm:$0xff]
                  %1818 = vst [vmem:[%s1388 + $0x358] sm:$0xff] %v1817
                  %v1819 = vld [vmem:[%s1387 + $0xa14] sm:$0xff]
                  %1820 = vst [vmem:[%s1388 + $0x35c] sm:$0xff] %v1819
                  %v1821 = vld [vmem:[%s1387 + $0xa20] sm:$0xff]
                  %1822 = vst [vmem:[%s1388 + $0x360] sm:$0xff] %v1821
                  %v1823 = vld [vmem:[%s1387 + $0xa2c] sm:$0xff]
                  %1824 = vst [vmem:[%s1388 + $0x364] sm:$0xff] %v1823
                  %v1825 = vld [vmem:[%s1387 + $0xa38] sm:$0xff]
                  %1826 = vst [vmem:[%s1388 + $0x368] sm:$0xff] %v1825
                  %v1827 = vld [vmem:[%s1387 + $0xa44] sm:$0xff]
                  %1828 = vst [vmem:[%s1388 + $0x36c] sm:$0xff] %v1827
                  %v1829 = vld [vmem:[%s1387 + $0xa50] sm:$0xff]
                  %1830 = vst [vmem:[%s1388 + $0x370] sm:$0xff] %v1829
                  %v1831 = vld [vmem:[%s1387 + $0xa5c] sm:$0xff]
                  %1832 = vst [vmem:[%s1388 + $0x374] sm:$0xff] %v1831
                  %v1833 = vld [vmem:[%s1387 + $0xa68] sm:$0xff]
                  %1834 = vst [vmem:[%s1388 + $0x378] sm:$0xff] %v1833
                  %v1835 = vld [vmem:[%s1387 + $0xa74] sm:$0xff]
                  %1836 = vst [vmem:[%s1388 + $0x37c] sm:$0xff] %v1835
                  %v1837 = vld [vmem:[%s1387 + $0xa80] sm:$0xff]
                  %1838 = vst [vmem:[%s1388 + $0x380] sm:$0xff] %v1837
                  %v1839 = vld [vmem:[%s1387 + $0xa8c] sm:$0xff]
                  %1840 = vst [vmem:[%s1388 + $0x384] sm:$0xff] %v1839
                  %v1841 = vld [vmem:[%s1387 + $0xa98] sm:$0xff]
                  %1842 = vst [vmem:[%s1388 + $0x388] sm:$0xff] %v1841
                  %v1843 = vld [vmem:[%s1387 + $0xaa4] sm:$0xff]
                  %1844 = vst [vmem:[%s1388 + $0x38c] sm:$0xff] %v1843
                  %v1845 = vld [vmem:[%s1387 + $0xab0] sm:$0xff]
                  %1846 = vst [vmem:[%s1388 + $0x390] sm:$0xff] %v1845
                  %v1847 = vld [vmem:[%s1387 + $0xabc] sm:$0xff]
                  %1848 = vst [vmem:[%s1388 + $0x394] sm:$0xff] %v1847
                  %v1849 = vld [vmem:[%s1387 + $0xac8] sm:$0xff]
                  %1850 = vst [vmem:[%s1388 + $0x398] sm:$0xff] %v1849
                  %v1851 = vld [vmem:[%s1387 + $0xad4] sm:$0xff]
                  %1852 = vst [vmem:[%s1388 + $0x39c] sm:$0xff] %v1851
                  %v1853 = vld [vmem:[%s1387 + $0xae0] sm:$0xff]
                  %1854 = vst [vmem:[%s1388 + $0x3a0] sm:$0xff] %v1853
                  %v1855 = vld [vmem:[%s1387 + $0xaec] sm:$0xff]
                  %1856 = vst [vmem:[%s1388 + $0x3a4] sm:$0xff] %v1855
                  %v1857 = vld [vmem:[%s1387 + $0xaf8] sm:$0xff]
                  %1858 = vst [vmem:[%s1388 + $0x3a8] sm:$0xff] %v1857
                  %v1859 = vld [vmem:[%s1387 + $0xb04] sm:$0xff]
                  %1860 = vst [vmem:[%s1388 + $0x3ac] sm:$0xff] %v1859
                  %v1861 = vld [vmem:[%s1387 + $0xb10] sm:$0xff]
                  %1862 = vst [vmem:[%s1388 + $0x3b0] sm:$0xff] %v1861
                  %v1863 = vld [vmem:[%s1387 + $0xb1c] sm:$0xff]
                  %1864 = vst [vmem:[%s1388 + $0x3b4] sm:$0xff] %v1863
                  %v1865 = vld [vmem:[%s1387 + $0xb28] sm:$0xff]
                  %1866 = vst [vmem:[%s1388 + $0x3b8] sm:$0xff] %v1865
                  %v1867 = vld [vmem:[%s1387 + $0xb34] sm:$0xff]
                  %1868 = vst [vmem:[%s1388 + $0x3bc] sm:$0xff] %v1867
                  %v1869 = vld [vmem:[%s1387 + $0xb40] sm:$0xff]
                  %1870 = vst [vmem:[%s1388 + $0x3c0] sm:$0xff] %v1869
                  %v1871 = vld [vmem:[%s1387 + $0xb4c] sm:$0xff]
                  %1872 = vst [vmem:[%s1388 + $0x3c4] sm:$0xff] %v1871
                  %v1873 = vld [vmem:[%s1387 + $0xb58] sm:$0xff]
                  %1874 = vst [vmem:[%s1388 + $0x3c8] sm:$0xff] %v1873
                  %v1875 = vld [vmem:[%s1387 + $0xb64] sm:$0xff]
                  %1876 = vst [vmem:[%s1388 + $0x3cc] sm:$0xff] %v1875
                  %v1877 = vld [vmem:[%s1387 + $0xb70] sm:$0xff]
                  %1878 = vst [vmem:[%s1388 + $0x3d0] sm:$0xff] %v1877
                  %v1879 = vld [vmem:[%s1387 + $0xb7c] sm:$0xff]
                  %1880 = vst [vmem:[%s1388 + $0x3d4] sm:$0xff] %v1879
                  %v1881 = vld [vmem:[%s1387 + $0xb88] sm:$0xff]
                  %1882 = vst [vmem:[%s1388 + $0x3d8] sm:$0xff] %v1881
                  %v1883 = vld [vmem:[%s1387 + $0xb94] sm:$0xff]
                  %1884 = vst [vmem:[%s1388 + $0x3dc] sm:$0xff] %v1883
                  %v1885 = vld [vmem:[%s1387 + $0xba0] sm:$0xff]
                  %1886 = vst [vmem:[%s1388 + $0x3e0] sm:$0xff] %v1885
                  %v1887 = vld [vmem:[%s1387 + $0xbac] sm:$0xff]
                  %1888 = vst [vmem:[%s1388 + $0x3e4] sm:$0xff] %v1887
                  %v1889 = vld [vmem:[%s1387 + $0xbb8] sm:$0xff]
                  %1890 = vst [vmem:[%s1388 + $0x3e8] sm:$0xff] %v1889
                  %v1891 = vld [vmem:[%s1387 + $0xbc4] sm:$0xff]
                  %1892 = vst [vmem:[%s1388 + $0x3ec] sm:$0xff] %v1891
                  %v1893 = vld [vmem:[%s1387 + $0xbd0] sm:$0xff]
                  %1894 = vst [vmem:[%s1388 + $0x3f0] sm:$0xff] %v1893
                  %v1895 = vld [vmem:[%s1387 + $0xbdc] sm:$0xff]
                  %1896 = vst [vmem:[%s1388 + $0x3f4] sm:$0xff] %v1895
                  %v1897 = vld [vmem:[%s1387 + $0xbe8] sm:$0xff]
                  %1898 = vst [vmem:[%s1388 + $0x3f8] sm:$0xff] %v1897
                  %v1899 = vld [vmem:[%s1387 + $0xbf4] sm:$0xff]
                  %1900 = vst [vmem:[%s1388 + $0x3fc] sm:$0xff] %v1899
                  %v1901 = vld [vmem:[%s1387 + $0xc00] sm:$0xff]
                  %1902 = vst [vmem:[%s1388 + $0x400] sm:$0xff] %v1901
                  %v1903 = vld [vmem:[%s1387 + $0xc0c] sm:$0xff]
                  %1904 = vst [vmem:[%s1388 + $0x404] sm:$0xff] %v1903
                  %v1905 = vld [vmem:[%s1387 + $0xc18] sm:$0xff]
                  %1906 = vst [vmem:[%s1388 + $0x408] sm:$0xff] %v1905
                  %v1907 = vld [vmem:[%s1387 + $0xc24] sm:$0xff]
                  %1908 = vst [vmem:[%s1388 + $0x40c] sm:$0xff] %v1907
                  %v1909 = vld [vmem:[%s1387 + $0xc30] sm:$0xff]
                  %1910 = vst [vmem:[%s1388 + $0x410] sm:$0xff] %v1909
                  %v1911 = vld [vmem:[%s1387 + $0xc3c] sm:$0xff]
                  %1912 = vst [vmem:[%s1388 + $0x414] sm:$0xff] %v1911
                  %v1913 = vld [vmem:[%s1387 + $0xc48] sm:$0xff]
                  %1914 = vst [vmem:[%s1388 + $0x418] sm:$0xff] %v1913
                  %v1915 = vld [vmem:[%s1387 + $0xc54] sm:$0xff]
                  %1916 = vst [vmem:[%s1388 + $0x41c] sm:$0xff] %v1915
                  %v1917 = vld [vmem:[%s1387 + $0xc60] sm:$0xff]
                  %1918 = vst [vmem:[%s1388 + $0x420] sm:$0xff] %v1917
                  %v1919 = vld [vmem:[%s1387 + $0xc6c] sm:$0xff]
                  %1920 = vst [vmem:[%s1388 + $0x424] sm:$0xff] %v1919
                  %v1921 = vld [vmem:[%s1387 + $0xc78] sm:$0xff]
                  %1922 = vst [vmem:[%s1388 + $0x428] sm:$0xff] %v1921
                  %v1923 = vld [vmem:[%s1387 + $0xc84] sm:$0xff]
                  %1924 = vst [vmem:[%s1388 + $0x42c] sm:$0xff] %v1923
                  %v1925 = vld [vmem:[%s1387 + $0xc90] sm:$0xff]
                  %1926 = vst [vmem:[%s1388 + $0x430] sm:$0xff] %v1925
                  %v1927 = vld [vmem:[%s1387 + $0xc9c] sm:$0xff]
                  %1928 = vst [vmem:[%s1388 + $0x434] sm:$0xff] %v1927
                  %v1929 = vld [vmem:[%s1387 + $0xca8] sm:$0xff]
                  %1930 = vst [vmem:[%s1388 + $0x438] sm:$0xff] %v1929
                  %v1931 = vld [vmem:[%s1387 + $0xcb4] sm:$0xff]
                  %1932 = vst [vmem:[%s1388 + $0x43c] sm:$0xff] %v1931
                  %v1933 = vld [vmem:[%s1387 + $0xcc0] sm:$0xff]
                  %1934 = vst [vmem:[%s1388 + $0x440] sm:$0xff] %v1933
                  %v1935 = vld [vmem:[%s1387 + $0xccc] sm:$0xff]
                  %1936 = vst [vmem:[%s1388 + $0x444] sm:$0xff] %v1935
                  %v1937 = vld [vmem:[%s1387 + $0xcd8] sm:$0xff]
                  %1938 = vst [vmem:[%s1388 + $0x448] sm:$0xff] %v1937
                  %v1939 = vld [vmem:[%s1387 + $0xce4] sm:$0xff]
                  %1940 = vst [vmem:[%s1388 + $0x44c] sm:$0xff] %v1939
                  %v1941 = vld [vmem:[%s1387 + $0xcf0] sm:$0xff]
                  %1942 = vst [vmem:[%s1388 + $0x450] sm:$0xff] %v1941
                  %v1943 = vld [vmem:[%s1387 + $0xcfc] sm:$0xff]
                  %1944 = vst [vmem:[%s1388 + $0x454] sm:$0xff] %v1943
                  %v1945 = vld [vmem:[%s1387 + $0xd08] sm:$0xff]
                  %1946 = vst [vmem:[%s1388 + $0x458] sm:$0xff] %v1945
                  %v1947 = vld [vmem:[%s1387 + $0xd14] sm:$0xff]
                  %1948 = vst [vmem:[%s1388 + $0x45c] sm:$0xff] %v1947
                  %v1949 = vld [vmem:[%s1387 + $0xd20] sm:$0xff]
                  %1950 = vst [vmem:[%s1388 + $0x460] sm:$0xff] %v1949
                  %v1951 = vld [vmem:[%s1387 + $0xd2c] sm:$0xff]
                  %1952 = vst [vmem:[%s1388 + $0x464] sm:$0xff] %v1951
                  %v1953 = vld [vmem:[%s1387 + $0xd38] sm:$0xff]
                  %1954 = vst [vmem:[%s1388 + $0x468] sm:$0xff] %v1953
                  %v1955 = vld [vmem:[%s1387 + $0xd44] sm:$0xff]
                  %1956 = vst [vmem:[%s1388 + $0x46c] sm:$0xff] %v1955
                  %v1957 = vld [vmem:[%s1387 + $0xd50] sm:$0xff]
                  %1958 = vst [vmem:[%s1388 + $0x470] sm:$0xff] %v1957
                  %v1959 = vld [vmem:[%s1387 + $0xd5c] sm:$0xff]
                  %1960 = vst [vmem:[%s1388 + $0x474] sm:$0xff] %v1959
                  %v1961 = vld [vmem:[%s1387 + $0xd68] sm:$0xff]
                  %1962 = vst [vmem:[%s1388 + $0x478] sm:$0xff] %v1961
                  %v1963 = vld [vmem:[%s1387 + $0xd74] sm:$0xff]
                  %1964 = vst [vmem:[%s1388 + $0x47c] sm:$0xff] %v1963
                  %s1965 = sadd.s32 1, %s1386
                  %p1966 = scmp.ge.s32.totalorder %s1965, 0
                  %s1967 = scalar_select %p1966, 0, %s1965
                  %s1968 = smul.u32 %s1967, 8
                  %s1969 = smul.u32 %s1967, 8
                  %s1970 = scalar_lea.vmem %s191, %s1968
                  %s1971 = scalar_lea.vmem %s189, %s1969 [#allocation2]
                $region63: #{embedding_layer_forward.8} parent=57 // loop_footer
                  %s1385 = sadd.s32 1, %s1381
                $region64: #{embedding_layer_forward.8} parent=57 // loop_footer_branch
                  %1380 = sbr.rel target = $region60
                $region65: #{embedding_layer_forward.8} parent=57 // loop_exit
                  _
                %s1973 = ssub.s32 16, 1
                loop: start=0, step=1, limit=1
                $region66: #{embedding_layer_forward.8} parent=57 // loop_pre_header
                  _
                $region67: #{embedding_layer_forward.8} parent=57 // loop_header
                  %s1975 = sphi 0, %s1979
                  %p1976 = scmp.ge.s32.totalorder %s1975, 1
                  %s1980 = sphi %s191, %s191
                  %s1981 = sphi %s189, %s189
                $region68: #{embedding_layer_forward.8} parent=57 // loop_header_branch
                  %1978 = sbr.rel (%p1976) target = $region72
                $region69: #{embedding_layer_forward.8} parent=57 // loop_body
                  %v1982 = vld [vmem:[%s1980] sm:%s1973]
                  %1983 = vst [vmem:[%s1981] sm:%s1973] %v1982
                  %v1984 = vld [vmem:[%s1980 + $0xc] sm:%s1973]
                  %1985 = vst [vmem:[%s1981 + $0x4] sm:%s1973] %v1984
                  %v1986 = vld [vmem:[%s1980 + $0x18] sm:%s1973]
                  %1987 = vst [vmem:[%s1981 + $0x8] sm:%s1973] %v1986
                  %v1988 = vld [vmem:[%s1980 + $0x24] sm:%s1973]
                  %1989 = vst [vmem:[%s1981 + $0xc] sm:%s1973] %v1988
                  %v1990 = vld [vmem:[%s1980 + $0x30] sm:%s1973]
                  %1991 = vst [vmem:[%s1981 + $0x10] sm:%s1973] %v1990
                  %v1992 = vld [vmem:[%s1980 + $0x3c] sm:%s1973]
                  %1993 = vst [vmem:[%s1981 + $0x14] sm:%s1973] %v1992
                  %v1994 = vld [vmem:[%s1980 + $0x48] sm:%s1973]
                  %1995 = vst [vmem:[%s1981 + $0x18] sm:%s1973] %v1994
                  %v1996 = vld [vmem:[%s1980 + $0x54] sm:%s1973]
                  %1997 = vst [vmem:[%s1981 + $0x1c] sm:%s1973] %v1996
                  %v1998 = vld [vmem:[%s1980 + $0x60] sm:%s1973]
                  %1999 = vst [vmem:[%s1981 + $0x20] sm:%s1973] %v1998
                  %v2000 = vld [vmem:[%s1980 + $0x6c] sm:%s1973]
                  %2001 = vst [vmem:[%s1981 + $0x24] sm:%s1973] %v2000
                  %v2002 = vld [vmem:[%s1980 + $0x78] sm:%s1973]
                  %2003 = vst [vmem:[%s1981 + $0x28] sm:%s1973] %v2002
                  %v2004 = vld [vmem:[%s1980 + $0x84] sm:%s1973]
                  %2005 = vst [vmem:[%s1981 + $0x2c] sm:%s1973] %v2004
                  %v2006 = vld [vmem:[%s1980 + $0x90] sm:%s1973]
                  %2007 = vst [vmem:[%s1981 + $0x30] sm:%s1973] %v2006
                  %v2008 = vld [vmem:[%s1980 + $0x9c] sm:%s1973]
                  %2009 = vst [vmem:[%s1981 + $0x34] sm:%s1973] %v2008
                  %v2010 = vld [vmem:[%s1980 + $0xa8] sm:%s1973]
                  %2011 = vst [vmem:[%s1981 + $0x38] sm:%s1973] %v2010
                  %v2012 = vld [vmem:[%s1980 + $0xb4] sm:%s1973]
                  %2013 = vst [vmem:[%s1981 + $0x3c] sm:%s1973] %v2012
                  %v2014 = vld [vmem:[%s1980 + $0xc0] sm:%s1973]
                  %2015 = vst [vmem:[%s1981 + $0x40] sm:%s1973] %v2014
                  %v2016 = vld [vmem:[%s1980 + $0xcc] sm:%s1973]
                  %2017 = vst [vmem:[%s1981 + $0x44] sm:%s1973] %v2016
                  %v2018 = vld [vmem:[%s1980 + $0xd8] sm:%s1973]
                  %2019 = vst [vmem:[%s1981 + $0x48] sm:%s1973] %v2018
                  %v2020 = vld [vmem:[%s1980 + $0xe4] sm:%s1973]
                  %2021 = vst [vmem:[%s1981 + $0x4c] sm:%s1973] %v2020
                  %v2022 = vld [vmem:[%s1980 + $0xf0] sm:%s1973]
                  %2023 = vst [vmem:[%s1981 + $0x50] sm:%s1973] %v2022
                  %v2024 = vld [vmem:[%s1980 + $0xfc] sm:%s1973]
                  %2025 = vst [vmem:[%s1981 + $0x54] sm:%s1973] %v2024
                  %v2026 = vld [vmem:[%s1980 + $0x108] sm:%s1973]
                  %2027 = vst [vmem:[%s1981 + $0x58] sm:%s1973] %v2026
                  %v2028 = vld [vmem:[%s1980 + $0x114] sm:%s1973]
                  %2029 = vst [vmem:[%s1981 + $0x5c] sm:%s1973] %v2028
                  %v2030 = vld [vmem:[%s1980 + $0x120] sm:%s1973]
                  %2031 = vst [vmem:[%s1981 + $0x60] sm:%s1973] %v2030
                  %v2032 = vld [vmem:[%s1980 + $0x12c] sm:%s1973]
                  %2033 = vst [vmem:[%s1981 + $0x64] sm:%s1973] %v2032
                  %v2034 = vld [vmem:[%s1980 + $0x138] sm:%s1973]
                  %2035 = vst [vmem:[%s1981 + $0x68] sm:%s1973] %v2034
                  %v2036 = vld [vmem:[%s1980 + $0x144] sm:%s1973]
                  %2037 = vst [vmem:[%s1981 + $0x6c] sm:%s1973] %v2036
                  %v2038 = vld [vmem:[%s1980 + $0x150] sm:%s1973]
                  %2039 = vst [vmem:[%s1981 + $0x70] sm:%s1973] %v2038
                  %v2040 = vld [vmem:[%s1980 + $0x15c] sm:%s1973]
                  %2041 = vst [vmem:[%s1981 + $0x74] sm:%s1973] %v2040
                  %v2042 = vld [vmem:[%s1980 + $0x168] sm:%s1973]
                  %2043 = vst [vmem:[%s1981 + $0x78] sm:%s1973] %v2042
                  %v2044 = vld [vmem:[%s1980 + $0x174] sm:%s1973]
                  %2045 = vst [vmem:[%s1981 + $0x7c] sm:%s1973] %v2044
                  %v2046 = vld [vmem:[%s1980 + $0x180] sm:%s1973]
                  %2047 = vst [vmem:[%s1981 + $0x80] sm:%s1973] %v2046
                  %v2048 = vld [vmem:[%s1980 + $0x18c] sm:%s1973]
                  %2049 = vst [vmem:[%s1981 + $0x84] sm:%s1973] %v2048
                  %v2050 = vld [vmem:[%s1980 + $0x198] sm:%s1973]
                  %2051 = vst [vmem:[%s1981 + $0x88] sm:%s1973] %v2050
                  %v2052 = vld [vmem:[%s1980 + $0x1a4] sm:%s1973]
                  %2053 = vst [vmem:[%s1981 + $0x8c] sm:%s1973] %v2052
                  %v2054 = vld [vmem:[%s1980 + $0x1b0] sm:%s1973]
                  %2055 = vst [vmem:[%s1981 + $0x90] sm:%s1973] %v2054
                  %v2056 = vld [vmem:[%s1980 + $0x1bc] sm:%s1973]
                  %2057 = vst [vmem:[%s1981 + $0x94] sm:%s1973] %v2056
                  %v2058 = vld [vmem:[%s1980 + $0x1c8] sm:%s1973]
                  %2059 = vst [vmem:[%s1981 + $0x98] sm:%s1973] %v2058
                  %v2060 = vld [vmem:[%s1980 + $0x1d4] sm:%s1973]
                  %2061 = vst [vmem:[%s1981 + $0x9c] sm:%s1973] %v2060
                  %v2062 = vld [vmem:[%s1980 + $0x1e0] sm:%s1973]
                  %2063 = vst [vmem:[%s1981 + $0xa0] sm:%s1973] %v2062
                  %v2064 = vld [vmem:[%s1980 + $0x1ec] sm:%s1973]
                  %2065 = vst [vmem:[%s1981 + $0xa4] sm:%s1973] %v2064
                  %v2066 = vld [vmem:[%s1980 + $0x1f8] sm:%s1973]
                  %2067 = vst [vmem:[%s1981 + $0xa8] sm:%s1973] %v2066
                  %v2068 = vld [vmem:[%s1980 + $0x204] sm:%s1973]
                  %2069 = vst [vmem:[%s1981 + $0xac] sm:%s1973] %v2068
                  %v2070 = vld [vmem:[%s1980 + $0x210] sm:%s1973]
                  %2071 = vst [vmem:[%s1981 + $0xb0] sm:%s1973] %v2070
                  %v2072 = vld [vmem:[%s1980 + $0x21c] sm:%s1973]
                  %2073 = vst [vmem:[%s1981 + $0xb4] sm:%s1973] %v2072
                  %v2074 = vld [vmem:[%s1980 + $0x228] sm:%s1973]
                  %2075 = vst [vmem:[%s1981 + $0xb8] sm:%s1973] %v2074
                  %v2076 = vld [vmem:[%s1980 + $0x234] sm:%s1973]
                  %2077 = vst [vmem:[%s1981 + $0xbc] sm:%s1973] %v2076
                  %v2078 = vld [vmem:[%s1980 + $0x240] sm:%s1973]
                  %2079 = vst [vmem:[%s1981 + $0xc0] sm:%s1973] %v2078
                  %v2080 = vld [vmem:[%s1980 + $0x24c] sm:%s1973]
                  %2081 = vst [vmem:[%s1981 + $0xc4] sm:%s1973] %v2080
                  %v2082 = vld [vmem:[%s1980 + $0x258] sm:%s1973]
                  %2083 = vst [vmem:[%s1981 + $0xc8] sm:%s1973] %v2082
                  %v2084 = vld [vmem:[%s1980 + $0x264] sm:%s1973]
                  %2085 = vst [vmem:[%s1981 + $0xcc] sm:%s1973] %v2084
                  %v2086 = vld [vmem:[%s1980 + $0x270] sm:%s1973]
                  %2087 = vst [vmem:[%s1981 + $0xd0] sm:%s1973] %v2086
                  %v2088 = vld [vmem:[%s1980 + $0x27c] sm:%s1973]
                  %2089 = vst [vmem:[%s1981 + $0xd4] sm:%s1973] %v2088
                  %v2090 = vld [vmem:[%s1980 + $0x288] sm:%s1973]
                  %2091 = vst [vmem:[%s1981 + $0xd8] sm:%s1973] %v2090
                  %v2092 = vld [vmem:[%s1980 + $0x294] sm:%s1973]
                  %2093 = vst [vmem:[%s1981 + $0xdc] sm:%s1973] %v2092
                  %v2094 = vld [vmem:[%s1980 + $0x2a0] sm:%s1973]
                  %2095 = vst [vmem:[%s1981 + $0xe0] sm:%s1973] %v2094
                  %v2096 = vld [vmem:[%s1980 + $0x2ac] sm:%s1973]
                  %2097 = vst [vmem:[%s1981 + $0xe4] sm:%s1973] %v2096
                  %v2098 = vld [vmem:[%s1980 + $0x2b8] sm:%s1973]
                  %2099 = vst [vmem:[%s1981 + $0xe8] sm:%s1973] %v2098
                  %v2100 = vld [vmem:[%s1980 + $0x2c4] sm:%s1973]
                  %2101 = vst [vmem:[%s1981 + $0xec] sm:%s1973] %v2100
                  %v2102 = vld [vmem:[%s1980 + $0x2d0] sm:%s1973]
                  %2103 = vst [vmem:[%s1981 + $0xf0] sm:%s1973] %v2102
                  %v2104 = vld [vmem:[%s1980 + $0x2dc] sm:%s1973]
                  %2105 = vst [vmem:[%s1981 + $0xf4] sm:%s1973] %v2104
                  %v2106 = vld [vmem:[%s1980 + $0x2e8] sm:%s1973]
                  %2107 = vst [vmem:[%s1981 + $0xf8] sm:%s1973] %v2106
                  %v2108 = vld [vmem:[%s1980 + $0x2f4] sm:%s1973]
                  %2109 = vst [vmem:[%s1981 + $0xfc] sm:%s1973] %v2108
                  %v2110 = vld [vmem:[%s1980 + $0x300] sm:%s1973]
                  %2111 = vst [vmem:[%s1981 + $0x100] sm:%s1973] %v2110
                  %v2112 = vld [vmem:[%s1980 + $0x30c] sm:%s1973]
                  %2113 = vst [vmem:[%s1981 + $0x104] sm:%s1973] %v2112
                  %v2114 = vld [vmem:[%s1980 + $0x318] sm:%s1973]
                  %2115 = vst [vmem:[%s1981 + $0x108] sm:%s1973] %v2114
                  %v2116 = vld [vmem:[%s1980 + $0x324] sm:%s1973]
                  %2117 = vst [vmem:[%s1981 + $0x10c] sm:%s1973] %v2116
                  %v2118 = vld [vmem:[%s1980 + $0x330] sm:%s1973]
                  %2119 = vst [vmem:[%s1981 + $0x110] sm:%s1973] %v2118
                  %v2120 = vld [vmem:[%s1980 + $0x33c] sm:%s1973]
                  %2121 = vst [vmem:[%s1981 + $0x114] sm:%s1973] %v2120
                  %v2122 = vld [vmem:[%s1980 + $0x348] sm:%s1973]
                  %2123 = vst [vmem:[%s1981 + $0x118] sm:%s1973] %v2122
                  %v2124 = vld [vmem:[%s1980 + $0x354] sm:%s1973]
                  %2125 = vst [vmem:[%s1981 + $0x11c] sm:%s1973] %v2124
                  %v2126 = vld [vmem:[%s1980 + $0x360] sm:%s1973]
                  %2127 = vst [vmem:[%s1981 + $0x120] sm:%s1973] %v2126
                  %v2128 = vld [vmem:[%s1980 + $0x36c] sm:%s1973]
                  %2129 = vst [vmem:[%s1981 + $0x124] sm:%s1973] %v2128
                  %v2130 = vld [vmem:[%s1980 + $0x378] sm:%s1973]
                  %2131 = vst [vmem:[%s1981 + $0x128] sm:%s1973] %v2130
                  %v2132 = vld [vmem:[%s1980 + $0x384] sm:%s1973]
                  %2133 = vst [vmem:[%s1981 + $0x12c] sm:%s1973] %v2132
                  %v2134 = vld [vmem:[%s1980 + $0x390] sm:%s1973]
                  %2135 = vst [vmem:[%s1981 + $0x130] sm:%s1973] %v2134
                  %v2136 = vld [vmem:[%s1980 + $0x39c] sm:%s1973]
                  %2137 = vst [vmem:[%s1981 + $0x134] sm:%s1973] %v2136
                  %v2138 = vld [vmem:[%s1980 + $0x3a8] sm:%s1973]
                  %2139 = vst [vmem:[%s1981 + $0x138] sm:%s1973] %v2138
                  %v2140 = vld [vmem:[%s1980 + $0x3b4] sm:%s1973]
                  %2141 = vst [vmem:[%s1981 + $0x13c] sm:%s1973] %v2140
                  %v2142 = vld [vmem:[%s1980 + $0x3c0] sm:%s1973]
                  %2143 = vst [vmem:[%s1981 + $0x140] sm:%s1973] %v2142
                  %v2144 = vld [vmem:[%s1980 + $0x3cc] sm:%s1973]
                  %2145 = vst [vmem:[%s1981 + $0x144] sm:%s1973] %v2144
                  %v2146 = vld [vmem:[%s1980 + $0x3d8] sm:%s1973]
                  %2147 = vst [vmem:[%s1981 + $0x148] sm:%s1973] %v2146
                  %v2148 = vld [vmem:[%s1980 + $0x3e4] sm:%s1973]
                  %2149 = vst [vmem:[%s1981 + $0x14c] sm:%s1973] %v2148
                  %v2150 = vld [vmem:[%s1980 + $0x3f0] sm:%s1973]
                  %2151 = vst [vmem:[%s1981 + $0x150] sm:%s1973] %v2150
                  %v2152 = vld [vmem:[%s1980 + $0x3fc] sm:%s1973]
                  %2153 = vst [vmem:[%s1981 + $0x154] sm:%s1973] %v2152
                  %v2154 = vld [vmem:[%s1980 + $0x408] sm:%s1973]
                  %2155 = vst [vmem:[%s1981 + $0x158] sm:%s1973] %v2154
                  %v2156 = vld [vmem:[%s1980 + $0x414] sm:%s1973]
                  %2157 = vst [vmem:[%s1981 + $0x15c] sm:%s1973] %v2156
                  %v2158 = vld [vmem:[%s1980 + $0x420] sm:%s1973]
                  %2159 = vst [vmem:[%s1981 + $0x160] sm:%s1973] %v2158
                  %v2160 = vld [vmem:[%s1980 + $0x42c] sm:%s1973]
                  %2161 = vst [vmem:[%s1981 + $0x164] sm:%s1973] %v2160
                  %v2162 = vld [vmem:[%s1980 + $0x438] sm:%s1973]
                  %2163 = vst [vmem:[%s1981 + $0x168] sm:%s1973] %v2162
                  %v2164 = vld [vmem:[%s1980 + $0x444] sm:%s1973]
                  %2165 = vst [vmem:[%s1981 + $0x16c] sm:%s1973] %v2164
                  %v2166 = vld [vmem:[%s1980 + $0x450] sm:%s1973]
                  %2167 = vst [vmem:[%s1981 + $0x170] sm:%s1973] %v2166
                  %v2168 = vld [vmem:[%s1980 + $0x45c] sm:%s1973]
                  %2169 = vst [vmem:[%s1981 + $0x174] sm:%s1973] %v2168
                  %v2170 = vld [vmem:[%s1980 + $0x468] sm:%s1973]
                  %2171 = vst [vmem:[%s1981 + $0x178] sm:%s1973] %v2170
                  %v2172 = vld [vmem:[%s1980 + $0x474] sm:%s1973]
                  %2173 = vst [vmem:[%s1981 + $0x17c] sm:%s1973] %v2172
                  %v2174 = vld [vmem:[%s1980 + $0x480] sm:%s1973]
                  %2175 = vst [vmem:[%s1981 + $0x180] sm:%s1973] %v2174
                  %v2176 = vld [vmem:[%s1980 + $0x48c] sm:%s1973]
                  %2177 = vst [vmem:[%s1981 + $0x184] sm:%s1973] %v2176
                  %v2178 = vld [vmem:[%s1980 + $0x498] sm:%s1973]
                  %2179 = vst [vmem:[%s1981 + $0x188] sm:%s1973] %v2178
                  %v2180 = vld [vmem:[%s1980 + $0x4a4] sm:%s1973]
                  %2181 = vst [vmem:[%s1981 + $0x18c] sm:%s1973] %v2180
                  %v2182 = vld [vmem:[%s1980 + $0x4b0] sm:%s1973]
                  %2183 = vst [vmem:[%s1981 + $0x190] sm:%s1973] %v2182
                  %v2184 = vld [vmem:[%s1980 + $0x4bc] sm:%s1973]
                  %2185 = vst [vmem:[%s1981 + $0x194] sm:%s1973] %v2184
                  %v2186 = vld [vmem:[%s1980 + $0x4c8] sm:%s1973]
                  %2187 = vst [vmem:[%s1981 + $0x198] sm:%s1973] %v2186
                  %v2188 = vld [vmem:[%s1980 + $0x4d4] sm:%s1973]
                  %2189 = vst [vmem:[%s1981 + $0x19c] sm:%s1973] %v2188
                  %v2190 = vld [vmem:[%s1980 + $0x4e0] sm:%s1973]
                  %2191 = vst [vmem:[%s1981 + $0x1a0] sm:%s1973] %v2190
                  %v2192 = vld [vmem:[%s1980 + $0x4ec] sm:%s1973]
                  %2193 = vst [vmem:[%s1981 + $0x1a4] sm:%s1973] %v2192
                  %v2194 = vld [vmem:[%s1980 + $0x4f8] sm:%s1973]
                  %2195 = vst [vmem:[%s1981 + $0x1a8] sm:%s1973] %v2194
                  %v2196 = vld [vmem:[%s1980 + $0x504] sm:%s1973]
                  %2197 = vst [vmem:[%s1981 + $0x1ac] sm:%s1973] %v2196
                  %v2198 = vld [vmem:[%s1980 + $0x510] sm:%s1973]
                  %2199 = vst [vmem:[%s1981 + $0x1b0] sm:%s1973] %v2198
                  %v2200 = vld [vmem:[%s1980 + $0x51c] sm:%s1973]
                  %2201 = vst [vmem:[%s1981 + $0x1b4] sm:%s1973] %v2200
                  %v2202 = vld [vmem:[%s1980 + $0x528] sm:%s1973]
                  %2203 = vst [vmem:[%s1981 + $0x1b8] sm:%s1973] %v2202
                  %v2204 = vld [vmem:[%s1980 + $0x534] sm:%s1973]
                  %2205 = vst [vmem:[%s1981 + $0x1bc] sm:%s1973] %v2204
                  %v2206 = vld [vmem:[%s1980 + $0x540] sm:%s1973]
                  %2207 = vst [vmem:[%s1981 + $0x1c0] sm:%s1973] %v2206
                  %v2208 = vld [vmem:[%s1980 + $0x54c] sm:%s1973]
                  %2209 = vst [vmem:[%s1981 + $0x1c4] sm:%s1973] %v2208
                  %v2210 = vld [vmem:[%s1980 + $0x558] sm:%s1973]
                  %2211 = vst [vmem:[%s1981 + $0x1c8] sm:%s1973] %v2210
                  %v2212 = vld [vmem:[%s1980 + $0x564] sm:%s1973]
                  %2213 = vst [vmem:[%s1981 + $0x1cc] sm:%s1973] %v2212
                  %v2214 = vld [vmem:[%s1980 + $0x570] sm:%s1973]
                  %2215 = vst [vmem:[%s1981 + $0x1d0] sm:%s1973] %v2214
                  %v2216 = vld [vmem:[%s1980 + $0x57c] sm:%s1973]
                  %2217 = vst [vmem:[%s1981 + $0x1d4] sm:%s1973] %v2216
                  %v2218 = vld [vmem:[%s1980 + $0x588] sm:%s1973]
                  %2219 = vst [vmem:[%s1981 + $0x1d8] sm:%s1973] %v2218
                  %v2220 = vld [vmem:[%s1980 + $0x594] sm:%s1973]
                  %2221 = vst [vmem:[%s1981 + $0x1dc] sm:%s1973] %v2220
                  %v2222 = vld [vmem:[%s1980 + $0x5a0] sm:%s1973]
                  %2223 = vst [vmem:[%s1981 + $0x1e0] sm:%s1973] %v2222
                  %v2224 = vld [vmem:[%s1980 + $0x5ac] sm:%s1973]
                  %2225 = vst [vmem:[%s1981 + $0x1e4] sm:%s1973] %v2224
                  %v2226 = vld [vmem:[%s1980 + $0x5b8] sm:%s1973]
                  %2227 = vst [vmem:[%s1981 + $0x1e8] sm:%s1973] %v2226
                  %v2228 = vld [vmem:[%s1980 + $0x5c4] sm:%s1973]
                  %2229 = vst [vmem:[%s1981 + $0x1ec] sm:%s1973] %v2228
                  %v2230 = vld [vmem:[%s1980 + $0x5d0] sm:%s1973]
                  %2231 = vst [vmem:[%s1981 + $0x1f0] sm:%s1973] %v2230
                  %v2232 = vld [vmem:[%s1980 + $0x5dc] sm:%s1973]
                  %2233 = vst [vmem:[%s1981 + $0x1f4] sm:%s1973] %v2232
                  %v2234 = vld [vmem:[%s1980 + $0x5e8] sm:%s1973]
                  %2235 = vst [vmem:[%s1981 + $0x1f8] sm:%s1973] %v2234
                  %v2236 = vld [vmem:[%s1980 + $0x5f4] sm:%s1973]
                  %2237 = vst [vmem:[%s1981 + $0x1fc] sm:%s1973] %v2236
                  %v2238 = vld [vmem:[%s1980 + $0x600] sm:%s1973]
                  %2239 = vst [vmem:[%s1981 + $0x200] sm:%s1973] %v2238
                  %v2240 = vld [vmem:[%s1980 + $0x60c] sm:%s1973]
                  %2241 = vst [vmem:[%s1981 + $0x204] sm:%s1973] %v2240
                  %v2242 = vld [vmem:[%s1980 + $0x618] sm:%s1973]
                  %2243 = vst [vmem:[%s1981 + $0x208] sm:%s1973] %v2242
                  %v2244 = vld [vmem:[%s1980 + $0x624] sm:%s1973]
                  %2245 = vst [vmem:[%s1981 + $0x20c] sm:%s1973] %v2244
                  %v2246 = vld [vmem:[%s1980 + $0x630] sm:%s1973]
                  %2247 = vst [vmem:[%s1981 + $0x210] sm:%s1973] %v2246
                  %v2248 = vld [vmem:[%s1980 + $0x63c] sm:%s1973]
                  %2249 = vst [vmem:[%s1981 + $0x214] sm:%s1973] %v2248
                  %v2250 = vld [vmem:[%s1980 + $0x648] sm:%s1973]
                  %2251 = vst [vmem:[%s1981 + $0x218] sm:%s1973] %v2250
                  %v2252 = vld [vmem:[%s1980 + $0x654] sm:%s1973]
                  %2253 = vst [vmem:[%s1981 + $0x21c] sm:%s1973] %v2252
                  %v2254 = vld [vmem:[%s1980 + $0x660] sm:%s1973]
                  %2255 = vst [vmem:[%s1981 + $0x220] sm:%s1973] %v2254
                  %v2256 = vld [vmem:[%s1980 + $0x66c] sm:%s1973]
                  %2257 = vst [vmem:[%s1981 + $0x224] sm:%s1973] %v2256
                  %v2258 = vld [vmem:[%s1980 + $0x678] sm:%s1973]
                  %2259 = vst [vmem:[%s1981 + $0x228] sm:%s1973] %v2258
                  %v2260 = vld [vmem:[%s1980 + $0x684] sm:%s1973]
                  %2261 = vst [vmem:[%s1981 + $0x22c] sm:%s1973] %v2260
                  %v2262 = vld [vmem:[%s1980 + $0x690] sm:%s1973]
                  %2263 = vst [vmem:[%s1981 + $0x230] sm:%s1973] %v2262
                  %v2264 = vld [vmem:[%s1980 + $0x69c] sm:%s1973]
                  %2265 = vst [vmem:[%s1981 + $0x234] sm:%s1973] %v2264
                  %v2266 = vld [vmem:[%s1980 + $0x6a8] sm:%s1973]
                  %2267 = vst [vmem:[%s1981 + $0x238] sm:%s1973] %v2266
                  %v2268 = vld [vmem:[%s1980 + $0x6b4] sm:%s1973]
                  %2269 = vst [vmem:[%s1981 + $0x23c] sm:%s1973] %v2268
                  %v2270 = vld [vmem:[%s1980 + $0x6c0] sm:%s1973]
                  %2271 = vst [vmem:[%s1981 + $0x240] sm:%s1973] %v2270
                  %v2272 = vld [vmem:[%s1980 + $0x6cc] sm:%s1973]
                  %2273 = vst [vmem:[%s1981 + $0x244] sm:%s1973] %v2272
                  %v2274 = vld [vmem:[%s1980 + $0x6d8] sm:%s1973]
                  %2275 = vst [vmem:[%s1981 + $0x248] sm:%s1973] %v2274
                  %v2276 = vld [vmem:[%s1980 + $0x6e4] sm:%s1973]
                  %2277 = vst [vmem:[%s1981 + $0x24c] sm:%s1973] %v2276
                  %v2278 = vld [vmem:[%s1980 + $0x6f0] sm:%s1973]
                  %2279 = vst [vmem:[%s1981 + $0x250] sm:%s1973] %v2278
                  %v2280 = vld [vmem:[%s1980 + $0x6fc] sm:%s1973]
                  %2281 = vst [vmem:[%s1981 + $0x254] sm:%s1973] %v2280
                  %v2282 = vld [vmem:[%s1980 + $0x708] sm:%s1973]
                  %2283 = vst [vmem:[%s1981 + $0x258] sm:%s1973] %v2282
                  %v2284 = vld [vmem:[%s1980 + $0x714] sm:%s1973]
                  %2285 = vst [vmem:[%s1981 + $0x25c] sm:%s1973] %v2284
                  %v2286 = vld [vmem:[%s1980 + $0x720] sm:%s1973]
                  %2287 = vst [vmem:[%s1981 + $0x260] sm:%s1973] %v2286
                  %v2288 = vld [vmem:[%s1980 + $0x72c] sm:%s1973]
                  %2289 = vst [vmem:[%s1981 + $0x264] sm:%s1973] %v2288
                  %v2290 = vld [vmem:[%s1980 + $0x738] sm:%s1973]
                  %2291 = vst [vmem:[%s1981 + $0x268] sm:%s1973] %v2290
                  %v2292 = vld [vmem:[%s1980 + $0x744] sm:%s1973]
                  %2293 = vst [vmem:[%s1981 + $0x26c] sm:%s1973] %v2292
                  %v2294 = vld [vmem:[%s1980 + $0x750] sm:%s1973]
                  %2295 = vst [vmem:[%s1981 + $0x270] sm:%s1973] %v2294
                  %v2296 = vld [vmem:[%s1980 + $0x75c] sm:%s1973]
                  %2297 = vst [vmem:[%s1981 + $0x274] sm:%s1973] %v2296
                  %v2298 = vld [vmem:[%s1980 + $0x768] sm:%s1973]
                  %2299 = vst [vmem:[%s1981 + $0x278] sm:%s1973] %v2298
                  %v2300 = vld [vmem:[%s1980 + $0x774] sm:%s1973]
                  %2301 = vst [vmem:[%s1981 + $0x27c] sm:%s1973] %v2300
                  %v2302 = vld [vmem:[%s1980 + $0x780] sm:%s1973]
                  %2303 = vst [vmem:[%s1981 + $0x280] sm:%s1973] %v2302
                  %v2304 = vld [vmem:[%s1980 + $0x78c] sm:%s1973]
                  %2305 = vst [vmem:[%s1981 + $0x284] sm:%s1973] %v2304
                  %v2306 = vld [vmem:[%s1980 + $0x798] sm:%s1973]
                  %2307 = vst [vmem:[%s1981 + $0x288] sm:%s1973] %v2306
                  %v2308 = vld [vmem:[%s1980 + $0x7a4] sm:%s1973]
                  %2309 = vst [vmem:[%s1981 + $0x28c] sm:%s1973] %v2308
                  %v2310 = vld [vmem:[%s1980 + $0x7b0] sm:%s1973]
                  %2311 = vst [vmem:[%s1981 + $0x290] sm:%s1973] %v2310
                  %v2312 = vld [vmem:[%s1980 + $0x7bc] sm:%s1973]
                  %2313 = vst [vmem:[%s1981 + $0x294] sm:%s1973] %v2312
                  %v2314 = vld [vmem:[%s1980 + $0x7c8] sm:%s1973]
                  %2315 = vst [vmem:[%s1981 + $0x298] sm:%s1973] %v2314
                  %v2316 = vld [vmem:[%s1980 + $0x7d4] sm:%s1973]
                  %2317 = vst [vmem:[%s1981 + $0x29c] sm:%s1973] %v2316
                  %v2318 = vld [vmem:[%s1980 + $0x7e0] sm:%s1973]
                  %2319 = vst [vmem:[%s1981 + $0x2a0] sm:%s1973] %v2318
                  %v2320 = vld [vmem:[%s1980 + $0x7ec] sm:%s1973]
                  %2321 = vst [vmem:[%s1981 + $0x2a4] sm:%s1973] %v2320
                  %v2322 = vld [vmem:[%s1980 + $0x7f8] sm:%s1973]
                  %2323 = vst [vmem:[%s1981 + $0x2a8] sm:%s1973] %v2322
                  %v2324 = vld [vmem:[%s1980 + $0x804] sm:%s1973]
                  %2325 = vst [vmem:[%s1981 + $0x2ac] sm:%s1973] %v2324
                  %v2326 = vld [vmem:[%s1980 + $0x810] sm:%s1973]
                  %2327 = vst [vmem:[%s1981 + $0x2b0] sm:%s1973] %v2326
                  %v2328 = vld [vmem:[%s1980 + $0x81c] sm:%s1973]
                  %2329 = vst [vmem:[%s1981 + $0x2b4] sm:%s1973] %v2328
                  %v2330 = vld [vmem:[%s1980 + $0x828] sm:%s1973]
                  %2331 = vst [vmem:[%s1981 + $0x2b8] sm:%s1973] %v2330
                  %v2332 = vld [vmem:[%s1980 + $0x834] sm:%s1973]
                  %2333 = vst [vmem:[%s1981 + $0x2bc] sm:%s1973] %v2332
                  %v2334 = vld [vmem:[%s1980 + $0x840] sm:%s1973]
                  %2335 = vst [vmem:[%s1981 + $0x2c0] sm:%s1973] %v2334
                  %v2336 = vld [vmem:[%s1980 + $0x84c] sm:%s1973]
                  %2337 = vst [vmem:[%s1981 + $0x2c4] sm:%s1973] %v2336
                  %v2338 = vld [vmem:[%s1980 + $0x858] sm:%s1973]
                  %2339 = vst [vmem:[%s1981 + $0x2c8] sm:%s1973] %v2338
                  %v2340 = vld [vmem:[%s1980 + $0x864] sm:%s1973]
                  %2341 = vst [vmem:[%s1981 + $0x2cc] sm:%s1973] %v2340
                  %v2342 = vld [vmem:[%s1980 + $0x870] sm:%s1973]
                  %2343 = vst [vmem:[%s1981 + $0x2d0] sm:%s1973] %v2342
                  %v2344 = vld [vmem:[%s1980 + $0x87c] sm:%s1973]
                  %2345 = vst [vmem:[%s1981 + $0x2d4] sm:%s1973] %v2344
                  %v2346 = vld [vmem:[%s1980 + $0x888] sm:%s1973]
                  %2347 = vst [vmem:[%s1981 + $0x2d8] sm:%s1973] %v2346
                  %v2348 = vld [vmem:[%s1980 + $0x894] sm:%s1973]
                  %2349 = vst [vmem:[%s1981 + $0x2dc] sm:%s1973] %v2348
                  %v2350 = vld [vmem:[%s1980 + $0x8a0] sm:%s1973]
                  %2351 = vst [vmem:[%s1981 + $0x2e0] sm:%s1973] %v2350
                  %v2352 = vld [vmem:[%s1980 + $0x8ac] sm:%s1973]
                  %2353 = vst [vmem:[%s1981 + $0x2e4] sm:%s1973] %v2352
                  %v2354 = vld [vmem:[%s1980 + $0x8b8] sm:%s1973]
                  %2355 = vst [vmem:[%s1981 + $0x2e8] sm:%s1973] %v2354
                  %v2356 = vld [vmem:[%s1980 + $0x8c4] sm:%s1973]
                  %2357 = vst [vmem:[%s1981 + $0x2ec] sm:%s1973] %v2356
                  %v2358 = vld [vmem:[%s1980 + $0x8d0] sm:%s1973]
                  %2359 = vst [vmem:[%s1981 + $0x2f0] sm:%s1973] %v2358
                  %v2360 = vld [vmem:[%s1980 + $0x8dc] sm:%s1973]
                  %2361 = vst [vmem:[%s1981 + $0x2f4] sm:%s1973] %v2360
                  %v2362 = vld [vmem:[%s1980 + $0x8e8] sm:%s1973]
                  %2363 = vst [vmem:[%s1981 + $0x2f8] sm:%s1973] %v2362
                  %v2364 = vld [vmem:[%s1980 + $0x8f4] sm:%s1973]
                  %2365 = vst [vmem:[%s1981 + $0x2fc] sm:%s1973] %v2364
                  %v2366 = vld [vmem:[%s1980 + $0x900] sm:%s1973]
                  %2367 = vst [vmem:[%s1981 + $0x300] sm:%s1973] %v2366
                  %v2368 = vld [vmem:[%s1980 + $0x90c] sm:%s1973]
                  %2369 = vst [vmem:[%s1981 + $0x304] sm:%s1973] %v2368
                  %v2370 = vld [vmem:[%s1980 + $0x918] sm:%s1973]
                  %2371 = vst [vmem:[%s1981 + $0x308] sm:%s1973] %v2370
                  %v2372 = vld [vmem:[%s1980 + $0x924] sm:%s1973]
                  %2373 = vst [vmem:[%s1981 + $0x30c] sm:%s1973] %v2372
                  %v2374 = vld [vmem:[%s1980 + $0x930] sm:%s1973]
                  %2375 = vst [vmem:[%s1981 + $0x310] sm:%s1973] %v2374
                  %v2376 = vld [vmem:[%s1980 + $0x93c] sm:%s1973]
                  %2377 = vst [vmem:[%s1981 + $0x314] sm:%s1973] %v2376
                  %v2378 = vld [vmem:[%s1980 + $0x948] sm:%s1973]
                  %2379 = vst [vmem:[%s1981 + $0x318] sm:%s1973] %v2378
                  %v2380 = vld [vmem:[%s1980 + $0x954] sm:%s1973]
                  %2381 = vst [vmem:[%s1981 + $0x31c] sm:%s1973] %v2380
                  %v2382 = vld [vmem:[%s1980 + $0x960] sm:%s1973]
                  %2383 = vst [vmem:[%s1981 + $0x320] sm:%s1973] %v2382
                  %v2384 = vld [vmem:[%s1980 + $0x96c] sm:%s1973]
                  %2385 = vst [vmem:[%s1981 + $0x324] sm:%s1973] %v2384
                  %v2386 = vld [vmem:[%s1980 + $0x978] sm:%s1973]
                  %2387 = vst [vmem:[%s1981 + $0x328] sm:%s1973] %v2386
                  %v2388 = vld [vmem:[%s1980 + $0x984] sm:%s1973]
                  %2389 = vst [vmem:[%s1981 + $0x32c] sm:%s1973] %v2388
                  %v2390 = vld [vmem:[%s1980 + $0x990] sm:%s1973]
                  %2391 = vst [vmem:[%s1981 + $0x330] sm:%s1973] %v2390
                  %v2392 = vld [vmem:[%s1980 + $0x99c] sm:%s1973]
                  %2393 = vst [vmem:[%s1981 + $0x334] sm:%s1973] %v2392
                  %v2394 = vld [vmem:[%s1980 + $0x9a8] sm:%s1973]
                  %2395 = vst [vmem:[%s1981 + $0x338] sm:%s1973] %v2394
                  %v2396 = vld [vmem:[%s1980 + $0x9b4] sm:%s1973]
                  %2397 = vst [vmem:[%s1981 + $0x33c] sm:%s1973] %v2396
                  %v2398 = vld [vmem:[%s1980 + $0x9c0] sm:%s1973]
                  %2399 = vst [vmem:[%s1981 + $0x340] sm:%s1973] %v2398
                  %v2400 = vld [vmem:[%s1980 + $0x9cc] sm:%s1973]
                  %2401 = vst [vmem:[%s1981 + $0x344] sm:%s1973] %v2400
                  %v2402 = vld [vmem:[%s1980 + $0x9d8] sm:%s1973]
                  %2403 = vst [vmem:[%s1981 + $0x348] sm:%s1973] %v2402
                  %v2404 = vld [vmem:[%s1980 + $0x9e4] sm:%s1973]
                  %2405 = vst [vmem:[%s1981 + $0x34c] sm:%s1973] %v2404
                  %v2406 = vld [vmem:[%s1980 + $0x9f0] sm:%s1973]
                  %2407 = vst [vmem:[%s1981 + $0x350] sm:%s1973] %v2406
                  %v2408 = vld [vmem:[%s1980 + $0x9fc] sm:%s1973]
                  %2409 = vst [vmem:[%s1981 + $0x354] sm:%s1973] %v2408
                  %v2410 = vld [vmem:[%s1980 + $0xa08] sm:%s1973]
                  %2411 = vst [vmem:[%s1981 + $0x358] sm:%s1973] %v2410
                  %v2412 = vld [vmem:[%s1980 + $0xa14] sm:%s1973]
                  %2413 = vst [vmem:[%s1981 + $0x35c] sm:%s1973] %v2412
                  %v2414 = vld [vmem:[%s1980 + $0xa20] sm:%s1973]
                  %2415 = vst [vmem:[%s1981 + $0x360] sm:%s1973] %v2414
                  %v2416 = vld [vmem:[%s1980 + $0xa2c] sm:%s1973]
                  %2417 = vst [vmem:[%s1981 + $0x364] sm:%s1973] %v2416
                  %v2418 = vld [vmem:[%s1980 + $0xa38] sm:%s1973]
                  %2419 = vst [vmem:[%s1981 + $0x368] sm:%s1973] %v2418
                  %v2420 = vld [vmem:[%s1980 + $0xa44] sm:%s1973]
                  %2421 = vst [vmem:[%s1981 + $0x36c] sm:%s1973] %v2420
                  %v2422 = vld [vmem:[%s1980 + $0xa50] sm:%s1973]
                  %2423 = vst [vmem:[%s1981 + $0x370] sm:%s1973] %v2422
                  %v2424 = vld [vmem:[%s1980 + $0xa5c] sm:%s1973]
                  %2425 = vst [vmem:[%s1981 + $0x374] sm:%s1973] %v2424
                  %v2426 = vld [vmem:[%s1980 + $0xa68] sm:%s1973]
                  %2427 = vst [vmem:[%s1981 + $0x378] sm:%s1973] %v2426
                  %v2428 = vld [vmem:[%s1980 + $0xa74] sm:%s1973]
                  %2429 = vst [vmem:[%s1981 + $0x37c] sm:%s1973] %v2428
                  %v2430 = vld [vmem:[%s1980 + $0xa80] sm:%s1973]
                  %2431 = vst [vmem:[%s1981 + $0x380] sm:%s1973] %v2430
                  %v2432 = vld [vmem:[%s1980 + $0xa8c] sm:%s1973]
                  %2433 = vst [vmem:[%s1981 + $0x384] sm:%s1973] %v2432
                  %v2434 = vld [vmem:[%s1980 + $0xa98] sm:%s1973]
                  %2435 = vst [vmem:[%s1981 + $0x388] sm:%s1973] %v2434
                  %v2436 = vld [vmem:[%s1980 + $0xaa4] sm:%s1973]
                  %2437 = vst [vmem:[%s1981 + $0x38c] sm:%s1973] %v2436
                  %v2438 = vld [vmem:[%s1980 + $0xab0] sm:%s1973]
                  %2439 = vst [vmem:[%s1981 + $0x390] sm:%s1973] %v2438
                  %v2440 = vld [vmem:[%s1980 + $0xabc] sm:%s1973]
                  %2441 = vst [vmem:[%s1981 + $0x394] sm:%s1973] %v2440
                  %v2442 = vld [vmem:[%s1980 + $0xac8] sm:%s1973]
                  %2443 = vst [vmem:[%s1981 + $0x398] sm:%s1973] %v2442
                  %v2444 = vld [vmem:[%s1980 + $0xad4] sm:%s1973]
                  %2445 = vst [vmem:[%s1981 + $0x39c] sm:%s1973] %v2444
                  %v2446 = vld [vmem:[%s1980 + $0xae0] sm:%s1973]
                  %2447 = vst [vmem:[%s1981 + $0x3a0] sm:%s1973] %v2446
                  %v2448 = vld [vmem:[%s1980 + $0xaec] sm:%s1973]
                  %2449 = vst [vmem:[%s1981 + $0x3a4] sm:%s1973] %v2448
                  %v2450 = vld [vmem:[%s1980 + $0xaf8] sm:%s1973]
                  %2451 = vst [vmem:[%s1981 + $0x3a8] sm:%s1973] %v2450
                  %v2452 = vld [vmem:[%s1980 + $0xb04] sm:%s1973]
                  %2453 = vst [vmem:[%s1981 + $0x3ac] sm:%s1973] %v2452
                  %v2454 = vld [vmem:[%s1980 + $0xb10] sm:%s1973]
                  %2455 = vst [vmem:[%s1981 + $0x3b0] sm:%s1973] %v2454
                  %v2456 = vld [vmem:[%s1980 + $0xb1c] sm:%s1973]
                  %2457 = vst [vmem:[%s1981 + $0x3b4] sm:%s1973] %v2456
                  %v2458 = vld [vmem:[%s1980 + $0xb28] sm:%s1973]
                  %2459 = vst [vmem:[%s1981 + $0x3b8] sm:%s1973] %v2458
                  %v2460 = vld [vmem:[%s1980 + $0xb34] sm:%s1973]
                  %2461 = vst [vmem:[%s1981 + $0x3bc] sm:%s1973] %v2460
                  %v2462 = vld [vmem:[%s1980 + $0xb40] sm:%s1973]
                  %2463 = vst [vmem:[%s1981 + $0x3c0] sm:%s1973] %v2462
                  %v2464 = vld [vmem:[%s1980 + $0xb4c] sm:%s1973]
                  %2465 = vst [vmem:[%s1981 + $0x3c4] sm:%s1973] %v2464
                  %v2466 = vld [vmem:[%s1980 + $0xb58] sm:%s1973]
                  %2467 = vst [vmem:[%s1981 + $0x3c8] sm:%s1973] %v2466
                  %v2468 = vld [vmem:[%s1980 + $0xb64] sm:%s1973]
                  %2469 = vst [vmem:[%s1981 + $0x3cc] sm:%s1973] %v2468
                  %v2470 = vld [vmem:[%s1980 + $0xb70] sm:%s1973]
                  %2471 = vst [vmem:[%s1981 + $0x3d0] sm:%s1973] %v2470
                  %v2472 = vld [vmem:[%s1980 + $0xb7c] sm:%s1973]
                  %2473 = vst [vmem:[%s1981 + $0x3d4] sm:%s1973] %v2472
                  %v2474 = vld [vmem:[%s1980 + $0xb88] sm:%s1973]
                  %2475 = vst [vmem:[%s1981 + $0x3d8] sm:%s1973] %v2474
                  %v2476 = vld [vmem:[%s1980 + $0xb94] sm:%s1973]
                  %2477 = vst [vmem:[%s1981 + $0x3dc] sm:%s1973] %v2476
                  %v2478 = vld [vmem:[%s1980 + $0xba0] sm:%s1973]
                  %2479 = vst [vmem:[%s1981 + $0x3e0] sm:%s1973] %v2478
                  %v2480 = vld [vmem:[%s1980 + $0xbac] sm:%s1973]
                  %2481 = vst [vmem:[%s1981 + $0x3e4] sm:%s1973] %v2480
                  %v2482 = vld [vmem:[%s1980 + $0xbb8] sm:%s1973]
                  %2483 = vst [vmem:[%s1981 + $0x3e8] sm:%s1973] %v2482
                  %v2484 = vld [vmem:[%s1980 + $0xbc4] sm:%s1973]
                  %2485 = vst [vmem:[%s1981 + $0x3ec] sm:%s1973] %v2484
                  %v2486 = vld [vmem:[%s1980 + $0xbd0] sm:%s1973]
                  %2487 = vst [vmem:[%s1981 + $0x3f0] sm:%s1973] %v2486
                  %v2488 = vld [vmem:[%s1980 + $0xbdc] sm:%s1973]
                  %2489 = vst [vmem:[%s1981 + $0x3f4] sm:%s1973] %v2488
                  %v2490 = vld [vmem:[%s1980 + $0xbe8] sm:%s1973]
                  %2491 = vst [vmem:[%s1981 + $0x3f8] sm:%s1973] %v2490
                  %v2492 = vld [vmem:[%s1980 + $0xbf4] sm:%s1973]
                  %2493 = vst [vmem:[%s1981 + $0x3fc] sm:%s1973] %v2492
                  %v2494 = vld [vmem:[%s1980 + $0xc00] sm:%s1973]
                  %2495 = vst [vmem:[%s1981 + $0x400] sm:%s1973] %v2494
                  %v2496 = vld [vmem:[%s1980 + $0xc0c] sm:%s1973]
                  %2497 = vst [vmem:[%s1981 + $0x404] sm:%s1973] %v2496
                  %v2498 = vld [vmem:[%s1980 + $0xc18] sm:%s1973]
                  %2499 = vst [vmem:[%s1981 + $0x408] sm:%s1973] %v2498
                  %v2500 = vld [vmem:[%s1980 + $0xc24] sm:%s1973]
                  %2501 = vst [vmem:[%s1981 + $0x40c] sm:%s1973] %v2500
                  %v2502 = vld [vmem:[%s1980 + $0xc30] sm:%s1973]
                  %2503 = vst [vmem:[%s1981 + $0x410] sm:%s1973] %v2502
                  %v2504 = vld [vmem:[%s1980 + $0xc3c] sm:%s1973]
                  %2505 = vst [vmem:[%s1981 + $0x414] sm:%s1973] %v2504
                  %v2506 = vld [vmem:[%s1980 + $0xc48] sm:%s1973]
                  %2507 = vst [vmem:[%s1981 + $0x418] sm:%s1973] %v2506
                  %v2508 = vld [vmem:[%s1980 + $0xc54] sm:%s1973]
                  %2509 = vst [vmem:[%s1981 + $0x41c] sm:%s1973] %v2508
                  %v2510 = vld [vmem:[%s1980 + $0xc60] sm:%s1973]
                  %2511 = vst [vmem:[%s1981 + $0x420] sm:%s1973] %v2510
                  %v2512 = vld [vmem:[%s1980 + $0xc6c] sm:%s1973]
                  %2513 = vst [vmem:[%s1981 + $0x424] sm:%s1973] %v2512
                  %v2514 = vld [vmem:[%s1980 + $0xc78] sm:%s1973]
                  %2515 = vst [vmem:[%s1981 + $0x428] sm:%s1973] %v2514
                  %v2516 = vld [vmem:[%s1980 + $0xc84] sm:%s1973]
                  %2517 = vst [vmem:[%s1981 + $0x42c] sm:%s1973] %v2516
                  %v2518 = vld [vmem:[%s1980 + $0xc90] sm:%s1973]
                  %2519 = vst [vmem:[%s1981 + $0x430] sm:%s1973] %v2518
                  %v2520 = vld [vmem:[%s1980 + $0xc9c] sm:%s1973]
                  %2521 = vst [vmem:[%s1981 + $0x434] sm:%s1973] %v2520
                  %v2522 = vld [vmem:[%s1980 + $0xca8] sm:%s1973]
                  %2523 = vst [vmem:[%s1981 + $0x438] sm:%s1973] %v2522
                  %v2524 = vld [vmem:[%s1980 + $0xcb4] sm:%s1973]
                  %2525 = vst [vmem:[%s1981 + $0x43c] sm:%s1973] %v2524
                  %v2526 = vld [vmem:[%s1980 + $0xcc0] sm:%s1973]
                  %2527 = vst [vmem:[%s1981 + $0x440] sm:%s1973] %v2526
                  %v2528 = vld [vmem:[%s1980 + $0xccc] sm:%s1973]
                  %2529 = vst [vmem:[%s1981 + $0x444] sm:%s1973] %v2528
                  %v2530 = vld [vmem:[%s1980 + $0xcd8] sm:%s1973]
                  %2531 = vst [vmem:[%s1981 + $0x448] sm:%s1973] %v2530
                  %v2532 = vld [vmem:[%s1980 + $0xce4] sm:%s1973]
                  %2533 = vst [vmem:[%s1981 + $0x44c] sm:%s1973] %v2532
                  %v2534 = vld [vmem:[%s1980 + $0xcf0] sm:%s1973]
                  %2535 = vst [vmem:[%s1981 + $0x450] sm:%s1973] %v2534
                  %v2536 = vld [vmem:[%s1980 + $0xcfc] sm:%s1973]
                  %2537 = vst [vmem:[%s1981 + $0x454] sm:%s1973] %v2536
                  %v2538 = vld [vmem:[%s1980 + $0xd08] sm:%s1973]
                  %2539 = vst [vmem:[%s1981 + $0x458] sm:%s1973] %v2538
                  %v2540 = vld [vmem:[%s1980 + $0xd14] sm:%s1973]
                  %2541 = vst [vmem:[%s1981 + $0x45c] sm:%s1973] %v2540
                  %v2542 = vld [vmem:[%s1980 + $0xd20] sm:%s1973]
                  %2543 = vst [vmem:[%s1981 + $0x460] sm:%s1973] %v2542
                  %v2544 = vld [vmem:[%s1980 + $0xd2c] sm:%s1973]
                  %2545 = vst [vmem:[%s1981 + $0x464] sm:%s1973] %v2544
                  %v2546 = vld [vmem:[%s1980 + $0xd38] sm:%s1973]
                  %2547 = vst [vmem:[%s1981 + $0x468] sm:%s1973] %v2546
                  %v2548 = vld [vmem:[%s1980 + $0xd44] sm:%s1973]
                  %2549 = vst [vmem:[%s1981 + $0x46c] sm:%s1973] %v2548
                  %v2550 = vld [vmem:[%s1980 + $0xd50] sm:%s1973]
                  %2551 = vst [vmem:[%s1981 + $0x470] sm:%s1973] %v2550
                  %v2552 = vld [vmem:[%s1980 + $0xd5c] sm:%s1973]
                  %2553 = vst [vmem:[%s1981 + $0x474] sm:%s1973] %v2552
                  %v2554 = vld [vmem:[%s1980 + $0xd68] sm:%s1973]
                  %2555 = vst [vmem:[%s1981 + $0x478] sm:%s1973] %v2554
                  %v2556 = vld [vmem:[%s1980 + $0xd74] sm:%s1973]
                  %2557 = vst [vmem:[%s1981 + $0x47c] sm:%s1973] %v2556
                $region70: #{embedding_layer_forward.8} parent=57 // loop_footer
                  %s1979 = sadd.s32 1, %s1975
                $region71: #{embedding_layer_forward.8} parent=57 // loop_footer_branch
                  %1974 = sbr.rel target = $region67
                $region72: #{embedding_layer_forward.8} parent=57 // loop_exit
                  _
              $region58: #{embedding_layer_forward.8} parent=31 // pred_fallthru
                _
            $region32: #{embedding_layer_forward.8} parent=27 // pred_fallthru
              _
            // Predicated region
            $region33: #{embedding_layer_forward.8} parent=27 // pred_check
              _
            $region34: #{embedding_layer_forward.8} parent=27 // pred_check_branch
              %197 = sbr.rel (0) target = $region36
            $region35: #{embedding_layer_forward.8} parent=27 // pred_region
              %s199 = ssub.s32 16, 1
              loop: start=0, step=1, limit=1
              $region37: #{embedding_layer_forward.8} parent=35 // loop_pre_header
                _
              $region38: #{embedding_layer_forward.8} parent=35 // loop_header
                %s201 = sphi 0, %s205
                %p202 = scmp.ge.s32.totalorder %s201, 1
                %s206 = sphi %s191, %s191
                %s207 = sphi %s189, %s189
              $region39: #{embedding_layer_forward.8} parent=35 // loop_header_branch
                %204 = sbr.rel (%p202) target = $region43
              $region40: #{embedding_layer_forward.8} parent=35 // loop_body
                %v208 = vld [vmem:[%s206] sm:%s199]
                %209 = vst [vmem:[%s207] sm:%s199] %v208
                %v210 = vld [vmem:[%s206 + $0xc] sm:%s199]
                %211 = vst [vmem:[%s207 + $0x4] sm:%s199] %v210
                %v212 = vld [vmem:[%s206 + $0x18] sm:%s199]
                %213 = vst [vmem:[%s207 + $0x8] sm:%s199] %v212
                %v214 = vld [vmem:[%s206 + $0x24] sm:%s199]
                %215 = vst [vmem:[%s207 + $0xc] sm:%s199] %v214
                %v216 = vld [vmem:[%s206 + $0x30] sm:%s199]
                %217 = vst [vmem:[%s207 + $0x10] sm:%s199] %v216
                %v218 = vld [vmem:[%s206 + $0x3c] sm:%s199]
                %219 = vst [vmem:[%s207 + $0x14] sm:%s199] %v218
                %v220 = vld [vmem:[%s206 + $0x48] sm:%s199]
                %221 = vst [vmem:[%s207 + $0x18] sm:%s199] %v220
                %v222 = vld [vmem:[%s206 + $0x54] sm:%s199]
                %223 = vst [vmem:[%s207 + $0x1c] sm:%s199] %v222
                %v224 = vld [vmem:[%s206 + $0x60] sm:%s199]
                %225 = vst [vmem:[%s207 + $0x20] sm:%s199] %v224
                %v226 = vld [vmem:[%s206 + $0x6c] sm:%s199]
                %227 = vst [vmem:[%s207 + $0x24] sm:%s199] %v226
                %v228 = vld [vmem:[%s206 + $0x78] sm:%s199]
                %229 = vst [vmem:[%s207 + $0x28] sm:%s199] %v228
                %v230 = vld [vmem:[%s206 + $0x84] sm:%s199]
                %231 = vst [vmem:[%s207 + $0x2c] sm:%s199] %v230
                %v232 = vld [vmem:[%s206 + $0x90] sm:%s199]
                %233 = vst [vmem:[%s207 + $0x30] sm:%s199] %v232
                %v234 = vld [vmem:[%s206 + $0x9c] sm:%s199]
                %235 = vst [vmem:[%s207 + $0x34] sm:%s199] %v234
                %v236 = vld [vmem:[%s206 + $0xa8] sm:%s199]
                %237 = vst [vmem:[%s207 + $0x38] sm:%s199] %v236
                %v238 = vld [vmem:[%s206 + $0xb4] sm:%s199]
                %239 = vst [vmem:[%s207 + $0x3c] sm:%s199] %v238
                %v240 = vld [vmem:[%s206 + $0xc0] sm:%s199]
                %241 = vst [vmem:[%s207 + $0x40] sm:%s199] %v240
                %v242 = vld [vmem:[%s206 + $0xcc] sm:%s199]
                %243 = vst [vmem:[%s207 + $0x44] sm:%s199] %v242
                %v244 = vld [vmem:[%s206 + $0xd8] sm:%s199]
                %245 = vst [vmem:[%s207 + $0x48] sm:%s199] %v244
                %v246 = vld [vmem:[%s206 + $0xe4] sm:%s199]
                %247 = vst [vmem:[%s207 + $0x4c] sm:%s199] %v246
                %v248 = vld [vmem:[%s206 + $0xf0] sm:%s199]
                %249 = vst [vmem:[%s207 + $0x50] sm:%s199] %v248
                %v250 = vld [vmem:[%s206 + $0xfc] sm:%s199]
                %251 = vst [vmem:[%s207 + $0x54] sm:%s199] %v250
                %v252 = vld [vmem:[%s206 + $0x108] sm:%s199]
                %253 = vst [vmem:[%s207 + $0x58] sm:%s199] %v252
                %v254 = vld [vmem:[%s206 + $0x114] sm:%s199]
                %255 = vst [vmem:[%s207 + $0x5c] sm:%s199] %v254
                %v256 = vld [vmem:[%s206 + $0x120] sm:%s199]
                %257 = vst [vmem:[%s207 + $0x60] sm:%s199] %v256
                %v258 = vld [vmem:[%s206 + $0x12c] sm:%s199]
                %259 = vst [vmem:[%s207 + $0x64] sm:%s199] %v258
                %v260 = vld [vmem:[%s206 + $0x138] sm:%s199]
                %261 = vst [vmem:[%s207 + $0x68] sm:%s199] %v260
                %v262 = vld [vmem:[%s206 + $0x144] sm:%s199]
                %263 = vst [vmem:[%s207 + $0x6c] sm:%s199] %v262
                %v264 = vld [vmem:[%s206 + $0x150] sm:%s199]
                %265 = vst [vmem:[%s207 + $0x70] sm:%s199] %v264
                %v266 = vld [vmem:[%s206 + $0x15c] sm:%s199]
                %267 = vst [vmem:[%s207 + $0x74] sm:%s199] %v266
                %v268 = vld [vmem:[%s206 + $0x168] sm:%s199]
                %269 = vst [vmem:[%s207 + $0x78] sm:%s199] %v268
                %v270 = vld [vmem:[%s206 + $0x174] sm:%s199]
                %271 = vst [vmem:[%s207 + $0x7c] sm:%s199] %v270
                %v272 = vld [vmem:[%s206 + $0x180] sm:%s199]
                %273 = vst [vmem:[%s207 + $0x80] sm:%s199] %v272
                %v274 = vld [vmem:[%s206 + $0x18c] sm:%s199]
                %275 = vst [vmem:[%s207 + $0x84] sm:%s199] %v274
                %v276 = vld [vmem:[%s206 + $0x198] sm:%s199]
                %277 = vst [vmem:[%s207 + $0x88] sm:%s199] %v276
                %v278 = vld [vmem:[%s206 + $0x1a4] sm:%s199]
                %279 = vst [vmem:[%s207 + $0x8c] sm:%s199] %v278
                %v280 = vld [vmem:[%s206 + $0x1b0] sm:%s199]
                %281 = vst [vmem:[%s207 + $0x90] sm:%s199] %v280
                %v282 = vld [vmem:[%s206 + $0x1bc] sm:%s199]
                %283 = vst [vmem:[%s207 + $0x94] sm:%s199] %v282
                %v284 = vld [vmem:[%s206 + $0x1c8] sm:%s199]
                %285 = vst [vmem:[%s207 + $0x98] sm:%s199] %v284
                %v286 = vld [vmem:[%s206 + $0x1d4] sm:%s199]
                %287 = vst [vmem:[%s207 + $0x9c] sm:%s199] %v286
                %v288 = vld [vmem:[%s206 + $0x1e0] sm:%s199]
                %289 = vst [vmem:[%s207 + $0xa0] sm:%s199] %v288
                %v290 = vld [vmem:[%s206 + $0x1ec] sm:%s199]
                %291 = vst [vmem:[%s207 + $0xa4] sm:%s199] %v290
                %v292 = vld [vmem:[%s206 + $0x1f8] sm:%s199]
                %293 = vst [vmem:[%s207 + $0xa8] sm:%s199] %v292
                %v294 = vld [vmem:[%s206 + $0x204] sm:%s199]
                %295 = vst [vmem:[%s207 + $0xac] sm:%s199] %v294
                %v296 = vld [vmem:[%s206 + $0x210] sm:%s199]
                %297 = vst [vmem:[%s207 + $0xb0] sm:%s199] %v296
                %v298 = vld [vmem:[%s206 + $0x21c] sm:%s199]
                %299 = vst [vmem:[%s207 + $0xb4] sm:%s199] %v298
                %v300 = vld [vmem:[%s206 + $0x228] sm:%s199]
                %301 = vst [vmem:[%s207 + $0xb8] sm:%s199] %v300
                %v302 = vld [vmem:[%s206 + $0x234] sm:%s199]
                %303 = vst [vmem:[%s207 + $0xbc] sm:%s199] %v302
                %v304 = vld [vmem:[%s206 + $0x240] sm:%s199]
                %305 = vst [vmem:[%s207 + $0xc0] sm:%s199] %v304
                %v306 = vld [vmem:[%s206 + $0x24c] sm:%s199]
                %307 = vst [vmem:[%s207 + $0xc4] sm:%s199] %v306
                %v308 = vld [vmem:[%s206 + $0x258] sm:%s199]
                %309 = vst [vmem:[%s207 + $0xc8] sm:%s199] %v308
                %v310 = vld [vmem:[%s206 + $0x264] sm:%s199]
                %311 = vst [vmem:[%s207 + $0xcc] sm:%s199] %v310
                %v312 = vld [vmem:[%s206 + $0x270] sm:%s199]
                %313 = vst [vmem:[%s207 + $0xd0] sm:%s199] %v312
                %v314 = vld [vmem:[%s206 + $0x27c] sm:%s199]
                %315 = vst [vmem:[%s207 + $0xd4] sm:%s199] %v314
                %v316 = vld [vmem:[%s206 + $0x288] sm:%s199]
                %317 = vst [vmem:[%s207 + $0xd8] sm:%s199] %v316
                %v318 = vld [vmem:[%s206 + $0x294] sm:%s199]
                %319 = vst [vmem:[%s207 + $0xdc] sm:%s199] %v318
                %v320 = vld [vmem:[%s206 + $0x2a0] sm:%s199]
                %321 = vst [vmem:[%s207 + $0xe0] sm:%s199] %v320
                %v322 = vld [vmem:[%s206 + $0x2ac] sm:%s199]
                %323 = vst [vmem:[%s207 + $0xe4] sm:%s199] %v322
                %v324 = vld [vmem:[%s206 + $0x2b8] sm:%s199]
                %325 = vst [vmem:[%s207 + $0xe8] sm:%s199] %v324
                %v326 = vld [vmem:[%s206 + $0x2c4] sm:%s199]
                %327 = vst [vmem:[%s207 + $0xec] sm:%s199] %v326
                %v328 = vld [vmem:[%s206 + $0x2d0] sm:%s199]
                %329 = vst [vmem:[%s207 + $0xf0] sm:%s199] %v328
                %v330 = vld [vmem:[%s206 + $0x2dc] sm:%s199]
                %331 = vst [vmem:[%s207 + $0xf4] sm:%s199] %v330
                %v332 = vld [vmem:[%s206 + $0x2e8] sm:%s199]
                %333 = vst [vmem:[%s207 + $0xf8] sm:%s199] %v332
                %v334 = vld [vmem:[%s206 + $0x2f4] sm:%s199]
                %335 = vst [vmem:[%s207 + $0xfc] sm:%s199] %v334
                %v336 = vld [vmem:[%s206 + $0x300] sm:%s199]
                %337 = vst [vmem:[%s207 + $0x100] sm:%s199] %v336
                %v338 = vld [vmem:[%s206 + $0x30c] sm:%s199]
                %339 = vst [vmem:[%s207 + $0x104] sm:%s199] %v338
                %v340 = vld [vmem:[%s206 + $0x318] sm:%s199]
                %341 = vst [vmem:[%s207 + $0x108] sm:%s199] %v340
                %v342 = vld [vmem:[%s206 + $0x324] sm:%s199]
                %343 = vst [vmem:[%s207 + $0x10c] sm:%s199] %v342
                %v344 = vld [vmem:[%s206 + $0x330] sm:%s199]
                %345 = vst [vmem:[%s207 + $0x110] sm:%s199] %v344
                %v346 = vld [vmem:[%s206 + $0x33c] sm:%s199]
                %347 = vst [vmem:[%s207 + $0x114] sm:%s199] %v346
                %v348 = vld [vmem:[%s206 + $0x348] sm:%s199]
                %349 = vst [vmem:[%s207 + $0x118] sm:%s199] %v348
                %v350 = vld [vmem:[%s206 + $0x354] sm:%s199]
                %351 = vst [vmem:[%s207 + $0x11c] sm:%s199] %v350
                %v352 = vld [vmem:[%s206 + $0x360] sm:%s199]
                %353 = vst [vmem:[%s207 + $0x120] sm:%s199] %v352
                %v354 = vld [vmem:[%s206 + $0x36c] sm:%s199]
                %355 = vst [vmem:[%s207 + $0x124] sm:%s199] %v354
                %v356 = vld [vmem:[%s206 + $0x378] sm:%s199]
                %357 = vst [vmem:[%s207 + $0x128] sm:%s199] %v356
                %v358 = vld [vmem:[%s206 + $0x384] sm:%s199]
                %359 = vst [vmem:[%s207 + $0x12c] sm:%s199] %v358
                %v360 = vld [vmem:[%s206 + $0x390] sm:%s199]
                %361 = vst [vmem:[%s207 + $0x130] sm:%s199] %v360
                %v362 = vld [vmem:[%s206 + $0x39c] sm:%s199]
                %363 = vst [vmem:[%s207 + $0x134] sm:%s199] %v362
                %v364 = vld [vmem:[%s206 + $0x3a8] sm:%s199]
                %365 = vst [vmem:[%s207 + $0x138] sm:%s199] %v364
                %v366 = vld [vmem:[%s206 + $0x3b4] sm:%s199]
                %367 = vst [vmem:[%s207 + $0x13c] sm:%s199] %v366
                %v368 = vld [vmem:[%s206 + $0x3c0] sm:%s199]
                %369 = vst [vmem:[%s207 + $0x140] sm:%s199] %v368
                %v370 = vld [vmem:[%s206 + $0x3cc] sm:%s199]
                %371 = vst [vmem:[%s207 + $0x144] sm:%s199] %v370
                %v372 = vld [vmem:[%s206 + $0x3d8] sm:%s199]
                %373 = vst [vmem:[%s207 + $0x148] sm:%s199] %v372
                %v374 = vld [vmem:[%s206 + $0x3e4] sm:%s199]
                %375 = vst [vmem:[%s207 + $0x14c] sm:%s199] %v374
                %v376 = vld [vmem:[%s206 + $0x3f0] sm:%s199]
                %377 = vst [vmem:[%s207 + $0x150] sm:%s199] %v376
                %v378 = vld [vmem:[%s206 + $0x3fc] sm:%s199]
                %379 = vst [vmem:[%s207 + $0x154] sm:%s199] %v378
                %v380 = vld [vmem:[%s206 + $0x408] sm:%s199]
                %381 = vst [vmem:[%s207 + $0x158] sm:%s199] %v380
                %v382 = vld [vmem:[%s206 + $0x414] sm:%s199]
                %383 = vst [vmem:[%s207 + $0x15c] sm:%s199] %v382
                %v384 = vld [vmem:[%s206 + $0x420] sm:%s199]
                %385 = vst [vmem:[%s207 + $0x160] sm:%s199] %v384
                %v386 = vld [vmem:[%s206 + $0x42c] sm:%s199]
                %387 = vst [vmem:[%s207 + $0x164] sm:%s199] %v386
                %v388 = vld [vmem:[%s206 + $0x438] sm:%s199]
                %389 = vst [vmem:[%s207 + $0x168] sm:%s199] %v388
                %v390 = vld [vmem:[%s206 + $0x444] sm:%s199]
                %391 = vst [vmem:[%s207 + $0x16c] sm:%s199] %v390
                %v392 = vld [vmem:[%s206 + $0x450] sm:%s199]
                %393 = vst [vmem:[%s207 + $0x170] sm:%s199] %v392
                %v394 = vld [vmem:[%s206 + $0x45c] sm:%s199]
                %395 = vst [vmem:[%s207 + $0x174] sm:%s199] %v394
                %v396 = vld [vmem:[%s206 + $0x468] sm:%s199]
                %397 = vst [vmem:[%s207 + $0x178] sm:%s199] %v396
                %v398 = vld [vmem:[%s206 + $0x474] sm:%s199]
                %399 = vst [vmem:[%s207 + $0x17c] sm:%s199] %v398
                %v400 = vld [vmem:[%s206 + $0x480] sm:%s199]
                %401 = vst [vmem:[%s207 + $0x180] sm:%s199] %v400
                %v402 = vld [vmem:[%s206 + $0x48c] sm:%s199]
                %403 = vst [vmem:[%s207 + $0x184] sm:%s199] %v402
                %v404 = vld [vmem:[%s206 + $0x498] sm:%s199]
                %405 = vst [vmem:[%s207 + $0x188] sm:%s199] %v404
                %v406 = vld [vmem:[%s206 + $0x4a4] sm:%s199]
                %407 = vst [vmem:[%s207 + $0x18c] sm:%s199] %v406
                %v408 = vld [vmem:[%s206 + $0x4b0] sm:%s199]
                %409 = vst [vmem:[%s207 + $0x190] sm:%s199] %v408
                %v410 = vld [vmem:[%s206 + $0x4bc] sm:%s199]
                %411 = vst [vmem:[%s207 + $0x194] sm:%s199] %v410
                %v412 = vld [vmem:[%s206 + $0x4c8] sm:%s199]
                %413 = vst [vmem:[%s207 + $0x198] sm:%s199] %v412
                %v414 = vld [vmem:[%s206 + $0x4d4] sm:%s199]
                %415 = vst [vmem:[%s207 + $0x19c] sm:%s199] %v414
                %v416 = vld [vmem:[%s206 + $0x4e0] sm:%s199]
                %417 = vst [vmem:[%s207 + $0x1a0] sm:%s199] %v416
                %v418 = vld [vmem:[%s206 + $0x4ec] sm:%s199]
                %419 = vst [vmem:[%s207 + $0x1a4] sm:%s199] %v418
                %v420 = vld [vmem:[%s206 + $0x4f8] sm:%s199]
                %421 = vst [vmem:[%s207 + $0x1a8] sm:%s199] %v420
                %v422 = vld [vmem:[%s206 + $0x504] sm:%s199]
                %423 = vst [vmem:[%s207 + $0x1ac] sm:%s199] %v422
                %v424 = vld [vmem:[%s206 + $0x510] sm:%s199]
                %425 = vst [vmem:[%s207 + $0x1b0] sm:%s199] %v424
                %v426 = vld [vmem:[%s206 + $0x51c] sm:%s199]
                %427 = vst [vmem:[%s207 + $0x1b4] sm:%s199] %v426
                %v428 = vld [vmem:[%s206 + $0x528] sm:%s199]
                %429 = vst [vmem:[%s207 + $0x1b8] sm:%s199] %v428
                %v430 = vld [vmem:[%s206 + $0x534] sm:%s199]
                %431 = vst [vmem:[%s207 + $0x1bc] sm:%s199] %v430
                %v432 = vld [vmem:[%s206 + $0x540] sm:%s199]
                %433 = vst [vmem:[%s207 + $0x1c0] sm:%s199] %v432
                %v434 = vld [vmem:[%s206 + $0x54c] sm:%s199]
                %435 = vst [vmem:[%s207 + $0x1c4] sm:%s199] %v434
                %v436 = vld [vmem:[%s206 + $0x558] sm:%s199]
                %437 = vst [vmem:[%s207 + $0x1c8] sm:%s199] %v436
                %v438 = vld [vmem:[%s206 + $0x564] sm:%s199]
                %439 = vst [vmem:[%s207 + $0x1cc] sm:%s199] %v438
                %v440 = vld [vmem:[%s206 + $0x570] sm:%s199]
                %441 = vst [vmem:[%s207 + $0x1d0] sm:%s199] %v440
                %v442 = vld [vmem:[%s206 + $0x57c] sm:%s199]
                %443 = vst [vmem:[%s207 + $0x1d4] sm:%s199] %v442
                %v444 = vld [vmem:[%s206 + $0x588] sm:%s199]
                %445 = vst [vmem:[%s207 + $0x1d8] sm:%s199] %v444
                %v446 = vld [vmem:[%s206 + $0x594] sm:%s199]
                %447 = vst [vmem:[%s207 + $0x1dc] sm:%s199] %v446
                %v448 = vld [vmem:[%s206 + $0x5a0] sm:%s199]
                %449 = vst [vmem:[%s207 + $0x1e0] sm:%s199] %v448
                %v450 = vld [vmem:[%s206 + $0x5ac] sm:%s199]
                %451 = vst [vmem:[%s207 + $0x1e4] sm:%s199] %v450
                %v452 = vld [vmem:[%s206 + $0x5b8] sm:%s199]
                %453 = vst [vmem:[%s207 + $0x1e8] sm:%s199] %v452
                %v454 = vld [vmem:[%s206 + $0x5c4] sm:%s199]
                %455 = vst [vmem:[%s207 + $0x1ec] sm:%s199] %v454
                %v456 = vld [vmem:[%s206 + $0x5d0] sm:%s199]
                %457 = vst [vmem:[%s207 + $0x1f0] sm:%s199] %v456
                %v458 = vld [vmem:[%s206 + $0x5dc] sm:%s199]
                %459 = vst [vmem:[%s207 + $0x1f4] sm:%s199] %v458
                %v460 = vld [vmem:[%s206 + $0x5e8] sm:%s199]
                %461 = vst [vmem:[%s207 + $0x1f8] sm:%s199] %v460
                %v462 = vld [vmem:[%s206 + $0x5f4] sm:%s199]
                %463 = vst [vmem:[%s207 + $0x1fc] sm:%s199] %v462
                %v464 = vld [vmem:[%s206 + $0x600] sm:%s199]
                %465 = vst [vmem:[%s207 + $0x200] sm:%s199] %v464
                %v466 = vld [vmem:[%s206 + $0x60c] sm:%s199]
                %467 = vst [vmem:[%s207 + $0x204] sm:%s199] %v466
                %v468 = vld [vmem:[%s206 + $0x618] sm:%s199]
                %469 = vst [vmem:[%s207 + $0x208] sm:%s199] %v468
                %v470 = vld [vmem:[%s206 + $0x624] sm:%s199]
                %471 = vst [vmem:[%s207 + $0x20c] sm:%s199] %v470
                %v472 = vld [vmem:[%s206 + $0x630] sm:%s199]
                %473 = vst [vmem:[%s207 + $0x210] sm:%s199] %v472
                %v474 = vld [vmem:[%s206 + $0x63c] sm:%s199]
                %475 = vst [vmem:[%s207 + $0x214] sm:%s199] %v474
                %v476 = vld [vmem:[%s206 + $0x648] sm:%s199]
                %477 = vst [vmem:[%s207 + $0x218] sm:%s199] %v476
                %v478 = vld [vmem:[%s206 + $0x654] sm:%s199]
                %479 = vst [vmem:[%s207 + $0x21c] sm:%s199] %v478
                %v480 = vld [vmem:[%s206 + $0x660] sm:%s199]
                %481 = vst [vmem:[%s207 + $0x220] sm:%s199] %v480
                %v482 = vld [vmem:[%s206 + $0x66c] sm:%s199]
                %483 = vst [vmem:[%s207 + $0x224] sm:%s199] %v482
                %v484 = vld [vmem:[%s206 + $0x678] sm:%s199]
                %485 = vst [vmem:[%s207 + $0x228] sm:%s199] %v484
                %v486 = vld [vmem:[%s206 + $0x684] sm:%s199]
                %487 = vst [vmem:[%s207 + $0x22c] sm:%s199] %v486
                %v488 = vld [vmem:[%s206 + $0x690] sm:%s199]
                %489 = vst [vmem:[%s207 + $0x230] sm:%s199] %v488
                %v490 = vld [vmem:[%s206 + $0x69c] sm:%s199]
                %491 = vst [vmem:[%s207 + $0x234] sm:%s199] %v490
                %v492 = vld [vmem:[%s206 + $0x6a8] sm:%s199]
                %493 = vst [vmem:[%s207 + $0x238] sm:%s199] %v492
                %v494 = vld [vmem:[%s206 + $0x6b4] sm:%s199]
                %495 = vst [vmem:[%s207 + $0x23c] sm:%s199] %v494
                %v496 = vld [vmem:[%s206 + $0x6c0] sm:%s199]
                %497 = vst [vmem:[%s207 + $0x240] sm:%s199] %v496
                %v498 = vld [vmem:[%s206 + $0x6cc] sm:%s199]
                %499 = vst [vmem:[%s207 + $0x244] sm:%s199] %v498
                %v500 = vld [vmem:[%s206 + $0x6d8] sm:%s199]
                %501 = vst [vmem:[%s207 + $0x248] sm:%s199] %v500
                %v502 = vld [vmem:[%s206 + $0x6e4] sm:%s199]
                %503 = vst [vmem:[%s207 + $0x24c] sm:%s199] %v502
                %v504 = vld [vmem:[%s206 + $0x6f0] sm:%s199]
                %505 = vst [vmem:[%s207 + $0x250] sm:%s199] %v504
                %v506 = vld [vmem:[%s206 + $0x6fc] sm:%s199]
                %507 = vst [vmem:[%s207 + $0x254] sm:%s199] %v506
                %v508 = vld [vmem:[%s206 + $0x708] sm:%s199]
                %509 = vst [vmem:[%s207 + $0x258] sm:%s199] %v508
                %v510 = vld [vmem:[%s206 + $0x714] sm:%s199]
                %511 = vst [vmem:[%s207 + $0x25c] sm:%s199] %v510
                %v512 = vld [vmem:[%s206 + $0x720] sm:%s199]
                %513 = vst [vmem:[%s207 + $0x260] sm:%s199] %v512
                %v514 = vld [vmem:[%s206 + $0x72c] sm:%s199]
                %515 = vst [vmem:[%s207 + $0x264] sm:%s199] %v514
                %v516 = vld [vmem:[%s206 + $0x738] sm:%s199]
                %517 = vst [vmem:[%s207 + $0x268] sm:%s199] %v516
                %v518 = vld [vmem:[%s206 + $0x744] sm:%s199]
                %519 = vst [vmem:[%s207 + $0x26c] sm:%s199] %v518
                %v520 = vld [vmem:[%s206 + $0x750] sm:%s199]
                %521 = vst [vmem:[%s207 + $0x270] sm:%s199] %v520
                %v522 = vld [vmem:[%s206 + $0x75c] sm:%s199]
                %523 = vst [vmem:[%s207 + $0x274] sm:%s199] %v522
                %v524 = vld [vmem:[%s206 + $0x768] sm:%s199]
                %525 = vst [vmem:[%s207 + $0x278] sm:%s199] %v524
                %v526 = vld [vmem:[%s206 + $0x774] sm:%s199]
                %527 = vst [vmem:[%s207 + $0x27c] sm:%s199] %v526
                %v528 = vld [vmem:[%s206 + $0x780] sm:%s199]
                %529 = vst [vmem:[%s207 + $0x280] sm:%s199] %v528
                %v530 = vld [vmem:[%s206 + $0x78c] sm:%s199]
                %531 = vst [vmem:[%s207 + $0x284] sm:%s199] %v530
                %v532 = vld [vmem:[%s206 + $0x798] sm:%s199]
                %533 = vst [vmem:[%s207 + $0x288] sm:%s199] %v532
                %v534 = vld [vmem:[%s206 + $0x7a4] sm:%s199]
                %535 = vst [vmem:[%s207 + $0x28c] sm:%s199] %v534
                %v536 = vld [vmem:[%s206 + $0x7b0] sm:%s199]
                %537 = vst [vmem:[%s207 + $0x290] sm:%s199] %v536
                %v538 = vld [vmem:[%s206 + $0x7bc] sm:%s199]
                %539 = vst [vmem:[%s207 + $0x294] sm:%s199] %v538
                %v540 = vld [vmem:[%s206 + $0x7c8] sm:%s199]
                %541 = vst [vmem:[%s207 + $0x298] sm:%s199] %v540
                %v542 = vld [vmem:[%s206 + $0x7d4] sm:%s199]
                %543 = vst [vmem:[%s207 + $0x29c] sm:%s199] %v542
                %v544 = vld [vmem:[%s206 + $0x7e0] sm:%s199]
                %545 = vst [vmem:[%s207 + $0x2a0] sm:%s199] %v544
                %v546 = vld [vmem:[%s206 + $0x7ec] sm:%s199]
                %547 = vst [vmem:[%s207 + $0x2a4] sm:%s199] %v546
                %v548 = vld [vmem:[%s206 + $0x7f8] sm:%s199]
                %549 = vst [vmem:[%s207 + $0x2a8] sm:%s199] %v548
                %v550 = vld [vmem:[%s206 + $0x804] sm:%s199]
                %551 = vst [vmem:[%s207 + $0x2ac] sm:%s199] %v550
                %v552 = vld [vmem:[%s206 + $0x810] sm:%s199]
                %553 = vst [vmem:[%s207 + $0x2b0] sm:%s199] %v552
                %v554 = vld [vmem:[%s206 + $0x81c] sm:%s199]
                %555 = vst [vmem:[%s207 + $0x2b4] sm:%s199] %v554
                %v556 = vld [vmem:[%s206 + $0x828] sm:%s199]
                %557 = vst [vmem:[%s207 + $0x2b8] sm:%s199] %v556
                %v558 = vld [vmem:[%s206 + $0x834] sm:%s199]
                %559 = vst [vmem:[%s207 + $0x2bc] sm:%s199] %v558
                %v560 = vld [vmem:[%s206 + $0x840] sm:%s199]
                %561 = vst [vmem:[%s207 + $0x2c0] sm:%s199] %v560
                %v562 = vld [vmem:[%s206 + $0x84c] sm:%s199]
                %563 = vst [vmem:[%s207 + $0x2c4] sm:%s199] %v562
                %v564 = vld [vmem:[%s206 + $0x858] sm:%s199]
                %565 = vst [vmem:[%s207 + $0x2c8] sm:%s199] %v564
                %v566 = vld [vmem:[%s206 + $0x864] sm:%s199]
                %567 = vst [vmem:[%s207 + $0x2cc] sm:%s199] %v566
                %v568 = vld [vmem:[%s206 + $0x870] sm:%s199]
                %569 = vst [vmem:[%s207 + $0x2d0] sm:%s199] %v568
                %v570 = vld [vmem:[%s206 + $0x87c] sm:%s199]
                %571 = vst [vmem:[%s207 + $0x2d4] sm:%s199] %v570
                %v572 = vld [vmem:[%s206 + $0x888] sm:%s199]
                %573 = vst [vmem:[%s207 + $0x2d8] sm:%s199] %v572
                %v574 = vld [vmem:[%s206 + $0x894] sm:%s199]
                %575 = vst [vmem:[%s207 + $0x2dc] sm:%s199] %v574
                %v576 = vld [vmem:[%s206 + $0x8a0] sm:%s199]
                %577 = vst [vmem:[%s207 + $0x2e0] sm:%s199] %v576
                %v578 = vld [vmem:[%s206 + $0x8ac] sm:%s199]
                %579 = vst [vmem:[%s207 + $0x2e4] sm:%s199] %v578
                %v580 = vld [vmem:[%s206 + $0x8b8] sm:%s199]
                %581 = vst [vmem:[%s207 + $0x2e8] sm:%s199] %v580
                %v582 = vld [vmem:[%s206 + $0x8c4] sm:%s199]
                %583 = vst [vmem:[%s207 + $0x2ec] sm:%s199] %v582
                %v584 = vld [vmem:[%s206 + $0x8d0] sm:%s199]
                %585 = vst [vmem:[%s207 + $0x2f0] sm:%s199] %v584
                %v586 = vld [vmem:[%s206 + $0x8dc] sm:%s199]
                %587 = vst [vmem:[%s207 + $0x2f4] sm:%s199] %v586
                %v588 = vld [vmem:[%s206 + $0x8e8] sm:%s199]
                %589 = vst [vmem:[%s207 + $0x2f8] sm:%s199] %v588
                %v590 = vld [vmem:[%s206 + $0x8f4] sm:%s199]
                %591 = vst [vmem:[%s207 + $0x2fc] sm:%s199] %v590
                %v592 = vld [vmem:[%s206 + $0x900] sm:%s199]
                %593 = vst [vmem:[%s207 + $0x300] sm:%s199] %v592
                %v594 = vld [vmem:[%s206 + $0x90c] sm:%s199]
                %595 = vst [vmem:[%s207 + $0x304] sm:%s199] %v594
                %v596 = vld [vmem:[%s206 + $0x918] sm:%s199]
                %597 = vst [vmem:[%s207 + $0x308] sm:%s199] %v596
                %v598 = vld [vmem:[%s206 + $0x924] sm:%s199]
                %599 = vst [vmem:[%s207 + $0x30c] sm:%s199] %v598
                %v600 = vld [vmem:[%s206 + $0x930] sm:%s199]
                %601 = vst [vmem:[%s207 + $0x310] sm:%s199] %v600
                %v602 = vld [vmem:[%s206 + $0x93c] sm:%s199]
                %603 = vst [vmem:[%s207 + $0x314] sm:%s199] %v602
                %v604 = vld [vmem:[%s206 + $0x948] sm:%s199]
                %605 = vst [vmem:[%s207 + $0x318] sm:%s199] %v604
                %v606 = vld [vmem:[%s206 + $0x954] sm:%s199]
                %607 = vst [vmem:[%s207 + $0x31c] sm:%s199] %v606
                %v608 = vld [vmem:[%s206 + $0x960] sm:%s199]
                %609 = vst [vmem:[%s207 + $0x320] sm:%s199] %v608
                %v610 = vld [vmem:[%s206 + $0x96c] sm:%s199]
                %611 = vst [vmem:[%s207 + $0x324] sm:%s199] %v610
                %v612 = vld [vmem:[%s206 + $0x978] sm:%s199]
                %613 = vst [vmem:[%s207 + $0x328] sm:%s199] %v612
                %v614 = vld [vmem:[%s206 + $0x984] sm:%s199]
                %615 = vst [vmem:[%s207 + $0x32c] sm:%s199] %v614
                %v616 = vld [vmem:[%s206 + $0x990] sm:%s199]
                %617 = vst [vmem:[%s207 + $0x330] sm:%s199] %v616
                %v618 = vld [vmem:[%s206 + $0x99c] sm:%s199]
                %619 = vst [vmem:[%s207 + $0x334] sm:%s199] %v618
                %v620 = vld [vmem:[%s206 + $0x9a8] sm:%s199]
                %621 = vst [vmem:[%s207 + $0x338] sm:%s199] %v620
                %v622 = vld [vmem:[%s206 + $0x9b4] sm:%s199]
                %623 = vst [vmem:[%s207 + $0x33c] sm:%s199] %v622
                %v624 = vld [vmem:[%s206 + $0x9c0] sm:%s199]
                %625 = vst [vmem:[%s207 + $0x340] sm:%s199] %v624
                %v626 = vld [vmem:[%s206 + $0x9cc] sm:%s199]
                %627 = vst [vmem:[%s207 + $0x344] sm:%s199] %v626
                %v628 = vld [vmem:[%s206 + $0x9d8] sm:%s199]
                %629 = vst [vmem:[%s207 + $0x348] sm:%s199] %v628
                %v630 = vld [vmem:[%s206 + $0x9e4] sm:%s199]
                %631 = vst [vmem:[%s207 + $0x34c] sm:%s199] %v630
                %v632 = vld [vmem:[%s206 + $0x9f0] sm:%s199]
                %633 = vst [vmem:[%s207 + $0x350] sm:%s199] %v632
                %v634 = vld [vmem:[%s206 + $0x9fc] sm:%s199]
                %635 = vst [vmem:[%s207 + $0x354] sm:%s199] %v634
                %v636 = vld [vmem:[%s206 + $0xa08] sm:%s199]
                %637 = vst [vmem:[%s207 + $0x358] sm:%s199] %v636
                %v638 = vld [vmem:[%s206 + $0xa14] sm:%s199]
                %639 = vst [vmem:[%s207 + $0x35c] sm:%s199] %v638
                %v640 = vld [vmem:[%s206 + $0xa20] sm:%s199]
                %641 = vst [vmem:[%s207 + $0x360] sm:%s199] %v640
                %v642 = vld [vmem:[%s206 + $0xa2c] sm:%s199]
                %643 = vst [vmem:[%s207 + $0x364] sm:%s199] %v642
                %v644 = vld [vmem:[%s206 + $0xa38] sm:%s199]
                %645 = vst [vmem:[%s207 + $0x368] sm:%s199] %v644
                %v646 = vld [vmem:[%s206 + $0xa44] sm:%s199]
                %647 = vst [vmem:[%s207 + $0x36c] sm:%s199] %v646
                %v648 = vld [vmem:[%s206 + $0xa50] sm:%s199]
                %649 = vst [vmem:[%s207 + $0x370] sm:%s199] %v648
                %v650 = vld [vmem:[%s206 + $0xa5c] sm:%s199]
                %651 = vst [vmem:[%s207 + $0x374] sm:%s199] %v650
                %v652 = vld [vmem:[%s206 + $0xa68] sm:%s199]
                %653 = vst [vmem:[%s207 + $0x378] sm:%s199] %v652
                %v654 = vld [vmem:[%s206 + $0xa74] sm:%s199]
                %655 = vst [vmem:[%s207 + $0x37c] sm:%s199] %v654
                %v656 = vld [vmem:[%s206 + $0xa80] sm:%s199]
                %657 = vst [vmem:[%s207 + $0x380] sm:%s199] %v656
                %v658 = vld [vmem:[%s206 + $0xa8c] sm:%s199]
                %659 = vst [vmem:[%s207 + $0x384] sm:%s199] %v658
                %v660 = vld [vmem:[%s206 + $0xa98] sm:%s199]
                %661 = vst [vmem:[%s207 + $0x388] sm:%s199] %v660
                %v662 = vld [vmem:[%s206 + $0xaa4] sm:%s199]
                %663 = vst [vmem:[%s207 + $0x38c] sm:%s199] %v662
                %v664 = vld [vmem:[%s206 + $0xab0] sm:%s199]
                %665 = vst [vmem:[%s207 + $0x390] sm:%s199] %v664
                %v666 = vld [vmem:[%s206 + $0xabc] sm:%s199]
                %667 = vst [vmem:[%s207 + $0x394] sm:%s199] %v666
                %v668 = vld [vmem:[%s206 + $0xac8] sm:%s199]
                %669 = vst [vmem:[%s207 + $0x398] sm:%s199] %v668
                %v670 = vld [vmem:[%s206 + $0xad4] sm:%s199]
                %671 = vst [vmem:[%s207 + $0x39c] sm:%s199] %v670
                %v672 = vld [vmem:[%s206 + $0xae0] sm:%s199]
                %673 = vst [vmem:[%s207 + $0x3a0] sm:%s199] %v672
                %v674 = vld [vmem:[%s206 + $0xaec] sm:%s199]
                %675 = vst [vmem:[%s207 + $0x3a4] sm:%s199] %v674
                %v676 = vld [vmem:[%s206 + $0xaf8] sm:%s199]
                %677 = vst [vmem:[%s207 + $0x3a8] sm:%s199] %v676
                %v678 = vld [vmem:[%s206 + $0xb04] sm:%s199]
                %679 = vst [vmem:[%s207 + $0x3ac] sm:%s199] %v678
                %v680 = vld [vmem:[%s206 + $0xb10] sm:%s199]
                %681 = vst [vmem:[%s207 + $0x3b0] sm:%s199] %v680
                %v682 = vld [vmem:[%s206 + $0xb1c] sm:%s199]
                %683 = vst [vmem:[%s207 + $0x3b4] sm:%s199] %v682
                %v684 = vld [vmem:[%s206 + $0xb28] sm:%s199]
                %685 = vst [vmem:[%s207 + $0x3b8] sm:%s199] %v684
                %v686 = vld [vmem:[%s206 + $0xb34] sm:%s199]
                %687 = vst [vmem:[%s207 + $0x3bc] sm:%s199] %v686
                %v688 = vld [vmem:[%s206 + $0xb40] sm:%s199]
                %689 = vst [vmem:[%s207 + $0x3c0] sm:%s199] %v688
                %v690 = vld [vmem:[%s206 + $0xb4c] sm:%s199]
                %691 = vst [vmem:[%s207 + $0x3c4] sm:%s199] %v690
                %v692 = vld [vmem:[%s206 + $0xb58] sm:%s199]
                %693 = vst [vmem:[%s207 + $0x3c8] sm:%s199] %v692
                %v694 = vld [vmem:[%s206 + $0xb64] sm:%s199]
                %695 = vst [vmem:[%s207 + $0x3cc] sm:%s199] %v694
                %v696 = vld [vmem:[%s206 + $0xb70] sm:%s199]
                %697 = vst [vmem:[%s207 + $0x3d0] sm:%s199] %v696
                %v698 = vld [vmem:[%s206 + $0xb7c] sm:%s199]
                %699 = vst [vmem:[%s207 + $0x3d4] sm:%s199] %v698
                %v700 = vld [vmem:[%s206 + $0xb88] sm:%s199]
                %701 = vst [vmem:[%s207 + $0x3d8] sm:%s199] %v700
                %v702 = vld [vmem:[%s206 + $0xb94] sm:%s199]
                %703 = vst [vmem:[%s207 + $0x3dc] sm:%s199] %v702
                %v704 = vld [vmem:[%s206 + $0xba0] sm:%s199]
                %705 = vst [vmem:[%s207 + $0x3e0] sm:%s199] %v704
                %v706 = vld [vmem:[%s206 + $0xbac] sm:%s199]
                %707 = vst [vmem:[%s207 + $0x3e4] sm:%s199] %v706
                %v708 = vld [vmem:[%s206 + $0xbb8] sm:%s199]
                %709 = vst [vmem:[%s207 + $0x3e8] sm:%s199] %v708
                %v710 = vld [vmem:[%s206 + $0xbc4] sm:%s199]
                %711 = vst [vmem:[%s207 + $0x3ec] sm:%s199] %v710
                %v712 = vld [vmem:[%s206 + $0xbd0] sm:%s199]
                %713 = vst [vmem:[%s207 + $0x3f0] sm:%s199] %v712
                %v714 = vld [vmem:[%s206 + $0xbdc] sm:%s199]
                %715 = vst [vmem:[%s207 + $0x3f4] sm:%s199] %v714
                %v716 = vld [vmem:[%s206 + $0xbe8] sm:%s199]
                %717 = vst [vmem:[%s207 + $0x3f8] sm:%s199] %v716
                %v718 = vld [vmem:[%s206 + $0xbf4] sm:%s199]
                %719 = vst [vmem:[%s207 + $0x3fc] sm:%s199] %v718
                %v720 = vld [vmem:[%s206 + $0xc00] sm:%s199]
                %721 = vst [vmem:[%s207 + $0x400] sm:%s199] %v720
                %v722 = vld [vmem:[%s206 + $0xc0c] sm:%s199]
                %723 = vst [vmem:[%s207 + $0x404] sm:%s199] %v722
                %v724 = vld [vmem:[%s206 + $0xc18] sm:%s199]
                %725 = vst [vmem:[%s207 + $0x408] sm:%s199] %v724
                %v726 = vld [vmem:[%s206 + $0xc24] sm:%s199]
                %727 = vst [vmem:[%s207 + $0x40c] sm:%s199] %v726
                %v728 = vld [vmem:[%s206 + $0xc30] sm:%s199]
                %729 = vst [vmem:[%s207 + $0x410] sm:%s199] %v728
                %v730 = vld [vmem:[%s206 + $0xc3c] sm:%s199]
                %731 = vst [vmem:[%s207 + $0x414] sm:%s199] %v730
                %v732 = vld [vmem:[%s206 + $0xc48] sm:%s199]
                %733 = vst [vmem:[%s207 + $0x418] sm:%s199] %v732
                %v734 = vld [vmem:[%s206 + $0xc54] sm:%s199]
                %735 = vst [vmem:[%s207 + $0x41c] sm:%s199] %v734
                %v736 = vld [vmem:[%s206 + $0xc60] sm:%s199]
                %737 = vst [vmem:[%s207 + $0x420] sm:%s199] %v736
                %v738 = vld [vmem:[%s206 + $0xc6c] sm:%s199]
                %739 = vst [vmem:[%s207 + $0x424] sm:%s199] %v738
                %v740 = vld [vmem:[%s206 + $0xc78] sm:%s199]
                %741 = vst [vmem:[%s207 + $0x428] sm:%s199] %v740
                %v742 = vld [vmem:[%s206 + $0xc84] sm:%s199]
                %743 = vst [vmem:[%s207 + $0x42c] sm:%s199] %v742
                %v744 = vld [vmem:[%s206 + $0xc90] sm:%s199]
                %745 = vst [vmem:[%s207 + $0x430] sm:%s199] %v744
                %v746 = vld [vmem:[%s206 + $0xc9c] sm:%s199]
                %747 = vst [vmem:[%s207 + $0x434] sm:%s199] %v746
                %v748 = vld [vmem:[%s206 + $0xca8] sm:%s199]
                %749 = vst [vmem:[%s207 + $0x438] sm:%s199] %v748
                %v750 = vld [vmem:[%s206 + $0xcb4] sm:%s199]
                %751 = vst [vmem:[%s207 + $0x43c] sm:%s199] %v750
                %v752 = vld [vmem:[%s206 + $0xcc0] sm:%s199]
                %753 = vst [vmem:[%s207 + $0x440] sm:%s199] %v752
                %v754 = vld [vmem:[%s206 + $0xccc] sm:%s199]
                %755 = vst [vmem:[%s207 + $0x444] sm:%s199] %v754
                %v756 = vld [vmem:[%s206 + $0xcd8] sm:%s199]
                %757 = vst [vmem:[%s207 + $0x448] sm:%s199] %v756
                %v758 = vld [vmem:[%s206 + $0xce4] sm:%s199]
                %759 = vst [vmem:[%s207 + $0x44c] sm:%s199] %v758
                %v760 = vld [vmem:[%s206 + $0xcf0] sm:%s199]
                %761 = vst [vmem:[%s207 + $0x450] sm:%s199] %v760
                %v762 = vld [vmem:[%s206 + $0xcfc] sm:%s199]
                %763 = vst [vmem:[%s207 + $0x454] sm:%s199] %v762
                %v764 = vld [vmem:[%s206 + $0xd08] sm:%s199]
                %765 = vst [vmem:[%s207 + $0x458] sm:%s199] %v764
                %v766 = vld [vmem:[%s206 + $0xd14] sm:%s199]
                %767 = vst [vmem:[%s207 + $0x45c] sm:%s199] %v766
                %v768 = vld [vmem:[%s206 + $0xd20] sm:%s199]
                %769 = vst [vmem:[%s207 + $0x460] sm:%s199] %v768
                %v770 = vld [vmem:[%s206 + $0xd2c] sm:%s199]
                %771 = vst [vmem:[%s207 + $0x464] sm:%s199] %v770
                %v772 = vld [vmem:[%s206 + $0xd38] sm:%s199]
                %773 = vst [vmem:[%s207 + $0x468] sm:%s199] %v772
                %v774 = vld [vmem:[%s206 + $0xd44] sm:%s199]
                %775 = vst [vmem:[%s207 + $0x46c] sm:%s199] %v774
                %v776 = vld [vmem:[%s206 + $0xd50] sm:%s199]
                %777 = vst [vmem:[%s207 + $0x470] sm:%s199] %v776
                %v778 = vld [vmem:[%s206 + $0xd5c] sm:%s199]
                %779 = vst [vmem:[%s207 + $0x474] sm:%s199] %v778
                %v780 = vld [vmem:[%s206 + $0xd68] sm:%s199]
                %781 = vst [vmem:[%s207 + $0x478] sm:%s199] %v780
                %v782 = vld [vmem:[%s206 + $0xd74] sm:%s199]
                %783 = vst [vmem:[%s207 + $0x47c] sm:%s199] %v782
              $region41: #{embedding_layer_forward.8} parent=35 // loop_footer
                %s205 = sadd.s32 1, %s201
              $region42: #{embedding_layer_forward.8} parent=35 // loop_footer_branch
                %200 = sbr.rel target = $region38
              $region43: #{embedding_layer_forward.8} parent=35 // loop_exit
                _
            $region36: #{embedding_layer_forward.8} parent=27 // pred_fallthru
              _
          $region28: #{embedding_layer_forward.8} parent=23 // pred_fallthru
            _
          %2558 = vnop
        $region24: #{embedding_layer_forward.8} parent=19 // pred_fallthru
          _
        // Predicated region
        $region73: #{embedding_layer_forward.8} parent=19 // pred_check
          %p2559 = pneg %p94
        $region74: #{embedding_layer_forward.8} parent=19 // pred_check_branch
          %2561 = sbr.rel (%p2559) target = $region76
        $region75: #{embedding_layer_forward.8} parent=19 // pred_region
          %p2562 = scmp.lt.s32.totalorder %s18, 2
          %s2563 = scalar_select %p2562, %s18, 2
          %s2564 = scalar_lea.vmem %s2, %s2563
        $region76: #{embedding_layer_forward.8} parent=19 // pred_fallthru
          _
        // Predicated region
        $region77: #{embedding_layer_forward.8} parent=19 // pred_check
          %p2565 = pneg %p120
        $region78: #{embedding_layer_forward.8} parent=19 // pred_check_branch
          %2567 = sbr.rel (%p2565) target = $region80
        $region79: #{embedding_layer_forward.8} parent=19 // pred_region
          %p2568 = scmp.lt.s32.totalorder %s18, 2
          %s2569 = scalar_select %p2568, %s18, 2
          %s2570 = scalar_lea.vmem %s3, %s2569
        $region80: #{embedding_layer_forward.8} parent=19 // pred_fallthru
          _
      $region20: #{embedding_layer_forward.8} parent=5 // pred_fallthru
        _
      %p2571 = scmp.le.s32.totalorder 1, %s10
      %p2572 = scmp.lt.s32.totalorder %s10, 4
      %p2573 = pnand %p2571, %p2572
      %p2574 = pneg %p2573
      // Predicated region
      $region81: #{embedding_layer_forward.8} parent=5 // pred_check
        _
      $region82: #{embedding_layer_forward.8} parent=5 // pred_check_branch
        %2576 = sbr.rel (%p2573) target = $region84
      $region83: #{embedding_layer_forward.8} parent=5 // pred_region
        %s2577 = ssub.s32 %s10, 1
        %s2578 = sand.u32 %s61, 1
        %s2579 = sand.u32 %s61, 1
        %s2580 = smul.addr %s2579, 1152
        %s2581 = scalar_lea.vmem [#allocation2], %s2580
        // Predicated region
        $region85: #{embedding_layer_forward.8} parent=83 // pred_check
          %p2582 = pneg %p74
        $region86: #{embedding_layer_forward.8} parent=83 // pred_check_branch
          %2584 = sbr.rel (%p2582) target = $region88
        $region87: #{embedding_layer_forward.8} parent=83 // pred_region
          _
        $region88: #{embedding_layer_forward.8} parent=83 // pred_fallthru
          _
        %s2585 = smul.u32 2, %s19
        %p2586 = scmp.lt.s32.totalorder %s2585, 1
        %s2587 = scalar_select %p2586, %s2585, 1
        %s2588 = smul.addr %s2587, 18
        %s2589 = smul.addr %s2588, 4
        %s2590 = scalar_lea.vmem %s0, %s2589
        %p2591 = pneg %p48
        %p2592 = pneg %p45
        %s2593 = sand.u32 %s61, 1
        %s2594 = sand.u32 %s61, 1
        %s2595 = smul.addr %s2594, 1152
        %s2596 = scalar_lea.vmem [#allocation2], %s2595
        %p2597 = pneg %p74
        %p2598 = pneg %p71
        %p2599 = scmp.lt.s32.totalorder %s20, 2
        %s2600 = scalar_select %p2599, %s20, 2
        %s2601 = scalar_lea.vmem %s2, %s2600
        %p2602 = pneg %p100
        %p2603 = pneg %p97
        %p2604 = scmp.lt.s32.totalorder %s20, 2
        %s2605 = scalar_select %p2604, %s20, 2
        %s2606 = scalar_lea.vmem %s3, %s2605
        %p2607 = pneg %p126
        %p2608 = pneg %p123
        %p2609 = pneg %p154
        %p2610 = pneg %p151
        %s2611 = sand.u32 %s141, 1
        %s2612 = sand.u32 %s141, 1
        %s2613 = smul.addr %s2612, 8
        %s2614 = scalar_lea.vmem [#allocation3], %s2613
        %s2615 = smul.u32 2, %s19
        %p2616 = scmp.lt.s32.totalorder %s2615, 1
        %s2617 = scalar_select %p2616, %s2615, 1
        %s2618 = smul.addr %s2617, 18
        %s2619 = smul.addr %s2618, 4
        %s2620 = scalar_lea.vmem %s0, %s2619
        %s2621 = smul.u32 2, %s19
        %p2622 = scmp.lt.s32.totalorder %s20, 2
        %s2623 = scalar_select %p2622, %s20, 2
        %s2624 = scalar_lea.vmem %s2, %s2623
        %p2625 = scmp.lt.s32.totalorder %s20, 2
        %s2626 = scalar_select %p2625, %s20, 2
        %s2627 = scalar_lea.vmem %s3, %s2626
        %s2628 = smul.u32 2, %s19
        %v2629 = vld [vmem:[%s2620] sm:$0xff]
        %v2630 = vld [vmem:[%s2620 + $0x8] sm:$0xff]
        %v2631 = vld [vmem:[%s2620 + $0x10] sm:$0xff]
        %v2632 = vld [vmem:[%s2620 + $0x18] sm:$0xff]
        %v2633 = vld [vmem:[%s2620 + $0x20] sm:$0xff]
        %v2634 = vld [vmem:[%s2620 + $0x28] sm:$0xff]
        %v2635 = vld [vmem:[%s2620 + $0x30] sm:$0xff]
        %v2636 = vld [vmem:[%s2620 + $0x38] sm:$0xff]
        %v2637 = vld [vmem:[%s2620 + $0x40] sm:$0xff]
        %v2638 = vld [vmem:[%s2620 + $0x48] sm:$0xff]
        %v2639 = vld [vmem:[%s2620 + $0x50] sm:$0xff]
        %v2640 = vld [vmem:[%s2620 + $0x58] sm:$0xff]
        %v2641 = vld [vmem:[%s2620 + $0x60] sm:$0xff]
        %v2642 = vld [vmem:[%s2620 + $0x68] sm:$0xff]
        %v2643 = vld [vmem:[%s2620 + $0x70] sm:$0xff]
        %v2644 = vld [vmem:[%s2620 + $0x78] sm:$0xff]
        %v2645 = vld [vmem:[%s2620 + $0x80] sm:$0xff]
        %v2646 = vld [vmem:[%s2620 + $0x88] sm:$0xff]
        %v2647 = vld [vmem:[%s2581] sm:$0xf]
        %v2648 = vld [vmem:[%s2581 + $0x4] sm:$0xf]
        %v2649 = vld [vmem:[%s2581 + $0x8] sm:$0xf]
        %v2650 = vld [vmem:[%s2581 + $0xc] sm:$0xf]
        %v2651 = vld [vmem:[%s2581 + $0x10] sm:$0xf]
        %v2652 = vld [vmem:[%s2581 + $0x14] sm:$0xf]
        %v2653 = vld [vmem:[%s2581 + $0x18] sm:$0xf]
        %v2654 = vld [vmem:[%s2581 + $0x1c] sm:$0xf]
        %v2655 = vld [vmem:[%s2581 + $0x20] sm:$0xf]
        %v2656 = vld [vmem:[%s2581 + $0x24] sm:$0xf]
        %v2657 = vld [vmem:[%s2581 + $0x28] sm:$0xf]
        %v2658 = vld [vmem:[%s2581 + $0x2c] sm:$0xf]
        %v2659 = vld [vmem:[%s2581 + $0x30] sm:$0xf]
        %v2660 = vld [vmem:[%s2581 + $0x34] sm:$0xf]
        %v2661 = vld [vmem:[%s2581 + $0x38] sm:$0xf]
        %v2662 = vld [vmem:[%s2581 + $0x3c] sm:$0xf]
        %v2663 = vld [vmem:[%s2581 + $0x40] sm:$0xf]
        %v2664 = vld [vmem:[%s2581 + $0x44] sm:$0xf]
        %v2665 = vld [vmem:[%s2581 + $0x48] sm:$0xf]
        %v2666 = vld [vmem:[%s2581 + $0x4c] sm:$0xf]
        %v2667 = vld [vmem:[%s2581 + $0x50] sm:$0xf]
        %v2668 = vld [vmem:[%s2581 + $0x54] sm:$0xf]
        %v2669 = vld [vmem:[%s2581 + $0x58] sm:$0xf]
        %v2670 = vld [vmem:[%s2581 + $0x5c] sm:$0xf]
        %v2671 = vld [vmem:[%s2581 + $0x60] sm:$0xf]
        %v2672 = vld [vmem:[%s2581 + $0x64] sm:$0xf]
        %v2673 = vld [vmem:[%s2581 + $0x68] sm:$0xf]
        %v2674 = vld [vmem:[%s2581 + $0x6c] sm:$0xf]
        %v2675 = vld [vmem:[%s2581 + $0x70] sm:$0xf]
        %v2676 = vld [vmem:[%s2581 + $0x74] sm:$0xf]
        %v2677 = vld [vmem:[%s2581 + $0x78] sm:$0xf]
        %v2678 = vld [vmem:[%s2581 + $0x7c] sm:$0xf]
        %v2679 = vld [vmem:[%s2581 + $0x80] sm:$0xf]
        %v2680 = vld [vmem:[%s2581 + $0x84] sm:$0xf]
        %v2681 = vld [vmem:[%s2581 + $0x88] sm:$0xf]
        %v2682 = vld [vmem:[%s2581 + $0x8c] sm:$0xf]
        %v2683 = vld [vmem:[%s2581 + $0x90] sm:$0xf]
        %v2684 = vld [vmem:[%s2581 + $0x94] sm:$0xf]
        %v2685 = vld [vmem:[%s2581 + $0x98] sm:$0xf]
        %v2686 = vld [vmem:[%s2581 + $0x9c] sm:$0xf]
        %v2687 = vld [vmem:[%s2581 + $0xa0] sm:$0xf]
        %v2688 = vld [vmem:[%s2581 + $0xa4] sm:$0xf]
        %v2689 = vld [vmem:[%s2581 + $0xa8] sm:$0xf]
        %v2690 = vld [vmem:[%s2581 + $0xac] sm:$0xf]
        %v2691 = vld [vmem:[%s2581 + $0xb0] sm:$0xf]
        %v2692 = vld [vmem:[%s2581 + $0xb4] sm:$0xf]
        %v2693 = vld [vmem:[%s2581 + $0xb8] sm:$0xf]
        %v2694 = vld [vmem:[%s2581 + $0xbc] sm:$0xf]
        %v2695 = vld [vmem:[%s2581 + $0xc0] sm:$0xf]
        %v2696 = vld [vmem:[%s2581 + $0xc4] sm:$0xf]
        %v2697 = vld [vmem:[%s2581 + $0xc8] sm:$0xf]
        %v2698 = vld [vmem:[%s2581 + $0xcc] sm:$0xf]
        %v2699 = vld [vmem:[%s2581 + $0xd0] sm:$0xf]
        %v2700 = vld [vmem:[%s2581 + $0xd4] sm:$0xf]
        %v2701 = vld [vmem:[%s2581 + $0xd8] sm:$0xf]
        %v2702 = vld [vmem:[%s2581 + $0xdc] sm:$0xf]
        %v2703 = vld [vmem:[%s2581 + $0xe0] sm:$0xf]
        %v2704 = vld [vmem:[%s2581 + $0xe4] sm:$0xf]
        %v2705 = vld [vmem:[%s2581 + $0xe8] sm:$0xf]
        %v2706 = vld [vmem:[%s2581 + $0xec] sm:$0xf]
        %v2707 = vld [vmem:[%s2581 + $0xf0] sm:$0xf]
        %v2708 = vld [vmem:[%s2581 + $0xf4] sm:$0xf]
        %v2709 = vld [vmem:[%s2581 + $0xf8] sm:$0xf]
        %v2710 = vld [vmem:[%s2581 + $0xfc] sm:$0xf]
        %v2711 = vld [vmem:[%s2581 + $0x100] sm:$0xf]
        %v2712 = vld [vmem:[%s2581 + $0x104] sm:$0xf]
        %v2713 = vld [vmem:[%s2581 + $0x108] sm:$0xf]
        %v2714 = vld [vmem:[%s2581 + $0x10c] sm:$0xf]
        %v2715 = vld [vmem:[%s2581 + $0x110] sm:$0xf]
        %v2716 = vld [vmem:[%s2581 + $0x114] sm:$0xf]
        %v2717 = vld [vmem:[%s2581 + $0x118] sm:$0xf]
        %v2718 = vld [vmem:[%s2581 + $0x11c] sm:$0xf]
        %v2719 = vld [vmem:[%s2581 + $0x120] sm:$0xf]
        %v2720 = vld [vmem:[%s2581 + $0x124] sm:$0xf]
        %v2721 = vld [vmem:[%s2581 + $0x128] sm:$0xf]
        %v2722 = vld [vmem:[%s2581 + $0x12c] sm:$0xf]
        %v2723 = vld [vmem:[%s2581 + $0x130] sm:$0xf]
        %v2724 = vld [vmem:[%s2581 + $0x134] sm:$0xf]
        %v2725 = vld [vmem:[%s2581 + $0x138] sm:$0xf]
        %v2726 = vld [vmem:[%s2581 + $0x13c] sm:$0xf]
        %v2727 = vld [vmem:[%s2581 + $0x140] sm:$0xf]
        %v2728 = vld [vmem:[%s2581 + $0x144] sm:$0xf]
        %v2729 = vld [vmem:[%s2581 + $0x148] sm:$0xf]
        %v2730 = vld [vmem:[%s2581 + $0x14c] sm:$0xf]
        %v2731 = vld [vmem:[%s2581 + $0x150] sm:$0xf]
        %v2732 = vld [vmem:[%s2581 + $0x154] sm:$0xf]
        %v2733 = vld [vmem:[%s2581 + $0x158] sm:$0xf]
        %v2734 = vld [vmem:[%s2581 + $0x15c] sm:$0xf]
        %v2735 = vld [vmem:[%s2581 + $0x160] sm:$0xf]
        %v2736 = vld [vmem:[%s2581 + $0x164] sm:$0xf]
        %v2737 = vld [vmem:[%s2581 + $0x168] sm:$0xf]
        %v2738 = vld [vmem:[%s2581 + $0x16c] sm:$0xf]
        %v2739 = vld [vmem:[%s2581 + $0x170] sm:$0xf]
        %v2740 = vld [vmem:[%s2581 + $0x174] sm:$0xf]
        %v2741 = vld [vmem:[%s2581 + $0x178] sm:$0xf]
        %v2742 = vld [vmem:[%s2581 + $0x17c] sm:$0xf]
        %v2743 = vld [vmem:[%s2581 + $0x180] sm:$0xf]
        %v2744 = vld [vmem:[%s2581 + $0x184] sm:$0xf]
        %v2745 = vld [vmem:[%s2581 + $0x188] sm:$0xf]
        %v2746 = vld [vmem:[%s2581 + $0x18c] sm:$0xf]
        %v2747 = vld [vmem:[%s2581 + $0x190] sm:$0xf]
        %v2748 = vld [vmem:[%s2581 + $0x194] sm:$0xf]
        %v2749 = vld [vmem:[%s2581 + $0x198] sm:$0xf]
        %v2750 = vld [vmem:[%s2581 + $0x19c] sm:$0xf]
        %v2751 = vld [vmem:[%s2581 + $0x1a0] sm:$0xf]
        %v2752 = vld [vmem:[%s2581 + $0x1a4] sm:$0xf]
        %v2753 = vld [vmem:[%s2581 + $0x1a8] sm:$0xf]
        %v2754 = vld [vmem:[%s2581 + $0x1ac] sm:$0xf]
        %v2755 = vld [vmem:[%s2581 + $0x1b0] sm:$0xf]
        %v2756 = vld [vmem:[%s2581 + $0x1b4] sm:$0xf]
        %v2757 = vld [vmem:[%s2581 + $0x1b8] sm:$0xf]
        %v2758 = vld [vmem:[%s2581 + $0x1bc] sm:$0xf]
        %v2759 = vld [vmem:[%s2581 + $0x1c0] sm:$0xf]
        %v2760 = vld [vmem:[%s2581 + $0x1c4] sm:$0xf]
        %v2761 = vld [vmem:[%s2581 + $0x1c8] sm:$0xf]
        %v2762 = vld [vmem:[%s2581 + $0x1cc] sm:$0xf]
        %v2763 = vld [vmem:[%s2581 + $0x1d0] sm:$0xf]
        %v2764 = vld [vmem:[%s2581 + $0x1d4] sm:$0xf]
        %v2765 = vld [vmem:[%s2581 + $0x1d8] sm:$0xf]
        %v2766 = vld [vmem:[%s2581 + $0x1dc] sm:$0xf]
        %v2767 = vld [vmem:[%s2581 + $0x1e0] sm:$0xf]
        %v2768 = vld [vmem:[%s2581 + $0x1e4] sm:$0xf]
        %v2769 = vld [vmem:[%s2581 + $0x1e8] sm:$0xf]
        %v2770 = vld [vmem:[%s2581 + $0x1ec] sm:$0xf]
        %v2771 = vld [vmem:[%s2581 + $0x1f0] sm:$0xf]
        %v2772 = vld [vmem:[%s2581 + $0x1f4] sm:$0xf]
        %v2773 = vld [vmem:[%s2581 + $0x1f8] sm:$0xf]
        %v2774 = vld [vmem:[%s2581 + $0x1fc] sm:$0xf]
        %v2775 = vld [vmem:[%s2581 + $0x200] sm:$0xf]
        %v2776 = vld [vmem:[%s2581 + $0x204] sm:$0xf]
        %v2777 = vld [vmem:[%s2581 + $0x208] sm:$0xf]
        %v2778 = vld [vmem:[%s2581 + $0x20c] sm:$0xf]
        %v2779 = vld [vmem:[%s2581 + $0x210] sm:$0xf]
        %v2780 = vld [vmem:[%s2581 + $0x214] sm:$0xf]
        %v2781 = vld [vmem:[%s2581 + $0x218] sm:$0xf]
        %v2782 = vld [vmem:[%s2581 + $0x21c] sm:$0xf]
        %v2783 = vld [vmem:[%s2581 + $0x220] sm:$0xf]
        %v2784 = vld [vmem:[%s2581 + $0x224] sm:$0xf]
        %v2785 = vld [vmem:[%s2581 + $0x228] sm:$0xf]
        %v2786 = vld [vmem:[%s2581 + $0x22c] sm:$0xf]
        %v2787 = vld [vmem:[%s2581 + $0x230] sm:$0xf]
        %v2788 = vld [vmem:[%s2581 + $0x234] sm:$0xf]
        %v2789 = vld [vmem:[%s2581 + $0x238] sm:$0xf]
        %v2790 = vld [vmem:[%s2581 + $0x23c] sm:$0xf]
        %v2791 = vld [vmem:[%s2581 + $0x240] sm:$0xf]
        %v2792 = vld [vmem:[%s2581 + $0x244] sm:$0xf]
        %v2793 = vld [vmem:[%s2581 + $0x248] sm:$0xf]
        %v2794 = vld [vmem:[%s2581 + $0x24c] sm:$0xf]
        %v2795 = vld [vmem:[%s2581 + $0x250] sm:$0xf]
        %v2796 = vld [vmem:[%s2581 + $0x254] sm:$0xf]
        %v2797 = vld [vmem:[%s2581 + $0x258] sm:$0xf]
        %v2798 = vld [vmem:[%s2581 + $0x25c] sm:$0xf]
        %v2799 = vld [vmem:[%s2581 + $0x260] sm:$0xf]
        %v2800 = vld [vmem:[%s2581 + $0x264] sm:$0xf]
        %v2801 = vld [vmem:[%s2581 + $0x268] sm:$0xf]
        %v2802 = vld [vmem:[%s2581 + $0x26c] sm:$0xf]
        %v2803 = vld [vmem:[%s2581 + $0x270] sm:$0xf]
        %v2804 = vld [vmem:[%s2581 + $0x274] sm:$0xf]
        %v2805 = vld [vmem:[%s2581 + $0x278] sm:$0xf]
        %v2806 = vld [vmem:[%s2581 + $0x27c] sm:$0xf]
        %v2807 = vld [vmem:[%s2581 + $0x280] sm:$0xf]
        %v2808 = vld [vmem:[%s2581 + $0x284] sm:$0xf]
        %v2809 = vld [vmem:[%s2581 + $0x288] sm:$0xf]
        %v2810 = vld [vmem:[%s2581 + $0x28c] sm:$0xf]
        %v2811 = vld [vmem:[%s2581 + $0x290] sm:$0xf]
        %v2812 = vld [vmem:[%s2581 + $0x294] sm:$0xf]
        %v2813 = vld [vmem:[%s2581 + $0x298] sm:$0xf]
        %v2814 = vld [vmem:[%s2581 + $0x29c] sm:$0xf]
        %v2815 = vld [vmem:[%s2581 + $0x2a0] sm:$0xf]
        %v2816 = vld [vmem:[%s2581 + $0x2a4] sm:$0xf]
        %v2817 = vld [vmem:[%s2581 + $0x2a8] sm:$0xf]
        %v2818 = vld [vmem:[%s2581 + $0x2ac] sm:$0xf]
        %v2819 = vld [vmem:[%s2581 + $0x2b0] sm:$0xf]
        %v2820 = vld [vmem:[%s2581 + $0x2b4] sm:$0xf]
        %v2821 = vld [vmem:[%s2581 + $0x2b8] sm:$0xf]
        %v2822 = vld [vmem:[%s2581 + $0x2bc] sm:$0xf]
        %v2823 = vld [vmem:[%s2581 + $0x2c0] sm:$0xf]
        %v2824 = vld [vmem:[%s2581 + $0x2c4] sm:$0xf]
        %v2825 = vld [vmem:[%s2581 + $0x2c8] sm:$0xf]
        %v2826 = vld [vmem:[%s2581 + $0x2cc] sm:$0xf]
        %v2827 = vld [vmem:[%s2581 + $0x2d0] sm:$0xf]
        %v2828 = vld [vmem:[%s2581 + $0x2d4] sm:$0xf]
        %v2829 = vld [vmem:[%s2581 + $0x2d8] sm:$0xf]
        %v2830 = vld [vmem:[%s2581 + $0x2dc] sm:$0xf]
        %v2831 = vld [vmem:[%s2581 + $0x2e0] sm:$0xf]
        %v2832 = vld [vmem:[%s2581 + $0x2e4] sm:$0xf]
        %v2833 = vld [vmem:[%s2581 + $0x2e8] sm:$0xf]
        %v2834 = vld [vmem:[%s2581 + $0x2ec] sm:$0xf]
        %v2835 = vld [vmem:[%s2581 + $0x2f0] sm:$0xf]
        %v2836 = vld [vmem:[%s2581 + $0x2f4] sm:$0xf]
        %v2837 = vld [vmem:[%s2581 + $0x2f8] sm:$0xf]
        %v2838 = vld [vmem:[%s2581 + $0x2fc] sm:$0xf]
        %v2839 = vld [vmem:[%s2581 + $0x300] sm:$0xf]
        %v2840 = vld [vmem:[%s2581 + $0x304] sm:$0xf]
        %v2841 = vld [vmem:[%s2581 + $0x308] sm:$0xf]
        %v2842 = vld [vmem:[%s2581 + $0x30c] sm:$0xf]
        %v2843 = vld [vmem:[%s2581 + $0x310] sm:$0xf]
        %v2844 = vld [vmem:[%s2581 + $0x314] sm:$0xf]
        %v2845 = vld [vmem:[%s2581 + $0x318] sm:$0xf]
        %v2846 = vld [vmem:[%s2581 + $0x31c] sm:$0xf]
        %v2847 = vld [vmem:[%s2581 + $0x320] sm:$0xf]
        %v2848 = vld [vmem:[%s2581 + $0x324] sm:$0xf]
        %v2849 = vld [vmem:[%s2581 + $0x328] sm:$0xf]
        %v2850 = vld [vmem:[%s2581 + $0x32c] sm:$0xf]
        %v2851 = vld [vmem:[%s2581 + $0x330] sm:$0xf]
        %v2852 = vld [vmem:[%s2581 + $0x334] sm:$0xf]
        %v2853 = vld [vmem:[%s2581 + $0x338] sm:$0xf]
        %v2854 = vld [vmem:[%s2581 + $0x33c] sm:$0xf]
        %v2855 = vld [vmem:[%s2581 + $0x340] sm:$0xf]
        %v2856 = vld [vmem:[%s2581 + $0x344] sm:$0xf]
        %v2857 = vld [vmem:[%s2581 + $0x348] sm:$0xf]
        %v2858 = vld [vmem:[%s2581 + $0x34c] sm:$0xf]
        %v2859 = vld [vmem:[%s2581 + $0x350] sm:$0xf]
        %v2860 = vld [vmem:[%s2581 + $0x354] sm:$0xf]
        %v2861 = vld [vmem:[%s2581 + $0x358] sm:$0xf]
        %v2862 = vld [vmem:[%s2581 + $0x35c] sm:$0xf]
        %v2863 = vld [vmem:[%s2581 + $0x360] sm:$0xf]
        %v2864 = vld [vmem:[%s2581 + $0x364] sm:$0xf]
        %v2865 = vld [vmem:[%s2581 + $0x368] sm:$0xf]
        %v2866 = vld [vmem:[%s2581 + $0x36c] sm:$0xf]
        %v2867 = vld [vmem:[%s2581 + $0x370] sm:$0xf]
        %v2868 = vld [vmem:[%s2581 + $0x374] sm:$0xf]
        %v2869 = vld [vmem:[%s2581 + $0x378] sm:$0xf]
        %v2870 = vld [vmem:[%s2581 + $0x37c] sm:$0xf]
        %v2871 = vld [vmem:[%s2581 + $0x380] sm:$0xf]
        %v2872 = vld [vmem:[%s2581 + $0x384] sm:$0xf]
        %v2873 = vld [vmem:[%s2581 + $0x388] sm:$0xf]
        %v2874 = vld [vmem:[%s2581 + $0x38c] sm:$0xf]
        %v2875 = vld [vmem:[%s2581 + $0x390] sm:$0xf]
        %v2876 = vld [vmem:[%s2581 + $0x394] sm:$0xf]
        %v2877 = vld [vmem:[%s2581 + $0x398] sm:$0xf]
        %v2878 = vld [vmem:[%s2581 + $0x39c] sm:$0xf]
        %v2879 = vld [vmem:[%s2581 + $0x3a0] sm:$0xf]
        %v2880 = vld [vmem:[%s2581 + $0x3a4] sm:$0xf]
        %v2881 = vld [vmem:[%s2581 + $0x3a8] sm:$0xf]
        %v2882 = vld [vmem:[%s2581 + $0x3ac] sm:$0xf]
        %v2883 = vld [vmem:[%s2581 + $0x3b0] sm:$0xf]
        %v2884 = vld [vmem:[%s2581 + $0x3b4] sm:$0xf]
        %v2885 = vld [vmem:[%s2581 + $0x3b8] sm:$0xf]
        %v2886 = vld [vmem:[%s2581 + $0x3bc] sm:$0xf]
        %v2887 = vld [vmem:[%s2581 + $0x3c0] sm:$0xf]
        %v2888 = vld [vmem:[%s2581 + $0x3c4] sm:$0xf]
        %v2889 = vld [vmem:[%s2581 + $0x3c8] sm:$0xf]
        %v2890 = vld [vmem:[%s2581 + $0x3cc] sm:$0xf]
        %v2891 = vld [vmem:[%s2581 + $0x3d0] sm:$0xf]
        %v2892 = vld [vmem:[%s2581 + $0x3d4] sm:$0xf]
        %v2893 = vld [vmem:[%s2581 + $0x3d8] sm:$0xf]
        %v2894 = vld [vmem:[%s2581 + $0x3dc] sm:$0xf]
        %v2895 = vld [vmem:[%s2581 + $0x3e0] sm:$0xf]
        %v2896 = vld [vmem:[%s2581 + $0x3e4] sm:$0xf]
        %v2897 = vld [vmem:[%s2581 + $0x3e8] sm:$0xf]
        %v2898 = vld [vmem:[%s2581 + $0x3ec] sm:$0xf]
        %v2899 = vld [vmem:[%s2581 + $0x3f0] sm:$0xf]
        %v2900 = vld [vmem:[%s2581 + $0x3f4] sm:$0xf]
        %v2901 = vld [vmem:[%s2581 + $0x3f8] sm:$0xf]
        %v2902 = vld [vmem:[%s2581 + $0x3fc] sm:$0xf]
        %v2903 = vld [vmem:[%s2581 + $0x400] sm:$0xf]
        %v2904 = vld [vmem:[%s2581 + $0x404] sm:$0xf]
        %v2905 = vld [vmem:[%s2581 + $0x408] sm:$0xf]
        %v2906 = vld [vmem:[%s2581 + $0x40c] sm:$0xf]
        %v2907 = vld [vmem:[%s2581 + $0x410] sm:$0xf]
        %v2908 = vld [vmem:[%s2581 + $0x414] sm:$0xf]
        %v2909 = vld [vmem:[%s2581 + $0x418] sm:$0xf]
        %v2910 = vld [vmem:[%s2581 + $0x41c] sm:$0xf]
        %v2911 = vld [vmem:[%s2581 + $0x420] sm:$0xf]
        %v2912 = vld [vmem:[%s2581 + $0x424] sm:$0xf]
        %v2913 = vld [vmem:[%s2581 + $0x428] sm:$0xf]
        %v2914 = vld [vmem:[%s2581 + $0x42c] sm:$0xf]
        %v2915 = vld [vmem:[%s2581 + $0x430] sm:$0xf]
        %v2916 = vld [vmem:[%s2581 + $0x434] sm:$0xf]
        %v2917 = vld [vmem:[%s2581 + $0x438] sm:$0xf]
        %v2918 = vld [vmem:[%s2581 + $0x43c] sm:$0xf]
        %v2919 = vld [vmem:[%s2581 + $0x440] sm:$0xf]
        %v2920 = vld [vmem:[%s2581 + $0x444] sm:$0xf]
        %v2921 = vld [vmem:[%s2581 + $0x448] sm:$0xf]
        %v2922 = vld [vmem:[%s2581 + $0x44c] sm:$0xf]
        %v2923 = vld [vmem:[%s2581 + $0x450] sm:$0xf]
        %v2924 = vld [vmem:[%s2581 + $0x454] sm:$0xf]
        %v2925 = vld [vmem:[%s2581 + $0x458] sm:$0xf]
        %v2926 = vld [vmem:[%s2581 + $0x45c] sm:$0xf]
        %v2927 = vld [vmem:[%s2581 + $0x460] sm:$0xf]
        %v2928 = vld [vmem:[%s2581 + $0x464] sm:$0xf]
        %v2929 = vld [vmem:[%s2581 + $0x468] sm:$0xf]
        %v2930 = vld [vmem:[%s2581 + $0x46c] sm:$0xf]
        %v2931 = vld [vmem:[%s2581 + $0x470] sm:$0xf]
        %v2932 = vld [vmem:[%s2581 + $0x474] sm:$0xf]
        %v2933 = vld [vmem:[%s2581 + $0x478] sm:$0xf]
        %v2934 = vld [vmem:[%s2581 + $0x47c] sm:$0xf]
        %v2953 = vunpack.c.l.b16 %v2629
        %v2954 = vunpack.c.h.b16 %v2629
        %v2955 = vunpack.c.l.b16 %v2630
        %v2956 = vunpack.c.h.b16 %v2630
        %v2957 = vunpack.c.l.b16 %v2631
        %v2958 = vunpack.c.h.b16 %v2631
        %v2959 = vunpack.c.l.b16 %v2632
        %v2960 = vunpack.c.h.b16 %v2632
        %v2961 = vunpack.c.l.b16 %v2633
        %v2962 = vunpack.c.h.b16 %v2633
        %v2963 = vunpack.c.l.b16 %v2634
        %v2964 = vunpack.c.h.b16 %v2634
        %v2965 = vunpack.c.l.b16 %v2635
        %v2966 = vunpack.c.h.b16 %v2635
        %v2967 = vunpack.c.l.b16 %v2636
        %v2968 = vunpack.c.h.b16 %v2636
        %v2969 = vunpack.c.l.b16 %v2637
        %v2970 = vunpack.c.h.b16 %v2637
        %v2971 = vunpack.c.l.b16 %v2638
        %v2972 = vunpack.c.h.b16 %v2638
        %v2973 = vunpack.c.l.b16 %v2639
        %v2974 = vunpack.c.h.b16 %v2639
        %v2975 = vunpack.c.l.b16 %v2640
        %v2976 = vunpack.c.h.b16 %v2640
        %v2977 = vunpack.c.l.b16 %v2641
        %v2978 = vunpack.c.h.b16 %v2641
        %v2979 = vunpack.c.l.b16 %v2642
        %v2980 = vunpack.c.h.b16 %v2642
        %v2981 = vunpack.c.l.b16 %v2643
        %v2982 = vunpack.c.h.b16 %v2643
        %v2983 = vunpack.c.l.b16 %v2644
        %v2984 = vunpack.c.h.b16 %v2644
        %v2985 = vunpack.c.l.b16 %v2645
        %v2986 = vunpack.c.h.b16 %v2645
        %v2987 = vunpack.c.l.b16 %v2646
        %v2988 = vunpack.c.h.b16 %v2646
        %v2989 = vpack.c.b16 %v2971, %v2953
        %v2990 = vpack.c.b16 %v2972, %v2954
        %v2991 = vpack.c.b16 %v2973, %v2955
        %v2992 = vpack.c.b16 %v2974, %v2956
        %v2993 = vpack.c.b16 %v2975, %v2957
        %v2994 = vpack.c.b16 %v2976, %v2958
        %v2995 = vpack.c.b16 %v2977, %v2959
        %v2996 = vpack.c.b16 %v2978, %v2960
        %v2997 = vpack.c.b16 %v2979, %v2961
        %v2998 = vpack.c.b16 %v2980, %v2962
        %v2999 = vpack.c.b16 %v2981, %v2963
        %v3000 = vpack.c.b16 %v2982, %v2964
        %v3001 = vpack.c.b16 %v2983, %v2965
        %v3002 = vpack.c.b16 %v2984, %v2966
        %v3003 = vpack.c.b16 %v2985, %v2967
        %v3004 = vpack.c.b16 %v2986, %v2968
        %v3005 = vpack.c.b16 %v2987, %v2969
        %v3006 = vpack.c.b16 %v2988, %v2970
        %v3313 = vunpack.c.l.b16 %v2647
        %v3314 = vunpack.c.l.b16 %v2648
        %v3315 = vunpack.c.l.b16 %v2649
        %v3316 = vunpack.c.l.b16 %v2650
        %v3317 = vunpack.c.l.b16 %v2651
        %v3318 = vunpack.c.l.b16 %v2652
        %v3319 = vunpack.c.l.b16 %v2653
        %v3320 = vunpack.c.l.b16 %v2654
        %v3321 = vunpack.c.l.b16 %v2655
        %v3322 = vunpack.c.l.b16 %v2656
        %v3323 = vunpack.c.l.b16 %v2657
        %v3324 = vunpack.c.l.b16 %v2658
        %v3325 = vunpack.c.l.b16 %v2659
        %v3326 = vunpack.c.l.b16 %v2660
        %v3327 = vunpack.c.l.b16 %v2661
        %v3328 = vunpack.c.l.b16 %v2662
        %v3329 = vunpack.c.l.b16 %v2663
        %v3330 = vunpack.c.l.b16 %v2664
        %v3331 = vunpack.c.l.b16 %v2665
        %v3332 = vunpack.c.l.b16 %v2666
        %v3333 = vunpack.c.l.b16 %v2667
        %v3334 = vunpack.c.l.b16 %v2668
        %v3335 = vunpack.c.l.b16 %v2669
        %v3336 = vunpack.c.l.b16 %v2670
        %v3337 = vunpack.c.l.b16 %v2671
        %v3338 = vunpack.c.l.b16 %v2672
        %v3339 = vunpack.c.l.b16 %v2673
        %v3340 = vunpack.c.l.b16 %v2674
        %v3341 = vunpack.c.l.b16 %v2675
        %v3342 = vunpack.c.l.b16 %v2676
        %v3343 = vunpack.c.l.b16 %v2677
        %v3344 = vunpack.c.l.b16 %v2678
        %v3345 = vunpack.c.l.b16 %v2679
        %v3346 = vunpack.c.l.b16 %v2680
        %v3347 = vunpack.c.l.b16 %v2681
        %v3348 = vunpack.c.l.b16 %v2682
        %v3349 = vunpack.c.l.b16 %v2683
        %v3350 = vunpack.c.l.b16 %v2684
        %v3351 = vunpack.c.l.b16 %v2685
        %v3352 = vunpack.c.l.b16 %v2686
        %v3353 = vunpack.c.l.b16 %v2687
        %v3354 = vunpack.c.l.b16 %v2688
        %v3355 = vunpack.c.l.b16 %v2689
        %v3356 = vunpack.c.l.b16 %v2690
        %v3357 = vunpack.c.l.b16 %v2691
        %v3358 = vunpack.c.l.b16 %v2692
        %v3359 = vunpack.c.l.b16 %v2693
        %v3360 = vunpack.c.l.b16 %v2694
        %v3361 = vunpack.c.l.b16 %v2695
        %v3362 = vunpack.c.l.b16 %v2696
        %v3363 = vunpack.c.l.b16 %v2697
        %v3364 = vunpack.c.l.b16 %v2698
        %v3365 = vunpack.c.l.b16 %v2699
        %v3366 = vunpack.c.l.b16 %v2700
        %v3367 = vunpack.c.l.b16 %v2701
        %v3368 = vunpack.c.l.b16 %v2702
        %v3369 = vunpack.c.l.b16 %v2703
        %v3370 = vunpack.c.l.b16 %v2704
        %v3371 = vunpack.c.l.b16 %v2705
        %v3372 = vunpack.c.l.b16 %v2706
        %v3373 = vunpack.c.l.b16 %v2707
        %v3374 = vunpack.c.l.b16 %v2708
        %v3375 = vunpack.c.l.b16 %v2709
        %v3376 = vunpack.c.l.b16 %v2710
        %v3377 = vunpack.c.l.b16 %v2711
        %v3378 = vunpack.c.l.b16 %v2712
        %v3379 = vunpack.c.l.b16 %v2713
        %v3380 = vunpack.c.l.b16 %v2714
        %v3381 = vunpack.c.l.b16 %v2715
        %v3382 = vunpack.c.l.b16 %v2716
        %v3383 = vunpack.c.l.b16 %v2717
        %v3384 = vunpack.c.l.b16 %v2718
        %v3385 = vunpack.c.l.b16 %v2719
        %v3386 = vunpack.c.l.b16 %v2720
        %v3387 = vunpack.c.l.b16 %v2721
        %v3388 = vunpack.c.l.b16 %v2722
        %v3389 = vunpack.c.l.b16 %v2723
        %v3390 = vunpack.c.l.b16 %v2724
        %v3391 = vunpack.c.l.b16 %v2725
        %v3392 = vunpack.c.l.b16 %v2726
        %v3393 = vunpack.c.l.b16 %v2727
        %v3394 = vunpack.c.l.b16 %v2728
        %v3395 = vunpack.c.l.b16 %v2729
        %v3396 = vunpack.c.l.b16 %v2730
        %v3397 = vunpack.c.l.b16 %v2731
        %v3398 = vunpack.c.l.b16 %v2732
        %v3399 = vunpack.c.l.b16 %v2733
        %v3400 = vunpack.c.l.b16 %v2734
        %v3401 = vunpack.c.l.b16 %v2735
        %v3402 = vunpack.c.l.b16 %v2736
        %v3403 = vunpack.c.l.b16 %v2737
        %v3404 = vunpack.c.l.b16 %v2738
        %v3405 = vunpack.c.l.b16 %v2739
        %v3406 = vunpack.c.l.b16 %v2740
        %v3407 = vunpack.c.l.b16 %v2741
        %v3408 = vunpack.c.l.b16 %v2742
        %v3409 = vunpack.c.l.b16 %v2743
        %v3410 = vunpack.c.l.b16 %v2744
        %v3411 = vunpack.c.l.b16 %v2745
        %v3412 = vunpack.c.l.b16 %v2746
        %v3413 = vunpack.c.l.b16 %v2747
        %v3414 = vunpack.c.l.b16 %v2748
        %v3415 = vunpack.c.l.b16 %v2749
        %v3416 = vunpack.c.l.b16 %v2750
        %v3417 = vunpack.c.l.b16 %v2751
        %v3418 = vunpack.c.l.b16 %v2752
        %v3419 = vunpack.c.l.b16 %v2753
        %v3420 = vunpack.c.l.b16 %v2754
        %v3421 = vunpack.c.l.b16 %v2755
        %v3422 = vunpack.c.l.b16 %v2756
        %v3423 = vunpack.c.l.b16 %v2757
        %v3424 = vunpack.c.l.b16 %v2758
        %v3425 = vunpack.c.l.b16 %v2759
        %v3426 = vunpack.c.l.b16 %v2760
        %v3427 = vunpack.c.l.b16 %v2761
        %v3428 = vunpack.c.l.b16 %v2762
        %v3429 = vunpack.c.l.b16 %v2763
        %v3430 = vunpack.c.l.b16 %v2764
        %v3431 = vunpack.c.l.b16 %v2765
        %v3432 = vunpack.c.l.b16 %v2766
        %v3433 = vunpack.c.l.b16 %v2767
        %v3434 = vunpack.c.l.b16 %v2768
        %v3435 = vunpack.c.l.b16 %v2769
        %v3436 = vunpack.c.l.b16 %v2770
        %v3437 = vunpack.c.l.b16 %v2771
        %v3438 = vunpack.c.l.b16 %v2772
        %v3439 = vunpack.c.l.b16 %v2773
        %v3440 = vunpack.c.l.b16 %v2774
        %v3441 = vunpack.c.l.b16 %v2775
        %v3442 = vunpack.c.l.b16 %v2776
        %v3443 = vunpack.c.l.b16 %v2777
        %v3444 = vunpack.c.l.b16 %v2778
        %v3445 = vunpack.c.l.b16 %v2779
        %v3446 = vunpack.c.l.b16 %v2780
        %v3447 = vunpack.c.l.b16 %v2781
        %v3448 = vunpack.c.l.b16 %v2782
        %v3449 = vunpack.c.l.b16 %v2783
        %v3450 = vunpack.c.l.b16 %v2784
        %v3451 = vunpack.c.l.b16 %v2785
        %v3452 = vunpack.c.l.b16 %v2786
        %v3453 = vunpack.c.l.b16 %v2787
        %v3454 = vunpack.c.l.b16 %v2788
        %v3455 = vunpack.c.l.b16 %v2789
        %v3456 = vunpack.c.l.b16 %v2790
        %v3457 = vunpack.c.l.b16 %v2791
        %v3458 = vunpack.c.l.b16 %v2792
        %v3459 = vunpack.c.l.b16 %v2793
        %v3460 = vunpack.c.l.b16 %v2794
        %v3461 = vunpack.c.l.b16 %v2795
        %v3462 = vunpack.c.l.b16 %v2796
        %v3463 = vunpack.c.l.b16 %v2797
        %v3464 = vunpack.c.l.b16 %v2798
        %v3465 = vunpack.c.l.b16 %v2799
        %v3466 = vunpack.c.l.b16 %v2800
        %v3467 = vunpack.c.l.b16 %v2801
        %v3468 = vunpack.c.l.b16 %v2802
        %v3469 = vunpack.c.l.b16 %v2803
        %v3470 = vunpack.c.l.b16 %v2804
        %v3471 = vunpack.c.l.b16 %v2805
        %v3472 = vunpack.c.l.b16 %v2806
        %v3473 = vunpack.c.l.b16 %v2807
        %v3474 = vunpack.c.l.b16 %v2808
        %v3475 = vunpack.c.l.b16 %v2809
        %v3476 = vunpack.c.l.b16 %v2810
        %v3477 = vunpack.c.l.b16 %v2811
        %v3478 = vunpack.c.l.b16 %v2812
        %v3479 = vunpack.c.l.b16 %v2813
        %v3480 = vunpack.c.l.b16 %v2814
        %v3481 = vunpack.c.l.b16 %v2815
        %v3482 = vunpack.c.l.b16 %v2816
        %v3483 = vunpack.c.l.b16 %v2817
        %v3484 = vunpack.c.l.b16 %v2818
        %v3485 = vunpack.c.l.b16 %v2819
        %v3486 = vunpack.c.l.b16 %v2820
        %v3487 = vunpack.c.l.b16 %v2821
        %v3488 = vunpack.c.l.b16 %v2822
        %v3489 = vunpack.c.l.b16 %v2823
        %v3490 = vunpack.c.l.b16 %v2824
        %v3491 = vunpack.c.l.b16 %v2825
        %v3492 = vunpack.c.l.b16 %v2826
        %v3493 = vunpack.c.l.b16 %v2827
        %v3494 = vunpack.c.l.b16 %v2828
        %v3495 = vunpack.c.l.b16 %v2829
        %v3496 = vunpack.c.l.b16 %v2830
        %v3497 = vunpack.c.l.b16 %v2831
        %v3498 = vunpack.c.l.b16 %v2832
        %v3499 = vunpack.c.l.b16 %v2833
        %v3500 = vunpack.c.l.b16 %v2834
        %v3501 = vunpack.c.l.b16 %v2835
        %v3502 = vunpack.c.l.b16 %v2836
        %v3503 = vunpack.c.l.b16 %v2837
        %v3504 = vunpack.c.l.b16 %v2838
        %v3505 = vunpack.c.l.b16 %v2839
        %v3506 = vunpack.c.l.b16 %v2840
        %v3507 = vunpack.c.l.b16 %v2841
        %v3508 = vunpack.c.l.b16 %v2842
        %v3509 = vunpack.c.l.b16 %v2843
        %v3510 = vunpack.c.l.b16 %v2844
        %v3511 = vunpack.c.l.b16 %v2845
        %v3512 = vunpack.c.l.b16 %v2846
        %v3513 = vunpack.c.l.b16 %v2847
        %v3514 = vunpack.c.l.b16 %v2848
        %v3515 = vunpack.c.l.b16 %v2849
        %v3516 = vunpack.c.l.b16 %v2850
        %v3517 = vunpack.c.l.b16 %v2851
        %v3518 = vunpack.c.l.b16 %v2852
        %v3519 = vunpack.c.l.b16 %v2853
        %v3520 = vunpack.c.l.b16 %v2854
        %v3521 = vunpack.c.l.b16 %v2855
        %v3522 = vunpack.c.l.b16 %v2856
        %v3523 = vunpack.c.l.b16 %v2857
        %v3524 = vunpack.c.l.b16 %v2858
        %v3525 = vunpack.c.l.b16 %v2859
        %v3526 = vunpack.c.l.b16 %v2860
        %v3527 = vunpack.c.l.b16 %v2861
        %v3528 = vunpack.c.l.b16 %v2862
        %v3529 = vunpack.c.l.b16 %v2863
        %v3530 = vunpack.c.l.b16 %v2864
        %v3531 = vunpack.c.l.b16 %v2865
        %v3532 = vunpack.c.l.b16 %v2866
        %v3533 = vunpack.c.l.b16 %v2867
        %v3534 = vunpack.c.l.b16 %v2868
        %v3535 = vunpack.c.l.b16 %v2869
        %v3536 = vunpack.c.l.b16 %v2870
        %v3537 = vunpack.c.l.b16 %v2871
        %v3538 = vunpack.c.l.b16 %v2872
        %v3539 = vunpack.c.l.b16 %v2873
        %v3540 = vunpack.c.l.b16 %v2874
        %v3541 = vunpack.c.l.b16 %v2875
        %v3542 = vunpack.c.l.b16 %v2876
        %v3543 = vunpack.c.l.b16 %v2877
        %v3544 = vunpack.c.l.b16 %v2878
        %v3545 = vunpack.c.l.b16 %v2879
        %v3546 = vunpack.c.l.b16 %v2880
        %v3547 = vunpack.c.l.b16 %v2881
        %v3548 = vunpack.c.l.b16 %v2882
        %v3549 = vunpack.c.l.b16 %v2883
        %v3550 = vunpack.c.l.b16 %v2884
        %v3551 = vunpack.c.l.b16 %v2885
        %v3552 = vunpack.c.l.b16 %v2886
        %v3553 = vunpack.c.l.b16 %v2887
        %v3554 = vunpack.c.l.b16 %v2888
        %v3555 = vunpack.c.l.b16 %v2889
        %v3556 = vunpack.c.l.b16 %v2890
        %v3557 = vunpack.c.l.b16 %v2891
        %v3558 = vunpack.c.l.b16 %v2892
        %v3559 = vunpack.c.l.b16 %v2893
        %v3560 = vunpack.c.l.b16 %v2894
        %v3561 = vunpack.c.l.b16 %v2895
        %v3562 = vunpack.c.l.b16 %v2896
        %v3563 = vunpack.c.l.b16 %v2897
        %v3564 = vunpack.c.l.b16 %v2898
        %v3565 = vunpack.c.l.b16 %v2899
        %v3566 = vunpack.c.l.b16 %v2900
        %v3567 = vunpack.c.l.b16 %v2901
        %v3568 = vunpack.c.l.b16 %v2902
        %v3569 = vunpack.c.l.b16 %v2903
        %v3570 = vunpack.c.l.b16 %v2904
        %v3571 = vunpack.c.l.b16 %v2905
        %v3572 = vunpack.c.l.b16 %v2906
        %v3573 = vunpack.c.l.b16 %v2907
        %v3574 = vunpack.c.l.b16 %v2908
        %v3575 = vunpack.c.l.b16 %v2909
        %v3576 = vunpack.c.l.b16 %v2910
        %v3577 = vunpack.c.l.b16 %v2911
        %v3578 = vunpack.c.l.b16 %v2912
        %v3579 = vunpack.c.l.b16 %v2913
        %v3580 = vunpack.c.l.b16 %v2914
        %v3581 = vunpack.c.l.b16 %v2915
        %v3582 = vunpack.c.l.b16 %v2916
        %v3583 = vunpack.c.l.b16 %v2917
        %v3584 = vunpack.c.l.b16 %v2918
        %v3585 = vunpack.c.l.b16 %v2919
        %v3586 = vunpack.c.l.b16 %v2920
        %v3587 = vunpack.c.l.b16 %v2921
        %v3588 = vunpack.c.l.b16 %v2922
        %v3589 = vunpack.c.l.b16 %v2923
        %v3590 = vunpack.c.l.b16 %v2924
        %v3591 = vunpack.c.l.b16 %v2925
        %v3592 = vunpack.c.l.b16 %v2926
        %v3593 = vunpack.c.l.b16 %v2927
        %v3594 = vunpack.c.l.b16 %v2928
        %v3595 = vunpack.c.l.b16 %v2929
        %v3596 = vunpack.c.l.b16 %v2930
        %v3597 = vunpack.c.l.b16 %v2931
        %v3598 = vunpack.c.l.b16 %v2932
        %v3599 = vunpack.c.l.b16 %v2933
        %v3600 = vunpack.c.l.b16 %v2934
        %v3601 = vpack.c.b16 %v3314, %v3313
        %v3602 = vpack.c.b16 %v3316, %v3315
        %v3603 = vpack.c.b16 %v3318, %v3317
        %v3604 = vpack.c.b16 %v3320, %v3319
        %v3605 = vpack.c.b16 %v3322, %v3321
        %v3606 = vpack.c.b16 %v3324, %v3323
        %v3607 = vpack.c.b16 %v3326, %v3325
        %v3608 = vpack.c.b16 %v3328, %v3327
        %v3609 = vpack.c.b16 %v3330, %v3329
        %v3610 = vpack.c.b16 %v3332, %v3331
        %v3611 = vpack.c.b16 %v3334, %v3333
        %v3612 = vpack.c.b16 %v3336, %v3335
        %v3613 = vpack.c.b16 %v3338, %v3337
        %v3614 = vpack.c.b16 %v3340, %v3339
        %v3615 = vpack.c.b16 %v3342, %v3341
        %v3616 = vpack.c.b16 %v3344, %v3343
        %v3617 = vpack.c.b16 %v3346, %v3345
        %v3618 = vpack.c.b16 %v3348, %v3347
        %v3619 = vpack.c.b16 %v3350, %v3349
        %v3620 = vpack.c.b16 %v3352, %v3351
        %v3621 = vpack.c.b16 %v3354, %v3353
        %v3622 = vpack.c.b16 %v3356, %v3355
        %v3623 = vpack.c.b16 %v3358, %v3357
        %v3624 = vpack.c.b16 %v3360, %v3359
        %v3625 = vpack.c.b16 %v3362, %v3361
        %v3626 = vpack.c.b16 %v3364, %v3363
        %v3627 = vpack.c.b16 %v3366, %v3365
        %v3628 = vpack.c.b16 %v3368, %v3367
        %v3629 = vpack.c.b16 %v3370, %v3369
        %v3630 = vpack.c.b16 %v3372, %v3371
        %v3631 = vpack.c.b16 %v3374, %v3373
        %v3632 = vpack.c.b16 %v3376, %v3375
        %v3633 = vpack.c.b16 %v3378, %v3377
        %v3634 = vpack.c.b16 %v3380, %v3379
        %v3635 = vpack.c.b16 %v3382, %v3381
        %v3636 = vpack.c.b16 %v3384, %v3383
        %v3637 = vpack.c.b16 %v3386, %v3385
        %v3638 = vpack.c.b16 %v3388, %v3387
        %v3639 = vpack.c.b16 %v3390, %v3389
        %v3640 = vpack.c.b16 %v3392, %v3391
        %v3641 = vpack.c.b16 %v3394, %v3393
        %v3642 = vpack.c.b16 %v3396, %v3395
        %v3643 = vpack.c.b16 %v3398, %v3397
        %v3644 = vpack.c.b16 %v3400, %v3399
        %v3645 = vpack.c.b16 %v3402, %v3401
        %v3646 = vpack.c.b16 %v3404, %v3403
        %v3647 = vpack.c.b16 %v3406, %v3405
        %v3648 = vpack.c.b16 %v3408, %v3407
        %v3649 = vpack.c.b16 %v3410, %v3409
        %v3650 = vpack.c.b16 %v3412, %v3411
        %v3651 = vpack.c.b16 %v3414, %v3413
        %v3652 = vpack.c.b16 %v3416, %v3415
        %v3653 = vpack.c.b16 %v3418, %v3417
        %v3654 = vpack.c.b16 %v3420, %v3419
        %v3655 = vpack.c.b16 %v3422, %v3421
        %v3656 = vpack.c.b16 %v3424, %v3423
        %v3657 = vpack.c.b16 %v3426, %v3425
        %v3658 = vpack.c.b16 %v3428, %v3427
        %v3659 = vpack.c.b16 %v3430, %v3429
        %v3660 = vpack.c.b16 %v3432, %v3431
        %v3661 = vpack.c.b16 %v3434, %v3433
        %v3662 = vpack.c.b16 %v3436, %v3435
        %v3663 = vpack.c.b16 %v3438, %v3437
        %v3664 = vpack.c.b16 %v3440, %v3439
        %v3665 = vpack.c.b16 %v3442, %v3441
        %v3666 = vpack.c.b16 %v3444, %v3443
        %v3667 = vpack.c.b16 %v3446, %v3445
        %v3668 = vpack.c.b16 %v3448, %v3447
        %v3669 = vpack.c.b16 %v3450, %v3449
        %v3670 = vpack.c.b16 %v3452, %v3451
        %v3671 = vpack.c.b16 %v3454, %v3453
        %v3672 = vpack.c.b16 %v3456, %v3455
        %v3673 = vpack.c.b16 %v3458, %v3457
        %v3674 = vpack.c.b16 %v3460, %v3459
        %v3675 = vpack.c.b16 %v3462, %v3461
        %v3676 = vpack.c.b16 %v3464, %v3463
        %v3677 = vpack.c.b16 %v3466, %v3465
        %v3678 = vpack.c.b16 %v3468, %v3467
        %v3679 = vpack.c.b16 %v3470, %v3469
        %v3680 = vpack.c.b16 %v3472, %v3471
        %v3681 = vpack.c.b16 %v3474, %v3473
        %v3682 = vpack.c.b16 %v3476, %v3475
        %v3683 = vpack.c.b16 %v3478, %v3477
        %v3684 = vpack.c.b16 %v3480, %v3479
        %v3685 = vpack.c.b16 %v3482, %v3481
        %v3686 = vpack.c.b16 %v3484, %v3483
        %v3687 = vpack.c.b16 %v3486, %v3485
        %v3688 = vpack.c.b16 %v3488, %v3487
        %v3689 = vpack.c.b16 %v3490, %v3489
        %v3690 = vpack.c.b16 %v3492, %v3491
        %v3691 = vpack.c.b16 %v3494, %v3493
        %v3692 = vpack.c.b16 %v3496, %v3495
        %v3693 = vpack.c.b16 %v3498, %v3497
        %v3694 = vpack.c.b16 %v3500, %v3499
        %v3695 = vpack.c.b16 %v3502, %v3501
        %v3696 = vpack.c.b16 %v3504, %v3503
        %v3697 = vpack.c.b16 %v3506, %v3505
        %v3698 = vpack.c.b16 %v3508, %v3507
        %v3699 = vpack.c.b16 %v3510, %v3509
        %v3700 = vpack.c.b16 %v3512, %v3511
        %v3701 = vpack.c.b16 %v3514, %v3513
        %v3702 = vpack.c.b16 %v3516, %v3515
        %v3703 = vpack.c.b16 %v3518, %v3517
        %v3704 = vpack.c.b16 %v3520, %v3519
        %v3705 = vpack.c.b16 %v3522, %v3521
        %v3706 = vpack.c.b16 %v3524, %v3523
        %v3707 = vpack.c.b16 %v3526, %v3525
        %v3708 = vpack.c.b16 %v3528, %v3527
        %v3709 = vpack.c.b16 %v3530, %v3529
        %v3710 = vpack.c.b16 %v3532, %v3531
        %v3711 = vpack.c.b16 %v3534, %v3533
        %v3712 = vpack.c.b16 %v3536, %v3535
        %v3713 = vpack.c.b16 %v3538, %v3537
        %v3714 = vpack.c.b16 %v3540, %v3539
        %v3715 = vpack.c.b16 %v3542, %v3541
        %v3716 = vpack.c.b16 %v3544, %v3543
        %v3717 = vpack.c.b16 %v3546, %v3545
        %v3718 = vpack.c.b16 %v3548, %v3547
        %v3719 = vpack.c.b16 %v3550, %v3549
        %v3720 = vpack.c.b16 %v3552, %v3551
        %v3721 = vpack.c.b16 %v3554, %v3553
        %v3722 = vpack.c.b16 %v3556, %v3555
        %v3723 = vpack.c.b16 %v3558, %v3557
        %v3724 = vpack.c.b16 %v3560, %v3559
        %v3725 = vpack.c.b16 %v3562, %v3561
        %v3726 = vpack.c.b16 %v3564, %v3563
        %v3727 = vpack.c.b16 %v3566, %v3565
        %v3728 = vpack.c.b16 %v3568, %v3567
        %v3729 = vpack.c.b16 %v3570, %v3569
        %v3730 = vpack.c.b16 %v3572, %v3571
        %v3731 = vpack.c.b16 %v3574, %v3573
        %v3732 = vpack.c.b16 %v3576, %v3575
        %v3733 = vpack.c.b16 %v3578, %v3577
        %v3734 = vpack.c.b16 %v3580, %v3579
        %v3735 = vpack.c.b16 %v3582, %v3581
        %v3736 = vpack.c.b16 %v3584, %v3583
        %v3737 = vpack.c.b16 %v3586, %v3585
        %v3738 = vpack.c.b16 %v3588, %v3587
        %v3739 = vpack.c.b16 %v3590, %v3589
        %v3740 = vpack.c.b16 %v3592, %v3591
        %v3741 = vpack.c.b16 %v3594, %v3593
        %v3742 = vpack.c.b16 %v3596, %v3595
        %v3743 = vpack.c.b16 %v3598, %v3597
        %v3744 = vpack.c.b16 %v3600, %v3599
        %3889 = vmatpush.bf16.msra.mxu0 %v3608
        %3890 = vmatpush.bf16.msra.mxu0 %v3607
        %3891 = vmatpush.bf16.msra.mxu0 %v3606
        %3892 = vmatpush.bf16.msra.mxu0 %v3605
        %3893 = vmatpush.bf16.msra.mxu0 %v3604
        %3894 = vmatpush.bf16.msra.mxu0 %v3603
        %3895 = vmatpush.bf16.msra.mxu0 %v3602
        %3896 = vmatpush.bf16.msra.mxu0 %v3601
        %3897 = vmatmul.bf16.gmra.mxu0 %v2989
        %v3898 = vpop.f32.mrf.mxu0
        %v3899 = vadd.f32 0.0, %v3898
        %v3900 = vpop.f32.mrf.mxu0
        %v3901 = vadd.f32 0.0, %v3900
        %3902 = vdwg.mxu0
        %3903 = vmatpush.bf16.msra.mxu0 %v3616
        %3904 = vmatpush.bf16.msra.mxu0 %v3615
        %3905 = vmatpush.bf16.msra.mxu0 %v3614
        %3906 = vmatpush.bf16.msra.mxu0 %v3613
        %3907 = vmatpush.bf16.msra.mxu0 %v3612
        %3908 = vmatpush.bf16.msra.mxu0 %v3611
        %3909 = vmatpush.bf16.msra.mxu0 %v3610
        %3910 = vmatpush.bf16.msra.mxu0 %v3609
        %3911 = vmatmul.bf16.gmra.mxu0 %v2990
        %v3912 = vpop.f32.mrf.mxu0
        %v3913 = vadd.f32 %v3899, %v3912
        %v3914 = vpop.f32.mrf.mxu0
        %v3915 = vadd.f32 %v3901, %v3914
        %3916 = vdwg.mxu0
        %3917 = vmatpush.bf16.msra.mxu0 %v3624
        %3918 = vmatpush.bf16.msra.mxu0 %v3623
        %3919 = vmatpush.bf16.msra.mxu0 %v3622
        %3920 = vmatpush.bf16.msra.mxu0 %v3621
        %3921 = vmatpush.bf16.msra.mxu0 %v3620
        %3922 = vmatpush.bf16.msra.mxu0 %v3619
        %3923 = vmatpush.bf16.msra.mxu0 %v3618
        %3924 = vmatpush.bf16.msra.mxu0 %v3617
        %3925 = vmatmul.bf16.gmra.mxu0 %v2991
        %v3926 = vpop.f32.mrf.mxu0
        %v3927 = vadd.f32 %v3913, %v3926
        %v3928 = vpop.f32.mrf.mxu0
        %v3929 = vadd.f32 %v3915, %v3928
        %3930 = vdwg.mxu0
        %3931 = vmatpush.bf16.msra.mxu0 %v3632
        %3932 = vmatpush.bf16.msra.mxu0 %v3631
        %3933 = vmatpush.bf16.msra.mxu0 %v3630
        %3934 = vmatpush.bf16.msra.mxu0 %v3629
        %3935 = vmatpush.bf16.msra.mxu0 %v3628
        %3936 = vmatpush.bf16.msra.mxu0 %v3627
        %3937 = vmatpush.bf16.msra.mxu0 %v3626
        %3938 = vmatpush.bf16.msra.mxu0 %v3625
        %3939 = vmatmul.bf16.gmra.mxu0 %v2992
        %v3940 = vpop.f32.mrf.mxu0
        %v3941 = vadd.f32 %v3927, %v3940
        %v3942 = vpop.f32.mrf.mxu0
        %v3943 = vadd.f32 %v3929, %v3942
        %3944 = vdwg.mxu0
        %3945 = vmatpush.bf16.msra.mxu0 %v3640
        %3946 = vmatpush.bf16.msra.mxu0 %v3639
        %3947 = vmatpush.bf16.msra.mxu0 %v3638
        %3948 = vmatpush.bf16.msra.mxu0 %v3637
        %3949 = vmatpush.bf16.msra.mxu0 %v3636
        %3950 = vmatpush.bf16.msra.mxu0 %v3635
        %3951 = vmatpush.bf16.msra.mxu0 %v3634
        %3952 = vmatpush.bf16.msra.mxu0 %v3633
        %3953 = vmatmul.bf16.gmra.mxu0 %v2993
        %v3954 = vpop.f32.mrf.mxu0
        %v3955 = vadd.f32 %v3941, %v3954
        %v3956 = vpop.f32.mrf.mxu0
        %v3957 = vadd.f32 %v3943, %v3956
        %3958 = vdwg.mxu0
        %3959 = vmatpush.bf16.msra.mxu0 %v3648
        %3960 = vmatpush.bf16.msra.mxu0 %v3647
        %3961 = vmatpush.bf16.msra.mxu0 %v3646
        %3962 = vmatpush.bf16.msra.mxu0 %v3645
        %3963 = vmatpush.bf16.msra.mxu0 %v3644
        %3964 = vmatpush.bf16.msra.mxu0 %v3643
        %3965 = vmatpush.bf16.msra.mxu0 %v3642
        %3966 = vmatpush.bf16.msra.mxu0 %v3641
        %3967 = vmatmul.bf16.gmra.mxu0 %v2994
        %v3968 = vpop.f32.mrf.mxu0
        %v3969 = vadd.f32 %v3955, %v3968
        %v3970 = vpop.f32.mrf.mxu0
        %v3971 = vadd.f32 %v3957, %v3970
        %3972 = vdwg.mxu0
        %3973 = vmatpush.bf16.msra.mxu0 %v3656
        %3974 = vmatpush.bf16.msra.mxu0 %v3655
        %3975 = vmatpush.bf16.msra.mxu0 %v3654
        %3976 = vmatpush.bf16.msra.mxu0 %v3653
        %3977 = vmatpush.bf16.msra.mxu0 %v3652
        %3978 = vmatpush.bf16.msra.mxu0 %v3651
        %3979 = vmatpush.bf16.msra.mxu0 %v3650
        %3980 = vmatpush.bf16.msra.mxu0 %v3649
        %3981 = vmatmul.bf16.gmra.mxu0 %v2995
        %v3982 = vpop.f32.mrf.mxu0
        %v3983 = vadd.f32 %v3969, %v3982
        %v3984 = vpop.f32.mrf.mxu0
        %v3985 = vadd.f32 %v3971, %v3984
        %3986 = vdwg.mxu0
        %3987 = vmatpush.bf16.msra.mxu0 %v3664
        %3988 = vmatpush.bf16.msra.mxu0 %v3663
        %3989 = vmatpush.bf16.msra.mxu0 %v3662
        %3990 = vmatpush.bf16.msra.mxu0 %v3661
        %3991 = vmatpush.bf16.msra.mxu0 %v3660
        %3992 = vmatpush.bf16.msra.mxu0 %v3659
        %3993 = vmatpush.bf16.msra.mxu0 %v3658
        %3994 = vmatpush.bf16.msra.mxu0 %v3657
        %3995 = vmatmul.bf16.gmra.mxu0 %v2996
        %v3996 = vpop.f32.mrf.mxu0
        %v3997 = vadd.f32 %v3983, %v3996
        %v3998 = vpop.f32.mrf.mxu0
        %v3999 = vadd.f32 %v3985, %v3998
        %4000 = vdwg.mxu0
        %4001 = vmatpush.bf16.msra.mxu0 %v3672
        %4002 = vmatpush.bf16.msra.mxu0 %v3671
        %4003 = vmatpush.bf16.msra.mxu0 %v3670
        %4004 = vmatpush.bf16.msra.mxu0 %v3669
        %4005 = vmatpush.bf16.msra.mxu0 %v3668
        %4006 = vmatpush.bf16.msra.mxu0 %v3667
        %4007 = vmatpush.bf16.msra.mxu0 %v3666
        %4008 = vmatpush.bf16.msra.mxu0 %v3665
        %4009 = vmatmul.bf16.gmra.mxu0 %v2997
        %v4010 = vpop.f32.mrf.mxu0
        %v4011 = vadd.f32 %v3997, %v4010
        %v4012 = vpop.f32.mrf.mxu0
        %v4013 = vadd.f32 %v3999, %v4012
        %4014 = vdwg.mxu0
        %4015 = vmatpush.bf16.msra.mxu0 %v3680
        %4016 = vmatpush.bf16.msra.mxu0 %v3679
        %4017 = vmatpush.bf16.msra.mxu0 %v3678
        %4018 = vmatpush.bf16.msra.mxu0 %v3677
        %4019 = vmatpush.bf16.msra.mxu0 %v3676
        %4020 = vmatpush.bf16.msra.mxu0 %v3675
        %4021 = vmatpush.bf16.msra.mxu0 %v3674
        %4022 = vmatpush.bf16.msra.mxu0 %v3673
        %4023 = vmatmul.bf16.gmra.mxu0 %v2998
        %v4024 = vpop.f32.mrf.mxu0
        %v4025 = vadd.f32 %v4011, %v4024
        %v4026 = vpop.f32.mrf.mxu0
        %v4027 = vadd.f32 %v4013, %v4026
        %4028 = vdwg.mxu0
        %4029 = vmatpush.bf16.msra.mxu0 %v3688
        %4030 = vmatpush.bf16.msra.mxu0 %v3687
        %4031 = vmatpush.bf16.msra.mxu0 %v3686
        %4032 = vmatpush.bf16.msra.mxu0 %v3685
        %4033 = vmatpush.bf16.msra.mxu0 %v3684
        %4034 = vmatpush.bf16.msra.mxu0 %v3683
        %4035 = vmatpush.bf16.msra.mxu0 %v3682
        %4036 = vmatpush.bf16.msra.mxu0 %v3681
        %4037 = vmatmul.bf16.gmra.mxu0 %v2999
        %v4038 = vpop.f32.mrf.mxu0
        %v4039 = vadd.f32 %v4025, %v4038
        %v4040 = vpop.f32.mrf.mxu0
        %v4041 = vadd.f32 %v4027, %v4040
        %4042 = vdwg.mxu0
        %4043 = vmatpush.bf16.msra.mxu0 %v3696
        %4044 = vmatpush.bf16.msra.mxu0 %v3695
        %4045 = vmatpush.bf16.msra.mxu0 %v3694
        %4046 = vmatpush.bf16.msra.mxu0 %v3693
        %4047 = vmatpush.bf16.msra.mxu0 %v3692
        %4048 = vmatpush.bf16.msra.mxu0 %v3691
        %4049 = vmatpush.bf16.msra.mxu0 %v3690
        %4050 = vmatpush.bf16.msra.mxu0 %v3689
        %4051 = vmatmul.bf16.gmra.mxu0 %v3000
        %v4052 = vpop.f32.mrf.mxu0
        %v4053 = vadd.f32 %v4039, %v4052
        %v4054 = vpop.f32.mrf.mxu0
        %v4055 = vadd.f32 %v4041, %v4054
        %4056 = vdwg.mxu0
        %4057 = vmatpush.bf16.msra.mxu0 %v3704
        %4058 = vmatpush.bf16.msra.mxu0 %v3703
        %4059 = vmatpush.bf16.msra.mxu0 %v3702
        %4060 = vmatpush.bf16.msra.mxu0 %v3701
        %4061 = vmatpush.bf16.msra.mxu0 %v3700
        %4062 = vmatpush.bf16.msra.mxu0 %v3699
        %4063 = vmatpush.bf16.msra.mxu0 %v3698
        %4064 = vmatpush.bf16.msra.mxu0 %v3697
        %4065 = vmatmul.bf16.gmra.mxu0 %v3001
        %v4066 = vpop.f32.mrf.mxu0
        %v4067 = vadd.f32 %v4053, %v4066
        %v4068 = vpop.f32.mrf.mxu0
        %v4069 = vadd.f32 %v4055, %v4068
        %4070 = vdwg.mxu0
        %4071 = vmatpush.bf16.msra.mxu0 %v3712
        %4072 = vmatpush.bf16.msra.mxu0 %v3711
        %4073 = vmatpush.bf16.msra.mxu0 %v3710
        %4074 = vmatpush.bf16.msra.mxu0 %v3709
        %4075 = vmatpush.bf16.msra.mxu0 %v3708
        %4076 = vmatpush.bf16.msra.mxu0 %v3707
        %4077 = vmatpush.bf16.msra.mxu0 %v3706
        %4078 = vmatpush.bf16.msra.mxu0 %v3705
        %4079 = vmatmul.bf16.gmra.mxu0 %v3002
        %v4080 = vpop.f32.mrf.mxu0
        %v4081 = vadd.f32 %v4067, %v4080
        %v4082 = vpop.f32.mrf.mxu0
        %v4083 = vadd.f32 %v4069, %v4082
        %4084 = vdwg.mxu0
        %4085 = vmatpush.bf16.msra.mxu0 %v3720
        %4086 = vmatpush.bf16.msra.mxu0 %v3719
        %4087 = vmatpush.bf16.msra.mxu0 %v3718
        %4088 = vmatpush.bf16.msra.mxu0 %v3717
        %4089 = vmatpush.bf16.msra.mxu0 %v3716
        %4090 = vmatpush.bf16.msra.mxu0 %v3715
        %4091 = vmatpush.bf16.msra.mxu0 %v3714
        %4092 = vmatpush.bf16.msra.mxu0 %v3713
        %4093 = vmatmul.bf16.gmra.mxu0 %v3003
        %v4094 = vpop.f32.mrf.mxu0
        %v4095 = vadd.f32 %v4081, %v4094
        %v4096 = vpop.f32.mrf.mxu0
        %v4097 = vadd.f32 %v4083, %v4096
        %4098 = vdwg.mxu0
        %4099 = vmatpush.bf16.msra.mxu0 %v3728
        %4100 = vmatpush.bf16.msra.mxu0 %v3727
        %4101 = vmatpush.bf16.msra.mxu0 %v3726
        %4102 = vmatpush.bf16.msra.mxu0 %v3725
        %4103 = vmatpush.bf16.msra.mxu0 %v3724
        %4104 = vmatpush.bf16.msra.mxu0 %v3723
        %4105 = vmatpush.bf16.msra.mxu0 %v3722
        %4106 = vmatpush.bf16.msra.mxu0 %v3721
        %4107 = vmatmul.bf16.gmra.mxu0 %v3004
        %v4108 = vpop.f32.mrf.mxu0
        %v4109 = vadd.f32 %v4095, %v4108
        %v4110 = vpop.f32.mrf.mxu0
        %v4111 = vadd.f32 %v4097, %v4110
        %4112 = vdwg.mxu0
        %4113 = vmatpush.bf16.msra.mxu0 %v3736
        %4114 = vmatpush.bf16.msra.mxu0 %v3735
        %4115 = vmatpush.bf16.msra.mxu0 %v3734
        %4116 = vmatpush.bf16.msra.mxu0 %v3733
        %4117 = vmatpush.bf16.msra.mxu0 %v3732
        %4118 = vmatpush.bf16.msra.mxu0 %v3731
        %4119 = vmatpush.bf16.msra.mxu0 %v3730
        %4120 = vmatpush.bf16.msra.mxu0 %v3729
        %4121 = vmatmul.bf16.gmra.mxu0 %v3005
        %v4122 = vpop.f32.mrf.mxu0
        %v4123 = vadd.f32 %v4109, %v4122
        %v4124 = vpop.f32.mrf.mxu0
        %v4125 = vadd.f32 %v4111, %v4124
        %4126 = vdwg.mxu0
        %4127 = vmatpush.bf16.msra.mxu0 %v3744
        %4128 = vmatpush.bf16.msra.mxu0 %v3743
        %4129 = vmatpush.bf16.msra.mxu0 %v3742
        %4130 = vmatpush.bf16.msra.mxu0 %v3741
        %4131 = vmatpush.bf16.msra.mxu0 %v3740
        %4132 = vmatpush.bf16.msra.mxu0 %v3739
        %4133 = vmatpush.bf16.msra.mxu0 %v3738
        %4134 = vmatpush.bf16.msra.mxu0 %v3737
        %4135 = vmatmul.bf16.gmra.mxu0 %v3006
        %v4136 = vpop.f32.mrf.mxu0
        %v4137 = vadd.f32 %v4123, %v4136
        %v4138 = vpop.f32.mrf.mxu0
        %v4139 = vadd.f32 %v4125, %v4138
        %4140 = vdwg.mxu0
        %v4141 = vld [vmem:[%s2624] sm:$0x1]
        %v4143 = vperm.slane %v4141, 0
        %v4145 = vmul.f32 %v4137, %v4143
        %v4146 = vmul.f32 %v4139, %v4143
        %v4147 = vld [vmem:[%s2627] sm:$0x1]
        %v4149 = vperm.slane %v4147, 0
        %v4151 = vadd.f32 %v4145, %v4149
        %v4152 = vadd.f32 %v4146, %v4149
        %v4153 = vmax.f32 %v4151, 0.0
        %v4154 = vmax.f32 %v4152, 0.0
        %v4155 = vpack.c.bf16 %v4153, %v4153
        %v4156 = vpack.c.bf16 %v4154, %v4154
        %4157 = vst [vmem:[%s2614] sm:$0xf] %v4155
        %4158 = vst [vmem:[%s2614 + $0x4] sm:$0xf] %v4156
        %s4159 = sand.u32 %s141, 1
        %s4160 = sand.u32 %s141, 1
        %s4161 = smul.addr %s4160, 8
        %s4162 = scalar_lea.vmem [#allocation3], %s4161
        // Predicated region
        $region89: #{embedding_layer_forward.8} parent=83 // pred_check
          %p4163 = pneg %p151
        $region90: #{embedding_layer_forward.8} parent=83 // pred_check_branch
          %4165 = sbr.rel (%p4163) target = $region92
        $region91: #{embedding_layer_forward.8} parent=83 // pred_region
          %s4166 = smul.u32 2, %s19
          %s4167 = smul.addr %s4166, 3
          %s4168 = sadd.s32 %s20, %s4167
          %s4169 = smul.addr %s4168, 4
          %s4170 = scalar_lea.vmem %s4, %s4169
          // Predicated region
          $region93: #{embedding_layer_forward.8} parent=91 // pred_check
            _
          $region94: #{embedding_layer_forward.8} parent=91 // pred_check_branch
            %4172 = sbr.rel (0) target = $region96
          $region95: #{embedding_layer_forward.8} parent=91 // pred_region
            // Predicated region
            $region97: #{embedding_layer_forward.8} parent=95 // pred_check
              _
            $region98: #{embedding_layer_forward.8} parent=95 // pred_check_branch
              %4174 = sbr.rel target = $region100
            $region99: #{embedding_layer_forward.8} parent=95 // pred_region
              // Predicated region
              $region112: #{embedding_layer_forward.8} parent=99 // pred_check
                _
              $region113: #{embedding_layer_forward.8} parent=99 // pred_check_branch
                %4192 = sbr.rel (0) target = $region115
              $region114: #{embedding_layer_forward.8} parent=99 // pred_region
                loop: start=0, step=1, limit=1
                $region116: #{embedding_layer_forward.8} parent=114 // loop_pre_header
                  _
                $region117: #{embedding_layer_forward.8} parent=114 // loop_header
                  %s4194 = sphi 0, %s4198
                  %p4195 = scmp.ge.s32.totalorder %s4194, 1
                  %s4199 = sphi %s4162, %s4162
                  %s4200 = sphi %s4170, %s4170
                $region118: #{embedding_layer_forward.8} parent=114 // loop_header_branch
                  %4197 = sbr.rel (%p4195) target = $region122
                $region119: #{embedding_layer_forward.8} parent=114 // loop_body
                  _
                $region120: #{embedding_layer_forward.8} parent=114 // loop_footer
                  %s4198 = sadd.s32 1, %s4194
                $region121: #{embedding_layer_forward.8} parent=114 // loop_footer_branch
                  %4193 = sbr.rel target = $region117
                $region122: #{embedding_layer_forward.8} parent=114 // loop_exit
                  _
                %s4202 = ssub.s32 16, 1
                loop: start=0, step=1, limit=1
                $region123: #{embedding_layer_forward.8} parent=114 // loop_pre_header
                  _
                $region124: #{embedding_layer_forward.8} parent=114 // loop_header
                  %s4204 = sphi 0, %s4208
                  %p4205 = scmp.ge.s32.totalorder %s4204, 1
                  %s4209 = sphi %s4162, %s4162
                  %s4210 = sphi %s4170, %s4170
                $region125: #{embedding_layer_forward.8} parent=114 // loop_header_branch
                  %4207 = sbr.rel (%p4205) target = $region129
                $region126: #{embedding_layer_forward.8} parent=114 // loop_body
                  %v4211 = vld [vmem:[%s4209] sm:%s4202]
                  %4212 = vst [vmem:[%s4210] sm:%s4202] %v4211
                  %v4213 = vld [vmem:[%s4209 + $0x4] sm:%s4202]
                  %4214 = vst [vmem:[%s4210 + $0xc] sm:%s4202] %v4213
                $region127: #{embedding_layer_forward.8} parent=114 // loop_footer
                  %s4208 = sadd.s32 1, %s4204
                $region128: #{embedding_layer_forward.8} parent=114 // loop_footer_branch
                  %4203 = sbr.rel target = $region124
                $region129: #{embedding_layer_forward.8} parent=114 // loop_exit
                  _
              $region115: #{embedding_layer_forward.8} parent=99 // pred_fallthru
                _
            $region100: #{embedding_layer_forward.8} parent=95 // pred_fallthru
              _
            // Predicated region
            $region101: #{embedding_layer_forward.8} parent=95 // pred_check
              _
            $region102: #{embedding_layer_forward.8} parent=95 // pred_check_branch
              %4176 = sbr.rel (0) target = $region104
            $region103: #{embedding_layer_forward.8} parent=95 // pred_region
              %s4178 = ssub.s32 16, 1
              loop: start=0, step=1, limit=1
              $region105: #{embedding_layer_forward.8} parent=103 // loop_pre_header
                _
              $region106: #{embedding_layer_forward.8} parent=103 // loop_header
                %s4180 = sphi 0, %s4184
                %p4181 = scmp.ge.s32.totalorder %s4180, 1
                %s4185 = sphi %s4162, %s4162
                %s4186 = sphi %s4170, %s4170
              $region107: #{embedding_layer_forward.8} parent=103 // loop_header_branch
                %4183 = sbr.rel (%p4181) target = $region111
              $region108: #{embedding_layer_forward.8} parent=103 // loop_body
                %v4187 = vld [vmem:[%s4185] sm:%s4178]
                %4188 = vst [vmem:[%s4186] sm:%s4178] %v4187
                %v4189 = vld [vmem:[%s4185 + $0x4] sm:%s4178]
                %4190 = vst [vmem:[%s4186 + $0xc] sm:%s4178] %v4189
              $region109: #{embedding_layer_forward.8} parent=103 // loop_footer
                %s4184 = sadd.s32 1, %s4180
              $region110: #{embedding_layer_forward.8} parent=103 // loop_footer_branch
                %4179 = sbr.rel target = $region106
              $region111: #{embedding_layer_forward.8} parent=103 // loop_exit
                _
            $region104: #{embedding_layer_forward.8} parent=95 // pred_fallthru
              _
          $region96: #{embedding_layer_forward.8} parent=91 // pred_fallthru
            _
          %4215 = vnop
        $region92: #{embedding_layer_forward.8} parent=83 // pred_fallthru
          _
      $region84: #{embedding_layer_forward.8} parent=5 // pred_fallthru
        _
      %p4216 = scmp.le.s32.totalorder 2, %s10
      // Predicated region
      $region130: #{embedding_layer_forward.8} parent=5 // pred_check
        %p4217 = pneg %p4216
      $region131: #{embedding_layer_forward.8} parent=5 // pred_check_branch
        %4219 = sbr.rel (%p4217) target = $region133
      $region132: #{embedding_layer_forward.8} parent=5 // pred_region
        %s4220 = ssub.s32 %s10, 2
        // Predicated region
        $region134: #{embedding_layer_forward.8} parent=132 // pred_check
          %p4221 = pneg %p157
        $region135: #{embedding_layer_forward.8} parent=132 // pred_check_branch
          %4223 = sbr.rel (%p4221) target = $region137
        $region136: #{embedding_layer_forward.8} parent=132 // pred_region
          %s4224 = sand.u32 %s142, 1
          %s4225 = sand.u32 %s142, 1
          %s4226 = smul.addr %s4225, 8
          %s4227 = scalar_lea.vmem [#allocation3], %s4226
        $region137: #{embedding_layer_forward.8} parent=132 // pred_fallthru
          _
      $region133: #{embedding_layer_forward.8} parent=5 // pred_fallthru
        _
    $region6: #{embedding_layer_forward.8} parent=1 // loop_footer
      %s14 = sadd.s32 1, %s10
    $region7: #{embedding_layer_forward.8} parent=1 // loop_footer_branch
      %9 = sbr.rel target = $region3
    $region8: #{embedding_layer_forward.8} parent=1 // loop_exit
      _

// kernel: embedding_layer_forward.9
$region0: #{embedding_layer_forward.9}
  #allocation0 [shape = 'u32[]', space=smem, size = 0x4, offset = 0x4, fixed_abs, tag = 'smem constant byte address 0x4 - core index']
  #allocation1 [shape = 'u32[72,128]{1,0:T(1,128)}', space=vmem, size = 0x9000, scoped, tag = 'internal scratch']
  %s0 = inlined_call_operand.vmem [shape: bf16[16,384], index: 0, kind: input, shape index: {}]
  %s1 = inlined_call_operand.vmem [shape: bf16[384,768], index: 1, kind: input, shape index: {}]
  %s2 = inlined_call_operand.vmem [shape: f32[16,768], index: 2, kind: input, shape index: {}]
  %s3 = inlined_call_operand.vmem [shape: f32[16,768], index: 3, kind: output, shape index: {}]
  %s4 = sld [smem:[#allocation0]]
  $region113: #{embedding_layer_forward.9} parent=0
    _
  %s6 = ssub.s32 1, %s4
  %s7 = scalar_select 0, %s6, %s4
  $region1: #{embedding_layer_forward.9} parent=0
    #allocation2 [shape = 'u8[589824]{0}', space=vmem, size = 0x90000, scoped, tag = 'input window, operand 1']
    #allocation3 [shape = 'u8[49152]{0}', space=vmem, size = 0xc000, scoped, tag = 'input window, operand 2']
    #allocation4 [shape = 'u8[49152]{0}', space=vmem, size = 0xc000, scoped, tag = 'output window, operand 0']
    loop: start=0, step=1, limit=4
    $region2: #{embedding_layer_forward.9} parent=1 // loop_pre_header
      _
    $region3: #{embedding_layer_forward.9} parent=1 // loop_header
      %s9 = sphi 0, %s13
      %p10 = scmp.ge.s32.totalorder %s9, 4
      %s16 = sphi 0, %s28
      %s17 = sphi 0, %s24
      %s18 = sphi 0, %s16
      %s19 = sphi 0, %s17
      %s20 = sphi 0, %s18
      %s21 = sphi 0, %s19
      %s31 = sphi 0, %s33
      %s34 = sphi 0, %s31
      %s35 = sphi 0, %s34
      %s51 = sphi 0, %s35
      %s57 = sphi 0, %s59
      %s60 = sphi 0, %s57
      %s61 = sphi 0, %s60
      %s77 = sphi 0, %s61
      %s85 = sphi 0, %s87
      %s88 = sphi 0, %s85
      %s89 = sphi 0, %s88
      %s105 = sphi 0, %s89
      %s113 = sphi 0, %s115
      %s116 = sphi 0, %s113
      %s117 = sphi 0, %s116
      %s133 = sphi 0, %s117
    $region4: #{embedding_layer_forward.9} parent=1 // loop_header_branch
      %12 = sbr.rel (%p10) target = $region8
    $region5: #{embedding_layer_forward.9} parent=1 // loop_body
      %s14 = ssub.s32 %s9, 1
      %s15 = ssub.s32 %s9, 2
      %s22 = sadd.s32 1, %s17
      %p23 = scmp.ge.s32.totalorder %s22, 2
      %s24 = scalar_select %p23, 0, %s22
      %s25 = sadd.s32 1, %s16
      %s26 = scalar_select %p23, %s25, %s16
      %p27 = scmp.ge.s32.totalorder %s26, 1
      %s28 = scalar_select %p27, 0, %s26
      %s29 = ssub.s32 %s16, %s28
      %p30 = scmp.eq.s32.totalorder %s29, 0
      %s32 = sadd.s32 %s31, 1
      %s33 = scalar_select %p30, %s31, %s32
      %p36 = pneg %p30
      %p37 = scmp.eq.s32.totalorder %s9, 1
      %p38 = por %p36, %p37
      %p39 = scmp.ne.s32.totalorder %s31, %s34
      %p40 = scmp.eq.s32.totalorder %s9, 0
      %p41 = por %p39, %p40
      %p42 = scmp.ne.s32.totalorder %s31, %s34
      %p43 = scmp.eq.s32.totalorder %s14, 1
      %p44 = por %p42, %p43
      %p45 = scmp.ne.s32.totalorder %s34, %s35
      %p46 = scmp.eq.s32.totalorder %s14, 0
      %p47 = por %p45, %p46
      %p48 = scmp.ne.s32.totalorder %s34, %s35
      %p49 = scmp.eq.s32.totalorder %s15, 1
      %p50 = por %p48, %p49
      %p52 = scmp.ne.s32.totalorder %s35, %s51
      %p53 = scmp.eq.s32.totalorder %s15, 0
      %p54 = por %p52, %p53
      %s55 = ssub.s32 %s17, %s24
      %p56 = scmp.eq.s32.totalorder %s55, 0
      %s58 = sadd.s32 %s57, 1
      %s59 = scalar_select %p56, %s57, %s58
      %p62 = pneg %p56
      %p63 = scmp.eq.s32.totalorder %s9, 1
      %p64 = por %p62, %p63
      %p65 = scmp.ne.s32.totalorder %s57, %s60
      %p66 = scmp.eq.s32.totalorder %s9, 0
      %p67 = por %p65, %p66
      %p68 = scmp.ne.s32.totalorder %s57, %s60
      %p69 = scmp.eq.s32.totalorder %s14, 1
      %p70 = por %p68, %p69
      %p71 = scmp.ne.s32.totalorder %s60, %s61
      %p72 = scmp.eq.s32.totalorder %s14, 0
      %p73 = por %p71, %p72
      %p74 = scmp.ne.s32.totalorder %s60, %s61
      %p75 = scmp.eq.s32.totalorder %s15, 1
      %p76 = por %p74, %p75
      %p78 = scmp.ne.s32.totalorder %s61, %s77
      %p79 = scmp.eq.s32.totalorder %s15, 0
      %p80 = por %p78, %p79
      %s81 = ssub.s32 %s16, %s28
      %s82 = ssub.s32 %s17, %s24
      %s83 = sor.u32 %s81, %s82
      %p84 = scmp.eq.s32.totalorder %s83, 0
      %s86 = sadd.s32 %s85, 1
      %s87 = scalar_select %p84, %s85, %s86
      %p90 = pneg %p84
      %p91 = scmp.eq.s32.totalorder %s9, 1
      %p92 = por %p90, %p91
      %p93 = scmp.ne.s32.totalorder %s85, %s88
      %p94 = scmp.eq.s32.totalorder %s9, 0
      %p95 = por %p93, %p94
      %p96 = scmp.ne.s32.totalorder %s85, %s88
      %p97 = scmp.eq.s32.totalorder %s14, 1
      %p98 = por %p96, %p97
      %p99 = scmp.ne.s32.totalorder %s88, %s89
      %p100 = scmp.eq.s32.totalorder %s14, 0
      %p101 = por %p99, %p100
      %p102 = scmp.ne.s32.totalorder %s88, %s89
      %p103 = scmp.eq.s32.totalorder %s15, 1
      %p104 = por %p102, %p103
      %p106 = scmp.ne.s32.totalorder %s89, %s105
      %p107 = scmp.eq.s32.totalorder %s15, 0
      %p108 = por %p106, %p107
      %s109 = ssub.s32 %s16, %s28
      %s110 = ssub.s32 %s17, %s24
      %s111 = sor.u32 %s109, %s110
      %p112 = scmp.eq.s32.totalorder %s111, 0
      %s114 = sadd.s32 %s113, 1
      %s115 = scalar_select %p112, %s113, %s114
      %p118 = pneg %p112
      %p119 = scmp.eq.s32.totalorder %s9, 1
      %p120 = por %p118, %p119
      %p121 = scmp.ne.s32.totalorder %s113, %s116
      %p122 = scmp.eq.s32.totalorder %s9, 0
      %p123 = por %p121, %p122
      %p124 = scmp.ne.s32.totalorder %s113, %s116
      %p125 = scmp.eq.s32.totalorder %s14, 1
      %p126 = por %p124, %p125
      %p127 = scmp.ne.s32.totalorder %s116, %s117
      %p128 = scmp.eq.s32.totalorder %s14, 0
      %p129 = por %p127, %p128
      %p130 = scmp.ne.s32.totalorder %s116, %s117
      %p131 = scmp.eq.s32.totalorder %s15, 1
      %p132 = por %p130, %p131
      %p134 = scmp.ne.s32.totalorder %s117, %s133
      %p135 = scmp.eq.s32.totalorder %s15, 0
      %p136 = por %p134, %p135
      %p137 = scmp.le.s32.totalorder 1, %s9
      %p138 = scmp.lt.s32.totalorder %s9, 3
      %p139 = pnand %p137, %p138
      %p140 = pneg %p139
      // Predicated region
      $region9: #{embedding_layer_forward.9} parent=5 // pred_check
        _
      $region10: #{embedding_layer_forward.9} parent=5 // pred_check_branch
        %142 = sbr.rel (%p139) target = $region12
      $region11: #{embedding_layer_forward.9} parent=5 // pred_region
        %s143 = ssub.s32 %s9, 1
        // Predicated region
        $region13: #{embedding_layer_forward.9} parent=11 // pred_check
          %p144 = pneg %p47
        $region14: #{embedding_layer_forward.9} parent=11 // pred_check_branch
          %146 = sbr.rel (%p144) target = $region16
        $region15: #{embedding_layer_forward.9} parent=11 // pred_region
          %s147 = smul.u32 2, %s18
          %p148 = scmp.lt.s32.totalorder %s147, 1
          %s149 = scalar_select %p148, %s147, 1
          %s150 = smul.addr %s149, 3
          %s151 = smul.addr %s150, 4
          %s152 = scalar_lea.vmem %s0, %s151
          %s153 = smul.u32 2, %s18
        $region16: #{embedding_layer_forward.9} parent=11 // pred_fallthru
          _
      $region12: #{embedding_layer_forward.9} parent=5 // pred_fallthru
        _
      %p154 = scmp.lt.s32.totalorder %s9, 2
      // Predicated region
      $region17: #{embedding_layer_forward.9} parent=5 // pred_check
        %p155 = pneg %p154
      $region18: #{embedding_layer_forward.9} parent=5 // pred_check_branch
        %157 = sbr.rel (%p155) target = $region20
      $region19: #{embedding_layer_forward.9} parent=5 // pred_region
        // Predicated region
        $region21: #{embedding_layer_forward.9} parent=19 // pred_check
          %p158 = pneg %p67
        $region22: #{embedding_layer_forward.9} parent=19 // pred_check_branch
          %160 = sbr.rel (%p158) target = $region24
        $region23: #{embedding_layer_forward.9} parent=19 // pred_region
          %s161 = sand.u32 %s57, 1
          %s162 = sand.u32 %s57, 1
          %s163 = smul.addr %s162, 576
          %s164 = scalar_lea.vmem [#allocation2], %s163
          %s165 = smul.u32 3, %s17
          %s166 = smul.addr %s165, 4
          %s167 = scalar_lea.vmem %s1, %s166
          // Predicated region
          $region25: #{embedding_layer_forward.9} parent=23 // pred_check
            _
          $region26: #{embedding_layer_forward.9} parent=23 // pred_check_branch
            %169 = sbr.rel (0) target = $region28
          $region27: #{embedding_layer_forward.9} parent=23 // pred_region
            // Predicated region
            $region29: #{embedding_layer_forward.9} parent=27 // pred_check
              _
            $region30: #{embedding_layer_forward.9} parent=27 // pred_check_branch
              %171 = sbr.rel (0) target = $region32
            $region31: #{embedding_layer_forward.9} parent=27 // pred_region
              %s172 = scalar_lea.vmem %s167, 8
              %s173 = scalar_lea.vmem %s164, 8 [#allocation2]
              loop: start=0, step=1, limit=1
              $region33: #{embedding_layer_forward.9} parent=31 // loop_pre_header
                _
              $region34: #{embedding_layer_forward.9} parent=31 // loop_header
                %s175 = sphi 0, %s179
                %p176 = scmp.ge.s32.totalorder %s175, 1
                %s180 = sphi %s167, %s167
                %s181 = sphi %s164, %s164
              $region35: #{embedding_layer_forward.9} parent=31 // loop_header_branch
                %178 = sbr.rel (%p176) target = $region39
              $region36: #{embedding_layer_forward.9} parent=31 // loop_body
                %v182 = vld [vmem:[%s180] sm:$0xff]
                %183 = vst [vmem:[%s181] sm:$0xff] %v182
                %v184 = vld [vmem:[%s180 + $0x18] sm:$0xff]
                %185 = vst [vmem:[%s181 + $0xc] sm:$0xff] %v184
                %v186 = vld [vmem:[%s180 + $0x30] sm:$0xff]
                %187 = vst [vmem:[%s181 + $0x18] sm:$0xff] %v186
                %v188 = vld [vmem:[%s180 + $0x48] sm:$0xff]
                %189 = vst [vmem:[%s181 + $0x24] sm:$0xff] %v188
                %v190 = vld [vmem:[%s180 + $0x60] sm:$0xff]
                %191 = vst [vmem:[%s181 + $0x30] sm:$0xff] %v190
                %v192 = vld [vmem:[%s180 + $0x78] sm:$0xff]
                %193 = vst [vmem:[%s181 + $0x3c] sm:$0xff] %v192
                %v194 = vld [vmem:[%s180 + $0x90] sm:$0xff]
                %195 = vst [vmem:[%s181 + $0x48] sm:$0xff] %v194
                %v196 = vld [vmem:[%s180 + $0xa8] sm:$0xff]
                %197 = vst [vmem:[%s181 + $0x54] sm:$0xff] %v196
                %v198 = vld [vmem:[%s180 + $0xc0] sm:$0xff]
                %199 = vst [vmem:[%s181 + $0x60] sm:$0xff] %v198
                %v200 = vld [vmem:[%s180 + $0xd8] sm:$0xff]
                %201 = vst [vmem:[%s181 + $0x6c] sm:$0xff] %v200
                %v202 = vld [vmem:[%s180 + $0xf0] sm:$0xff]
                %203 = vst [vmem:[%s181 + $0x78] sm:$0xff] %v202
                %v204 = vld [vmem:[%s180 + $0x108] sm:$0xff]
                %205 = vst [vmem:[%s181 + $0x84] sm:$0xff] %v204
                %v206 = vld [vmem:[%s180 + $0x120] sm:$0xff]
                %207 = vst [vmem:[%s181 + $0x90] sm:$0xff] %v206
                %v208 = vld [vmem:[%s180 + $0x138] sm:$0xff]
                %209 = vst [vmem:[%s181 + $0x9c] sm:$0xff] %v208
                %v210 = vld [vmem:[%s180 + $0x150] sm:$0xff]
                %211 = vst [vmem:[%s181 + $0xa8] sm:$0xff] %v210
                %v212 = vld [vmem:[%s180 + $0x168] sm:$0xff]
                %213 = vst [vmem:[%s181 + $0xb4] sm:$0xff] %v212
                %v214 = vld [vmem:[%s180 + $0x180] sm:$0xff]
                %215 = vst [vmem:[%s181 + $0xc0] sm:$0xff] %v214
                %v216 = vld [vmem:[%s180 + $0x198] sm:$0xff]
                %217 = vst [vmem:[%s181 + $0xcc] sm:$0xff] %v216
                %v218 = vld [vmem:[%s180 + $0x1b0] sm:$0xff]
                %219 = vst [vmem:[%s181 + $0xd8] sm:$0xff] %v218
                %v220 = vld [vmem:[%s180 + $0x1c8] sm:$0xff]
                %221 = vst [vmem:[%s181 + $0xe4] sm:$0xff] %v220
                %v222 = vld [vmem:[%s180 + $0x1e0] sm:$0xff]
                %223 = vst [vmem:[%s181 + $0xf0] sm:$0xff] %v222
                %v224 = vld [vmem:[%s180 + $0x1f8] sm:$0xff]
                %225 = vst [vmem:[%s181 + $0xfc] sm:$0xff] %v224
                %v226 = vld [vmem:[%s180 + $0x210] sm:$0xff]
                %227 = vst [vmem:[%s181 + $0x108] sm:$0xff] %v226
                %v228 = vld [vmem:[%s180 + $0x228] sm:$0xff]
                %229 = vst [vmem:[%s181 + $0x114] sm:$0xff] %v228
                %v230 = vld [vmem:[%s180 + $0x240] sm:$0xff]
                %231 = vst [vmem:[%s181 + $0x120] sm:$0xff] %v230
                %v232 = vld [vmem:[%s180 + $0x258] sm:$0xff]
                %233 = vst [vmem:[%s181 + $0x12c] sm:$0xff] %v232
                %v234 = vld [vmem:[%s180 + $0x270] sm:$0xff]
                %235 = vst [vmem:[%s181 + $0x138] sm:$0xff] %v234
                %v236 = vld [vmem:[%s180 + $0x288] sm:$0xff]
                %237 = vst [vmem:[%s181 + $0x144] sm:$0xff] %v236
                %v238 = vld [vmem:[%s180 + $0x2a0] sm:$0xff]
                %239 = vst [vmem:[%s181 + $0x150] sm:$0xff] %v238
                %v240 = vld [vmem:[%s180 + $0x2b8] sm:$0xff]
                %241 = vst [vmem:[%s181 + $0x15c] sm:$0xff] %v240
                %v242 = vld [vmem:[%s180 + $0x2d0] sm:$0xff]
                %243 = vst [vmem:[%s181 + $0x168] sm:$0xff] %v242
                %v244 = vld [vmem:[%s180 + $0x2e8] sm:$0xff]
                %245 = vst [vmem:[%s181 + $0x174] sm:$0xff] %v244
                %v246 = vld [vmem:[%s180 + $0x300] sm:$0xff]
                %247 = vst [vmem:[%s181 + $0x180] sm:$0xff] %v246
                %v248 = vld [vmem:[%s180 + $0x318] sm:$0xff]
                %249 = vst [vmem:[%s181 + $0x18c] sm:$0xff] %v248
                %v250 = vld [vmem:[%s180 + $0x330] sm:$0xff]
                %251 = vst [vmem:[%s181 + $0x198] sm:$0xff] %v250
                %v252 = vld [vmem:[%s180 + $0x348] sm:$0xff]
                %253 = vst [vmem:[%s181 + $0x1a4] sm:$0xff] %v252
                %v254 = vld [vmem:[%s180 + $0x360] sm:$0xff]
                %255 = vst [vmem:[%s181 + $0x1b0] sm:$0xff] %v254
                %v256 = vld [vmem:[%s180 + $0x378] sm:$0xff]
                %257 = vst [vmem:[%s181 + $0x1bc] sm:$0xff] %v256
                %v258 = vld [vmem:[%s180 + $0x390] sm:$0xff]
                %259 = vst [vmem:[%s181 + $0x1c8] sm:$0xff] %v258
                %v260 = vld [vmem:[%s180 + $0x3a8] sm:$0xff]
                %261 = vst [vmem:[%s181 + $0x1d4] sm:$0xff] %v260
                %v262 = vld [vmem:[%s180 + $0x3c0] sm:$0xff]
                %263 = vst [vmem:[%s181 + $0x1e0] sm:$0xff] %v262
                %v264 = vld [vmem:[%s180 + $0x3d8] sm:$0xff]
                %265 = vst [vmem:[%s181 + $0x1ec] sm:$0xff] %v264
                %v266 = vld [vmem:[%s180 + $0x3f0] sm:$0xff]
                %267 = vst [vmem:[%s181 + $0x1f8] sm:$0xff] %v266
                %v268 = vld [vmem:[%s180 + $0x408] sm:$0xff]
                %269 = vst [vmem:[%s181 + $0x204] sm:$0xff] %v268
                %v270 = vld [vmem:[%s180 + $0x420] sm:$0xff]
                %271 = vst [vmem:[%s181 + $0x210] sm:$0xff] %v270
                %v272 = vld [vmem:[%s180 + $0x438] sm:$0xff]
                %273 = vst [vmem:[%s181 + $0x21c] sm:$0xff] %v272
                %v274 = vld [vmem:[%s180 + $0x450] sm:$0xff]
                %275 = vst [vmem:[%s181 + $0x228] sm:$0xff] %v274
                %v276 = vld [vmem:[%s180 + $0x468] sm:$0xff]
                %277 = vst [vmem:[%s181 + $0x234] sm:$0xff] %v276
              $region37: #{embedding_layer_forward.9} parent=31 // loop_footer
                %s179 = sadd.s32 1, %s175
              $region38: #{embedding_layer_forward.9} parent=31 // loop_footer_branch
                %174 = sbr.rel target = $region34
              $region39: #{embedding_layer_forward.9} parent=31 // loop_exit
                _
              %s279 = ssub.s32 16, 1
              loop: start=0, step=1, limit=1
              $region40: #{embedding_layer_forward.9} parent=31 // loop_pre_header
                _
              $region41: #{embedding_layer_forward.9} parent=31 // loop_header
                %s281 = sphi 0, %s285
                %p282 = scmp.ge.s32.totalorder %s281, 1
                %s286 = sphi %s172, %s172
                %s287 = sphi %s173, %s173
              $region42: #{embedding_layer_forward.9} parent=31 // loop_header_branch
                %284 = sbr.rel (%p282) target = $region46
              $region43: #{embedding_layer_forward.9} parent=31 // loop_body
                %v288 = vld [vmem:[%s286] sm:%s279]
                %289 = vst [vmem:[%s287] sm:%s279] %v288
                %v290 = vld [vmem:[%s286 + $0x18] sm:%s279]
                %291 = vst [vmem:[%s287 + $0xc] sm:%s279] %v290
                %v292 = vld [vmem:[%s286 + $0x30] sm:%s279]
                %293 = vst [vmem:[%s287 + $0x18] sm:%s279] %v292
                %v294 = vld [vmem:[%s286 + $0x48] sm:%s279]
                %295 = vst [vmem:[%s287 + $0x24] sm:%s279] %v294
                %v296 = vld [vmem:[%s286 + $0x60] sm:%s279]
                %297 = vst [vmem:[%s287 + $0x30] sm:%s279] %v296
                %v298 = vld [vmem:[%s286 + $0x78] sm:%s279]
                %299 = vst [vmem:[%s287 + $0x3c] sm:%s279] %v298
                %v300 = vld [vmem:[%s286 + $0x90] sm:%s279]
                %301 = vst [vmem:[%s287 + $0x48] sm:%s279] %v300
                %v302 = vld [vmem:[%s286 + $0xa8] sm:%s279]
                %303 = vst [vmem:[%s287 + $0x54] sm:%s279] %v302
                %v304 = vld [vmem:[%s286 + $0xc0] sm:%s279]
                %305 = vst [vmem:[%s287 + $0x60] sm:%s279] %v304
                %v306 = vld [vmem:[%s286 + $0xd8] sm:%s279]
                %307 = vst [vmem:[%s287 + $0x6c] sm:%s279] %v306
                %v308 = vld [vmem:[%s286 + $0xf0] sm:%s279]
                %309 = vst [vmem:[%s287 + $0x78] sm:%s279] %v308
                %v310 = vld [vmem:[%s286 + $0x108] sm:%s279]
                %311 = vst [vmem:[%s287 + $0x84] sm:%s279] %v310
                %v312 = vld [vmem:[%s286 + $0x120] sm:%s279]
                %313 = vst [vmem:[%s287 + $0x90] sm:%s279] %v312
                %v314 = vld [vmem:[%s286 + $0x138] sm:%s279]
                %315 = vst [vmem:[%s287 + $0x9c] sm:%s279] %v314
                %v316 = vld [vmem:[%s286 + $0x150] sm:%s279]
                %317 = vst [vmem:[%s287 + $0xa8] sm:%s279] %v316
                %v318 = vld [vmem:[%s286 + $0x168] sm:%s279]
                %319 = vst [vmem:[%s287 + $0xb4] sm:%s279] %v318
                %v320 = vld [vmem:[%s286 + $0x180] sm:%s279]
                %321 = vst [vmem:[%s287 + $0xc0] sm:%s279] %v320
                %v322 = vld [vmem:[%s286 + $0x198] sm:%s279]
                %323 = vst [vmem:[%s287 + $0xcc] sm:%s279] %v322
                %v324 = vld [vmem:[%s286 + $0x1b0] sm:%s279]
                %325 = vst [vmem:[%s287 + $0xd8] sm:%s279] %v324
                %v326 = vld [vmem:[%s286 + $0x1c8] sm:%s279]
                %327 = vst [vmem:[%s287 + $0xe4] sm:%s279] %v326
                %v328 = vld [vmem:[%s286 + $0x1e0] sm:%s279]
                %329 = vst [vmem:[%s287 + $0xf0] sm:%s279] %v328
                %v330 = vld [vmem:[%s286 + $0x1f8] sm:%s279]
                %331 = vst [vmem:[%s287 + $0xfc] sm:%s279] %v330
                %v332 = vld [vmem:[%s286 + $0x210] sm:%s279]
                %333 = vst [vmem:[%s287 + $0x108] sm:%s279] %v332
                %v334 = vld [vmem:[%s286 + $0x228] sm:%s279]
                %335 = vst [vmem:[%s287 + $0x114] sm:%s279] %v334
                %v336 = vld [vmem:[%s286 + $0x240] sm:%s279]
                %337 = vst [vmem:[%s287 + $0x120] sm:%s279] %v336
                %v338 = vld [vmem:[%s286 + $0x258] sm:%s279]
                %339 = vst [vmem:[%s287 + $0x12c] sm:%s279] %v338
                %v340 = vld [vmem:[%s286 + $0x270] sm:%s279]
                %341 = vst [vmem:[%s287 + $0x138] sm:%s279] %v340
                %v342 = vld [vmem:[%s286 + $0x288] sm:%s279]
                %343 = vst [vmem:[%s287 + $0x144] sm:%s279] %v342
                %v344 = vld [vmem:[%s286 + $0x2a0] sm:%s279]
                %345 = vst [vmem:[%s287 + $0x150] sm:%s279] %v344
                %v346 = vld [vmem:[%s286 + $0x2b8] sm:%s279]
                %347 = vst [vmem:[%s287 + $0x15c] sm:%s279] %v346
                %v348 = vld [vmem:[%s286 + $0x2d0] sm:%s279]
                %349 = vst [vmem:[%s287 + $0x168] sm:%s279] %v348
                %v350 = vld [vmem:[%s286 + $0x2e8] sm:%s279]
                %351 = vst [vmem:[%s287 + $0x174] sm:%s279] %v350
                %v352 = vld [vmem:[%s286 + $0x300] sm:%s279]
                %353 = vst [vmem:[%s287 + $0x180] sm:%s279] %v352
                %v354 = vld [vmem:[%s286 + $0x318] sm:%s279]
                %355 = vst [vmem:[%s287 + $0x18c] sm:%s279] %v354
                %v356 = vld [vmem:[%s286 + $0x330] sm:%s279]
                %357 = vst [vmem:[%s287 + $0x198] sm:%s279] %v356
                %v358 = vld [vmem:[%s286 + $0x348] sm:%s279]
                %359 = vst [vmem:[%s287 + $0x1a4] sm:%s279] %v358
                %v360 = vld [vmem:[%s286 + $0x360] sm:%s279]
                %361 = vst [vmem:[%s287 + $0x1b0] sm:%s279] %v360
                %v362 = vld [vmem:[%s286 + $0x378] sm:%s279]
                %363 = vst [vmem:[%s287 + $0x1bc] sm:%s279] %v362
                %v364 = vld [vmem:[%s286 + $0x390] sm:%s279]
                %365 = vst [vmem:[%s287 + $0x1c8] sm:%s279] %v364
                %v366 = vld [vmem:[%s286 + $0x3a8] sm:%s279]
                %367 = vst [vmem:[%s287 + $0x1d4] sm:%s279] %v366
                %v368 = vld [vmem:[%s286 + $0x3c0] sm:%s279]
                %369 = vst [vmem:[%s287 + $0x1e0] sm:%s279] %v368
                %v370 = vld [vmem:[%s286 + $0x3d8] sm:%s279]
                %371 = vst [vmem:[%s287 + $0x1ec] sm:%s279] %v370
                %v372 = vld [vmem:[%s286 + $0x3f0] sm:%s279]
                %373 = vst [vmem:[%s287 + $0x1f8] sm:%s279] %v372
                %v374 = vld [vmem:[%s286 + $0x408] sm:%s279]
                %375 = vst [vmem:[%s287 + $0x204] sm:%s279] %v374
                %v376 = vld [vmem:[%s286 + $0x420] sm:%s279]
                %377 = vst [vmem:[%s287 + $0x210] sm:%s279] %v376
                %v378 = vld [vmem:[%s286 + $0x438] sm:%s279]
                %379 = vst [vmem:[%s287 + $0x21c] sm:%s279] %v378
                %v380 = vld [vmem:[%s286 + $0x450] sm:%s279]
                %381 = vst [vmem:[%s287 + $0x228] sm:%s279] %v380
                %v382 = vld [vmem:[%s286 + $0x468] sm:%s279]
                %383 = vst [vmem:[%s287 + $0x234] sm:%s279] %v382
              $region44: #{embedding_layer_forward.9} parent=31 // loop_footer
                %s285 = sadd.s32 1, %s281
              $region45: #{embedding_layer_forward.9} parent=31 // loop_footer_branch
                %280 = sbr.rel target = $region41
              $region46: #{embedding_layer_forward.9} parent=31 // loop_exit
                _
            $region32: #{embedding_layer_forward.9} parent=27 // pred_fallthru
              _
          $region28: #{embedding_layer_forward.9} parent=23 // pred_fallthru
            _
          %384 = vnop
        $region24: #{embedding_layer_forward.9} parent=19 // pred_fallthru
          _
        // Predicated region
        $region47: #{embedding_layer_forward.9} parent=19 // pred_check
          %p385 = pneg %p95
        $region48: #{embedding_layer_forward.9} parent=19 // pred_check_branch
          %387 = sbr.rel (%p385) target = $region50
        $region49: #{embedding_layer_forward.9} parent=19 // pred_region
          %s388 = sand.u32 %s85, 1
          %s389 = sand.u32 %s85, 1
          %s390 = smul.addr %s389, 48
          %s391 = scalar_lea.vmem [#allocation3], %s390
          %s392 = smul.u32 2, %s16
          %s393 = smul.u32 3, %s17
          %s394 = smul.addr %s392, 6
          %s395 = sadd.s32 %s393, %s394
          %s396 = smul.addr %s395, 8
          %s397 = scalar_lea.vmem %s2, %s396
          // Predicated region
          $region51: #{embedding_layer_forward.9} parent=49 // pred_check
            _
          $region52: #{embedding_layer_forward.9} parent=49 // pred_check_branch
            %399 = sbr.rel (0) target = $region54
          $region53: #{embedding_layer_forward.9} parent=49 // pred_region
            // Predicated region
            $region55: #{embedding_layer_forward.9} parent=53 // pred_check
              _
            $region56: #{embedding_layer_forward.9} parent=53 // pred_check_branch
              %401 = sbr.rel (0) target = $region58
            $region57: #{embedding_layer_forward.9} parent=53 // pred_region
              loop: start=0, step=1, limit=1
              $region59: #{embedding_layer_forward.9} parent=57 // loop_pre_header
                _
              $region60: #{embedding_layer_forward.9} parent=57 // loop_header
                %s403 = sphi 0, %s407
                %p404 = scmp.ge.s32.totalorder %s403, 1
                %s408 = sphi %s397, %s397
                %s409 = sphi %s391, %s391
              $region61: #{embedding_layer_forward.9} parent=57 // loop_header_branch
                %406 = sbr.rel (%p404) target = $region65
              $region62: #{embedding_layer_forward.9} parent=57 // loop_body
                %v410 = vld [vmem:[%s408] sm:$0xff]
                %411 = vst [vmem:[%s409] sm:$0xff] %v410
                %v412 = vld [vmem:[%s408 + $0x8] sm:$0xff]
                %413 = vst [vmem:[%s409 + $0x8] sm:$0xff] %v412
                %v414 = vld [vmem:[%s408 + $0x10] sm:$0xff]
                %415 = vst [vmem:[%s409 + $0x10] sm:$0xff] %v414
                %v416 = vld [vmem:[%s408 + $0x30] sm:$0xff]
                %417 = vst [vmem:[%s409 + $0x18] sm:$0xff] %v416
                %v418 = vld [vmem:[%s408 + $0x38] sm:$0xff]
                %419 = vst [vmem:[%s409 + $0x20] sm:$0xff] %v418
                %v420 = vld [vmem:[%s408 + $0x40] sm:$0xff]
                %421 = vst [vmem:[%s409 + $0x28] sm:$0xff] %v420
              $region63: #{embedding_layer_forward.9} parent=57 // loop_footer
                %s407 = sadd.s32 1, %s403
              $region64: #{embedding_layer_forward.9} parent=57 // loop_footer_branch
                %402 = sbr.rel target = $region60
              $region65: #{embedding_layer_forward.9} parent=57 // loop_exit
                _
            $region58: #{embedding_layer_forward.9} parent=53 // pred_fallthru
              _
            // Predicated region
            $region66: #{embedding_layer_forward.9} parent=53 // pred_check
              _
            $region67: #{embedding_layer_forward.9} parent=53 // pred_check_branch
              %423 = sbr.rel target = $region69
            $region68: #{embedding_layer_forward.9} parent=53 // pred_region
              _
            $region69: #{embedding_layer_forward.9} parent=53 // pred_fallthru
              _
          $region54: #{embedding_layer_forward.9} parent=49 // pred_fallthru
            _
          %424 = vnop
        $region50: #{embedding_layer_forward.9} parent=19 // pred_fallthru
          _
      $region20: #{embedding_layer_forward.9} parent=5 // pred_fallthru
        _
      %p425 = scmp.le.s32.totalorder 1, %s9
      %p426 = scmp.lt.s32.totalorder %s9, 3
      %p427 = pnand %p425, %p426
      %p428 = pneg %p427
      // Predicated region
      $region70: #{embedding_layer_forward.9} parent=5 // pred_check
        _
      $region71: #{embedding_layer_forward.9} parent=5 // pred_check_branch
        %430 = sbr.rel (%p427) target = $region73
      $region72: #{embedding_layer_forward.9} parent=5 // pred_region
        %s431 = ssub.s32 %s9, 1
        %s432 = sand.u32 %s60, 1
        %s433 = sand.u32 %s60, 1
        %s434 = smul.addr %s433, 576
        %s435 = scalar_lea.vmem [#allocation2], %s434
        // Predicated region
        $region74: #{embedding_layer_forward.9} parent=72 // pred_check
          %p436 = pneg %p73
        $region75: #{embedding_layer_forward.9} parent=72 // pred_check_branch
          %438 = sbr.rel (%p436) target = $region77
        $region76: #{embedding_layer_forward.9} parent=72 // pred_region
          _
        $region77: #{embedding_layer_forward.9} parent=72 // pred_fallthru
          _
        %s439 = sand.u32 %s88, 1
        %s440 = sand.u32 %s88, 1
        %s441 = smul.addr %s440, 48
        %s442 = scalar_lea.vmem [#allocation3], %s441
        // Predicated region
        $region78: #{embedding_layer_forward.9} parent=72 // pred_check
          %p443 = pneg %p101
        $region79: #{embedding_layer_forward.9} parent=72 // pred_check_branch
          %445 = sbr.rel (%p443) target = $region81
        $region80: #{embedding_layer_forward.9} parent=72 // pred_region
          _
        $region81: #{embedding_layer_forward.9} parent=72 // pred_fallthru
          _
        %s446 = smul.u32 2, %s18
        %p447 = scmp.lt.s32.totalorder %s446, 1
        %s448 = scalar_select %p447, %s446, 1
        %s449 = smul.addr %s448, 3
        %s450 = smul.addr %s449, 4
        %s451 = scalar_lea.vmem %s0, %s450
        %p452 = pneg %p47
        %p453 = pneg %p44
        %s454 = sand.u32 %s60, 1
        %s455 = sand.u32 %s60, 1
        %s456 = smul.addr %s455, 576
        %s457 = scalar_lea.vmem [#allocation2], %s456
        %p458 = pneg %p73
        %p459 = pneg %p70
        %s460 = sand.u32 %s88, 1
        %s461 = sand.u32 %s88, 1
        %s462 = smul.addr %s461, 48
        %s463 = scalar_lea.vmem [#allocation3], %s462
        %p464 = pneg %p101
        %p465 = pneg %p98
        %p466 = pneg %p129
        %p467 = pneg %p126
        %s468 = sand.u32 %s116, 1
        %s469 = sand.u32 %s116, 1
        %s470 = smul.addr %s469, 48
        %s471 = scalar_lea.vmem [#allocation4], %s470
        %s472 = smul.u32 2, %s18
        %p473 = scmp.lt.s32.totalorder %s472, 1
        %s474 = scalar_select %p473, %s472, 1
        %s475 = smul.addr %s474, 3
        %s476 = smul.addr %s475, 4
        %s477 = scalar_lea.vmem %s0, %s476
        %s478 = smul.u32 2, %s18
        %s479 = smul.u32 3, %s19
        %s480 = smul.u32 2, %s18
        %s481 = smul.u32 3, %s19
        %s482 = smul.u32 2, %s18
        %s483 = smul.u32 3, %s19
        %v484 = vld [vmem:[%s477] sm:$0xff]
        %v485 = vld [vmem:[%s477 + $0x8] sm:$0xf]
        %v486 = vld [vmem:[%s477 + $0xc] sm:$0xff]
        %v487 = vld [vmem:[%s477 + $0x14] sm:$0xf]
        %v488 = vld [vmem:[%s435] sm:$0xff]
        %v489 = vld [vmem:[%s435 + $0x8] sm:$0xf]
        %v490 = vld [vmem:[%s435 + $0xc] sm:$0xff]
        %v491 = vld [vmem:[%s435 + $0x14] sm:$0xf]
        %v492 = vld [vmem:[%s435 + $0x18] sm:$0xff]
        %v493 = vld [vmem:[%s435 + $0x20] sm:$0xf]
        %v494 = vld [vmem:[%s435 + $0x24] sm:$0xff]
        %v495 = vld [vmem:[%s435 + $0x2c] sm:$0xf]
        %v496 = vld [vmem:[%s435 + $0x30] sm:$0xff]
        %v497 = vld [vmem:[%s435 + $0x38] sm:$0xf]
        %v498 = vld [vmem:[%s435 + $0x3c] sm:$0xff]
        %v499 = vld [vmem:[%s435 + $0x44] sm:$0xf]
        %v500 = vld [vmem:[%s435 + $0x48] sm:$0xff]
        %v501 = vld [vmem:[%s435 + $0x50] sm:$0xf]
        %v502 = vld [vmem:[%s435 + $0x54] sm:$0xff]
        %v503 = vld [vmem:[%s435 + $0x5c] sm:$0xf]
        %v504 = vld [vmem:[%s435 + $0x60] sm:$0xff]
        %v505 = vld [vmem:[%s435 + $0x68] sm:$0xf]
        %v506 = vld [vmem:[%s435 + $0x6c] sm:$0xff]
        %v507 = vld [vmem:[%s435 + $0x74] sm:$0xf]
        %v508 = vld [vmem:[%s435 + $0x78] sm:$0xff]
        %v509 = vld [vmem:[%s435 + $0x80] sm:$0xf]
        %v510 = vld [vmem:[%s435 + $0x84] sm:$0xff]
        %v511 = vld [vmem:[%s435 + $0x8c] sm:$0xf]
        %v512 = vld [vmem:[%s435 + $0x90] sm:$0xff]
        %v513 = vld [vmem:[%s435 + $0x98] sm:$0xf]
        %v514 = vld [vmem:[%s435 + $0x9c] sm:$0xff]
        %v515 = vld [vmem:[%s435 + $0xa4] sm:$0xf]
        %v516 = vld [vmem:[%s435 + $0xa8] sm:$0xff]
        %v517 = vld [vmem:[%s435 + $0xb0] sm:$0xf]
        %v518 = vld [vmem:[%s435 + $0xb4] sm:$0xff]
        %v519 = vld [vmem:[%s435 + $0xbc] sm:$0xf]
        %v520 = vld [vmem:[%s435 + $0xc0] sm:$0xff]
        %v521 = vld [vmem:[%s435 + $0xc8] sm:$0xf]
        %v522 = vld [vmem:[%s435 + $0xcc] sm:$0xff]
        %v523 = vld [vmem:[%s435 + $0xd4] sm:$0xf]
        %v524 = vld [vmem:[%s435 + $0xd8] sm:$0xff]
        %v525 = vld [vmem:[%s435 + $0xe0] sm:$0xf]
        %v526 = vld [vmem:[%s435 + $0xe4] sm:$0xff]
        %v527 = vld [vmem:[%s435 + $0xec] sm:$0xf]
        %v528 = vld [vmem:[%s435 + $0xf0] sm:$0xff]
        %v529 = vld [vmem:[%s435 + $0xf8] sm:$0xf]
        %v530 = vld [vmem:[%s435 + $0xfc] sm:$0xff]
        %v531 = vld [vmem:[%s435 + $0x104] sm:$0xf]
        %v532 = vld [vmem:[%s435 + $0x108] sm:$0xff]
        %v533 = vld [vmem:[%s435 + $0x110] sm:$0xf]
        %v534 = vld [vmem:[%s435 + $0x114] sm:$0xff]
        %v535 = vld [vmem:[%s435 + $0x11c] sm:$0xf]
        %v536 = vld [vmem:[%s435 + $0x120] sm:$0xff]
        %v537 = vld [vmem:[%s435 + $0x128] sm:$0xf]
        %v538 = vld [vmem:[%s435 + $0x12c] sm:$0xff]
        %v539 = vld [vmem:[%s435 + $0x134] sm:$0xf]
        %v540 = vld [vmem:[%s435 + $0x138] sm:$0xff]
        %v541 = vld [vmem:[%s435 + $0x140] sm:$0xf]
        %v542 = vld [vmem:[%s435 + $0x144] sm:$0xff]
        %v543 = vld [vmem:[%s435 + $0x14c] sm:$0xf]
        %v544 = vld [vmem:[%s435 + $0x150] sm:$0xff]
        %v545 = vld [vmem:[%s435 + $0x158] sm:$0xf]
        %v546 = vld [vmem:[%s435 + $0x15c] sm:$0xff]
        %v547 = vld [vmem:[%s435 + $0x164] sm:$0xf]
        %v548 = vld [vmem:[%s435 + $0x168] sm:$0xff]
        %v549 = vld [vmem:[%s435 + $0x170] sm:$0xf]
        %v550 = vld [vmem:[%s435 + $0x174] sm:$0xff]
        %v551 = vld [vmem:[%s435 + $0x17c] sm:$0xf]
        %v552 = vld [vmem:[%s435 + $0x180] sm:$0xff]
        %v553 = vld [vmem:[%s435 + $0x188] sm:$0xf]
        %v554 = vld [vmem:[%s435 + $0x18c] sm:$0xff]
        %v555 = vld [vmem:[%s435 + $0x194] sm:$0xf]
        %v556 = vld [vmem:[%s435 + $0x198] sm:$0xff]
        %v557 = vld [vmem:[%s435 + $0x1a0] sm:$0xf]
        %v558 = vld [vmem:[%s435 + $0x1a4] sm:$0xff]
        %v559 = vld [vmem:[%s435 + $0x1ac] sm:$0xf]
        %v560 = vld [vmem:[%s435 + $0x1b0] sm:$0xff]
        %v561 = vld [vmem:[%s435 + $0x1b8] sm:$0xf]
        %v562 = vld [vmem:[%s435 + $0x1bc] sm:$0xff]
        %v563 = vld [vmem:[%s435 + $0x1c4] sm:$0xf]
        %v564 = vld [vmem:[%s435 + $0x1c8] sm:$0xff]
        %v565 = vld [vmem:[%s435 + $0x1d0] sm:$0xf]
        %v566 = vld [vmem:[%s435 + $0x1d4] sm:$0xff]
        %v567 = vld [vmem:[%s435 + $0x1dc] sm:$0xf]
        %v568 = vld [vmem:[%s435 + $0x1e0] sm:$0xff]
        %v569 = vld [vmem:[%s435 + $0x1e8] sm:$0xf]
        %v570 = vld [vmem:[%s435 + $0x1ec] sm:$0xff]
        %v571 = vld [vmem:[%s435 + $0x1f4] sm:$0xf]
        %v572 = vld [vmem:[%s435 + $0x1f8] sm:$0xff]
        %v573 = vld [vmem:[%s435 + $0x200] sm:$0xf]
        %v574 = vld [vmem:[%s435 + $0x204] sm:$0xff]
        %v575 = vld [vmem:[%s435 + $0x20c] sm:$0xf]
        %v576 = vld [vmem:[%s435 + $0x210] sm:$0xff]
        %v577 = vld [vmem:[%s435 + $0x218] sm:$0xf]
        %v578 = vld [vmem:[%s435 + $0x21c] sm:$0xff]
        %v579 = vld [vmem:[%s435 + $0x224] sm:$0xf]
        %v580 = vld [vmem:[%s435 + $0x228] sm:$0xff]
        %v581 = vld [vmem:[%s435 + $0x230] sm:$0xf]
        %v582 = vld [vmem:[%s435 + $0x234] sm:$0xff]
        %v583 = vld [vmem:[%s435 + $0x23c] sm:$0xf]
        %v584 = vld [vmem:[%s442] sm:$0xff]
        %v585 = vld [vmem:[%s442 + $0x8] sm:$0xff]
        %v586 = vld [vmem:[%s442 + $0x10] sm:$0xff]
        %v587 = vld [vmem:[%s442 + $0x18] sm:$0xff]
        %v588 = vld [vmem:[%s442 + $0x20] sm:$0xff]
        %v589 = vld [vmem:[%s442 + $0x28] sm:$0xff]
        %v594 = vunpack.c.l.b16 %v484
        %v595 = vunpack.c.h.b16 %v484
        %v596 = vunpack.c.l.b16 %v485
        %v597 = vunpack.c.l.b16 %v486
        %v598 = vunpack.c.h.b16 %v486
        %v599 = vunpack.c.l.b16 %v487
        %v600 = vpack.c.b16 %v597, %v594
        %v601 = vpack.c.b16 %v598, %v595
        %v602 = vpack.c.b16 %v599, %v596
        %v702 = vunpack.c.l.b16 %v488
        %v703 = vunpack.c.h.b16 %v488
        %v704 = vunpack.c.l.b16 %v489
        %v705 = vunpack.c.l.b16 %v490
        %v706 = vunpack.c.h.b16 %v490
        %v707 = vunpack.c.l.b16 %v491
        %v708 = vunpack.c.l.b16 %v492
        %v709 = vunpack.c.h.b16 %v492
        %v710 = vunpack.c.l.b16 %v493
        %v711 = vunpack.c.l.b16 %v494
        %v712 = vunpack.c.h.b16 %v494
        %v713 = vunpack.c.l.b16 %v495
        %v714 = vunpack.c.l.b16 %v496
        %v715 = vunpack.c.h.b16 %v496
        %v716 = vunpack.c.l.b16 %v497
        %v717 = vunpack.c.l.b16 %v498
        %v718 = vunpack.c.h.b16 %v498
        %v719 = vunpack.c.l.b16 %v499
        %v720 = vunpack.c.l.b16 %v500
        %v721 = vunpack.c.h.b16 %v500
        %v722 = vunpack.c.l.b16 %v501
        %v723 = vunpack.c.l.b16 %v502
        %v724 = vunpack.c.h.b16 %v502
        %v725 = vunpack.c.l.b16 %v503
        %v726 = vunpack.c.l.b16 %v504
        %v727 = vunpack.c.h.b16 %v504
        %v728 = vunpack.c.l.b16 %v505
        %v729 = vunpack.c.l.b16 %v506
        %v730 = vunpack.c.h.b16 %v506
        %v731 = vunpack.c.l.b16 %v507
        %v732 = vunpack.c.l.b16 %v508
        %v733 = vunpack.c.h.b16 %v508
        %v734 = vunpack.c.l.b16 %v509
        %v735 = vunpack.c.l.b16 %v510
        %v736 = vunpack.c.h.b16 %v510
        %v737 = vunpack.c.l.b16 %v511
        %v738 = vunpack.c.l.b16 %v512
        %v739 = vunpack.c.h.b16 %v512
        %v740 = vunpack.c.l.b16 %v513
        %v741 = vunpack.c.l.b16 %v514
        %v742 = vunpack.c.h.b16 %v514
        %v743 = vunpack.c.l.b16 %v515
        %v744 = vunpack.c.l.b16 %v516
        %v745 = vunpack.c.h.b16 %v516
        %v746 = vunpack.c.l.b16 %v517
        %v747 = vunpack.c.l.b16 %v518
        %v748 = vunpack.c.h.b16 %v518
        %v749 = vunpack.c.l.b16 %v519
        %v750 = vunpack.c.l.b16 %v520
        %v751 = vunpack.c.h.b16 %v520
        %v752 = vunpack.c.l.b16 %v521
        %v753 = vunpack.c.l.b16 %v522
        %v754 = vunpack.c.h.b16 %v522
        %v755 = vunpack.c.l.b16 %v523
        %v756 = vunpack.c.l.b16 %v524
        %v757 = vunpack.c.h.b16 %v524
        %v758 = vunpack.c.l.b16 %v525
        %v759 = vunpack.c.l.b16 %v526
        %v760 = vunpack.c.h.b16 %v526
        %v761 = vunpack.c.l.b16 %v527
        %v762 = vunpack.c.l.b16 %v528
        %v763 = vunpack.c.h.b16 %v528
        %v764 = vunpack.c.l.b16 %v529
        %v765 = vunpack.c.l.b16 %v530
        %v766 = vunpack.c.h.b16 %v530
        %v767 = vunpack.c.l.b16 %v531
        %v768 = vunpack.c.l.b16 %v532
        %v769 = vunpack.c.h.b16 %v532
        %v770 = vunpack.c.l.b16 %v533
        %v771 = vunpack.c.l.b16 %v534
        %v772 = vunpack.c.h.b16 %v534
        %v773 = vunpack.c.l.b16 %v535
        %v774 = vunpack.c.l.b16 %v536
        %v775 = vunpack.c.h.b16 %v536
        %v776 = vunpack.c.l.b16 %v537
        %v777 = vunpack.c.l.b16 %v538
        %v778 = vunpack.c.h.b16 %v538
        %v779 = vunpack.c.l.b16 %v539
        %v780 = vunpack.c.l.b16 %v540
        %v781 = vunpack.c.h.b16 %v540
        %v782 = vunpack.c.l.b16 %v541
        %v783 = vunpack.c.l.b16 %v542
        %v784 = vunpack.c.h.b16 %v542
        %v785 = vunpack.c.l.b16 %v543
        %v786 = vunpack.c.l.b16 %v544
        %v787 = vunpack.c.h.b16 %v544
        %v788 = vunpack.c.l.b16 %v545
        %v789 = vunpack.c.l.b16 %v546
        %v790 = vunpack.c.h.b16 %v546
        %v791 = vunpack.c.l.b16 %v547
        %v792 = vunpack.c.l.b16 %v548
        %v793 = vunpack.c.h.b16 %v548
        %v794 = vunpack.c.l.b16 %v549
        %v795 = vunpack.c.l.b16 %v550
        %v796 = vunpack.c.h.b16 %v550
        %v797 = vunpack.c.l.b16 %v551
        %v798 = vunpack.c.l.b16 %v552
        %v799 = vunpack.c.h.b16 %v552
        %v800 = vunpack.c.l.b16 %v553
        %v801 = vunpack.c.l.b16 %v554
        %v802 = vunpack.c.h.b16 %v554
        %v803 = vunpack.c.l.b16 %v555
        %v804 = vunpack.c.l.b16 %v556
        %v805 = vunpack.c.h.b16 %v556
        %v806 = vunpack.c.l.b16 %v557
        %v807 = vunpack.c.l.b16 %v558
        %v808 = vunpack.c.h.b16 %v558
        %v809 = vunpack.c.l.b16 %v559
        %v810 = vunpack.c.l.b16 %v560
        %v811 = vunpack.c.h.b16 %v560
        %v812 = vunpack.c.l.b16 %v561
        %v813 = vunpack.c.l.b16 %v562
        %v814 = vunpack.c.h.b16 %v562
        %v815 = vunpack.c.l.b16 %v563
        %v816 = vunpack.c.l.b16 %v564
        %v817 = vunpack.c.h.b16 %v564
        %v818 = vunpack.c.l.b16 %v565
        %v819 = vunpack.c.l.b16 %v566
        %v820 = vunpack.c.h.b16 %v566
        %v821 = vunpack.c.l.b16 %v567
        %v822 = vunpack.c.l.b16 %v568
        %v823 = vunpack.c.h.b16 %v568
        %v824 = vunpack.c.l.b16 %v569
        %v825 = vunpack.c.l.b16 %v570
        %v826 = vunpack.c.h.b16 %v570
        %v827 = vunpack.c.l.b16 %v571
        %v828 = vunpack.c.l.b16 %v572
        %v829 = vunpack.c.h.b16 %v572
        %v830 = vunpack.c.l.b16 %v573
        %v831 = vunpack.c.l.b16 %v574
        %v832 = vunpack.c.h.b16 %v574
        %v833 = vunpack.c.l.b16 %v575
        %v834 = vunpack.c.l.b16 %v576
        %v835 = vunpack.c.h.b16 %v576
        %v836 = vunpack.c.l.b16 %v577
        %v837 = vunpack.c.l.b16 %v578
        %v838 = vunpack.c.h.b16 %v578
        %v839 = vunpack.c.l.b16 %v579
        %v840 = vunpack.c.l.b16 %v580
        %v841 = vunpack.c.h.b16 %v580
        %v842 = vunpack.c.l.b16 %v581
        %v843 = vunpack.c.l.b16 %v582
        %v844 = vunpack.c.h.b16 %v582
        %v845 = vunpack.c.l.b16 %v583
        %v846 = vpack.c.b16 %v705, %v702
        %v847 = vpack.c.b16 %v706, %v703
        %v848 = vpack.c.b16 %v707, %v704
        %v849 = vpack.c.b16 %v711, %v708
        %v850 = vpack.c.b16 %v712, %v709
        %v851 = vpack.c.b16 %v713, %v710
        %v852 = vpack.c.b16 %v717, %v714
        %v853 = vpack.c.b16 %v718, %v715
        %v854 = vpack.c.b16 %v719, %v716
        %v855 = vpack.c.b16 %v723, %v720
        %v856 = vpack.c.b16 %v724, %v721
        %v857 = vpack.c.b16 %v725, %v722
        %v858 = vpack.c.b16 %v729, %v726
        %v859 = vpack.c.b16 %v730, %v727
        %v860 = vpack.c.b16 %v731, %v728
        %v861 = vpack.c.b16 %v735, %v732
        %v862 = vpack.c.b16 %v736, %v733
        %v863 = vpack.c.b16 %v737, %v734
        %v864 = vpack.c.b16 %v741, %v738
        %v865 = vpack.c.b16 %v742, %v739
        %v866 = vpack.c.b16 %v743, %v740
        %v867 = vpack.c.b16 %v747, %v744
        %v868 = vpack.c.b16 %v748, %v745
        %v869 = vpack.c.b16 %v749, %v746
        %v870 = vpack.c.b16 %v753, %v750
        %v871 = vpack.c.b16 %v754, %v751
        %v872 = vpack.c.b16 %v755, %v752
        %v873 = vpack.c.b16 %v759, %v756
        %v874 = vpack.c.b16 %v760, %v757
        %v875 = vpack.c.b16 %v761, %v758
        %v876 = vpack.c.b16 %v765, %v762
        %v877 = vpack.c.b16 %v766, %v763
        %v878 = vpack.c.b16 %v767, %v764
        %v879 = vpack.c.b16 %v771, %v768
        %v880 = vpack.c.b16 %v772, %v769
        %v881 = vpack.c.b16 %v773, %v770
        %v882 = vpack.c.b16 %v777, %v774
        %v883 = vpack.c.b16 %v778, %v775
        %v884 = vpack.c.b16 %v779, %v776
        %v885 = vpack.c.b16 %v783, %v780
        %v886 = vpack.c.b16 %v784, %v781
        %v887 = vpack.c.b16 %v785, %v782
        %v888 = vpack.c.b16 %v789, %v786
        %v889 = vpack.c.b16 %v790, %v787
        %v890 = vpack.c.b16 %v791, %v788
        %v891 = vpack.c.b16 %v795, %v792
        %v892 = vpack.c.b16 %v796, %v793
        %v893 = vpack.c.b16 %v797, %v794
        %v894 = vpack.c.b16 %v801, %v798
        %v895 = vpack.c.b16 %v802, %v799
        %v896 = vpack.c.b16 %v803, %v800
        %v897 = vpack.c.b16 %v807, %v804
        %v898 = vpack.c.b16 %v808, %v805
        %v899 = vpack.c.b16 %v809, %v806
        %v900 = vpack.c.b16 %v813, %v810
        %v901 = vpack.c.b16 %v814, %v811
        %v902 = vpack.c.b16 %v815, %v812
        %v903 = vpack.c.b16 %v819, %v816
        %v904 = vpack.c.b16 %v820, %v817
        %v905 = vpack.c.b16 %v821, %v818
        %v906 = vpack.c.b16 %v825, %v822
        %v907 = vpack.c.b16 %v826, %v823
        %v908 = vpack.c.b16 %v827, %v824
        %v909 = vpack.c.b16 %v831, %v828
        %v910 = vpack.c.b16 %v832, %v829
        %v911 = vpack.c.b16 %v833, %v830
        %v912 = vpack.c.b16 %v837, %v834
        %v913 = vpack.c.b16 %v838, %v835
        %v914 = vpack.c.b16 %v839, %v836
        %v915 = vpack.c.b16 %v843, %v840
        %v916 = vpack.c.b16 %v844, %v841
        %v917 = vpack.c.b16 %v845, %v842
        %990 = vmatpush.bf16.msra.mxu0 %v867
        %991 = vmatpush.bf16.msra.mxu0 %v864
        %992 = vmatpush.bf16.msra.mxu0 %v861
        %993 = vmatpush.bf16.msra.mxu0 %v858
        %994 = vmatpush.bf16.msra.mxu0 %v855
        %995 = vmatpush.bf16.msra.mxu0 %v852
        %996 = vmatpush.bf16.msra.mxu0 %v849
        %997 = vmatpush.bf16.msra.mxu0 %v846
        %998 = vmatmul.bf16.gmra.mxu0 %v600
        %v999 = vpop.f32.mrf.mxu0
        %v1000 = vadd.f32 %v584, %v999
        %v1001 = vpop.f32.mrf.mxu0
        %v1002 = vadd.f32 %v587, %v1001
        %1003 = vdwg.mxu0
        %1004 = vmatpush.bf16.msra.mxu0 %v891
        %1005 = vmatpush.bf16.msra.mxu0 %v888
        %1006 = vmatpush.bf16.msra.mxu0 %v885
        %1007 = vmatpush.bf16.msra.mxu0 %v882
        %1008 = vmatpush.bf16.msra.mxu0 %v879
        %1009 = vmatpush.bf16.msra.mxu0 %v876
        %1010 = vmatpush.bf16.msra.mxu0 %v873
        %1011 = vmatpush.bf16.msra.mxu0 %v870
        %1012 = vmatmul.bf16.gmra.mxu0 %v601
        %v1013 = vpop.f32.mrf.mxu0
        %v1014 = vadd.f32 %v1000, %v1013
        %v1015 = vpop.f32.mrf.mxu0
        %v1016 = vadd.f32 %v1002, %v1015
        %1017 = vdwg.mxu0
        %1018 = vmatpush.bf16.msra.mxu0 %v915
        %1019 = vmatpush.bf16.msra.mxu0 %v912
        %1020 = vmatpush.bf16.msra.mxu0 %v909
        %1021 = vmatpush.bf16.msra.mxu0 %v906
        %1022 = vmatpush.bf16.msra.mxu0 %v903
        %1023 = vmatpush.bf16.msra.mxu0 %v900
        %1024 = vmatpush.bf16.msra.mxu0 %v897
        %1025 = vmatpush.bf16.msra.mxu0 %v894
        %1026 = vmatmul.bf16.gmra.mxu0 %v602
        %v1027 = vpop.f32.mrf.mxu0
        %v1028 = vadd.f32 %v1014, %v1027
        %v1029 = vpop.f32.mrf.mxu0
        %v1030 = vadd.f32 %v1016, %v1029
        %1031 = vdwg.mxu0
        %1032 = vmatpush.bf16.msra.mxu0 %v868
        %1033 = vmatpush.bf16.msra.mxu0 %v865
        %1034 = vmatpush.bf16.msra.mxu0 %v862
        %1035 = vmatpush.bf16.msra.mxu0 %v859
        %1036 = vmatpush.bf16.msra.mxu0 %v856
        %1037 = vmatpush.bf16.msra.mxu0 %v853
        %1038 = vmatpush.bf16.msra.mxu0 %v850
        %1039 = vmatpush.bf16.msra.mxu0 %v847
        %1040 = vmatmul.bf16.gmra.mxu0 %v600
        %v1041 = vpop.f32.mrf.mxu0
        %v1042 = vadd.f32 %v585, %v1041
        %v1043 = vpop.f32.mrf.mxu0
        %v1044 = vadd.f32 %v588, %v1043
        %1045 = vdwg.mxu0
        %1046 = vmatpush.bf16.msra.mxu0 %v892
        %1047 = vmatpush.bf16.msra.mxu0 %v889
        %1048 = vmatpush.bf16.msra.mxu0 %v886
        %1049 = vmatpush.bf16.msra.mxu0 %v883
        %1050 = vmatpush.bf16.msra.mxu0 %v880
        %1051 = vmatpush.bf16.msra.mxu0 %v877
        %1052 = vmatpush.bf16.msra.mxu0 %v874
        %1053 = vmatpush.bf16.msra.mxu0 %v871
        %1054 = vmatmul.bf16.gmra.mxu0 %v601
        %v1055 = vpop.f32.mrf.mxu0
        %v1056 = vadd.f32 %v1042, %v1055
        %v1057 = vpop.f32.mrf.mxu0
        %v1058 = vadd.f32 %v1044, %v1057
        %1059 = vdwg.mxu0
        %1060 = vmatpush.bf16.msra.mxu0 %v916
        %1061 = vmatpush.bf16.msra.mxu0 %v913
        %1062 = vmatpush.bf16.msra.mxu0 %v910
        %1063 = vmatpush.bf16.msra.mxu0 %v907
        %1064 = vmatpush.bf16.msra.mxu0 %v904
        %1065 = vmatpush.bf16.msra.mxu0 %v901
        %1066 = vmatpush.bf16.msra.mxu0 %v898
        %1067 = vmatpush.bf16.msra.mxu0 %v895
        %1068 = vmatmul.bf16.gmra.mxu0 %v602
        %v1069 = vpop.f32.mrf.mxu0
        %v1070 = vadd.f32 %v1056, %v1069
        %v1071 = vpop.f32.mrf.mxu0
        %v1072 = vadd.f32 %v1058, %v1071
        %1073 = vdwg.mxu0
        %1074 = vmatpush.bf16.msra.mxu0 %v869
        %1075 = vmatpush.bf16.msra.mxu0 %v866
        %1076 = vmatpush.bf16.msra.mxu0 %v863
        %1077 = vmatpush.bf16.msra.mxu0 %v860
        %1078 = vmatpush.bf16.msra.mxu0 %v857
        %1079 = vmatpush.bf16.msra.mxu0 %v854
        %1080 = vmatpush.bf16.msra.mxu0 %v851
        %1081 = vmatpush.bf16.msra.mxu0 %v848
        %1082 = vmatmul.bf16.gmra.mxu0 %v600
        %v1083 = vpop.f32.mrf.mxu0
        %v1084 = vadd.f32 %v586, %v1083
        %v1085 = vpop.f32.mrf.mxu0
        %v1086 = vadd.f32 %v589, %v1085
        %1087 = vdwg.mxu0
        %1088 = vmatpush.bf16.msra.mxu0 %v893
        %1089 = vmatpush.bf16.msra.mxu0 %v890
        %1090 = vmatpush.bf16.msra.mxu0 %v887
        %1091 = vmatpush.bf16.msra.mxu0 %v884
        %1092 = vmatpush.bf16.msra.mxu0 %v881
        %1093 = vmatpush.bf16.msra.mxu0 %v878
        %1094 = vmatpush.bf16.msra.mxu0 %v875
        %1095 = vmatpush.bf16.msra.mxu0 %v872
        %1096 = vmatmul.bf16.gmra.mxu0 %v601
        %v1097 = vpop.f32.mrf.mxu0
        %v1098 = vadd.f32 %v1084, %v1097
        %v1099 = vpop.f32.mrf.mxu0
        %v1100 = vadd.f32 %v1086, %v1099
        %1101 = vdwg.mxu0
        %1102 = vmatpush.bf16.msra.mxu0 %v917
        %1103 = vmatpush.bf16.msra.mxu0 %v914
        %1104 = vmatpush.bf16.msra.mxu0 %v911
        %1105 = vmatpush.bf16.msra.mxu0 %v908
        %1106 = vmatpush.bf16.msra.mxu0 %v905
        %1107 = vmatpush.bf16.msra.mxu0 %v902
        %1108 = vmatpush.bf16.msra.mxu0 %v899
        %1109 = vmatpush.bf16.msra.mxu0 %v896
        %1110 = vmatmul.bf16.gmra.mxu0 %v602
        %v1111 = vpop.f32.mrf.mxu0
        %v1112 = vadd.f32 %v1098, %v1111
        %v1113 = vpop.f32.mrf.mxu0
        %v1114 = vadd.f32 %v1100, %v1113
        %1115 = vdwg.mxu0
        %1116 = vst [vmem:[%s471] sm:$0xff] %v1028
        %1117 = vst [vmem:[%s471 + $0x8] sm:$0xff] %v1070
        %1118 = vst [vmem:[%s471 + $0x10] sm:$0xff] %v1112
        %1119 = vst [vmem:[%s471 + $0x18] sm:$0xff] %v1030
        %1120 = vst [vmem:[%s471 + $0x20] sm:$0xff] %v1072
        %1121 = vst [vmem:[%s471 + $0x28] sm:$0xff] %v1114
        %s1122 = sand.u32 %s116, 1
        %s1123 = sand.u32 %s116, 1
        %s1124 = smul.addr %s1123, 48
        %s1125 = scalar_lea.vmem [#allocation4], %s1124
        // Predicated region
        $region82: #{embedding_layer_forward.9} parent=72 // pred_check
          %p1126 = pneg %p126
        $region83: #{embedding_layer_forward.9} parent=72 // pred_check_branch
          %1128 = sbr.rel (%p1126) target = $region85
        $region84: #{embedding_layer_forward.9} parent=72 // pred_region
          %s1129 = smul.u32 2, %s18
          %s1130 = smul.u32 3, %s19
          %s1131 = smul.addr %s1129, 6
          %s1132 = sadd.s32 %s1130, %s1131
          %s1133 = smul.addr %s1132, 8
          %s1134 = scalar_lea.vmem %s3, %s1133
          // Predicated region
          $region86: #{embedding_layer_forward.9} parent=84 // pred_check
            _
          $region87: #{embedding_layer_forward.9} parent=84 // pred_check_branch
            %1136 = sbr.rel (0) target = $region89
          $region88: #{embedding_layer_forward.9} parent=84 // pred_region
            // Predicated region
            $region90: #{embedding_layer_forward.9} parent=88 // pred_check
              _
            $region91: #{embedding_layer_forward.9} parent=88 // pred_check_branch
              %1138 = sbr.rel (0) target = $region93
            $region92: #{embedding_layer_forward.9} parent=88 // pred_region
              loop: start=0, step=1, limit=1
              $region94: #{embedding_layer_forward.9} parent=92 // loop_pre_header
                _
              $region95: #{embedding_layer_forward.9} parent=92 // loop_header
                %s1140 = sphi 0, %s1144
                %p1141 = scmp.ge.s32.totalorder %s1140, 1
                %s1145 = sphi %s1125, %s1125
                %s1146 = sphi %s1134, %s1134
              $region96: #{embedding_layer_forward.9} parent=92 // loop_header_branch
                %1143 = sbr.rel (%p1141) target = $region100
              $region97: #{embedding_layer_forward.9} parent=92 // loop_body
                %v1147 = vld [vmem:[%s1145] sm:$0xff]
                %1148 = vst [vmem:[%s1146] sm:$0xff] %v1147
                %v1149 = vld [vmem:[%s1145 + $0x8] sm:$0xff]
                %1150 = vst [vmem:[%s1146 + $0x8] sm:$0xff] %v1149
                %v1151 = vld [vmem:[%s1145 + $0x10] sm:$0xff]
                %1152 = vst [vmem:[%s1146 + $0x10] sm:$0xff] %v1151
                %v1153 = vld [vmem:[%s1145 + $0x18] sm:$0xff]
                %1154 = vst [vmem:[%s1146 + $0x30] sm:$0xff] %v1153
                %v1155 = vld [vmem:[%s1145 + $0x20] sm:$0xff]
                %1156 = vst [vmem:[%s1146 + $0x38] sm:$0xff] %v1155
                %v1157 = vld [vmem:[%s1145 + $0x28] sm:$0xff]
                %1158 = vst [vmem:[%s1146 + $0x40] sm:$0xff] %v1157
              $region98: #{embedding_layer_forward.9} parent=92 // loop_footer
                %s1144 = sadd.s32 1, %s1140
              $region99: #{embedding_layer_forward.9} parent=92 // loop_footer_branch
                %1139 = sbr.rel target = $region95
              $region100: #{embedding_layer_forward.9} parent=92 // loop_exit
                _
            $region93: #{embedding_layer_forward.9} parent=88 // pred_fallthru
              _
            // Predicated region
            $region101: #{embedding_layer_forward.9} parent=88 // pred_check
              _
            $region102: #{embedding_layer_forward.9} parent=88 // pred_check_branch
              %1160 = sbr.rel target = $region104
            $region103: #{embedding_layer_forward.9} parent=88 // pred_region
              _
            $region104: #{embedding_layer_forward.9} parent=88 // pred_fallthru
              _
          $region89: #{embedding_layer_forward.9} parent=84 // pred_fallthru
            _
          %1161 = vnop
        $region85: #{embedding_layer_forward.9} parent=72 // pred_fallthru
          _
      $region73: #{embedding_layer_forward.9} parent=5 // pred_fallthru
        _
      %p1162 = scmp.le.s32.totalorder 2, %s9
      // Predicated region
      $region105: #{embedding_layer_forward.9} parent=5 // pred_check
        %p1163 = pneg %p1162
      $region106: #{embedding_layer_forward.9} parent=5 // pred_check_branch
        %1165 = sbr.rel (%p1163) target = $region108
      $region107: #{embedding_layer_forward.9} parent=5 // pred_region
        %s1166 = ssub.s32 %s9, 2
        // Predicated region
        $region109: #{embedding_layer_forward.9} parent=107 // pred_check
          %p1167 = pneg %p132
        $region110: #{embedding_layer_forward.9} parent=107 // pred_check_branch
          %1169 = sbr.rel (%p1167) target = $region112
        $region111: #{embedding_layer_forward.9} parent=107 // pred_region
          %s1170 = sand.u32 %s117, 1
          %s1171 = sand.u32 %s117, 1
          %s1172 = smul.addr %s1171, 48
          %s1173 = scalar_lea.vmem [#allocation4], %s1172
        $region112: #{embedding_layer_forward.9} parent=107 // pred_fallthru
          _
      $region108: #{embedding_layer_forward.9} parent=5 // pred_fallthru
        _
    $region6: #{embedding_layer_forward.9} parent=1 // loop_footer
      %s13 = sadd.s32 1, %s9
    $region7: #{embedding_layer_forward.9} parent=1 // loop_footer_branch
      %8 = sbr.rel target = $region3
    $region8: #{embedding_layer_forward.9} parent=1 // loop_exit
      _

</llo_original>
